<compile_context>
chip_gen: v5e
topology: v5e:2x2
jax: 0.10.0
libtpu: 0.0.40
codegen_flags: <defaults>
</compile_context>

<pallas_src>
import functools

import jax
import jax.numpy as jnp
import numpy as np
from jax.experimental import pallas as pl
from jax.experimental.pallas import tpu as pltpu

BN_EPS = 1e-5


# --------------------------------- kernel -----------------------------------

def _classifier_kernel(x_ref,
                       w1, s1, b1, w2, s2, b2, w3, s3, b3, w4, s4, b4,
                       sel1, sel2, sel3, wh, bh,
                       o_ref,
                       y1, p2, y2, p3, y3, p4, y4, feat,
                       *, B, conv_cfg, pool_cfg, last_cfg):
    # conv_cfg[li] = (taps, L, frame): row offsets of the K*K taps into the
    #   flattened zero-padded input of that layer, the per-image output length,
    #   and the per-image frame stride (hp*wp).
    # pool_cfg[li] = (wp, lm, next_frame)
    # last_cfg     = (wp, wo, L, frame) of the final conv layer.

    def conv_bn_relu(src_ref, w_ref, s_ref, b_ref, li):
        taps, L, frame = conv_cfg[li]
        Ls = (B - 1) * frame + L          # all B images stacked along M
        pieces = [src_ref[pl.ds(t, Ls), :] for t in taps]
        lhs = pieces[0] if len(pieces) == 1 else jnp.concatenate(pieces, axis=-1)
        acc = jnp.dot(lhs, w_ref[...], preferred_element_type=jnp.float32)
        # Folded eval-mode BatchNorm + ReLU.
        return jnp.maximum(acc * s_ref[...] + b_ref[...], 0.0), Ls

    def pool_pad(y_ref, sel_ref, dst_ref, li):
        # Fused 2x2/stride-2 max-pool + zero-pad + re-flatten for the next
        # layer: max of 4 shifted row-slices, then one bf16 matmul with a
        # constant 0/1 selection matrix (per image).
        _, _, frame = conv_cfg[li]
        wp, lm, nframe = pool_cfg[li]
        for b in range(B):
            base = b * frame
            m = jnp.maximum(
                jnp.maximum(y_ref[pl.ds(base, lm), :],
                            y_ref[pl.ds(base + 1, lm), :]),
                jnp.maximum(y_ref[pl.ds(base + wp, lm), :],
                            y_ref[pl.ds(base + wp + 1, lm), :]))
            r = jnp.dot(sel_ref[...], m, preferred_element_type=jnp.float32)
            dst_ref[pl.ds(b * nframe, nframe), :] = r.astype(jnp.bfloat16)

    # conv1 reads the wrapper-built im2col block (one big-K matmul).
    act, ls = conv_bn_relu(x_ref, w1, s1, b1, 0)
    y1[pl.ds(0, ls), :] = act.astype(jnp.bfloat16)
    pool_pad(y1, sel1, p2, 0)

    act, ls = conv_bn_relu(p2, w2, s2, b2, 1)
    y2[pl.ds(0, ls), :] = act.astype(jnp.bfloat16)
    pool_pad(y2, sel2, p3, 1)

    act, ls = conv_bn_relu(p3, w3, s3, b3, 2)
    y3[pl.ds(0, ls), :] = act.astype(jnp.bfloat16)
    pool_pad(y3, sel3, p4, 2)

    act, ls = conv_bn_relu(p4, w4, s4, b4, 3)
    y4[pl.ds(0, ls), :] = act.astype(jnp.bfloat16)

    # AdaptiveMaxPool2d((1,1)): global max over the valid spatial rows only
    # (wrap rows masked with 0; exact since activations are post-ReLU >= 0).
    wp_l, wo_l, l_l, frame_l = last_cfg
    rows = jax.lax.broadcasted_iota(jnp.int32, (l_l, 1), 0)
    valid = (rows % wp_l) < wo_l
    for b in range(B):
        v = y4[pl.ds(b * frame_l, l_l), :]
        fb = jnp.max(jnp.where(valid, v, jnp.zeros_like(v)),
                     axis=0, keepdims=True)
        feat[pl.ds(b, 1), :] = fb.astype(jnp.float32)

    # Head: Dropout(p=0.5) is identity in eval mode; Linear(256 -> out_pad).
    logits = jnp.dot(feat[...].astype(jnp.bfloat16), wh[...],
                     preferred_element_type=jnp.float32) + bh[...]
    o_ref[...] = logits


# ------------------------------- parameters ---------------------------------

def init_params(key, output_features):
    """Synthetic parameters with the same shapes/semantics as the PyTorch model."""
    conv_specs = [(3, 32, 5), (32, 64, 3), (64, 128, 3), (128, 256, 3)]
    convs = []
    for cin, cout, k in conv_specs:
        key, k1, k2, k3, k4, k5 = jax.random.split(key, 6)
        convs.append(dict(
            w=jax.random.normal(k1, (cout, cin, k, k), jnp.float32)
              / float(np.sqrt(cin * k * k)),                      # OIHW
            gamma=1.0 + 0.1 * jax.random.normal(k2, (cout,), jnp.float32),
            beta=0.1 * jax.random.normal(k3, (cout,), jnp.float32),
            mean=0.1 * jax.random.normal(k4, (cout,), jnp.float32),
            var=1.0 + jax.random.uniform(k5, (cout,), jnp.float32),
        ))
    key, k1, k2 = jax.random.split(key, 3)
    w_head = jax.random.normal(k1, (256, output_features), jnp.float32) / 16.0
    b_head = 0.01 * jax.random.normal(k2, (output_features,), jnp.float32)
    return {"convs": convs, "head": (w_head, b_head)}


def _fold_conv_params(params, out_pad):
    """Fold eval-mode BatchNorm into per-channel scale/bias; reorder conv
    weights to (K*K*Cin, Cout) bf16 (tap-major, cin-minor, matching im2col);
    pad the head to out_pad lanes."""
    folded = []
    for layer in params["convs"]:
        w = layer["w"]                                      # (Cout, Cin, K, K)
        scale = layer["gamma"] / jnp.sqrt(layer["var"] + BN_EPS)
        bias = layer["beta"] - layer["mean"] * scale
        cout, cin, k, _ = w.shape
        w2d = jnp.transpose(w, (2, 3, 1, 0)).reshape(k * k * cin, cout)
        folded.append((w2d.astype(jnp.bfloat16),
                       scale.reshape(1, cout).astype(jnp.float32),
                       bias.reshape(1, cout).astype(jnp.float32)))
    w_head, b_head = params["head"]
    nf, out = w_head.shape
    wh = jnp.zeros((nf, out_pad), jnp.float32).at[:, :out].set(w_head)
    bh = jnp.zeros((1, out_pad), jnp.float32).at[:, :out].set(
        b_head.reshape(1, -1))
    return folded, (wh.astype(jnp.bfloat16), bh.astype(jnp.float32))


# --------------------------------- forward ----------------------------------

def classifier_forward(params, x_nchw, *, batch_block=8):
    n, cin, h, w = x_nchw.shape
    out_features = params["head"][0].shape[1]
    out_pad = ((out_features + 127) // 128) * 128
    convs, (wh, bh) = _fold_conv_params(params, out_pad)
    ksizes = [layer["w"].shape[2] for layer in params["convs"]]
    couts = [layer["w"].shape[0] for layer in params["convs"]]

    B = min(batch_block, n)
    n_pad = ((n + B - 1) // B) * B

    # InputTransform (x*2/255 - 1; clamp branch dead for 0..255) BEFORE the
    # zero padding -- matches PyTorch (fixes the old border-fold bug).
    x = jnp.transpose(x_nchw, (0, 2, 3, 1)).astype(jnp.float32)
    x = x * (2.0 / 255.0) - 1.0
    x = jnp.pad(x, ((0, n_pad - n), (1, 1), (1, 1), (0, 0)))
    hp0, wp0 = h + 2, w + 2
    xf = x.reshape(n_pad, hp0 * wp0, cin)

    # Full im2col for conv1 only (cin=3 is too narrow to pack on-chip).
    k1 = ksizes[0]
    pieces = []
    for dy in range(k1):
        for dx in range(k1):
            off = dy * wp0 + dx
            pieces.append(jnp.pad(xf[:, off:, :], ((0, 0), (0, off), (0, 0))))
    x_im = jnp.concatenate(pieces, axis=-1)
    x_im = x_im.reshape(n_pad * hp0 * wp0, k1 * k1 * cin).astype(jnp.bfloat16)

    # Static per-layer spatial bookkeeping + the 0/1 pool/pad selection matrices.
    conv_cfg, pool_cfg, sels = [], [], []
    last_cfg = None
    hp, wp = hp0, wp0
    for li, k in enumerate(ksizes):
        ho, wo = hp - k + 1, wp - k + 1
        assert ho >= 2 and wo >= 2, "input too small for this backbone"
        L = (ho - 1) * wp + wo
        frame = hp * wp
        taps = (0,) if li == 0 else tuple(dy * wp + dx
                                          for dy in range(k) for dx in range(k))
        conv_cfg.append((taps, L, frame))
        if li < 3:
            assert ho % 2 == 0 and wo % 2 == 0, "2x2 pooling needs even output"
            lm = (ho - 2) * wp + (wo - 2) + 1
            nhp, nwp = ho // 2 + 2, wo // 2 + 2
            sel = np.zeros((nhp * nwp, lm), np.float32)
            for s in range(ho // 2):
                for t in range(wo // 2):
                    sel[(1 + s) * nwp + (1 + t), 2 * s * wp + 2 * t] = 1.0
            sels.append(jnp.asarray(sel, dtype=jnp.bfloat16))
            pool_cfg.append((wp, lm, nhp * nwp))
            hp, wp = nhp, nwp
        else:
            last_cfg = (wp, wo, L, frame)

    frames = [c[2] for c in conv_cfg]

    def const_spec(a):
        return pl.BlockSpec(a.shape, lambda g: (0, 0))

    inputs = [x_im]
    in_specs = [pl.BlockSpec((B * hp0 * wp0, k1 * k1 * cin), lambda g: (g, 0))]
    for (wt, sc, bi) in convs:
        for a in (wt, sc, bi):
            inputs.append(a)
            in_specs.append(const_spec(a))
    for sel in sels:
        inputs.append(sel)
        in_specs.append(const_spec(sel))
    inputs += [wh, bh]
    in_specs += [const_spec(wh), const_spec(bh)]

    scratch_shapes = [
        pltpu.VMEM((B * frames[0], couts[0]), jnp.bfloat16),   # y1: conv1 out
        pltpu.VMEM((B * frames[1], couts[0]), jnp.bfloat16),   # p2: conv2 in (padded)
        pltpu.VMEM((B * frames[1], couts[1]), jnp.bfloat16),   # y2: conv2 out
        pltpu.VMEM((B * frames[2], couts[1]), jnp.bfloat16),   # p3
        pltpu.VMEM((B * frames[2], couts[2]), jnp.bfloat16),   # y3
        pltpu.VMEM((B * frames[3], couts[2]), jnp.bfloat16),   # p4
        pltpu.VMEM((B * frames[3], couts[3]), jnp.bfloat16),   # y4: conv4 out
        pltpu.VMEM((B, couts[3]), jnp.float32),                # feat (global max)
    ]

    kernel = functools.partial(
        _classifier_kernel, B=B,
        conv_cfg=tuple(conv_cfg), pool_cfg=tuple(pool_cfg), last_cfg=last_cfg)

    out = pl.pallas_call(
        kernel,
        out_shape=jax.ShapeDtypeStruct((n_pad, out_pad), jnp.float32),
        grid_spec=pltpu.PrefetchScalarGridSpec(
            num_scalar_prefetch=0,
            grid=(n_pad // B,),
            in_specs=in_specs,
            out_specs=pl.BlockSpec((B, out_pad), lambda g: (g, 0)),
            scratch_shapes=scratch_shapes,
        ),
        compiler_params=pltpu.CompilerParams(
            dimension_semantics=("parallel",),
            vmem_limit_bytes=32 * 1024 * 1024),
    )(*inputs)
    return out[:n, :out_features]


# ---------------------- pure-JAX reference (for checking) -------------------

def classifier_forward_reference(params, x_nchw):
    """f32 reference of the PyTorch forward (eval mode), no Pallas."""
    x = jnp.transpose(x_nchw, (0, 2, 3, 1)).astype(jnp.float32)
    x = 2.0 * (x / 255.0) - 1.0                     # InputTransform (clamp dead)
    for li, layer in enumerate(params["convs"]):
        wgt = layer["w"]
        cout, cin, k, _ = wgt.shape
        scale = layer["gamma"] / jnp.sqrt(layer["var"] + BN_EPS)
        bias = layer["beta"] - layer["mean"] * scale
        xp = jnp.pad(x, ((0, 0), (1, 1), (1, 1), (0, 0)))
        n, hp, wp, _ = xp.shape
        ho, wo = hp - k + 1, wp - k + 1
        patches = jnp.concatenate(
            [xp[:, i:i + ho, j:j + wo, :] for i in range(k) for j in range(k)],
            axis=-1).reshape(n * ho * wo, k * k * cin)
        w2d = jnp.transpose(wgt, (2, 3, 1, 0)).reshape(k * k * cin, cout)
        y = jnp.maximum((patches @ w2d) * scale + bias, 0.0)
        y = y.reshape(n, ho, wo, cout)
        if li < 3:
            y = jnp.maximum(jnp.maximum(y[:, 0::2, 0::2], y[:, 0::2, 1::2]),
                            jnp.maximum(y[:, 1::2, 0::2], y[:, 1::2, 1::2]))
        x = y
    feat = jnp.max(x, axis=(1, 2))                  # AdaptiveMaxPool2d + flatten
    w_head, b_head = params["head"]
    return feat @ w_head + b_head                   # Dropout is identity (eval)


if __name__ == "__main__":
    key = jax.random.PRNGKey(0)
    kx, kparam = jax.random.split(key)
    N, C, H, W = 2, 3, 18, 18      # 18 -> conv5(p=1) 16 -> 8 -> 4 -> 2 -> global
    OUTPUT_FEATURES = 10
    x = jax.random.uniform(kx, (N, C, H, W), jnp.float32, 0.0, 255.0)
    params = init_params(kparam, OUTPUT_FEATURES)

    out = jax.block_until_ready(jax.jit(classifier_forward)(params, x))
    assert out.shape == (N, OUTPUT_FEATURES) and out.dtype == jnp.float32

    ref = jax.block_until_ready(classifier_forward_reference(params, x))
    np.testing.assert_allclose(np.asarray(out), np.asarray(ref),
                               rtol=5e-2, atol=5e-2)   # bf16 matmul tolerance
    print("KERNEL_OK")
</pallas_src>

<mosaic_0001>
module attributes {stable_mosaic.version = 11 : i64} {
  func.func @_classifier_kernel(%arg0: i32, %arg1: memref<800x75xbf16, #tpu.memory_space<vmem>>, %arg2: memref<75x32xbf16, #tpu.memory_space<vmem>>, %arg3: memref<1x32xf32, #tpu.memory_space<vmem>>, %arg4: memref<1x32xf32, #tpu.memory_space<vmem>>, %arg5: memref<288x64xbf16, #tpu.memory_space<vmem>>, %arg6: memref<1x64xf32, #tpu.memory_space<vmem>>, %arg7: memref<1x64xf32, #tpu.memory_space<vmem>>, %arg8: memref<576x128xbf16, #tpu.memory_space<vmem>>, %arg9: memref<1x128xf32, #tpu.memory_space<vmem>>, %arg10: memref<1x128xf32, #tpu.memory_space<vmem>>, %arg11: memref<1152x256xbf16, #tpu.memory_space<vmem>>, %arg12: memref<1x256xf32, #tpu.memory_space<vmem>>, %arg13: memref<1x256xf32, #tpu.memory_space<vmem>>, %arg14: memref<100x295xbf16, #tpu.memory_space<vmem>>, %arg15: memref<36x67xbf16, #tpu.memory_space<vmem>>, %arg16: memref<16x15xbf16, #tpu.memory_space<vmem>>, %arg17: memref<256x128xbf16, #tpu.memory_space<vmem>>, %arg18: memref<1x128xf32, #tpu.memory_space<vmem>>, %arg19: memref<2x128xf32, #tpu.memory_space<vmem>>, %arg20: memref<800x32xbf16, #tpu.memory_space<vmem>>, %arg21: memref<200x32xbf16, #tpu.memory_space<vmem>>, %arg22: memref<200x64xbf16, #tpu.memory_space<vmem>>, %arg23: memref<72x64xbf16, #tpu.memory_space<vmem>>, %arg24: memref<72x128xbf16, #tpu.memory_space<vmem>>, %arg25: memref<32x128xbf16, #tpu.memory_space<vmem>>, %arg26: memref<32x256xbf16, #tpu.memory_space<vmem>>, %arg27: memref<2x256xf32, #tpu.memory_space<vmem>>) attributes {dimension_semantics = [#tpu.dimension_semantics<parallel>], iteration_bounds = array<i64: 1>, scalar_prefetch = 0 : i64, scratch_operands = 8 : i64, tpu.core_type = #tpu.core_type<tc>, window_params = [{transform_indices = @transform_0, window_bounds = array<i64: 800, 75>}, {pipeline_mode = #tpu.pipeline_mode<synchronous>, transform_indices = @transform_1, window_bounds = array<i64: 75, 32>}, {pipeline_mode = #tpu.pipeline_mode<synchronous>, transform_indices = @transform_2, window_bounds = array<i64: 1, 32>}, {pipeline_mode = #tpu.pipeline_mode<synchronous>, transform_indices = @transform_3, window_bounds = array<i64: 1, 32>}, {pipeline_mode = #tpu.pipeline_mode<synchronous>, transform_indices = @transform_4, window_bounds = array<i64: 288, 64>}, {pipeline_mode = #tpu.pipeline_mode<synchronous>, transform_indices = @transform_5, window_bounds = array<i64: 1, 64>}, {pipeline_mode = #tpu.pipeline_mode<synchronous>, transform_indices = @transform_6, window_bounds = array<i64: 1, 64>}, {pipeline_mode = #tpu.pipeline_mode<synchronous>, transform_indices = @transform_7, window_bounds = array<i64: 576, 128>}, {pipeline_mode = #tpu.pipeline_mode<synchronous>, transform_indices = @transform_8, window_bounds = array<i64: 1, 128>}, {pipeline_mode = #tpu.pipeline_mode<synchronous>, transform_indices = @transform_9, window_bounds = array<i64: 1, 128>}, {pipeline_mode = #tpu.pipeline_mode<synchronous>, transform_indices = @transform_10, window_bounds = array<i64: 1152, 256>}, {pipeline_mode = #tpu.pipeline_mode<synchronous>, transform_indices = @transform_11, window_bounds = array<i64: 1, 256>}, {pipeline_mode = #tpu.pipeline_mode<synchronous>, transform_indices = @transform_12, window_bounds = array<i64: 1, 256>}, {pipeline_mode = #tpu.pipeline_mode<synchronous>, transform_indices = @transform_13, window_bounds = array<i64: 100, 295>}, {pipeline_mode = #tpu.pipeline_mode<synchronous>, transform_indices = @transform_14, window_bounds = array<i64: 36, 67>}, {pipeline_mode = #tpu.pipeline_mode<synchronous>, transform_indices = @transform_15, window_bounds = array<i64: 16, 15>}, {pipeline_mode = #tpu.pipeline_mode<synchronous>, transform_indices = @transform_16, window_bounds = array<i64: 256, 128>}, {pipeline_mode = #tpu.pipeline_mode<synchronous>, transform_indices = @transform_17, window_bounds = array<i64: 1, 128>}, {transform_indices = @transform_18, window_bounds = array<i64: 2, 128>}]} {
    %c0 = arith.constant 0 : index
    %c0_0 = arith.constant 0 : index
    %0 = vector.load %arg1[%c0, %c0_0] : memref<800x75xbf16, #tpu.memory_space<vmem>>, vector<716x75xbf16>
    %c0_1 = arith.constant 0 : index
    %c0_2 = arith.constant 0 : index
    %1 = vector.load %arg2[%c0_1, %c0_2] : memref<75x32xbf16, #tpu.memory_space<vmem>>, vector<75x32xbf16>
    %cst = arith.constant dense<0.000000e+00> : vector<716x32xf32>
    %2 = tpu.matmul %0, %1, %cst {dimension_numbers = #tpu.dot_dimension_numbers<[1], [0], [0], [1], [0, 0, 1, 1], [], []>} : vector<716x75xbf16>, vector<75x32xbf16>, vector<716x32xf32> -> vector<716x32xf32>
    %c0_3 = arith.constant 0 : index
    %c0_4 = arith.constant 0 : index
    %3 = vector.load %arg3[%c0_3, %c0_4] : memref<1x32xf32, #tpu.memory_space<vmem>>, vector<1x32xf32>
    %4 = vector.broadcast %3 : vector<1x32xf32> to vector<716x32xf32>
    %5 = arith.mulf %2, %4 : vector<716x32xf32>
    %c0_5 = arith.constant 0 : index
    %c0_6 = arith.constant 0 : index
    %6 = vector.load %arg4[%c0_5, %c0_6] : memref<1x32xf32, #tpu.memory_space<vmem>>, vector<1x32xf32>
    %7 = vector.broadcast %6 : vector<1x32xf32> to vector<716x32xf32>
    %8 = arith.addf %5, %7 : vector<716x32xf32>
    %cst_7 = arith.constant 0.000000e+00 : f32
    %9 = vector.broadcast %cst_7 : f32 to vector<716x32xf32>
    %10 = arith.maximumf %8, %9 : vector<716x32xf32>
    %11 = arith.truncf %10 : vector<716x32xf32> to vector<716x32xbf16>
    %c0_8 = arith.constant 0 : index
    %c0_9 = arith.constant 0 : index
    %12 = vector.load %arg20[%c0_8, %c0_9] : memref<800x32xbf16, #tpu.memory_space<vmem>>, vector<716x32xbf16>
    tpu.vector_store %arg20[%c0_8, %c0_9], %11 {strides = array<i32>} : memref<800x32xbf16, #tpu.memory_space<vmem>>, vector<716x32xbf16>,
    %c0_10 = arith.constant 0 : index
    %c0_11 = arith.constant 0 : index
    %13 = vector.load %arg20[%c0_10, %c0_11] : memref<800x32xbf16, #tpu.memory_space<vmem>>, vector<295x32xbf16>
    %c1 = arith.constant 1 : index
    %c0_12 = arith.constant 0 : index
    %14 = vector.load %arg20[%c1, %c0_12] : memref<800x32xbf16, #tpu.memory_space<vmem>>, vector<295x32xbf16>
    %15 = arith.maximumf %13, %14 : vector<295x32xbf16>
    %c20 = arith.constant 20 : index
    %c0_13 = arith.constant 0 : index
    %16 = vector.load %arg20[%c20, %c0_13] : memref<800x32xbf16, #tpu.memory_space<vmem>>, vector<295x32xbf16>
    %c21 = arith.constant 21 : index
    %c0_14 = arith.constant 0 : index
    %17 = vector.load %arg20[%c21, %c0_14] : memref<800x32xbf16, #tpu.memory_space<vmem>>, vector<295x32xbf16>
    %18 = arith.maximumf %16, %17 : vector<295x32xbf16>
    %19 = arith.maximumf %15, %18 : vector<295x32xbf16>
    %c0_15 = arith.constant 0 : index
    %c0_16 = arith.constant 0 : index
    %20 = vector.load %arg14[%c0_15, %c0_16] : memref<100x295xbf16, #tpu.memory_space<vmem>>, vector<100x295xbf16>
    %cst_17 = arith.constant dense<0.000000e+00> : vector<100x32xf32>
    %21 = tpu.matmul %20, %19, %cst_17 {dimension_numbers = #tpu.dot_dimension_numbers<[1], [0], [0], [1], [0, 0, 1, 1], [], []>} : vector<100x295xbf16>, vector<295x32xbf16>, vector<100x32xf32> -> vector<100x32xf32>
    %22 = arith.truncf %21 : vector<100x32xf32> to vector<100x32xbf16>
    %c0_18 = arith.constant 0 : index
    %c0_19 = arith.constant 0 : index
    %23 = vector.load %arg21[%c0_18, %c0_19] : memref<200x32xbf16, #tpu.memory_space<vmem>>, vector<100x32xbf16>
    tpu.vector_store %arg21[%c0_18, %c0_19], %22 {strides = array<i32>} : memref<200x32xbf16, #tpu.memory_space<vmem>>, vector<100x32xbf16>,
    %c400 = arith.constant 400 : index
    %c0_20 = arith.constant 0 : index
    %24 = vector.load %arg20[%c400, %c0_20] : memref<800x32xbf16, #tpu.memory_space<vmem>>, vector<295x32xbf16>
    %c401 = arith.constant 401 : index
    %c0_21 = arith.constant 0 : index
    %25 = vector.load %arg20[%c401, %c0_21] : memref<800x32xbf16, #tpu.memory_space<vmem>>, vector<295x32xbf16>
    %26 = arith.maximumf %24, %25 : vector<295x32xbf16>
    %c420 = arith.constant 420 : index
    %c0_22 = arith.constant 0 : index
    %27 = vector.load %arg20[%c420, %c0_22] : memref<800x32xbf16, #tpu.memory_space<vmem>>, vector<295x32xbf16>
    %c421 = arith.constant 421 : index
    %c0_23 = arith.constant 0 : index
    %28 = vector.load %arg20[%c421, %c0_23] : memref<800x32xbf16, #tpu.memory_space<vmem>>, vector<295x32xbf16>
    %29 = arith.maximumf %27, %28 : vector<295x32xbf16>
    %30 = arith.maximumf %26, %29 : vector<295x32xbf16>
    %c0_24 = arith.constant 0 : index
    %c0_25 = arith.constant 0 : index
    %31 = vector.load %arg14[%c0_24, %c0_25] : memref<100x295xbf16, #tpu.memory_space<vmem>>, vector<100x295xbf16>
    %cst_26 = arith.constant dense<0.000000e+00> : vector<100x32xf32>
    %32 = tpu.matmul %31, %30, %cst_26 {dimension_numbers = #tpu.dot_dimension_numbers<[1], [0], [0], [1], [0, 0, 1, 1], [], []>} : vector<100x295xbf16>, vector<295x32xbf16>, vector<100x32xf32> -> vector<100x32xf32>
    %33 = arith.truncf %32 : vector<100x32xf32> to vector<100x32xbf16>
    %c100 = arith.constant 100 : index
    %c0_27 = arith.constant 0 : index
    %34 = vector.load %arg21[%c100, %c0_27] : memref<200x32xbf16, #tpu.memory_space<vmem>>, vector<100x32xbf16>
    tpu.vector_store %arg21[%c100, %c0_27], %33 {strides = array<i32>} : memref<200x32xbf16, #tpu.memory_space<vmem>>, vector<100x32xbf16>,
    %c0_28 = arith.constant 0 : index
    %c0_29 = arith.constant 0 : index
    %35 = vector.load %arg21[%c0_28, %c0_29] : memref<200x32xbf16, #tpu.memory_space<vmem>>, vector<178x32xbf16>
    %c1_30 = arith.constant 1 : index
    %c0_31 = arith.constant 0 : index
    %36 = vector.load %arg21[%c1_30, %c0_31] : memref<200x32xbf16, #tpu.memory_space<vmem>>, vector<178x32xbf16>
    %c2 = arith.constant 2 : index
    %c0_32 = arith.constant 0 : index
    %37 = vector.load %arg21[%c2, %c0_32] : memref<200x32xbf16, #tpu.memory_space<vmem>>, vector<178x32xbf16>
    %c10 = arith.constant 10 : index
    %c0_33 = arith.constant 0 : index
    %38 = vector.load %arg21[%c10, %c0_33] : memref<200x32xbf16, #tpu.memory_space<vmem>>, vector<178x32xbf16>
    %c11 = arith.constant 11 : index
    %c0_34 = arith.constant 0 : index
    %39 = vector.load %arg21[%c11, %c0_34] : memref<200x32xbf16, #tpu.memory_space<vmem>>, vector<178x32xbf16>
    %c12 = arith.constant 12 : index
    %c0_35 = arith.constant 0 : index
    %40 = vector.load %arg21[%c12, %c0_35] : memref<200x32xbf16, #tpu.memory_space<vmem>>, vector<178x32xbf16>
    %c20_36 = arith.constant 20 : index
    %c0_37 = arith.constant 0 : index
    %41 = vector.load %arg21[%c20_36, %c0_37] : memref<200x32xbf16, #tpu.memory_space<vmem>>, vector<178x32xbf16>
    %c21_38 = arith.constant 21 : index
    %c0_39 = arith.constant 0 : index
    %42 = vector.load %arg21[%c21_38, %c0_39] : memref<200x32xbf16, #tpu.memory_space<vmem>>, vector<178x32xbf16>
    %c22 = arith.constant 22 : index
    %c0_40 = arith.constant 0 : index
    %43 = vector.load %arg21[%c22, %c0_40] : memref<200x32xbf16, #tpu.memory_space<vmem>>, vector<178x32xbf16>
    %44 = tpu.concatenate %35, %36, %37, %38, %39, %40, %41, %42, %43 in 1 : vector<178x32xbf16>, vector<178x32xbf16>, vector<178x32xbf16>, vector<178x32xbf16>, vector<178x32xbf16>, vector<178x32xbf16>, vector<178x32xbf16>, vector<178x32xbf16>, vector<178x32xbf16> -> vector<178x288xbf16>
    %c0_41 = arith.constant 0 : index
    %c0_42 = arith.constant 0 : index
    %45 = vector.load %arg5[%c0_41, %c0_42] : memref<288x64xbf16, #tpu.memory_space<vmem>>, vector<288x64xbf16>
    %cst_43 = arith.constant dense<0.000000e+00> : vector<178x64xf32>
    %46 = tpu.matmul %44, %45, %cst_43 {dimension_numbers = #tpu.dot_dimension_numbers<[1], [0], [0], [1], [0, 0, 1, 1], [], []>} : vector<178x288xbf16>, vector<288x64xbf16>, vector<178x64xf32> -> vector<178x64xf32>
    %c0_44 = arith.constant 0 : index
    %c0_45 = arith.constant 0 : index
    %47 = vector.load %arg6[%c0_44, %c0_45] : memref<1x64xf32, #tpu.memory_space<vmem>>, vector<1x64xf32>
    %48 = vector.broadcast %47 : vector<1x64xf32> to vector<178x64xf32>
    %49 = arith.mulf %46, %48 : vector<178x64xf32>
    %c0_46 = arith.constant 0 : index
    %c0_47 = arith.constant 0 : index
    %50 = vector.load %arg7[%c0_46, %c0_47] : memref<1x64xf32, #tpu.memory_space<vmem>>, vector<1x64xf32>
    %51 = vector.broadcast %50 : vector<1x64xf32> to vector<178x64xf32>
    %52 = arith.addf %49, %51 : vector<178x64xf32>
    %cst_48 = arith.constant 0.000000e+00 : f32
    %53 = vector.broadcast %cst_48 : f32 to vector<178x64xf32>
    %54 = arith.maximumf %52, %53 : vector<178x64xf32>
    %55 = arith.truncf %54 : vector<178x64xf32> to vector<178x64xbf16>
    %c0_49 = arith.constant 0 : index
    %c0_50 = arith.constant 0 : index
    %56 = vector.load %arg22[%c0_49, %c0_50] : memref<200x64xbf16, #tpu.memory_space<vmem>>, vector<178x64xbf16>
    tpu.vector_store %arg22[%c0_49, %c0_50], %55 {strides = array<i32>} : memref<200x64xbf16, #tpu.memory_space<vmem>>, vector<178x64xbf16>,
    %c0_51 = arith.constant 0 : index
    %c0_52 = arith.constant 0 : index
    %57 = vector.load %arg22[%c0_51, %c0_52] : memref<200x64xbf16, #tpu.memory_space<vmem>>, vector<67x64xbf16>
    %c1_53 = arith.constant 1 : index
    %c0_54 = arith.constant 0 : index
    %58 = vector.load %arg22[%c1_53, %c0_54] : memref<200x64xbf16, #tpu.memory_space<vmem>>, vector<67x64xbf16>
    %59 = arith.maximumf %57, %58 : vector<67x64xbf16>
    %c10_55 = arith.constant 10 : index
    %c0_56 = arith.constant 0 : index
    %60 = vector.load %arg22[%c10_55, %c0_56] : memref<200x64xbf16, #tpu.memory_space<vmem>>, vector<67x64xbf16>
    %c11_57 = arith.constant 11 : index
    %c0_58 = arith.constant 0 : index
    %61 = vector.load %arg22[%c11_57, %c0_58] : memref<200x64xbf16, #tpu.memory_space<vmem>>, vector<67x64xbf16>
    %62 = arith.maximumf %60, %61 : vector<67x64xbf16>
    %63 = arith.maximumf %59, %62 : vector<67x64xbf16>
    %c0_59 = arith.constant 0 : index
    %c0_60 = arith.constant 0 : index
    %64 = vector.load %arg15[%c0_59, %c0_60] : memref<36x67xbf16, #tpu.memory_space<vmem>>, vector<36x67xbf16>
    %cst_61 = arith.constant dense<0.000000e+00> : vector<36x64xf32>
    %65 = tpu.matmul %64, %63, %cst_61 {dimension_numbers = #tpu.dot_dimension_numbers<[1], [0], [0], [1], [0, 0, 1, 1], [], []>} : vector<36x67xbf16>, vector<67x64xbf16>, vector<36x64xf32> -> vector<36x64xf32>
    %66 = arith.truncf %65 : vector<36x64xf32> to vector<36x64xbf16>
    %c0_62 = arith.constant 0 : index
    %c0_63 = arith.constant 0 : index
    %67 = vector.load %arg23[%c0_62, %c0_63] : memref<72x64xbf16, #tpu.memory_space<vmem>>, vector<36x64xbf16>
    tpu.vector_store %arg23[%c0_62, %c0_63], %66 {strides = array<i32>} : memref<72x64xbf16, #tpu.memory_space<vmem>>, vector<36x64xbf16>,
    %c100_64 = arith.constant 100 : index
    %c0_65 = arith.constant 0 : index
    %68 = vector.load %arg22[%c100_64, %c0_65] : memref<200x64xbf16, #tpu.memory_space<vmem>>, vector<67x64xbf16>
    %c101 = arith.constant 101 : index
    %c0_66 = arith.constant 0 : index
    %69 = vector.load %arg22[%c101, %c0_66] : memref<200x64xbf16, #tpu.memory_space<vmem>>, vector<67x64xbf16>
    %70 = arith.maximumf %68, %69 : vector<67x64xbf16>
    %c110 = arith.constant 110 : index
    %c0_67 = arith.constant 0 : index
    %71 = vector.load %arg22[%c110, %c0_67] : memref<200x64xbf16, #tpu.memory_space<vmem>>, vector<67x64xbf16>
    %c111 = arith.constant 111 : index
    %c0_68 = arith.constant 0 : index
    %72 = vector.load %arg22[%c111, %c0_68] : memref<200x64xbf16, #tpu.memory_space<vmem>>, vector<67x64xbf16>
    %73 = arith.maximumf %71, %72 : vector<67x64xbf16>
    %74 = arith.maximumf %70, %73 : vector<67x64xbf16>
    %c0_69 = arith.constant 0 : index
    %c0_70 = arith.constant 0 : index
    %75 = vector.load %arg15[%c0_69, %c0_70] : memref<36x67xbf16, #tpu.memory_space<vmem>>, vector<36x67xbf16>
    %cst_71 = arith.constant dense<0.000000e+00> : vector<36x64xf32>
    %76 = tpu.matmul %75, %74, %cst_71 {dimension_numbers = #tpu.dot_dimension_numbers<[1], [0], [0], [1], [0, 0, 1, 1], [], []>} : vector<36x67xbf16>, vector<67x64xbf16>, vector<36x64xf32> -> vector<36x64xf32>
    %77 = arith.truncf %76 : vector<36x64xf32> to vector<36x64xbf16>
    %c36 = arith.constant 36 : index
    %c0_72 = arith.constant 0 : index
    %78 = vector.load %arg23[%c36, %c0_72] : memref<72x64xbf16, #tpu.memory_space<vmem>>, vector<36x64xbf16>
    tpu.vector_store %arg23[%c36, %c0_72], %77 {strides = array<i32>} : memref<72x64xbf16, #tpu.memory_space<vmem>>, vector<36x64xbf16>,
    %c0_73 = arith.constant 0 : index
    %c0_74 = arith.constant 0 : index
    %79 = vector.load %arg23[%c0_73, %c0_74] : memref<72x64xbf16, #tpu.memory_space<vmem>>, vector<58x64xbf16>
    %c1_75 = arith.constant 1 : index
    %c0_76 = arith.constant 0 : index
    %80 = vector.load %arg23[%c1_75, %c0_76] : memref<72x64xbf16, #tpu.memory_space<vmem>>, vector<58x64xbf16>
    %c2_77 = arith.constant 2 : index
    %c0_78 = arith.constant 0 : index
    %81 = vector.load %arg23[%c2_77, %c0_78] : memref<72x64xbf16, #tpu.memory_space<vmem>>, vector<58x64xbf16>
    %c6 = arith.constant 6 : index
    %c0_79 = arith.constant 0 : index
    %82 = vector.load %arg23[%c6, %c0_79] : memref<72x64xbf16, #tpu.memory_space<vmem>>, vector<58x64xbf16>
    %c7 = arith.constant 7 : index
    %c0_80 = arith.constant 0 : index
    %83 = vector.load %arg23[%c7, %c0_80] : memref<72x64xbf16, #tpu.memory_space<vmem>>, vector<58x64xbf16>
    %c8 = arith.constant 8 : index
    %c0_81 = arith.constant 0 : index
    %84 = vector.load %arg23[%c8, %c0_81] : memref<72x64xbf16, #tpu.memory_space<vmem>>, vector<58x64xbf16>
    %c12_82 = arith.constant 12 : index
    %c0_83 = arith.constant 0 : index
    %85 = vector.load %arg23[%c12_82, %c0_83] : memref<72x64xbf16, #tpu.memory_space<vmem>>, vector<58x64xbf16>
    %c13 = arith.constant 13 : index
    %c0_84 = arith.constant 0 : index
    %86 = vector.load %arg23[%c13, %c0_84] : memref<72x64xbf16, #tpu.memory_space<vmem>>, vector<58x64xbf16>
    %c14 = arith.constant 14 : index
    %c0_85 = arith.constant 0 : index
    %87 = vector.load %arg23[%c14, %c0_85] : memref<72x64xbf16, #tpu.memory_space<vmem>>, vector<58x64xbf16>
    %88 = tpu.concatenate %79, %80, %81, %82, %83, %84, %85, %86, %87 in 1 : vector<58x64xbf16>, vector<58x64xbf16>, vector<58x64xbf16>, vector<58x64xbf16>, vector<58x64xbf16>, vector<58x64xbf16>, vector<58x64xbf16>, vector<58x64xbf16>, vector<58x64xbf16> -> vector<58x576xbf16>
    %c0_86 = arith.constant 0 : index
    %c0_87 = arith.constant 0 : index
    %89 = vector.load %arg8[%c0_86, %c0_87] : memref<576x128xbf16, #tpu.memory_space<vmem>>, vector<576x128xbf16>
    %cst_88 = arith.constant dense<0.000000e+00> : vector<58x128xf32>
    %90 = tpu.matmul %88, %89, %cst_88 {dimension_numbers = #tpu.dot_dimension_numbers<[1], [0], [0], [1], [0, 0, 1, 1], [], []>} : vector<58x576xbf16>, vector<576x128xbf16>, vector<58x128xf32> -> vector<58x128xf32>
    %c0_89 = arith.constant 0 : index
    %c0_90 = arith.constant 0 : index
    %91 = vector.load %arg9[%c0_89, %c0_90] : memref<1x128xf32, #tpu.memory_space<vmem>>, vector<1x128xf32>
    %92 = vector.broadcast %91 : vector<1x128xf32> to vector<58x128xf32>
    %93 = arith.mulf %90, %92 : vector<58x128xf32>
    %c0_91 = arith.constant 0 : index
    %c0_92 = arith.constant 0 : index
    %94 = vector.load %arg10[%c0_91, %c0_92] : memref<1x128xf32, #tpu.memory_space<vmem>>, vector<1x128xf32>
    %95 = vector.broadcast %94 : vector<1x128xf32> to vector<58x128xf32>
    %96 = arith.addf %93, %95 : vector<58x128xf32>
    %cst_93 = arith.constant 0.000000e+00 : f32
    %97 = vector.broadcast %cst_93 : f32 to vector<58x128xf32>
    %98 = arith.maximumf %96, %97 : vector<58x128xf32>
    %99 = arith.truncf %98 : vector<58x128xf32> to vector<58x128xbf16>
    %c0_94 = arith.constant 0 : index
    %c0_95 = arith.constant 0 : index
    %100 = vector.load %arg24[%c0_94, %c0_95] : memref<72x128xbf16, #tpu.memory_space<vmem>>, vector<58x128xbf16>
    tpu.vector_store %arg24[%c0_94, %c0_95], %99 {strides = array<i32>} : memref<72x128xbf16, #tpu.memory_space<vmem>>, vector<58x128xbf16>,
    %c0_96 = arith.constant 0 : index
    %c0_97 = arith.constant 0 : index
    %101 = vector.load %arg24[%c0_96, %c0_97] : memref<72x128xbf16, #tpu.memory_space<vmem>>, vector<15x128xbf16>
    %c1_98 = arith.constant 1 : index
    %c0_99 = arith.constant 0 : index
    %102 = vector.load %arg24[%c1_98, %c0_99] : memref<72x128xbf16, #tpu.memory_space<vmem>>, vector<15x128xbf16>
    %103 = arith.maximumf %101, %102 : vector<15x128xbf16>
    %c6_100 = arith.constant 6 : index
    %c0_101 = arith.constant 0 : index
    %104 = vector.load %arg24[%c6_100, %c0_101] : memref<72x128xbf16, #tpu.memory_space<vmem>>, vector<15x128xbf16>
    %c7_102 = arith.constant 7 : index
    %c0_103 = arith.constant 0 : index
    %105 = vector.load %arg24[%c7_102, %c0_103] : memref<72x128xbf16, #tpu.memory_space<vmem>>, vector<15x128xbf16>
    %106 = arith.maximumf %104, %105 : vector<15x128xbf16>
    %107 = arith.maximumf %103, %106 : vector<15x128xbf16>
    %c0_104 = arith.constant 0 : index
    %c0_105 = arith.constant 0 : index
    %108 = vector.load %arg16[%c0_104, %c0_105] : memref<16x15xbf16, #tpu.memory_space<vmem>>, vector<16x15xbf16>
    %cst_106 = arith.constant dense<0.000000e+00> : vector<16x128xf32>
    %109 = tpu.matmul %108, %107, %cst_106 {dimension_numbers = #tpu.dot_dimension_numbers<[1], [0], [0], [1], [0, 0, 1, 1], [], []>} : vector<16x15xbf16>, vector<15x128xbf16>, vector<16x128xf32> -> vector<16x128xf32>
    %110 = arith.truncf %109 : vector<16x128xf32> to vector<16x128xbf16>
    %c0_107 = arith.constant 0 : index
    %c0_108 = arith.constant 0 : index
    %111 = vector.load %arg25[%c0_107, %c0_108] : memref<32x128xbf16, #tpu.memory_space<vmem>>, vector<16x128xbf16>
    tpu.vector_store %arg25[%c0_107, %c0_108], %110 {strides = array<i32>} : memref<32x128xbf16, #tpu.memory_space<vmem>>, vector<16x128xbf16>,
    %c36_109 = arith.constant 36 : index
    %c0_110 = arith.constant 0 : index
    %112 = vector.load %arg24[%c36_109, %c0_110] : memref<72x128xbf16, #tpu.memory_space<vmem>>, vector<15x128xbf16>
    %c37 = arith.constant 37 : index
    %c0_111 = arith.constant 0 : index
    %113 = vector.load %arg24[%c37, %c0_111] : memref<72x128xbf16, #tpu.memory_space<vmem>>, vector<15x128xbf16>
    %114 = arith.maximumf %112, %113 : vector<15x128xbf16>
    %c42 = arith.constant 42 : index
    %c0_112 = arith.constant 0 : index
    %115 = vector.load %arg24[%c42, %c0_112] : memref<72x128xbf16, #tpu.memory_space<vmem>>, vector<15x128xbf16>
    %c43 = arith.constant 43 : index
    %c0_113 = arith.constant 0 : index
    %116 = vector.load %arg24[%c43, %c0_113] : memref<72x128xbf16, #tpu.memory_space<vmem>>, vector<15x128xbf16>
    %117 = arith.maximumf %115, %116 : vector<15x128xbf16>
    %118 = arith.maximumf %114, %117 : vector<15x128xbf16>
    %c0_114 = arith.constant 0 : index
    %c0_115 = arith.constant 0 : index
    %119 = vector.load %arg16[%c0_114, %c0_115] : memref<16x15xbf16, #tpu.memory_space<vmem>>, vector<16x15xbf16>
    %cst_116 = arith.constant dense<0.000000e+00> : vector<16x128xf32>
    %120 = tpu.matmul %119, %118, %cst_116 {dimension_numbers = #tpu.dot_dimension_numbers<[1], [0], [0], [1], [0, 0, 1, 1], [], []>} : vector<16x15xbf16>, vector<15x128xbf16>, vector<16x128xf32> -> vector<16x128xf32>
    %121 = arith.truncf %120 : vector<16x128xf32> to vector<16x128xbf16>
    %c16 = arith.constant 16 : index
    %c0_117 = arith.constant 0 : index
    %122 = vector.load %arg25[%c16, %c0_117] : memref<32x128xbf16, #tpu.memory_space<vmem>>, vector<16x128xbf16>
    tpu.vector_store %arg25[%c16, %c0_117], %121 {strides = array<i32>} : memref<32x128xbf16, #tpu.memory_space<vmem>>, vector<16x128xbf16>,
    %c0_118 = arith.constant 0 : index
    %c0_119 = arith.constant 0 : index
    %123 = vector.load %arg25[%c0_118, %c0_119] : memref<32x128xbf16, #tpu.memory_space<vmem>>, vector<22x128xbf16>
    %c1_120 = arith.constant 1 : index
    %c0_121 = arith.constant 0 : index
    %124 = vector.load %arg25[%c1_120, %c0_121] : memref<32x128xbf16, #tpu.memory_space<vmem>>, vector<22x128xbf16>
    %c2_122 = arith.constant 2 : index
    %c0_123 = arith.constant 0 : index
    %125 = vector.load %arg25[%c2_122, %c0_123] : memref<32x128xbf16, #tpu.memory_space<vmem>>, vector<22x128xbf16>
    %c4 = arith.constant 4 : index
    %c0_124 = arith.constant 0 : index
    %126 = vector.load %arg25[%c4, %c0_124] : memref<32x128xbf16, #tpu.memory_space<vmem>>, vector<22x128xbf16>
    %c5 = arith.constant 5 : index
    %c0_125 = arith.constant 0 : index
    %127 = vector.load %arg25[%c5, %c0_125] : memref<32x128xbf16, #tpu.memory_space<vmem>>, vector<22x128xbf16>
    %c6_126 = arith.constant 6 : index
    %c0_127 = arith.constant 0 : index
    %128 = vector.load %arg25[%c6_126, %c0_127] : memref<32x128xbf16, #tpu.memory_space<vmem>>, vector<22x128xbf16>
    %c8_128 = arith.constant 8 : index
    %c0_129 = arith.constant 0 : index
    %129 = vector.load %arg25[%c8_128, %c0_129] : memref<32x128xbf16, #tpu.memory_space<vmem>>, vector<22x128xbf16>
    %c9 = arith.constant 9 : index
    %c0_130 = arith.constant 0 : index
    %130 = vector.load %arg25[%c9, %c0_130] : memref<32x128xbf16, #tpu.memory_space<vmem>>, vector<22x128xbf16>
    %c10_131 = arith.constant 10 : index
    %c0_132 = arith.constant 0 : index
    %131 = vector.load %arg25[%c10_131, %c0_132] : memref<32x128xbf16, #tpu.memory_space<vmem>>, vector<22x128xbf16>
    %132 = tpu.concatenate %123, %124, %125, %126, %127, %128, %129, %130, %131 in 1 : vector<22x128xbf16>, vector<22x128xbf16>, vector<22x128xbf16>, vector<22x128xbf16>, vector<22x128xbf16>, vector<22x128xbf16>, vector<22x128xbf16>, vector<22x128xbf16>, vector<22x128xbf16> -> vector<22x1152xbf16>
    %c0_133 = arith.constant 0 : index
    %c0_134 = arith.constant 0 : index
    %133 = vector.load %arg11[%c0_133, %c0_134] : memref<1152x256xbf16, #tpu.memory_space<vmem>>, vector<1152x256xbf16>
    %cst_135 = arith.constant dense<0.000000e+00> : vector<22x256xf32>
    %134 = tpu.matmul %132, %133, %cst_135 {dimension_numbers = #tpu.dot_dimension_numbers<[1], [0], [0], [1], [0, 0, 1, 1], [], []>} : vector<22x1152xbf16>, vector<1152x256xbf16>, vector<22x256xf32> -> vector<22x256xf32>
    %c0_136 = arith.constant 0 : index
    %c0_137 = arith.constant 0 : index
    %135 = vector.load %arg12[%c0_136, %c0_137] : memref<1x256xf32, #tpu.memory_space<vmem>>, vector<1x256xf32>
    %136 = vector.broadcast %135 : vector<1x256xf32> to vector<22x256xf32>
    %137 = arith.mulf %134, %136 : vector<22x256xf32>
    %c0_138 = arith.constant 0 : index
    %c0_139 = arith.constant 0 : index
    %138 = vector.load %arg13[%c0_138, %c0_139] : memref<1x256xf32, #tpu.memory_space<vmem>>, vector<1x256xf32>
    %139 = vector.broadcast %138 : vector<1x256xf32> to vector<22x256xf32>
    %140 = arith.addf %137, %139 : vector<22x256xf32>
    %cst_140 = arith.constant 0.000000e+00 : f32
    %141 = vector.broadcast %cst_140 : f32 to vector<22x256xf32>
    %142 = arith.maximumf %140, %141 : vector<22x256xf32>
    %143 = arith.truncf %142 : vector<22x256xf32> to vector<22x256xbf16>
    %c0_141 = arith.constant 0 : index
    %c0_142 = arith.constant 0 : index
    %144 = vector.load %arg26[%c0_141, %c0_142] : memref<32x256xbf16, #tpu.memory_space<vmem>>, vector<22x256xbf16>
    tpu.vector_store %arg26[%c0_141, %c0_142], %143 {strides = array<i32>} : memref<32x256xbf16, #tpu.memory_space<vmem>>, vector<22x256xbf16>,
    %145 = tpu.iota {dimensions = array<i32: 0>} : vector<6x1xi32>
    %c4_i32 = arith.constant 4 : i32
    %c0_i32 = arith.constant 0 : i32
    %146 = arith.cmpi eq, %c4_i32, %c0_i32 : i32
    %c1_i32 = arith.constant 1 : i32
    %147 = arith.select %146, %c1_i32, %c4_i32 : i32
    %148 = vector.broadcast %147 : i32 to vector<6x1xi32>
    %149 = arith.remsi %145, %148 : vector<6x1xi32>
    %c0_i32_143 = arith.constant 0 : i32
    %150 = vector.broadcast %c0_i32_143 : i32 to vector<6x1xi32>
    %151 = arith.cmpi ne, %149, %150 : vector<6x1xi32>
    %c0_i32_144 = arith.constant 0 : i32
    %152 = vector.broadcast %c0_i32_144 : i32 to vector<6x1xi32>
    %153 = arith.cmpi slt, %149, %152 : vector<6x1xi32>
    %c0_i32_145 = arith.constant 0 : i32
    %154 = arith.cmpi slt, %147, %c0_i32_145 : i32
    %155 = vector.broadcast %154 : i1 to vector<6x1xi1>
    %156 = vector.broadcast %155 : vector<6x1xi1> to vector<6x1xi1>
    %157 = arith.xori %153, %156 : vector<6x1xi1>
    %158 = arith.andi %157, %151 : vector<6x1xi1>
    %159 = vector.broadcast %147 : i32 to vector<6x1xi32>
    %160 = arith.addi %149, %159 : vector<6x1xi32>
    %161 = arith.select %158, %160, %149 : vector<6x1xi1>, vector<6x1xi32>
    %c2_i32 = arith.constant 2 : i32
    %162 = vector.broadcast %c2_i32 : i32 to vector<6x1xi32>
    %163 = arith.cmpi slt, %161, %162 : vector<6x1xi32>
    %c0_146 = arith.constant 0 : index
    %c0_147 = arith.constant 0 : index
    %164 = vector.load %arg26[%c0_146, %c0_147] : memref<32x256xbf16, #tpu.memory_space<vmem>>, vector<6x256xbf16>
    %cst_148 = arith.constant 0.000000e+00 : bf16
    %165 = vector.broadcast %cst_148 : bf16 to vector<6x256xbf16>
    %166 = vector.shape_cast %163 : vector<6x1xi1> to vector<6x1xi1>
    %167 = vector.broadcast %166 : vector<6x1xi1> to vector<6x256xi1>
    %168 = arith.select %167, %164, %165 : vector<6x256xi1>, vector<6x256xbf16>
    %cst_149 = arith.constant dense<0xFF80> : vector<256xbf16>
    %169 = vector.multi_reduction <maximumf>, %168, %cst_149 [0] : vector<6x256xbf16> to vector<256xbf16>
    %170 = vector.shape_cast %169 : vector<256xbf16> to vector<1x256xbf16>
    %171 = arith.extf %170 : vector<1x256xbf16> to vector<1x256xf32>
    %c0_150 = arith.constant 0 : index
    %c0_151 = arith.constant 0 : index
    %172 = vector.load %arg27[%c0_150, %c0_151] : memref<2x256xf32, #tpu.memory_space<vmem>>, vector<1x256xf32>
    tpu.vector_store %arg27[%c0_150, %c0_151], %171 {strides = array<i32>} : memref<2x256xf32, #tpu.memory_space<vmem>>, vector<1x256xf32>,
    %c16_152 = arith.constant 16 : index
    %c0_153 = arith.constant 0 : index
    %173 = vector.load %arg26[%c16_152, %c0_153] : memref<32x256xbf16, #tpu.memory_space<vmem>>, vector<6x256xbf16>
    %cst_154 = arith.constant 0.000000e+00 : bf16
    %174 = vector.broadcast %cst_154 : bf16 to vector<6x256xbf16>
    %175 = vector.shape_cast %163 : vector<6x1xi1> to vector<6x1xi1>
    %176 = vector.broadcast %175 : vector<6x1xi1> to vector<6x256xi1>
    %177 = arith.select %176, %173, %174 : vector<6x256xi1>, vector<6x256xbf16>
    %cst_155 = arith.constant dense<0xFF80> : vector<256xbf16>
    %178 = vector.multi_reduction <maximumf>, %177, %cst_155 [0] : vector<6x256xbf16> to vector<256xbf16>
    %179 = vector.shape_cast %178 : vector<256xbf16> to vector<1x256xbf16>
    %180 = arith.extf %179 : vector<1x256xbf16> to vector<1x256xf32>
    %c1_156 = arith.constant 1 : index
    %c0_157 = arith.constant 0 : index
    %181 = vector.load %arg27[%c1_156, %c0_157] : memref<2x256xf32, #tpu.memory_space<vmem>>, vector<1x256xf32>
    tpu.vector_store %arg27[%c1_156, %c0_157], %180 {strides = array<i32>} : memref<2x256xf32, #tpu.memory_space<vmem>>, vector<1x256xf32>,
    %c0_158 = arith.constant 0 : index
    %c0_159 = arith.constant 0 : index
    %182 = vector.load %arg27[%c0_158, %c0_159] : memref<2x256xf32, #tpu.memory_space<vmem>>, vector<2x256xf32>
    %183 = arith.truncf %182 : vector<2x256xf32> to vector<2x256xbf16>
    %c0_160 = arith.constant 0 : index
    %c0_161 = arith.constant 0 : index
    %184 = vector.load %arg17[%c0_160, %c0_161] : memref<256x128xbf16, #tpu.memory_space<vmem>>, vector<256x128xbf16>
    %cst_162 = arith.constant dense<0.000000e+00> : vector<2x128xf32>
    %185 = tpu.matmul %183, %184, %cst_162 {dimension_numbers = #tpu.dot_dimension_numbers<[1], [0], [0], [1], [0, 0, 1, 1], [], []>} : vector<2x256xbf16>, vector<256x128xbf16>, vector<2x128xf32> -> vector<2x128xf32>
    %c0_163 = arith.constant 0 : index
    %c0_164 = arith.constant 0 : index
    %186 = vector.load %arg18[%c0_163, %c0_164] : memref<1x128xf32, #tpu.memory_space<vmem>>, vector<1x128xf32>
    %187 = vector.broadcast %186 : vector<1x128xf32> to vector<2x128xf32>
    %188 = arith.addf %185, %187 : vector<2x128xf32>
    %c0_165 = arith.constant 0 : index
    %c0_166 = arith.constant 0 : index
    %189 = vector.load %arg19[%c0_165, %c0_166] : memref<2x128xf32, #tpu.memory_space<vmem>>, vector<2x128xf32>
    tpu.vector_store %arg19[%c0_165, %c0_166], %188 {strides = array<i32>} : memref<2x128xf32, #tpu.memory_space<vmem>>, vector<2x128xf32>,
    return
  }
  func.func @transform_0(%arg0: i32) -> (i32, i32) {
    %c0_i32 = arith.constant 0 : i32
    %c0_i32_0 = arith.constant 0 : i32
    return %arg0, %c0_i32 : i32, i32
  }
  func.func @transform_1(%arg0: i32) -> (i32, i32) {
    %c0_i32 = arith.constant 0 : i32
    %c0_i32_0 = arith.constant 0 : i32
    %c0_i32_1 = arith.constant 0 : i32
    return %c0_i32, %c0_i32_0 : i32, i32
  }
  func.func @transform_2(%arg0: i32) -> (i32, i32) {
    %c0_i32 = arith.constant 0 : i32
    %c0_i32_0 = arith.constant 0 : i32
    %c0_i32_1 = arith.constant 0 : i32
    return %c0_i32, %c0_i32_0 : i32, i32
  }
  func.func @transform_3(%arg0: i32) -> (i32, i32) {
    %c0_i32 = arith.constant 0 : i32
    %c0_i32_0 = arith.constant 0 : i32
    %c0_i32_1 = arith.constant 0 : i32
    return %c0_i32, %c0_i32_0 : i32, i32
  }
  func.func @transform_4(%arg0: i32) -> (i32, i32) {
    %c0_i32 = arith.constant 0 : i32
    %c0_i32_0 = arith.constant 0 : i32
    %c0_i32_1 = arith.constant 0 : i32
    return %c0_i32, %c0_i32_0 : i32, i32
  }
  func.func @transform_5(%arg0: i32) -> (i32, i32) {
    %c0_i32 = arith.constant 0 : i32
    %c0_i32_0 = arith.constant 0 : i32
    %c0_i32_1 = arith.constant 0 : i32
    return %c0_i32, %c0_i32_0 : i32, i32
  }
  func.func @transform_6(%arg0: i32) -> (i32, i32) {
    %c0_i32 = arith.constant 0 : i32
    %c0_i32_0 = arith.constant 0 : i32
    %c0_i32_1 = arith.constant 0 : i32
    return %c0_i32, %c0_i32_0 : i32, i32
  }
  func.func @transform_7(%arg0: i32) -> (i32, i32) {
    %c0_i32 = arith.constant 0 : i32
    %c0_i32_0 = arith.constant 0 : i32
    %c0_i32_1 = arith.constant 0 : i32
    return %c0_i32, %c0_i32_0 : i32, i32
  }
  func.func @transform_8(%arg0: i32) -> (i32, i32) {
    %c0_i32 = arith.constant 0 : i32
    %c0_i32_0 = arith.constant 0 : i32
    %c0_i32_1 = arith.constant 0 : i32
    return %c0_i32, %c0_i32_0 : i32, i32
  }
  func.func @transform_9(%arg0: i32) -> (i32, i32) {
    %c0_i32 = arith.constant 0 : i32
    %c0_i32_0 = arith.constant 0 : i32
    %c0_i32_1 = arith.constant 0 : i32
    return %c0_i32, %c0_i32_0 : i32, i32
  }
  func.func @transform_10(%arg0: i32) -> (i32, i32) {
    %c0_i32 = arith.constant 0 : i32
    %c0_i32_0 = arith.constant 0 : i32
    %c0_i32_1 = arith.constant 0 : i32
    return %c0_i32, %c0_i32_0 : i32, i32
  }
  func.func @transform_11(%arg0: i32) -> (i32, i32) {
    %c0_i32 = arith.constant 0 : i32
    %c0_i32_0 = arith.constant 0 : i32
    %c0_i32_1 = arith.constant 0 : i32
    return %c0_i32, %c0_i32_0 : i32, i32
  }
  func.func @transform_12(%arg0: i32) -> (i32, i32) {
    %c0_i32 = arith.constant 0 : i32
    %c0_i32_0 = arith.constant 0 : i32
    %c0_i32_1 = arith.constant 0 : i32
    return %c0_i32, %c0_i32_0 : i32, i32
  }
  func.func @transform_13(%arg0: i32) -> (i32, i32) {
    %c0_i32 = arith.constant 0 : i32
    %c0_i32_0 = arith.constant 0 : i32
    %c0_i32_1 = arith.constant 0 : i32
    return %c0_i32, %c0_i32_0 : i32, i32
  }
  func.func @transform_14(%arg0: i32) -> (i32, i32) {
    %c0_i32 = arith.constant 0 : i32
    %c0_i32_0 = arith.constant 0 : i32
    %c0_i32_1 = arith.constant 0 : i32
    return %c0_i32, %c0_i32_0 : i32, i32
  }
  func.func @transform_15(%arg0: i32) -> (i32, i32) {
    %c0_i32 = arith.constant 0 : i32
    %c0_i32_0 = arith.constant 0 : i32
    %c0_i32_1 = arith.constant 0 : i32
    return %c0_i32, %c0_i32_0 : i32, i32
  }
  func.func @transform_16(%arg0: i32) -> (i32, i32) {
    %c0_i32 = arith.constant 0 : i32
    %c0_i32_0 = arith.constant 0 : i32
    %c0_i32_1 = arith.constant 0 : i32
    return %c0_i32, %c0_i32_0 : i32, i32
  }
  func.func @transform_17(%arg0: i32) -> (i32, i32) {
    %c0_i32 = arith.constant 0 : i32
    %c0_i32_0 = arith.constant 0 : i32
    %c0_i32_1 = arith.constant 0 : i32
    return %c0_i32, %c0_i32_0 : i32, i32
  }
  func.func @transform_18(%arg0: i32) -> (i32, i32) {
    %c0_i32 = arith.constant 0 : i32
    %c0_i32_0 = arith.constant 0 : i32
    return %arg0, %c0_i32 : i32, i32
  }
}

</mosaic_0001>

<llo_original>
// kernel: classifier_forward.1
$region0: #{classifier_forward.1}
  #allocation0 [shape = 'u32[]', space=smem, size = 0x4, offset = 0x4, fixed_abs, tag = 'smem constant byte address 0x4 - core index']
  #allocation1 [shape = 'u32[72,128]{1,0:T(1,128)}', space=vmem, size = 0x9000, scoped, tag = 'internal scratch']
  #allocation2 [shape = 'bf16[800,32]{1,0:T(8,128)(2,1)}', space=vmem, size = 0x32000, scoped, tag = 'scratch operand']
  #allocation3 [shape = 'bf16[200,32]{1,0:T(8,128)(2,1)}', space=vmem, size = 0xc800, scoped, tag = 'scratch operand']
  #allocation4 [shape = 'bf16[200,64]{1,0:T(8,128)(2,1)}', space=vmem, size = 0xc800, scoped, tag = 'scratch operand']
  #allocation5 [shape = 'bf16[72,64]{1,0:T(8,128)(2,1)}', space=vmem, size = 0x4800, scoped, tag = 'scratch operand']
  #allocation6 [shape = 'bf16[72,128]{1,0:T(8,128)(2,1)}', space=vmem, size = 0x4800, scoped, tag = 'scratch operand']
  #allocation7 [shape = 'bf16[32,128]{1,0:T(8,128)(2,1)}', space=vmem, size = 0x2000, scoped, tag = 'scratch operand']
  #allocation8 [shape = 'bf16[32,256]{1,0:T(8,128)(2,1)}', space=vmem, size = 0x4000, scoped, tag = 'scratch operand']
  #allocation9 [shape = 'f32[2,256]{1,0:T(2,128)}', space=vmem, size = 0x800, scoped, tag = 'scratch operand']
  %s0 = inlined_call_operand.vmem [shape: bf16[800,75], index: 0, kind: input, shape index: {}]
  %s1 = inlined_call_operand.vmem [shape: bf16[75,32], index: 1, kind: input, shape index: {}]
  %s2 = inlined_call_operand.vmem [shape: f32[1,32], index: 2, kind: input, shape index: {}]
  %s3 = inlined_call_operand.vmem [shape: f32[1,32], index: 3, kind: input, shape index: {}]
  %s4 = inlined_call_operand.vmem [shape: bf16[288,64], index: 4, kind: input, shape index: {}]
  %s5 = inlined_call_operand.vmem [shape: f32[1,64], index: 5, kind: input, shape index: {}]
  %s6 = inlined_call_operand.vmem [shape: f32[1,64], index: 6, kind: input, shape index: {}]
  %s7 = inlined_call_operand.vmem [shape: bf16[576,128], index: 7, kind: input, shape index: {}]
  %s8 = inlined_call_operand.vmem [shape: f32[1,128], index: 8, kind: input, shape index: {}]
  %s9 = inlined_call_operand.vmem [shape: f32[1,128], index: 9, kind: input, shape index: {}]
  %s10 = inlined_call_operand.vmem [shape: bf16[1152,256], index: 10, kind: input, shape index: {}]
  %s11 = inlined_call_operand.vmem [shape: f32[1,256], index: 11, kind: input, shape index: {}]
  %s12 = inlined_call_operand.vmem [shape: f32[1,256], index: 12, kind: input, shape index: {}]
  %s13 = inlined_call_operand.vmem [shape: bf16[100,295], index: 13, kind: input, shape index: {}]
  %s14 = inlined_call_operand.vmem [shape: bf16[36,67], index: 14, kind: input, shape index: {}]
  %s15 = inlined_call_operand.vmem [shape: bf16[16,15], index: 15, kind: input, shape index: {}]
  %s16 = inlined_call_operand.vmem [shape: bf16[256,128], index: 16, kind: input, shape index: {}]
  %s17 = inlined_call_operand.vmem [shape: f32[1,128], index: 17, kind: input, shape index: {}]
  %s18 = inlined_call_operand.hbm [shape: f32[2,128], index: 18, kind: output, shape index: {}]
  %s19 = sld [smem:[#allocation0]]
  $region82: #{classifier_forward.1} parent=0
    _
  %s21 = ssub.s32 1, %s19
  %s22 = scalar_select 0, %s21, %s19
  $region1: #{classifier_forward.1} parent=0
    #allocation10 [shape = 'u8[1024]{0}', space=vmem, size = 0x400, scoped, tag = 'output window, operand 0, single buffered']
    #allocation11 [shape = 's32[1]{0}', space=sflag, size = 0x4, scoped, tag = 'scoped memory for classifier_forward.1']
    %23 = vsyncpa [#allocation11], 0
    // Predicated region
    $region2: #{classifier_forward.1} parent=1 // pred_check
      _
    $region3: #{classifier_forward.1} parent=1 // pred_check_branch
      %25 = sbr.rel (0) target = $region5
    $region4: #{classifier_forward.1} parent=1 // pred_region
      _
    $region5: #{classifier_forward.1} parent=1 // pred_fallthru
      _
    // Predicated region
    $region6: #{classifier_forward.1} parent=1 // pred_check
      _
    $region7: #{classifier_forward.1} parent=1 // pred_check_branch
      %27 = sbr.rel (0) target = $region9
    $region8: #{classifier_forward.1} parent=1 // pred_region
      _
    $region9: #{classifier_forward.1} parent=1 // pred_fallthru
      _
    // Predicated region
    $region10: #{classifier_forward.1} parent=1 // pred_check
      _
    $region11: #{classifier_forward.1} parent=1 // pred_check_branch
      %29 = sbr.rel (0) target = $region13
    $region12: #{classifier_forward.1} parent=1 // pred_region
      _
    $region13: #{classifier_forward.1} parent=1 // pred_fallthru
      _
    // Predicated region
    $region14: #{classifier_forward.1} parent=1 // pred_check
      _
    $region15: #{classifier_forward.1} parent=1 // pred_check_branch
      %31 = sbr.rel (0) target = $region17
    $region16: #{classifier_forward.1} parent=1 // pred_region
      _
    $region17: #{classifier_forward.1} parent=1 // pred_fallthru
      _
    // Predicated region
    $region18: #{classifier_forward.1} parent=1 // pred_check
      _
    $region19: #{classifier_forward.1} parent=1 // pred_check_branch
      %33 = sbr.rel (0) target = $region21
    $region20: #{classifier_forward.1} parent=1 // pred_region
      _
    $region21: #{classifier_forward.1} parent=1 // pred_fallthru
      _
    // Predicated region
    $region22: #{classifier_forward.1} parent=1 // pred_check
      _
    $region23: #{classifier_forward.1} parent=1 // pred_check_branch
      %35 = sbr.rel (0) target = $region25
    $region24: #{classifier_forward.1} parent=1 // pred_region
      _
    $region25: #{classifier_forward.1} parent=1 // pred_fallthru
      _
    // Predicated region
    $region26: #{classifier_forward.1} parent=1 // pred_check
      _
    $region27: #{classifier_forward.1} parent=1 // pred_check_branch
      %37 = sbr.rel (0) target = $region29
    $region28: #{classifier_forward.1} parent=1 // pred_region
      _
    $region29: #{classifier_forward.1} parent=1 // pred_fallthru
      _
    // Predicated region
    $region30: #{classifier_forward.1} parent=1 // pred_check
      _
    $region31: #{classifier_forward.1} parent=1 // pred_check_branch
      %39 = sbr.rel (0) target = $region33
    $region32: #{classifier_forward.1} parent=1 // pred_region
      _
    $region33: #{classifier_forward.1} parent=1 // pred_fallthru
      _
    // Predicated region
    $region34: #{classifier_forward.1} parent=1 // pred_check
      _
    $region35: #{classifier_forward.1} parent=1 // pred_check_branch
      %41 = sbr.rel (0) target = $region37
    $region36: #{classifier_forward.1} parent=1 // pred_region
      _
    $region37: #{classifier_forward.1} parent=1 // pred_fallthru
      _
    // Predicated region
    $region38: #{classifier_forward.1} parent=1 // pred_check
      _
    $region39: #{classifier_forward.1} parent=1 // pred_check_branch
      %43 = sbr.rel (0) target = $region41
    $region40: #{classifier_forward.1} parent=1 // pred_region
      _
    $region41: #{classifier_forward.1} parent=1 // pred_fallthru
      _
    // Predicated region
    $region42: #{classifier_forward.1} parent=1 // pred_check
      _
    $region43: #{classifier_forward.1} parent=1 // pred_check_branch
      %45 = sbr.rel (0) target = $region45
    $region44: #{classifier_forward.1} parent=1 // pred_region
      _
    $region45: #{classifier_forward.1} parent=1 // pred_fallthru
      _
    // Predicated region
    $region46: #{classifier_forward.1} parent=1 // pred_check
      _
    $region47: #{classifier_forward.1} parent=1 // pred_check_branch
      %47 = sbr.rel (0) target = $region49
    $region48: #{classifier_forward.1} parent=1 // pred_region
      _
    $region49: #{classifier_forward.1} parent=1 // pred_fallthru
      _
    // Predicated region
    $region50: #{classifier_forward.1} parent=1 // pred_check
      _
    $region51: #{classifier_forward.1} parent=1 // pred_check_branch
      %49 = sbr.rel (0) target = $region53
    $region52: #{classifier_forward.1} parent=1 // pred_region
      _
    $region53: #{classifier_forward.1} parent=1 // pred_fallthru
      _
    // Predicated region
    $region54: #{classifier_forward.1} parent=1 // pred_check
      _
    $region55: #{classifier_forward.1} parent=1 // pred_check_branch
      %51 = sbr.rel (0) target = $region57
    $region56: #{classifier_forward.1} parent=1 // pred_region
      _
    $region57: #{classifier_forward.1} parent=1 // pred_fallthru
      _
    // Predicated region
    $region58: #{classifier_forward.1} parent=1 // pred_check
      _
    $region59: #{classifier_forward.1} parent=1 // pred_check_branch
      %53 = sbr.rel (0) target = $region61
    $region60: #{classifier_forward.1} parent=1 // pred_region
      _
    $region61: #{classifier_forward.1} parent=1 // pred_fallthru
      _
    // Predicated region
    $region62: #{classifier_forward.1} parent=1 // pred_check
      _
    $region63: #{classifier_forward.1} parent=1 // pred_check_branch
      %55 = sbr.rel (0) target = $region65
    $region64: #{classifier_forward.1} parent=1 // pred_region
      _
    $region65: #{classifier_forward.1} parent=1 // pred_fallthru
      _
    // Predicated region
    $region66: #{classifier_forward.1} parent=1 // pred_check
      _
    $region67: #{classifier_forward.1} parent=1 // pred_check_branch
      %57 = sbr.rel (0) target = $region69
    $region68: #{classifier_forward.1} parent=1 // pred_region
      _
    $region69: #{classifier_forward.1} parent=1 // pred_fallthru
      _
    // Predicated region
    $region70: #{classifier_forward.1} parent=1 // pred_check
      _
    $region71: #{classifier_forward.1} parent=1 // pred_check_branch
      %59 = sbr.rel (0) target = $region73
    $region72: #{classifier_forward.1} parent=1 // pred_region
      _
    $region73: #{classifier_forward.1} parent=1 // pred_fallthru
      _
    %v61 = vld [vmem:[%s0] sm:$0xf]
    %v62 = vld [vmem:[%s0 + $0x4] sm:$0xf]
    %v63 = vld [vmem:[%s0 + $0x8] sm:$0xf]
    %v64 = vld [vmem:[%s0 + $0xc] sm:$0xf]
    %v65 = vld [vmem:[%s0 + $0x10] sm:$0xf]
    %v66 = vld [vmem:[%s0 + $0x14] sm:$0xf]
    %v67 = vld [vmem:[%s0 + $0x18] sm:$0xf]
    %v68 = vld [vmem:[%s0 + $0x1c] sm:$0xf]
    %v69 = vld [vmem:[%s0 + $0x20] sm:$0xf]
    %v70 = vld [vmem:[%s0 + $0x24] sm:$0xf]
    %v71 = vld [vmem:[%s0 + $0x28] sm:$0xf]
    %v72 = vld [vmem:[%s0 + $0x2c] sm:$0xf]
    %v73 = vld [vmem:[%s0 + $0x30] sm:$0xf]
    %v74 = vld [vmem:[%s0 + $0x34] sm:$0xf]
    %v75 = vld [vmem:[%s0 + $0x38] sm:$0xf]
    %v76 = vld [vmem:[%s0 + $0x3c] sm:$0xf]
    %v77 = vld [vmem:[%s0 + $0x40] sm:$0xf]
    %v78 = vld [vmem:[%s0 + $0x44] sm:$0xf]
    %v79 = vld [vmem:[%s0 + $0x48] sm:$0xf]
    %v80 = vld [vmem:[%s0 + $0x4c] sm:$0xf]
    %v81 = vld [vmem:[%s0 + $0x50] sm:$0xf]
    %v82 = vld [vmem:[%s0 + $0x54] sm:$0xf]
    %v83 = vld [vmem:[%s0 + $0x58] sm:$0xf]
    %v84 = vld [vmem:[%s0 + $0x5c] sm:$0xf]
    %v85 = vld [vmem:[%s0 + $0x60] sm:$0xf]
    %v86 = vld [vmem:[%s0 + $0x64] sm:$0xf]
    %v87 = vld [vmem:[%s0 + $0x68] sm:$0xf]
    %v88 = vld [vmem:[%s0 + $0x6c] sm:$0xf]
    %v89 = vld [vmem:[%s0 + $0x70] sm:$0xf]
    %v90 = vld [vmem:[%s0 + $0x74] sm:$0xf]
    %v91 = vld [vmem:[%s0 + $0x78] sm:$0xf]
    %v92 = vld [vmem:[%s0 + $0x7c] sm:$0xf]
    %v93 = vld [vmem:[%s0 + $0x80] sm:$0xf]
    %v94 = vld [vmem:[%s0 + $0x84] sm:$0xf]
    %v95 = vld [vmem:[%s0 + $0x88] sm:$0xf]
    %v96 = vld [vmem:[%s0 + $0x8c] sm:$0xf]
    %v97 = vld [vmem:[%s0 + $0x90] sm:$0xf]
    %v98 = vld [vmem:[%s0 + $0x94] sm:$0xf]
    %v99 = vld [vmem:[%s0 + $0x98] sm:$0xf]
    %v100 = vld [vmem:[%s0 + $0x9c] sm:$0xf]
    %v101 = vld [vmem:[%s0 + $0xa0] sm:$0xf]
    %v102 = vld [vmem:[%s0 + $0xa4] sm:$0xf]
    %v103 = vld [vmem:[%s0 + $0xa8] sm:$0xf]
    %v104 = vld [vmem:[%s0 + $0xac] sm:$0xf]
    %v105 = vld [vmem:[%s0 + $0xb0] sm:$0xf]
    %v106 = vld [vmem:[%s0 + $0xb4] sm:$0xf]
    %v107 = vld [vmem:[%s0 + $0xb8] sm:$0xf]
    %v108 = vld [vmem:[%s0 + $0xbc] sm:$0xf]
    %v109 = vld [vmem:[%s0 + $0xc0] sm:$0xf]
    %v110 = vld [vmem:[%s0 + $0xc4] sm:$0xf]
    %v111 = vld [vmem:[%s0 + $0xc8] sm:$0xf]
    %v112 = vld [vmem:[%s0 + $0xcc] sm:$0xf]
    %v113 = vld [vmem:[%s0 + $0xd0] sm:$0xf]
    %v114 = vld [vmem:[%s0 + $0xd4] sm:$0xf]
    %v115 = vld [vmem:[%s0 + $0xd8] sm:$0xf]
    %v116 = vld [vmem:[%s0 + $0xdc] sm:$0xf]
    %v117 = vld [vmem:[%s0 + $0xe0] sm:$0xf]
    %v118 = vld [vmem:[%s0 + $0xe4] sm:$0xf]
    %v119 = vld [vmem:[%s0 + $0xe8] sm:$0xf]
    %v120 = vld [vmem:[%s0 + $0xec] sm:$0xf]
    %v121 = vld [vmem:[%s0 + $0xf0] sm:$0xf]
    %v122 = vld [vmem:[%s0 + $0xf4] sm:$0xf]
    %v123 = vld [vmem:[%s0 + $0xf8] sm:$0xf]
    %v124 = vld [vmem:[%s0 + $0xfc] sm:$0xf]
    %v125 = vld [vmem:[%s0 + $0x100] sm:$0xf]
    %v126 = vld [vmem:[%s0 + $0x104] sm:$0xf]
    %v127 = vld [vmem:[%s0 + $0x108] sm:$0xf]
    %v128 = vld [vmem:[%s0 + $0x10c] sm:$0xf]
    %v129 = vld [vmem:[%s0 + $0x110] sm:$0xf]
    %v130 = vld [vmem:[%s0 + $0x114] sm:$0xf]
    %v131 = vld [vmem:[%s0 + $0x118] sm:$0xf]
    %v132 = vld [vmem:[%s0 + $0x11c] sm:$0xf]
    %v133 = vld [vmem:[%s0 + $0x120] sm:$0xf]
    %v134 = vld [vmem:[%s0 + $0x124] sm:$0xf]
    %v135 = vld [vmem:[%s0 + $0x128] sm:$0xf]
    %v136 = vld [vmem:[%s0 + $0x12c] sm:$0xf]
    %v137 = vld [vmem:[%s0 + $0x130] sm:$0xf]
    %v138 = vld [vmem:[%s0 + $0x134] sm:$0xf]
    %v139 = vld [vmem:[%s0 + $0x138] sm:$0xf]
    %v140 = vld [vmem:[%s0 + $0x13c] sm:$0xf]
    %v141 = vld [vmem:[%s0 + $0x140] sm:$0xf]
    %v142 = vld [vmem:[%s0 + $0x144] sm:$0xf]
    %v143 = vld [vmem:[%s0 + $0x148] sm:$0xf]
    %v144 = vld [vmem:[%s0 + $0x14c] sm:$0xf]
    %v145 = vld [vmem:[%s0 + $0x150] sm:$0xf]
    %v146 = vld [vmem:[%s0 + $0x154] sm:$0xf]
    %v147 = vld [vmem:[%s0 + $0x158] sm:$0xf]
    %v148 = vld [vmem:[%s0 + $0x15c] sm:$0xf]
    %v149 = vld [vmem:[%s0 + $0x160] sm:$0xf]
    %v150 = vld [vmem:[%s0 + $0x164] sm:$0x3]
    %v151 = vld [vmem:[%s1] sm:$0xf]
    %v152 = vld [vmem:[%s1 + $0x4] sm:$0xf]
    %v153 = vld [vmem:[%s1 + $0x8] sm:$0xf]
    %v154 = vld [vmem:[%s1 + $0xc] sm:$0xf]
    %v155 = vld [vmem:[%s1 + $0x10] sm:$0xf]
    %v156 = vld [vmem:[%s1 + $0x14] sm:$0xf]
    %v157 = vld [vmem:[%s1 + $0x18] sm:$0xf]
    %v158 = vld [vmem:[%s1 + $0x1c] sm:$0xf]
    %v159 = vld [vmem:[%s1 + $0x20] sm:$0xf]
    %v160 = vld [vmem:[%s1 + $0x24] sm:$0x3]
    %v251 = vunpack.c.l.b16 %v61
    %v252 = vunpack.c.l.b16 %v62
    %v253 = vunpack.c.l.b16 %v63
    %v254 = vunpack.c.l.b16 %v64
    %v255 = vunpack.c.l.b16 %v65
    %v256 = vunpack.c.l.b16 %v66
    %v257 = vunpack.c.l.b16 %v67
    %v258 = vunpack.c.l.b16 %v68
    %v259 = vunpack.c.l.b16 %v69
    %v260 = vunpack.c.l.b16 %v70
    %v261 = vunpack.c.l.b16 %v71
    %v262 = vunpack.c.l.b16 %v72
    %v263 = vunpack.c.l.b16 %v73
    %v264 = vunpack.c.l.b16 %v74
    %v265 = vunpack.c.l.b16 %v75
    %v266 = vunpack.c.l.b16 %v76
    %v267 = vunpack.c.l.b16 %v77
    %v268 = vunpack.c.l.b16 %v78
    %v269 = vunpack.c.l.b16 %v79
    %v270 = vunpack.c.l.b16 %v80
    %v271 = vunpack.c.l.b16 %v81
    %v272 = vunpack.c.l.b16 %v82
    %v273 = vunpack.c.l.b16 %v83
    %v274 = vunpack.c.l.b16 %v84
    %v275 = vunpack.c.l.b16 %v85
    %v276 = vunpack.c.l.b16 %v86
    %v277 = vunpack.c.l.b16 %v87
    %v278 = vunpack.c.l.b16 %v88
    %v279 = vunpack.c.l.b16 %v89
    %v280 = vunpack.c.l.b16 %v90
    %v281 = vunpack.c.l.b16 %v91
    %v282 = vunpack.c.l.b16 %v92
    %v283 = vunpack.c.l.b16 %v93
    %v284 = vunpack.c.l.b16 %v94
    %v285 = vunpack.c.l.b16 %v95
    %v286 = vunpack.c.l.b16 %v96
    %v287 = vunpack.c.l.b16 %v97
    %v288 = vunpack.c.l.b16 %v98
    %v289 = vunpack.c.l.b16 %v99
    %v290 = vunpack.c.l.b16 %v100
    %v291 = vunpack.c.l.b16 %v101
    %v292 = vunpack.c.l.b16 %v102
    %v293 = vunpack.c.l.b16 %v103
    %v294 = vunpack.c.l.b16 %v104
    %v295 = vunpack.c.l.b16 %v105
    %v296 = vunpack.c.l.b16 %v106
    %v297 = vunpack.c.l.b16 %v107
    %v298 = vunpack.c.l.b16 %v108
    %v299 = vunpack.c.l.b16 %v109
    %v300 = vunpack.c.l.b16 %v110
    %v301 = vunpack.c.l.b16 %v111
    %v302 = vunpack.c.l.b16 %v112
    %v303 = vunpack.c.l.b16 %v113
    %v304 = vunpack.c.l.b16 %v114
    %v305 = vunpack.c.l.b16 %v115
    %v306 = vunpack.c.l.b16 %v116
    %v307 = vunpack.c.l.b16 %v117
    %v308 = vunpack.c.l.b16 %v118
    %v309 = vunpack.c.l.b16 %v119
    %v310 = vunpack.c.l.b16 %v120
    %v311 = vunpack.c.l.b16 %v121
    %v312 = vunpack.c.l.b16 %v122
    %v313 = vunpack.c.l.b16 %v123
    %v314 = vunpack.c.l.b16 %v124
    %v315 = vunpack.c.l.b16 %v125
    %v316 = vunpack.c.l.b16 %v126
    %v317 = vunpack.c.l.b16 %v127
    %v318 = vunpack.c.l.b16 %v128
    %v319 = vunpack.c.l.b16 %v129
    %v320 = vunpack.c.l.b16 %v130
    %v321 = vunpack.c.l.b16 %v131
    %v322 = vunpack.c.l.b16 %v132
    %v323 = vunpack.c.l.b16 %v133
    %v324 = vunpack.c.l.b16 %v134
    %v325 = vunpack.c.l.b16 %v135
    %v326 = vunpack.c.l.b16 %v136
    %v327 = vunpack.c.l.b16 %v137
    %v328 = vunpack.c.l.b16 %v138
    %v329 = vunpack.c.l.b16 %v139
    %v330 = vunpack.c.l.b16 %v140
    %v331 = vunpack.c.l.b16 %v141
    %v332 = vunpack.c.l.b16 %v142
    %v333 = vunpack.c.l.b16 %v143
    %v334 = vunpack.c.l.b16 %v144
    %v335 = vunpack.c.l.b16 %v145
    %v336 = vunpack.c.l.b16 %v146
    %v337 = vunpack.c.l.b16 %v147
    %v338 = vunpack.c.l.b16 %v148
    %v339 = vunpack.c.l.b16 %v149
    %v340 = vunpack.c.l.b16 %v150
    %v341 = vpack.c.b16 %v252, %v251
    %v342 = vpack.c.b16 %v254, %v253
    %v343 = vpack.c.b16 %v256, %v255
    %v344 = vpack.c.b16 %v258, %v257
    %v345 = vpack.c.b16 %v260, %v259
    %v346 = vpack.c.b16 %v262, %v261
    %v347 = vpack.c.b16 %v264, %v263
    %v348 = vpack.c.b16 %v266, %v265
    %v349 = vpack.c.b16 %v268, %v267
    %v350 = vpack.c.b16 %v270, %v269
    %v351 = vpack.c.b16 %v272, %v271
    %v352 = vpack.c.b16 %v274, %v273
    %v353 = vpack.c.b16 %v276, %v275
    %v354 = vpack.c.b16 %v278, %v277
    %v355 = vpack.c.b16 %v280, %v279
    %v356 = vpack.c.b16 %v282, %v281
    %v357 = vpack.c.b16 %v284, %v283
    %v358 = vpack.c.b16 %v286, %v285
    %v359 = vpack.c.b16 %v288, %v287
    %v360 = vpack.c.b16 %v290, %v289
    %v361 = vpack.c.b16 %v292, %v291
    %v362 = vpack.c.b16 %v294, %v293
    %v363 = vpack.c.b16 %v296, %v295
    %v364 = vpack.c.b16 %v298, %v297
    %v365 = vpack.c.b16 %v300, %v299
    %v366 = vpack.c.b16 %v302, %v301
    %v367 = vpack.c.b16 %v304, %v303
    %v368 = vpack.c.b16 %v306, %v305
    %v369 = vpack.c.b16 %v308, %v307
    %v370 = vpack.c.b16 %v310, %v309
    %v371 = vpack.c.b16 %v312, %v311
    %v372 = vpack.c.b16 %v314, %v313
    %v373 = vpack.c.b16 %v316, %v315
    %v374 = vpack.c.b16 %v318, %v317
    %v375 = vpack.c.b16 %v320, %v319
    %v376 = vpack.c.b16 %v322, %v321
    %v377 = vpack.c.b16 %v324, %v323
    %v378 = vpack.c.b16 %v326, %v325
    %v379 = vpack.c.b16 %v328, %v327
    %v380 = vpack.c.b16 %v330, %v329
    %v381 = vpack.c.b16 %v332, %v331
    %v382 = vpack.c.b16 %v334, %v333
    %v383 = vpack.c.b16 %v336, %v335
    %v384 = vpack.c.b16 %v338, %v337
    %v385 = vpack.c.b16 %v340, %v339
    %v396 = vunpack.c.l.b16 %v151
    %v397 = vunpack.c.l.b16 %v152
    %v398 = vunpack.c.l.b16 %v153
    %v399 = vunpack.c.l.b16 %v154
    %v400 = vunpack.c.l.b16 %v155
    %v401 = vunpack.c.l.b16 %v156
    %v402 = vunpack.c.l.b16 %v157
    %v403 = vunpack.c.l.b16 %v158
    %v404 = vunpack.c.l.b16 %v159
    %v405 = vunpack.c.l.b16 %v160
    %v406 = vpack.c.b16 %v397, %v396
    %v407 = vpack.c.b16 %v399, %v398
    %v408 = vpack.c.b16 %v401, %v400
    %v409 = vpack.c.b16 %v403, %v402
    %v410 = vpack.c.b16 %v405, %v404
    %vm415 = vcmask 613376
    %v417 = vsel %vm415, %v341, 0
    %v420 = vsel %vm415, %v342, 0
    %v423 = vsel %vm415, %v343, 0
    %v426 = vsel %vm415, %v344, 0
    %v429 = vsel %vm415, %v345, 0
    %v432 = vsel %vm415, %v346, 0
    %v435 = vsel %vm415, %v347, 0
    %v438 = vsel %vm415, %v348, 0
    %v441 = vsel %vm415, %v349, 0
    %v444 = vsel %vm415, %v350, 0
    %v447 = vsel %vm415, %v351, 0
    %v450 = vsel %vm415, %v352, 0
    %v453 = vsel %vm415, %v353, 0
    %v456 = vsel %vm415, %v354, 0
    %v459 = vsel %vm415, %v355, 0
    %v462 = vsel %vm415, %v356, 0
    %v465 = vsel %vm415, %v357, 0
    %v468 = vsel %vm415, %v358, 0
    %v471 = vsel %vm415, %v359, 0
    %v474 = vsel %vm415, %v360, 0
    %v477 = vsel %vm415, %v361, 0
    %v480 = vsel %vm415, %v362, 0
    %v483 = vsel %vm415, %v363, 0
    %v486 = vsel %vm415, %v364, 0
    %v489 = vsel %vm415, %v365, 0
    %v492 = vsel %vm415, %v366, 0
    %v495 = vsel %vm415, %v367, 0
    %v498 = vsel %vm415, %v368, 0
    %v501 = vsel %vm415, %v369, 0
    %v504 = vsel %vm415, %v370, 0
    %v507 = vsel %vm415, %v371, 0
    %v510 = vsel %vm415, %v372, 0
    %v513 = vsel %vm415, %v373, 0
    %v516 = vsel %vm415, %v374, 0
    %v519 = vsel %vm415, %v375, 0
    %v522 = vsel %vm415, %v376, 0
    %v525 = vsel %vm415, %v377, 0
    %v528 = vsel %vm415, %v378, 0
    %v531 = vsel %vm415, %v379, 0
    %v534 = vsel %vm415, %v380, 0
    %v537 = vsel %vm415, %v381, 0
    %v540 = vsel %vm415, %v382, 0
    %v543 = vsel %vm415, %v383, 0
    %v546 = vsel %vm415, %v384, 0
    %v549 = vsel %vm415, %v385, 0
    %vm551 = vcmask 1044480
    %vm552 = vcmask 1045504
    %v553 = vsel %vm551, 4294967295, 65535
    %v554 = vsel %vm552, %v553, 0
    %v556 = vand.u32 %v410, %v554
    %558 = vmatpush.bf16.msra.mxu0 0
    %559 = vmatpush.bf16.msra.mxu0 0
    %560 = vmatpush.bf16.msra.mxu0 0
    %561 = vmatpush.bf16.msra.mxu0 %v556
    %562 = vmatpush.bf16.msra.mxu0 %v409
    %563 = vmatpush.bf16.msra.mxu0 %v408
    %564 = vmatpush.bf16.msra.mxu0 %v407
    %565 = vmatpush.bf16.msra.mxu0 %v406
    %566 = vmatmul.bf16.gmra.mxu0 %v417
    %v567 = vpop.f32.mrf.mxu0
    %v568 = vadd.f32 0.0, %v567
    %v569 = vpop.f32.mrf.mxu0
    %v570 = vadd.f32 0.0, %v569
    %571 = vmatmul.bf16.gmra.mxu0 %v420
    %v572 = vpop.f32.mrf.mxu0
    %v573 = vadd.f32 0.0, %v572
    %v574 = vpop.f32.mrf.mxu0
    %v575 = vadd.f32 0.0, %v574
    %576 = vmatmul.bf16.gmra.mxu0 %v423
    %v577 = vpop.f32.mrf.mxu0
    %v578 = vadd.f32 0.0, %v577
    %v579 = vpop.f32.mrf.mxu0
    %v580 = vadd.f32 0.0, %v579
    %581 = vmatmul.bf16.gmra.mxu0 %v426
    %v582 = vpop.f32.mrf.mxu0
    %v583 = vadd.f32 0.0, %v582
    %v584 = vpop.f32.mrf.mxu0
    %v585 = vadd.f32 0.0, %v584
    %586 = vmatmul.bf16.gmra.mxu0 %v429
    %v587 = vpop.f32.mrf.mxu0
    %v588 = vadd.f32 0.0, %v587
    %v589 = vpop.f32.mrf.mxu0
    %v590 = vadd.f32 0.0, %v589
    %591 = vmatmul.bf16.gmra.mxu0 %v432
    %v592 = vpop.f32.mrf.mxu0
    %v593 = vadd.f32 0.0, %v592
    %v594 = vpop.f32.mrf.mxu0
    %v595 = vadd.f32 0.0, %v594
    %596 = vmatmul.bf16.gmra.mxu0 %v435
    %v597 = vpop.f32.mrf.mxu0
    %v598 = vadd.f32 0.0, %v597
    %v599 = vpop.f32.mrf.mxu0
    %v600 = vadd.f32 0.0, %v599
    %601 = vmatmul.bf16.gmra.mxu0 %v438
    %v602 = vpop.f32.mrf.mxu0
    %v603 = vadd.f32 0.0, %v602
    %v604 = vpop.f32.mrf.mxu0
    %v605 = vadd.f32 0.0, %v604
    %606 = vmatmul.bf16.gmra.mxu0 %v441
    %v607 = vpop.f32.mrf.mxu0
    %v608 = vadd.f32 0.0, %v607
    %v609 = vpop.f32.mrf.mxu0
    %v610 = vadd.f32 0.0, %v609
    %611 = vmatmul.bf16.gmra.mxu0 %v444
    %v612 = vpop.f32.mrf.mxu0
    %v613 = vadd.f32 0.0, %v612
    %v614 = vpop.f32.mrf.mxu0
    %v615 = vadd.f32 0.0, %v614
    %616 = vmatmul.bf16.gmra.mxu0 %v447
    %v617 = vpop.f32.mrf.mxu0
    %v618 = vadd.f32 0.0, %v617
    %v619 = vpop.f32.mrf.mxu0
    %v620 = vadd.f32 0.0, %v619
    %621 = vmatmul.bf16.gmra.mxu0 %v450
    %v622 = vpop.f32.mrf.mxu0
    %v623 = vadd.f32 0.0, %v622
    %v624 = vpop.f32.mrf.mxu0
    %v625 = vadd.f32 0.0, %v624
    %626 = vmatmul.bf16.gmra.mxu0 %v453
    %v627 = vpop.f32.mrf.mxu0
    %v628 = vadd.f32 0.0, %v627
    %v629 = vpop.f32.mrf.mxu0
    %v630 = vadd.f32 0.0, %v629
    %631 = vmatmul.bf16.gmra.mxu0 %v456
    %v632 = vpop.f32.mrf.mxu0
    %v633 = vadd.f32 0.0, %v632
    %v634 = vpop.f32.mrf.mxu0
    %v635 = vadd.f32 0.0, %v634
    %636 = vmatmul.bf16.gmra.mxu0 %v459
    %v637 = vpop.f32.mrf.mxu0
    %v638 = vadd.f32 0.0, %v637
    %v639 = vpop.f32.mrf.mxu0
    %v640 = vadd.f32 0.0, %v639
    %641 = vmatmul.bf16.gmra.mxu0 %v462
    %v642 = vpop.f32.mrf.mxu0
    %v643 = vadd.f32 0.0, %v642
    %v644 = vpop.f32.mrf.mxu0
    %v645 = vadd.f32 0.0, %v644
    %646 = vmatmul.bf16.gmra.mxu0 %v465
    %v647 = vpop.f32.mrf.mxu0
    %v648 = vadd.f32 0.0, %v647
    %v649 = vpop.f32.mrf.mxu0
    %v650 = vadd.f32 0.0, %v649
    %651 = vmatmul.bf16.gmra.mxu0 %v468
    %v652 = vpop.f32.mrf.mxu0
    %v653 = vadd.f32 0.0, %v652
    %v654 = vpop.f32.mrf.mxu0
    %v655 = vadd.f32 0.0, %v654
    %656 = vmatmul.bf16.gmra.mxu0 %v471
    %v657 = vpop.f32.mrf.mxu0
    %v658 = vadd.f32 0.0, %v657
    %v659 = vpop.f32.mrf.mxu0
    %v660 = vadd.f32 0.0, %v659
    %661 = vmatmul.bf16.gmra.mxu0 %v474
    %v662 = vpop.f32.mrf.mxu0
    %v663 = vadd.f32 0.0, %v662
    %v664 = vpop.f32.mrf.mxu0
    %v665 = vadd.f32 0.0, %v664
    %666 = vmatmul.bf16.gmra.mxu0 %v477
    %v667 = vpop.f32.mrf.mxu0
    %v668 = vadd.f32 0.0, %v667
    %v669 = vpop.f32.mrf.mxu0
    %v670 = vadd.f32 0.0, %v669
    %671 = vmatmul.bf16.gmra.mxu0 %v480
    %v672 = vpop.f32.mrf.mxu0
    %v673 = vadd.f32 0.0, %v672
    %v674 = vpop.f32.mrf.mxu0
    %v675 = vadd.f32 0.0, %v674
    %676 = vmatmul.bf16.gmra.mxu0 %v483
    %v677 = vpop.f32.mrf.mxu0
    %v678 = vadd.f32 0.0, %v677
    %v679 = vpop.f32.mrf.mxu0
    %v680 = vadd.f32 0.0, %v679
    %681 = vmatmul.bf16.gmra.mxu0 %v486
    %v682 = vpop.f32.mrf.mxu0
    %v683 = vadd.f32 0.0, %v682
    %v684 = vpop.f32.mrf.mxu0
    %v685 = vadd.f32 0.0, %v684
    %686 = vmatmul.bf16.gmra.mxu0 %v489
    %v687 = vpop.f32.mrf.mxu0
    %v688 = vadd.f32 0.0, %v687
    %v689 = vpop.f32.mrf.mxu0
    %v690 = vadd.f32 0.0, %v689
    %691 = vmatmul.bf16.gmra.mxu0 %v492
    %v692 = vpop.f32.mrf.mxu0
    %v693 = vadd.f32 0.0, %v692
    %v694 = vpop.f32.mrf.mxu0
    %v695 = vadd.f32 0.0, %v694
    %696 = vmatmul.bf16.gmra.mxu0 %v495
    %v697 = vpop.f32.mrf.mxu0
    %v698 = vadd.f32 0.0, %v697
    %v699 = vpop.f32.mrf.mxu0
    %v700 = vadd.f32 0.0, %v699
    %701 = vmatmul.bf16.gmra.mxu0 %v498
    %v702 = vpop.f32.mrf.mxu0
    %v703 = vadd.f32 0.0, %v702
    %v704 = vpop.f32.mrf.mxu0
    %v705 = vadd.f32 0.0, %v704
    %706 = vmatmul.bf16.gmra.mxu0 %v501
    %v707 = vpop.f32.mrf.mxu0
    %v708 = vadd.f32 0.0, %v707
    %v709 = vpop.f32.mrf.mxu0
    %v710 = vadd.f32 0.0, %v709
    %711 = vmatmul.bf16.gmra.mxu0 %v504
    %v712 = vpop.f32.mrf.mxu0
    %v713 = vadd.f32 0.0, %v712
    %v714 = vpop.f32.mrf.mxu0
    %v715 = vadd.f32 0.0, %v714
    %716 = vmatmul.bf16.gmra.mxu0 %v507
    %v717 = vpop.f32.mrf.mxu0
    %v718 = vadd.f32 0.0, %v717
    %v719 = vpop.f32.mrf.mxu0
    %v720 = vadd.f32 0.0, %v719
    %721 = vmatmul.bf16.gmra.mxu0 %v510
    %v722 = vpop.f32.mrf.mxu0
    %v723 = vadd.f32 0.0, %v722
    %v724 = vpop.f32.mrf.mxu0
    %v725 = vadd.f32 0.0, %v724
    %726 = vmatmul.bf16.gmra.mxu0 %v513
    %v727 = vpop.f32.mrf.mxu0
    %v728 = vadd.f32 0.0, %v727
    %v729 = vpop.f32.mrf.mxu0
    %v730 = vadd.f32 0.0, %v729
    %731 = vmatmul.bf16.gmra.mxu0 %v516
    %v732 = vpop.f32.mrf.mxu0
    %v733 = vadd.f32 0.0, %v732
    %v734 = vpop.f32.mrf.mxu0
    %v735 = vadd.f32 0.0, %v734
    %736 = vmatmul.bf16.gmra.mxu0 %v519
    %v737 = vpop.f32.mrf.mxu0
    %v738 = vadd.f32 0.0, %v737
    %v739 = vpop.f32.mrf.mxu0
    %v740 = vadd.f32 0.0, %v739
    %741 = vmatmul.bf16.gmra.mxu0 %v522
    %v742 = vpop.f32.mrf.mxu0
    %v743 = vadd.f32 0.0, %v742
    %v744 = vpop.f32.mrf.mxu0
    %v745 = vadd.f32 0.0, %v744
    %746 = vmatmul.bf16.gmra.mxu0 %v525
    %v747 = vpop.f32.mrf.mxu0
    %v748 = vadd.f32 0.0, %v747
    %v749 = vpop.f32.mrf.mxu0
    %v750 = vadd.f32 0.0, %v749
    %751 = vmatmul.bf16.gmra.mxu0 %v528
    %v752 = vpop.f32.mrf.mxu0
    %v753 = vadd.f32 0.0, %v752
    %v754 = vpop.f32.mrf.mxu0
    %v755 = vadd.f32 0.0, %v754
    %756 = vmatmul.bf16.gmra.mxu0 %v531
    %v757 = vpop.f32.mrf.mxu0
    %v758 = vadd.f32 0.0, %v757
    %v759 = vpop.f32.mrf.mxu0
    %v760 = vadd.f32 0.0, %v759
    %761 = vmatmul.bf16.gmra.mxu0 %v534
    %v762 = vpop.f32.mrf.mxu0
    %v763 = vadd.f32 0.0, %v762
    %v764 = vpop.f32.mrf.mxu0
    %v765 = vadd.f32 0.0, %v764
    %766 = vmatmul.bf16.gmra.mxu0 %v537
    %v767 = vpop.f32.mrf.mxu0
    %v768 = vadd.f32 0.0, %v767
    %v769 = vpop.f32.mrf.mxu0
    %v770 = vadd.f32 0.0, %v769
    %771 = vmatmul.bf16.gmra.mxu0 %v540
    %v772 = vpop.f32.mrf.mxu0
    %v773 = vadd.f32 0.0, %v772
    %v774 = vpop.f32.mrf.mxu0
    %v775 = vadd.f32 0.0, %v774
    %776 = vmatmul.bf16.gmra.mxu0 %v543
    %v777 = vpop.f32.mrf.mxu0
    %v778 = vadd.f32 0.0, %v777
    %v779 = vpop.f32.mrf.mxu0
    %v780 = vadd.f32 0.0, %v779
    %781 = vmatmul.bf16.gmra.mxu0 %v546
    %v782 = vpop.f32.mrf.mxu0
    %v783 = vadd.f32 0.0, %v782
    %v784 = vpop.f32.mrf.mxu0
    %v785 = vadd.f32 0.0, %v784
    %786 = vmatmul.bf16.gmra.mxu0 %v549
    %v787 = vpop.f32.mrf.mxu0
    %v788 = vadd.f32 0.0, %v787
    %v789 = vpop.f32.mrf.mxu0
    %v790 = vadd.f32 0.0, %v789
    %791 = vdwg.mxu0
    %v792 = vld [vmem:[%s2] sm:$0x1]
    %v794 = vperm.slane %v792, 0
    %v796 = vmul.f32 %v568, %v794
    %v797 = vmul.f32 %v570, %v794
    %v798 = vmul.f32 %v573, %v794
    %v799 = vmul.f32 %v575, %v794
    %v800 = vmul.f32 %v578, %v794
    %v801 = vmul.f32 %v580, %v794
    %v802 = vmul.f32 %v583, %v794
    %v803 = vmul.f32 %v585, %v794
    %v804 = vmul.f32 %v588, %v794
    %v805 = vmul.f32 %v590, %v794
    %v806 = vmul.f32 %v593, %v794
    %v807 = vmul.f32 %v595, %v794
    %v808 = vmul.f32 %v598, %v794
    %v809 = vmul.f32 %v600, %v794
    %v810 = vmul.f32 %v603, %v794
    %v811 = vmul.f32 %v605, %v794
    %v812 = vmul.f32 %v608, %v794
    %v813 = vmul.f32 %v610, %v794
    %v814 = vmul.f32 %v613, %v794
    %v815 = vmul.f32 %v615, %v794
    %v816 = vmul.f32 %v618, %v794
    %v817 = vmul.f32 %v620, %v794
    %v818 = vmul.f32 %v623, %v794
    %v819 = vmul.f32 %v625, %v794
    %v820 = vmul.f32 %v628, %v794
    %v821 = vmul.f32 %v630, %v794
    %v822 = vmul.f32 %v633, %v794
    %v823 = vmul.f32 %v635, %v794
    %v824 = vmul.f32 %v638, %v794
    %v825 = vmul.f32 %v640, %v794
    %v826 = vmul.f32 %v643, %v794
    %v827 = vmul.f32 %v645, %v794
    %v828 = vmul.f32 %v648, %v794
    %v829 = vmul.f32 %v650, %v794
    %v830 = vmul.f32 %v653, %v794
    %v831 = vmul.f32 %v655, %v794
    %v832 = vmul.f32 %v658, %v794
    %v833 = vmul.f32 %v660, %v794
    %v834 = vmul.f32 %v663, %v794
    %v835 = vmul.f32 %v665, %v794
    %v836 = vmul.f32 %v668, %v794
    %v837 = vmul.f32 %v670, %v794
    %v838 = vmul.f32 %v673, %v794
    %v839 = vmul.f32 %v675, %v794
    %v840 = vmul.f32 %v678, %v794
    %v841 = vmul.f32 %v680, %v794
    %v842 = vmul.f32 %v683, %v794
    %v843 = vmul.f32 %v685, %v794
    %v844 = vmul.f32 %v688, %v794
    %v845 = vmul.f32 %v690, %v794
    %v846 = vmul.f32 %v693, %v794
    %v847 = vmul.f32 %v695, %v794
    %v848 = vmul.f32 %v698, %v794
    %v849 = vmul.f32 %v700, %v794
    %v850 = vmul.f32 %v703, %v794
    %v851 = vmul.f32 %v705, %v794
    %v852 = vmul.f32 %v708, %v794
    %v853 = vmul.f32 %v710, %v794
    %v854 = vmul.f32 %v713, %v794
    %v855 = vmul.f32 %v715, %v794
    %v856 = vmul.f32 %v718, %v794
    %v857 = vmul.f32 %v720, %v794
    %v858 = vmul.f32 %v723, %v794
    %v859 = vmul.f32 %v725, %v794
    %v860 = vmul.f32 %v728, %v794
    %v861 = vmul.f32 %v730, %v794
    %v862 = vmul.f32 %v733, %v794
    %v863 = vmul.f32 %v735, %v794
    %v864 = vmul.f32 %v738, %v794
    %v865 = vmul.f32 %v740, %v794
    %v866 = vmul.f32 %v743, %v794
    %v867 = vmul.f32 %v745, %v794
    %v868 = vmul.f32 %v748, %v794
    %v869 = vmul.f32 %v750, %v794
    %v870 = vmul.f32 %v753, %v794
    %v871 = vmul.f32 %v755, %v794
    %v872 = vmul.f32 %v758, %v794
    %v873 = vmul.f32 %v760, %v794
    %v874 = vmul.f32 %v763, %v794
    %v875 = vmul.f32 %v765, %v794
    %v876 = vmul.f32 %v768, %v794
    %v877 = vmul.f32 %v770, %v794
    %v878 = vmul.f32 %v773, %v794
    %v879 = vmul.f32 %v775, %v794
    %v880 = vmul.f32 %v778, %v794
    %v881 = vmul.f32 %v780, %v794
    %v882 = vmul.f32 %v783, %v794
    %v883 = vmul.f32 %v785, %v794
    %v884 = vmul.f32 %v788, %v794
    %v885 = vmul.f32 %v790, %v794
    %v886 = vld [vmem:[%s3] sm:$0x1]
    %v888 = vperm.slane %v886, 0
    %v890 = vadd.f32 %v796, %v888
    %v891 = vadd.f32 %v797, %v888
    %v892 = vadd.f32 %v798, %v888
    %v893 = vadd.f32 %v799, %v888
    %v894 = vadd.f32 %v800, %v888
    %v895 = vadd.f32 %v801, %v888
    %v896 = vadd.f32 %v802, %v888
    %v897 = vadd.f32 %v803, %v888
    %v898 = vadd.f32 %v804, %v888
    %v899 = vadd.f32 %v805, %v888
    %v900 = vadd.f32 %v806, %v888
    %v901 = vadd.f32 %v807, %v888
    %v902 = vadd.f32 %v808, %v888
    %v903 = vadd.f32 %v809, %v888
    %v904 = vadd.f32 %v810, %v888
    %v905 = vadd.f32 %v811, %v888
    %v906 = vadd.f32 %v812, %v888
    %v907 = vadd.f32 %v813, %v888
    %v908 = vadd.f32 %v814, %v888
    %v909 = vadd.f32 %v815, %v888
    %v910 = vadd.f32 %v816, %v888
    %v911 = vadd.f32 %v817, %v888
    %v912 = vadd.f32 %v818, %v888
    %v913 = vadd.f32 %v819, %v888
    %v914 = vadd.f32 %v820, %v888
    %v915 = vadd.f32 %v821, %v888
    %v916 = vadd.f32 %v822, %v888
    %v917 = vadd.f32 %v823, %v888
    %v918 = vadd.f32 %v824, %v888
    %v919 = vadd.f32 %v825, %v888
    %v920 = vadd.f32 %v826, %v888
    %v921 = vadd.f32 %v827, %v888
    %v922 = vadd.f32 %v828, %v888
    %v923 = vadd.f32 %v829, %v888
    %v924 = vadd.f32 %v830, %v888
    %v925 = vadd.f32 %v831, %v888
    %v926 = vadd.f32 %v832, %v888
    %v927 = vadd.f32 %v833, %v888
    %v928 = vadd.f32 %v834, %v888
    %v929 = vadd.f32 %v835, %v888
    %v930 = vadd.f32 %v836, %v888
    %v931 = vadd.f32 %v837, %v888
    %v932 = vadd.f32 %v838, %v888
    %v933 = vadd.f32 %v839, %v888
    %v934 = vadd.f32 %v840, %v888
    %v935 = vadd.f32 %v841, %v888
    %v936 = vadd.f32 %v842, %v888
    %v937 = vadd.f32 %v843, %v888
    %v938 = vadd.f32 %v844, %v888
    %v939 = vadd.f32 %v845, %v888
    %v940 = vadd.f32 %v846, %v888
    %v941 = vadd.f32 %v847, %v888
    %v942 = vadd.f32 %v848, %v888
    %v943 = vadd.f32 %v849, %v888
    %v944 = vadd.f32 %v850, %v888
    %v945 = vadd.f32 %v851, %v888
    %v946 = vadd.f32 %v852, %v888
    %v947 = vadd.f32 %v853, %v888
    %v948 = vadd.f32 %v854, %v888
    %v949 = vadd.f32 %v855, %v888
    %v950 = vadd.f32 %v856, %v888
    %v951 = vadd.f32 %v857, %v888
    %v952 = vadd.f32 %v858, %v888
    %v953 = vadd.f32 %v859, %v888
    %v954 = vadd.f32 %v860, %v888
    %v955 = vadd.f32 %v861, %v888
    %v956 = vadd.f32 %v862, %v888
    %v957 = vadd.f32 %v863, %v888
    %v958 = vadd.f32 %v864, %v888
    %v959 = vadd.f32 %v865, %v888
    %v960 = vadd.f32 %v866, %v888
    %v961 = vadd.f32 %v867, %v888
    %v962 = vadd.f32 %v868, %v888
    %v963 = vadd.f32 %v869, %v888
    %v964 = vadd.f32 %v870, %v888
    %v965 = vadd.f32 %v871, %v888
    %v966 = vadd.f32 %v872, %v888
    %v967 = vadd.f32 %v873, %v888
    %v968 = vadd.f32 %v874, %v888
    %v969 = vadd.f32 %v875, %v888
    %v970 = vadd.f32 %v876, %v888
    %v971 = vadd.f32 %v877, %v888
    %v972 = vadd.f32 %v878, %v888
    %v973 = vadd.f32 %v879, %v888
    %v974 = vadd.f32 %v880, %v888
    %v975 = vadd.f32 %v881, %v888
    %v976 = vadd.f32 %v882, %v888
    %v977 = vadd.f32 %v883, %v888
    %v978 = vadd.f32 %v884, %v888
    %v979 = vadd.f32 %v885, %v888
    %v980 = vmax.f32 %v890, 0.0
    %v981 = vmax.f32 %v891, 0.0
    %v982 = vmax.f32 %v892, 0.0
    %v983 = vmax.f32 %v893, 0.0
    %v984 = vmax.f32 %v894, 0.0
    %v985 = vmax.f32 %v895, 0.0
    %v986 = vmax.f32 %v896, 0.0
    %v987 = vmax.f32 %v897, 0.0
    %v988 = vmax.f32 %v898, 0.0
    %v989 = vmax.f32 %v899, 0.0
    %v990 = vmax.f32 %v900, 0.0
    %v991 = vmax.f32 %v901, 0.0
    %v992 = vmax.f32 %v902, 0.0
    %v993 = vmax.f32 %v903, 0.0
    %v994 = vmax.f32 %v904, 0.0
    %v995 = vmax.f32 %v905, 0.0
    %v996 = vmax.f32 %v906, 0.0
    %v997 = vmax.f32 %v907, 0.0
    %v998 = vmax.f32 %v908, 0.0
    %v999 = vmax.f32 %v909, 0.0
    %v1000 = vmax.f32 %v910, 0.0
    %v1001 = vmax.f32 %v911, 0.0
    %v1002 = vmax.f32 %v912, 0.0
    %v1003 = vmax.f32 %v913, 0.0
    %v1004 = vmax.f32 %v914, 0.0
    %v1005 = vmax.f32 %v915, 0.0
    %v1006 = vmax.f32 %v916, 0.0
    %v1007 = vmax.f32 %v917, 0.0
    %v1008 = vmax.f32 %v918, 0.0
    %v1009 = vmax.f32 %v919, 0.0
    %v1010 = vmax.f32 %v920, 0.0
    %v1011 = vmax.f32 %v921, 0.0
    %v1012 = vmax.f32 %v922, 0.0
    %v1013 = vmax.f32 %v923, 0.0
    %v1014 = vmax.f32 %v924, 0.0
    %v1015 = vmax.f32 %v925, 0.0
    %v1016 = vmax.f32 %v926, 0.0
    %v1017 = vmax.f32 %v927, 0.0
    %v1018 = vmax.f32 %v928, 0.0
    %v1019 = vmax.f32 %v929, 0.0
    %v1020 = vmax.f32 %v930, 0.0
    %v1021 = vmax.f32 %v931, 0.0
    %v1022 = vmax.f32 %v932, 0.0
    %v1023 = vmax.f32 %v933, 0.0
    %v1024 = vmax.f32 %v934, 0.0
    %v1025 = vmax.f32 %v935, 0.0
    %v1026 = vmax.f32 %v936, 0.0
    %v1027 = vmax.f32 %v937, 0.0
    %v1028 = vmax.f32 %v938, 0.0
    %v1029 = vmax.f32 %v939, 0.0
    %v1030 = vmax.f32 %v940, 0.0
    %v1031 = vmax.f32 %v941, 0.0
    %v1032 = vmax.f32 %v942, 0.0
    %v1033 = vmax.f32 %v943, 0.0
    %v1034 = vmax.f32 %v944, 0.0
    %v1035 = vmax.f32 %v945, 0.0
    %v1036 = vmax.f32 %v946, 0.0
    %v1037 = vmax.f32 %v947, 0.0
    %v1038 = vmax.f32 %v948, 0.0
    %v1039 = vmax.f32 %v949, 0.0
    %v1040 = vmax.f32 %v950, 0.0
    %v1041 = vmax.f32 %v951, 0.0
    %v1042 = vmax.f32 %v952, 0.0
    %v1043 = vmax.f32 %v953, 0.0
    %v1044 = vmax.f32 %v954, 0.0
    %v1045 = vmax.f32 %v955, 0.0
    %v1046 = vmax.f32 %v956, 0.0
    %v1047 = vmax.f32 %v957, 0.0
    %v1048 = vmax.f32 %v958, 0.0
    %v1049 = vmax.f32 %v959, 0.0
    %v1050 = vmax.f32 %v960, 0.0
    %v1051 = vmax.f32 %v961, 0.0
    %v1052 = vmax.f32 %v962, 0.0
    %v1053 = vmax.f32 %v963, 0.0
    %v1054 = vmax.f32 %v964, 0.0
    %v1055 = vmax.f32 %v965, 0.0
    %v1056 = vmax.f32 %v966, 0.0
    %v1057 = vmax.f32 %v967, 0.0
    %v1058 = vmax.f32 %v968, 0.0
    %v1059 = vmax.f32 %v969, 0.0
    %v1060 = vmax.f32 %v970, 0.0
    %v1061 = vmax.f32 %v971, 0.0
    %v1062 = vmax.f32 %v972, 0.0
    %v1063 = vmax.f32 %v973, 0.0
    %v1064 = vmax.f32 %v974, 0.0
    %v1065 = vmax.f32 %v975, 0.0
    %v1066 = vmax.f32 %v976, 0.0
    %v1067 = vmax.f32 %v977, 0.0
    %v1068 = vmax.f32 %v978, 0.0
    %v1069 = vmax.f32 %v979, 0.0
    %v1070 = vpack.c.bf16 %v980, %v980
    %v1071 = vpack.c.bf16 %v981, %v981
    %v1072 = vpack.c.bf16 %v982, %v982
    %v1073 = vpack.c.bf16 %v983, %v983
    %v1074 = vpack.c.bf16 %v984, %v984
    %v1075 = vpack.c.bf16 %v985, %v985
    %v1076 = vpack.c.bf16 %v986, %v986
    %v1077 = vpack.c.bf16 %v987, %v987
    %v1078 = vpack.c.bf16 %v988, %v988
    %v1079 = vpack.c.bf16 %v989, %v989
    %v1080 = vpack.c.bf16 %v990, %v990
    %v1081 = vpack.c.bf16 %v991, %v991
    %v1082 = vpack.c.bf16 %v992, %v992
    %v1083 = vpack.c.bf16 %v993, %v993
    %v1084 = vpack.c.bf16 %v994, %v994
    %v1085 = vpack.c.bf16 %v995, %v995
    %v1086 = vpack.c.bf16 %v996, %v996
    %v1087 = vpack.c.bf16 %v997, %v997
    %v1088 = vpack.c.bf16 %v998, %v998
    %v1089 = vpack.c.bf16 %v999, %v999
    %v1090 = vpack.c.bf16 %v1000, %v1000
    %v1091 = vpack.c.bf16 %v1001, %v1001
    %v1092 = vpack.c.bf16 %v1002, %v1002
    %v1093 = vpack.c.bf16 %v1003, %v1003
    %v1094 = vpack.c.bf16 %v1004, %v1004
    %v1095 = vpack.c.bf16 %v1005, %v1005
    %v1096 = vpack.c.bf16 %v1006, %v1006
    %v1097 = vpack.c.bf16 %v1007, %v1007
    %v1098 = vpack.c.bf16 %v1008, %v1008
    %v1099 = vpack.c.bf16 %v1009, %v1009
    %v1100 = vpack.c.bf16 %v1010, %v1010
    %v1101 = vpack.c.bf16 %v1011, %v1011
    %v1102 = vpack.c.bf16 %v1012, %v1012
    %v1103 = vpack.c.bf16 %v1013, %v1013
    %v1104 = vpack.c.bf16 %v1014, %v1014
    %v1105 = vpack.c.bf16 %v1015, %v1015
    %v1106 = vpack.c.bf16 %v1016, %v1016
    %v1107 = vpack.c.bf16 %v1017, %v1017
    %v1108 = vpack.c.bf16 %v1018, %v1018
    %v1109 = vpack.c.bf16 %v1019, %v1019
    %v1110 = vpack.c.bf16 %v1020, %v1020
    %v1111 = vpack.c.bf16 %v1021, %v1021
    %v1112 = vpack.c.bf16 %v1022, %v1022
    %v1113 = vpack.c.bf16 %v1023, %v1023
    %v1114 = vpack.c.bf16 %v1024, %v1024
    %v1115 = vpack.c.bf16 %v1025, %v1025
    %v1116 = vpack.c.bf16 %v1026, %v1026
    %v1117 = vpack.c.bf16 %v1027, %v1027
    %v1118 = vpack.c.bf16 %v1028, %v1028
    %v1119 = vpack.c.bf16 %v1029, %v1029
    %v1120 = vpack.c.bf16 %v1030, %v1030
    %v1121 = vpack.c.bf16 %v1031, %v1031
    %v1122 = vpack.c.bf16 %v1032, %v1032
    %v1123 = vpack.c.bf16 %v1033, %v1033
    %v1124 = vpack.c.bf16 %v1034, %v1034
    %v1125 = vpack.c.bf16 %v1035, %v1035
    %v1126 = vpack.c.bf16 %v1036, %v1036
    %v1127 = vpack.c.bf16 %v1037, %v1037
    %v1128 = vpack.c.bf16 %v1038, %v1038
    %v1129 = vpack.c.bf16 %v1039, %v1039
    %v1130 = vpack.c.bf16 %v1040, %v1040
    %v1131 = vpack.c.bf16 %v1041, %v1041
    %v1132 = vpack.c.bf16 %v1042, %v1042
    %v1133 = vpack.c.bf16 %v1043, %v1043
    %v1134 = vpack.c.bf16 %v1044, %v1044
    %v1135 = vpack.c.bf16 %v1045, %v1045
    %v1136 = vpack.c.bf16 %v1046, %v1046
    %v1137 = vpack.c.bf16 %v1047, %v1047
    %v1138 = vpack.c.bf16 %v1048, %v1048
    %v1139 = vpack.c.bf16 %v1049, %v1049
    %v1140 = vpack.c.bf16 %v1050, %v1050
    %v1141 = vpack.c.bf16 %v1051, %v1051
    %v1142 = vpack.c.bf16 %v1052, %v1052
    %v1143 = vpack.c.bf16 %v1053, %v1053
    %v1144 = vpack.c.bf16 %v1054, %v1054
    %v1145 = vpack.c.bf16 %v1055, %v1055
    %v1146 = vpack.c.bf16 %v1056, %v1056
    %v1147 = vpack.c.bf16 %v1057, %v1057
    %v1148 = vpack.c.bf16 %v1058, %v1058
    %v1149 = vpack.c.bf16 %v1059, %v1059
    %v1150 = vpack.c.bf16 %v1060, %v1060
    %v1151 = vpack.c.bf16 %v1061, %v1061
    %v1152 = vpack.c.bf16 %v1062, %v1062
    %v1153 = vpack.c.bf16 %v1063, %v1063
    %v1154 = vpack.c.bf16 %v1064, %v1064
    %v1155 = vpack.c.bf16 %v1065, %v1065
    %v1156 = vpack.c.bf16 %v1066, %v1066
    %v1157 = vpack.c.bf16 %v1067, %v1067
    %v1158 = vpack.c.bf16 %v1068, %v1068
    %v1159 = vpack.c.bf16 %v1069, %v1069
    %vm1160 = vcmask 257024
    %1161 = vst.msk [vmem:[#allocation2] sm:$0xf] %vm1160, %v1070
    %1162 = vst.msk [vmem:[#allocation2 + $0x4] sm:$0xf] %vm1160, %v1071
    %1163 = vst.msk [vmem:[#allocation2 + $0x8] sm:$0xf] %vm1160, %v1072
    %1164 = vst.msk [vmem:[#allocation2 + $0xc] sm:$0xf] %vm1160, %v1073
    %1165 = vst.msk [vmem:[#allocation2 + $0x10] sm:$0xf] %vm1160, %v1074
    %1166 = vst.msk [vmem:[#allocation2 + $0x14] sm:$0xf] %vm1160, %v1075
    %1167 = vst.msk [vmem:[#allocation2 + $0x18] sm:$0xf] %vm1160, %v1076
    %1168 = vst.msk [vmem:[#allocation2 + $0x1c] sm:$0xf] %vm1160, %v1077
    %1169 = vst.msk [vmem:[#allocation2 + $0x20] sm:$0xf] %vm1160, %v1078
    %1170 = vst.msk [vmem:[#allocation2 + $0x24] sm:$0xf] %vm1160, %v1079
    %1171 = vst.msk [vmem:[#allocation2 + $0x28] sm:$0xf] %vm1160, %v1080
    %1172 = vst.msk [vmem:[#allocation2 + $0x2c] sm:$0xf] %vm1160, %v1081
    %1173 = vst.msk [vmem:[#allocation2 + $0x30] sm:$0xf] %vm1160, %v1082
    %1174 = vst.msk [vmem:[#allocation2 + $0x34] sm:$0xf] %vm1160, %v1083
    %1175 = vst.msk [vmem:[#allocation2 + $0x38] sm:$0xf] %vm1160, %v1084
    %1176 = vst.msk [vmem:[#allocation2 + $0x3c] sm:$0xf] %vm1160, %v1085
    %1177 = vst.msk [vmem:[#allocation2 + $0x40] sm:$0xf] %vm1160, %v1086
    %1178 = vst.msk [vmem:[#allocation2 + $0x44] sm:$0xf] %vm1160, %v1087
    %1179 = vst.msk [vmem:[#allocation2 + $0x48] sm:$0xf] %vm1160, %v1088
    %1180 = vst.msk [vmem:[#allocation2 + $0x4c] sm:$0xf] %vm1160, %v1089
    %1181 = vst.msk [vmem:[#allocation2 + $0x50] sm:$0xf] %vm1160, %v1090
    %1182 = vst.msk [vmem:[#allocation2 + $0x54] sm:$0xf] %vm1160, %v1091
    %1183 = vst.msk [vmem:[#allocation2 + $0x58] sm:$0xf] %vm1160, %v1092
    %1184 = vst.msk [vmem:[#allocation2 + $0x5c] sm:$0xf] %vm1160, %v1093
    %1185 = vst.msk [vmem:[#allocation2 + $0x60] sm:$0xf] %vm1160, %v1094
    %1186 = vst.msk [vmem:[#allocation2 + $0x64] sm:$0xf] %vm1160, %v1095
    %1187 = vst.msk [vmem:[#allocation2 + $0x68] sm:$0xf] %vm1160, %v1096
    %1188 = vst.msk [vmem:[#allocation2 + $0x6c] sm:$0xf] %vm1160, %v1097
    %1189 = vst.msk [vmem:[#allocation2 + $0x70] sm:$0xf] %vm1160, %v1098
    %1190 = vst.msk [vmem:[#allocation2 + $0x74] sm:$0xf] %vm1160, %v1099
    %1191 = vst.msk [vmem:[#allocation2 + $0x78] sm:$0xf] %vm1160, %v1100
    %1192 = vst.msk [vmem:[#allocation2 + $0x7c] sm:$0xf] %vm1160, %v1101
    %1193 = vst.msk [vmem:[#allocation2 + $0x80] sm:$0xf] %vm1160, %v1102
    %1194 = vst.msk [vmem:[#allocation2 + $0x84] sm:$0xf] %vm1160, %v1103
    %1195 = vst.msk [vmem:[#allocation2 + $0x88] sm:$0xf] %vm1160, %v1104
    %1196 = vst.msk [vmem:[#allocation2 + $0x8c] sm:$0xf] %vm1160, %v1105
    %1197 = vst.msk [vmem:[#allocation2 + $0x90] sm:$0xf] %vm1160, %v1106
    %1198 = vst.msk [vmem:[#allocation2 + $0x94] sm:$0xf] %vm1160, %v1107
    %1199 = vst.msk [vmem:[#allocation2 + $0x98] sm:$0xf] %vm1160, %v1108
    %1200 = vst.msk [vmem:[#allocation2 + $0x9c] sm:$0xf] %vm1160, %v1109
    %1201 = vst.msk [vmem:[#allocation2 + $0xa0] sm:$0xf] %vm1160, %v1110
    %1202 = vst.msk [vmem:[#allocation2 + $0xa4] sm:$0xf] %vm1160, %v1111
    %1203 = vst.msk [vmem:[#allocation2 + $0xa8] sm:$0xf] %vm1160, %v1112
    %1204 = vst.msk [vmem:[#allocation2 + $0xac] sm:$0xf] %vm1160, %v1113
    %1205 = vst.msk [vmem:[#allocation2 + $0xb0] sm:$0xf] %vm1160, %v1114
    %1206 = vst.msk [vmem:[#allocation2 + $0xb4] sm:$0xf] %vm1160, %v1115
    %1207 = vst.msk [vmem:[#allocation2 + $0xb8] sm:$0xf] %vm1160, %v1116
    %1208 = vst.msk [vmem:[#allocation2 + $0xbc] sm:$0xf] %vm1160, %v1117
    %1209 = vst.msk [vmem:[#allocation2 + $0xc0] sm:$0xf] %vm1160, %v1118
    %1210 = vst.msk [vmem:[#allocation2 + $0xc4] sm:$0xf] %vm1160, %v1119
    %1211 = vst.msk [vmem:[#allocation2 + $0xc8] sm:$0xf] %vm1160, %v1120
    %1212 = vst.msk [vmem:[#allocation2 + $0xcc] sm:$0xf] %vm1160, %v1121
    %1213 = vst.msk [vmem:[#allocation2 + $0xd0] sm:$0xf] %vm1160, %v1122
    %1214 = vst.msk [vmem:[#allocation2 + $0xd4] sm:$0xf] %vm1160, %v1123
    %1215 = vst.msk [vmem:[#allocation2 + $0xd8] sm:$0xf] %vm1160, %v1124
    %1216 = vst.msk [vmem:[#allocation2 + $0xdc] sm:$0xf] %vm1160, %v1125
    %1217 = vst.msk [vmem:[#allocation2 + $0xe0] sm:$0xf] %vm1160, %v1126
    %1218 = vst.msk [vmem:[#allocation2 + $0xe4] sm:$0xf] %vm1160, %v1127
    %1219 = vst.msk [vmem:[#allocation2 + $0xe8] sm:$0xf] %vm1160, %v1128
    %1220 = vst.msk [vmem:[#allocation2 + $0xec] sm:$0xf] %vm1160, %v1129
    %1221 = vst.msk [vmem:[#allocation2 + $0xf0] sm:$0xf] %vm1160, %v1130
    %1222 = vst.msk [vmem:[#allocation2 + $0xf4] sm:$0xf] %vm1160, %v1131
    %1223 = vst.msk [vmem:[#allocation2 + $0xf8] sm:$0xf] %vm1160, %v1132
    %1224 = vst.msk [vmem:[#allocation2 + $0xfc] sm:$0xf] %vm1160, %v1133
    %1225 = vst.msk [vmem:[#allocation2 + $0x100] sm:$0xf] %vm1160, %v1134
    %1226 = vst.msk [vmem:[#allocation2 + $0x104] sm:$0xf] %vm1160, %v1135
    %1227 = vst.msk [vmem:[#allocation2 + $0x108] sm:$0xf] %vm1160, %v1136
    %1228 = vst.msk [vmem:[#allocation2 + $0x10c] sm:$0xf] %vm1160, %v1137
    %1229 = vst.msk [vmem:[#allocation2 + $0x110] sm:$0xf] %vm1160, %v1138
    %1230 = vst.msk [vmem:[#allocation2 + $0x114] sm:$0xf] %vm1160, %v1139
    %1231 = vst.msk [vmem:[#allocation2 + $0x118] sm:$0xf] %vm1160, %v1140
    %1232 = vst.msk [vmem:[#allocation2 + $0x11c] sm:$0xf] %vm1160, %v1141
    %1233 = vst.msk [vmem:[#allocation2 + $0x120] sm:$0xf] %vm1160, %v1142
    %1234 = vst.msk [vmem:[#allocation2 + $0x124] sm:$0xf] %vm1160, %v1143
    %1235 = vst.msk [vmem:[#allocation2 + $0x128] sm:$0xf] %vm1160, %v1144
    %1236 = vst.msk [vmem:[#allocation2 + $0x12c] sm:$0xf] %vm1160, %v1145
    %1237 = vst.msk [vmem:[#allocation2 + $0x130] sm:$0xf] %vm1160, %v1146
    %1238 = vst.msk [vmem:[#allocation2 + $0x134] sm:$0xf] %vm1160, %v1147
    %1239 = vst.msk [vmem:[#allocation2 + $0x138] sm:$0xf] %vm1160, %v1148
    %1240 = vst.msk [vmem:[#allocation2 + $0x13c] sm:$0xf] %vm1160, %v1149
    %1241 = vst.msk [vmem:[#allocation2 + $0x140] sm:$0xf] %vm1160, %v1150
    %1242 = vst.msk [vmem:[#allocation2 + $0x144] sm:$0xf] %vm1160, %v1151
    %1243 = vst.msk [vmem:[#allocation2 + $0x148] sm:$0xf] %vm1160, %v1152
    %1244 = vst.msk [vmem:[#allocation2 + $0x14c] sm:$0xf] %vm1160, %v1153
    %1245 = vst.msk [vmem:[#allocation2 + $0x150] sm:$0xf] %vm1160, %v1154
    %1246 = vst.msk [vmem:[#allocation2 + $0x154] sm:$0xf] %vm1160, %v1155
    %1247 = vst.msk [vmem:[#allocation2 + $0x158] sm:$0xf] %vm1160, %v1156
    %1248 = vst.msk [vmem:[#allocation2 + $0x15c] sm:$0xf] %vm1160, %v1157
    %1249 = vst.msk [vmem:[#allocation2 + $0x160] sm:$0xf] %vm1160, %v1158
    %vm1250 = vcmask 254976
    %1251 = vst.msk [vmem:[#allocation2 + $0x164] sm:$0x3] %vm1250, %v1159
    %v1252 = vld [vmem:[#allocation2] sm:$0xf]
    %v1253 = vld [vmem:[#allocation2 + $0x4] sm:$0xf]
    %v1254 = vld [vmem:[#allocation2 + $0x8] sm:$0xf]
    %v1255 = vld [vmem:[#allocation2 + $0xc] sm:$0xf]
    %v1256 = vld [vmem:[#allocation2 + $0x10] sm:$0xf]
    %v1257 = vld [vmem:[#allocation2 + $0x14] sm:$0xf]
    %v1258 = vld [vmem:[#allocation2 + $0x18] sm:$0xf]
    %v1259 = vld [vmem:[#allocation2 + $0x1c] sm:$0xf]
    %v1260 = vld [vmem:[#allocation2 + $0x20] sm:$0xf]
    %v1261 = vld [vmem:[#allocation2 + $0x24] sm:$0xf]
    %v1262 = vld [vmem:[#allocation2 + $0x28] sm:$0xf]
    %v1263 = vld [vmem:[#allocation2 + $0x2c] sm:$0xf]
    %v1264 = vld [vmem:[#allocation2 + $0x30] sm:$0xf]
    %v1265 = vld [vmem:[#allocation2 + $0x34] sm:$0xf]
    %v1266 = vld [vmem:[#allocation2 + $0x38] sm:$0xf]
    %v1267 = vld [vmem:[#allocation2 + $0x3c] sm:$0xf]
    %v1268 = vld [vmem:[#allocation2 + $0x40] sm:$0xf]
    %v1269 = vld [vmem:[#allocation2 + $0x44] sm:$0xf]
    %v1270 = vld [vmem:[#allocation2 + $0x48] sm:$0xf]
    %v1271 = vld [vmem:[#allocation2 + $0x4c] sm:$0xf]
    %v1272 = vld [vmem:[#allocation2 + $0x50] sm:$0xf]
    %v1273 = vld [vmem:[#allocation2 + $0x54] sm:$0xf]
    %v1274 = vld [vmem:[#allocation2 + $0x58] sm:$0xf]
    %v1275 = vld [vmem:[#allocation2 + $0x5c] sm:$0xf]
    %v1276 = vld [vmem:[#allocation2 + $0x60] sm:$0xf]
    %v1277 = vld [vmem:[#allocation2 + $0x64] sm:$0xf]
    %v1278 = vld [vmem:[#allocation2 + $0x68] sm:$0xf]
    %v1279 = vld [vmem:[#allocation2 + $0x6c] sm:$0xf]
    %v1280 = vld [vmem:[#allocation2 + $0x70] sm:$0xf]
    %v1281 = vld [vmem:[#allocation2 + $0x74] sm:$0xf]
    %v1282 = vld [vmem:[#allocation2 + $0x78] sm:$0xf]
    %v1283 = vld [vmem:[#allocation2 + $0x7c] sm:$0xf]
    %v1284 = vld [vmem:[#allocation2 + $0x80] sm:$0xf]
    %v1285 = vld [vmem:[#allocation2 + $0x84] sm:$0xf]
    %v1286 = vld [vmem:[#allocation2 + $0x88] sm:$0xf]
    %v1287 = vld [vmem:[#allocation2 + $0x8c] sm:$0xf]
    %v1288 = vld [vmem:[#allocation2 + $0x90] sm:$0xf]
    %v1289 = vunpack.c.l.bf16 %v1252
    %v1290 = vunpack.c.l.bf16 %v1253
    %v1291 = vunpack.c.l.bf16 %v1254
    %v1292 = vunpack.c.l.bf16 %v1255
    %v1293 = vunpack.c.l.bf16 %v1256
    %v1294 = vunpack.c.l.bf16 %v1257
    %v1295 = vunpack.c.l.bf16 %v1258
    %v1296 = vunpack.c.l.bf16 %v1259
    %v1297 = vunpack.c.l.bf16 %v1260
    %v1298 = vunpack.c.l.bf16 %v1261
    %v1299 = vunpack.c.l.bf16 %v1262
    %v1300 = vunpack.c.l.bf16 %v1263
    %v1301 = vunpack.c.l.bf16 %v1264
    %v1302 = vunpack.c.l.bf16 %v1265
    %v1303 = vunpack.c.l.bf16 %v1266
    %v1304 = vunpack.c.l.bf16 %v1267
    %v1305 = vunpack.c.l.bf16 %v1268
    %v1306 = vunpack.c.l.bf16 %v1269
    %v1307 = vunpack.c.l.bf16 %v1270
    %v1308 = vunpack.c.l.bf16 %v1271
    %v1309 = vunpack.c.l.bf16 %v1272
    %v1310 = vunpack.c.l.bf16 %v1273
    %v1311 = vunpack.c.l.bf16 %v1274
    %v1312 = vunpack.c.l.bf16 %v1275
    %v1313 = vunpack.c.l.bf16 %v1276
    %v1314 = vunpack.c.l.bf16 %v1277
    %v1315 = vunpack.c.l.bf16 %v1278
    %v1316 = vunpack.c.l.bf16 %v1279
    %v1317 = vunpack.c.l.bf16 %v1280
    %v1318 = vunpack.c.l.bf16 %v1281
    %v1319 = vunpack.c.l.bf16 %v1282
    %v1320 = vunpack.c.l.bf16 %v1283
    %v1321 = vunpack.c.l.bf16 %v1284
    %v1322 = vunpack.c.l.bf16 %v1285
    %v1323 = vunpack.c.l.bf16 %v1286
    %v1324 = vunpack.c.l.bf16 %v1287
    %v1325 = vunpack.c.l.bf16 %v1288
    %vm1363 = vcmask 1046528
    %v1364 = vrot.slane %v1289, 1
    %v1365 = vrot.slane %v1290, 1
    %v1366 = vsel %vm1363, %v1364, %v1365
    %v1367 = vrot.slane %v1291, 1
    %v1368 = vsel %vm1363, %v1365, %v1367
    %v1369 = vrot.slane %v1292, 1
    %v1370 = vsel %vm1363, %v1367, %v1369
    %v1371 = vrot.slane %v1293, 1
    %v1372 = vsel %vm1363, %v1369, %v1371
    %v1373 = vrot.slane %v1294, 1
    %v1374 = vsel %vm1363, %v1371, %v1373
    %v1375 = vrot.slane %v1295, 1
    %v1376 = vsel %vm1363, %v1373, %v1375
    %v1377 = vrot.slane %v1296, 1
    %v1378 = vsel %vm1363, %v1375, %v1377
    %v1379 = vrot.slane %v1297, 1
    %v1380 = vsel %vm1363, %v1377, %v1379
    %v1381 = vrot.slane %v1298, 1
    %v1382 = vsel %vm1363, %v1379, %v1381
    %v1383 = vrot.slane %v1299, 1
    %v1384 = vsel %vm1363, %v1381, %v1383
    %v1385 = vrot.slane %v1300, 1
    %v1386 = vsel %vm1363, %v1383, %v1385
    %v1387 = vrot.slane %v1301, 1
    %v1388 = vsel %vm1363, %v1385, %v1387
    %v1389 = vrot.slane %v1302, 1
    %v1390 = vsel %vm1363, %v1387, %v1389
    %v1391 = vrot.slane %v1303, 1
    %v1392 = vsel %vm1363, %v1389, %v1391
    %v1393 = vrot.slane %v1304, 1
    %v1394 = vsel %vm1363, %v1391, %v1393
    %v1395 = vrot.slane %v1305, 1
    %v1396 = vsel %vm1363, %v1393, %v1395
    %v1397 = vrot.slane %v1306, 1
    %v1398 = vsel %vm1363, %v1395, %v1397
    %v1399 = vrot.slane %v1307, 1
    %v1400 = vsel %vm1363, %v1397, %v1399
    %v1401 = vrot.slane %v1308, 1
    %v1402 = vsel %vm1363, %v1399, %v1401
    %v1403 = vrot.slane %v1309, 1
    %v1404 = vsel %vm1363, %v1401, %v1403
    %v1405 = vrot.slane %v1310, 1
    %v1406 = vsel %vm1363, %v1403, %v1405
    %v1407 = vrot.slane %v1311, 1
    %v1408 = vsel %vm1363, %v1405, %v1407
    %v1409 = vrot.slane %v1312, 1
    %v1410 = vsel %vm1363, %v1407, %v1409
    %v1411 = vrot.slane %v1313, 1
    %v1412 = vsel %vm1363, %v1409, %v1411
    %v1413 = vrot.slane %v1314, 1
    %v1414 = vsel %vm1363, %v1411, %v1413
    %v1415 = vrot.slane %v1315, 1
    %v1416 = vsel %vm1363, %v1413, %v1415
    %v1417 = vrot.slane %v1316, 1
    %v1418 = vsel %vm1363, %v1415, %v1417
    %v1419 = vrot.slane %v1317, 1
    %v1420 = vsel %vm1363, %v1417, %v1419
    %v1421 = vrot.slane %v1318, 1
    %v1422 = vsel %vm1363, %v1419, %v1421
    %v1423 = vrot.slane %v1319, 1
    %v1424 = vsel %vm1363, %v1421, %v1423
    %v1425 = vrot.slane %v1320, 1
    %v1426 = vsel %vm1363, %v1423, %v1425
    %v1427 = vrot.slane %v1321, 1
    %v1428 = vsel %vm1363, %v1425, %v1427
    %v1429 = vrot.slane %v1322, 1
    %v1430 = vsel %vm1363, %v1427, %v1429
    %v1431 = vrot.slane %v1323, 1
    %v1432 = vsel %vm1363, %v1429, %v1431
    %v1433 = vrot.slane %v1324, 1
    %v1434 = vsel %vm1363, %v1431, %v1433
    %v1435 = vrot.slane %v1325, 1
    %v1436 = vsel %vm1363, %v1433, %v1435
    %v1474 = vmax.f32 %v1289, %v1366
    %v1475 = vmax.f32 %v1290, %v1368
    %v1476 = vmax.f32 %v1291, %v1370
    %v1477 = vmax.f32 %v1292, %v1372
    %v1478 = vmax.f32 %v1293, %v1374
    %v1479 = vmax.f32 %v1294, %v1376
    %v1480 = vmax.f32 %v1295, %v1378
    %v1481 = vmax.f32 %v1296, %v1380
    %v1482 = vmax.f32 %v1297, %v1382
    %v1483 = vmax.f32 %v1298, %v1384
    %v1484 = vmax.f32 %v1299, %v1386
    %v1485 = vmax.f32 %v1300, %v1388
    %v1486 = vmax.f32 %v1301, %v1390
    %v1487 = vmax.f32 %v1302, %v1392
    %v1488 = vmax.f32 %v1303, %v1394
    %v1489 = vmax.f32 %v1304, %v1396
    %v1490 = vmax.f32 %v1305, %v1398
    %v1491 = vmax.f32 %v1306, %v1400
    %v1492 = vmax.f32 %v1307, %v1402
    %v1493 = vmax.f32 %v1308, %v1404
    %v1494 = vmax.f32 %v1309, %v1406
    %v1495 = vmax.f32 %v1310, %v1408
    %v1496 = vmax.f32 %v1311, %v1410
    %v1497 = vmax.f32 %v1312, %v1412
    %v1498 = vmax.f32 %v1313, %v1414
    %v1499 = vmax.f32 %v1314, %v1416
    %v1500 = vmax.f32 %v1315, %v1418
    %v1501 = vmax.f32 %v1316, %v1420
    %v1502 = vmax.f32 %v1317, %v1422
    %v1503 = vmax.f32 %v1318, %v1424
    %v1504 = vmax.f32 %v1319, %v1426
    %v1505 = vmax.f32 %v1320, %v1428
    %v1506 = vmax.f32 %v1321, %v1430
    %v1507 = vmax.f32 %v1322, %v1432
    %v1508 = vmax.f32 %v1323, %v1434
    %v1509 = vmax.f32 %v1324, %v1436
    %v1510 = vmax.f32 %v1325, %v1435
    %v1511 = vpack.c.bf16 %v1474, %v1474
    %v1512 = vpack.c.bf16 %v1475, %v1475
    %v1513 = vpack.c.bf16 %v1476, %v1476
    %v1514 = vpack.c.bf16 %v1477, %v1477
    %v1515 = vpack.c.bf16 %v1478, %v1478
    %v1516 = vpack.c.bf16 %v1479, %v1479
    %v1517 = vpack.c.bf16 %v1480, %v1480
    %v1518 = vpack.c.bf16 %v1481, %v1481
    %v1519 = vpack.c.bf16 %v1482, %v1482
    %v1520 = vpack.c.bf16 %v1483, %v1483
    %v1521 = vpack.c.bf16 %v1484, %v1484
    %v1522 = vpack.c.bf16 %v1485, %v1485
    %v1523 = vpack.c.bf16 %v1486, %v1486
    %v1524 = vpack.c.bf16 %v1487, %v1487
    %v1525 = vpack.c.bf16 %v1488, %v1488
    %v1526 = vpack.c.bf16 %v1489, %v1489
    %v1527 = vpack.c.bf16 %v1490, %v1490
    %v1528 = vpack.c.bf16 %v1491, %v1491
    %v1529 = vpack.c.bf16 %v1492, %v1492
    %v1530 = vpack.c.bf16 %v1493, %v1493
    %v1531 = vpack.c.bf16 %v1494, %v1494
    %v1532 = vpack.c.bf16 %v1495, %v1495
    %v1533 = vpack.c.bf16 %v1496, %v1496
    %v1534 = vpack.c.bf16 %v1497, %v1497
    %v1535 = vpack.c.bf16 %v1498, %v1498
    %v1536 = vpack.c.bf16 %v1499, %v1499
    %v1537 = vpack.c.bf16 %v1500, %v1500
    %v1538 = vpack.c.bf16 %v1501, %v1501
    %v1539 = vpack.c.bf16 %v1502, %v1502
    %v1540 = vpack.c.bf16 %v1503, %v1503
    %v1541 = vpack.c.bf16 %v1504, %v1504
    %v1542 = vpack.c.bf16 %v1505, %v1505
    %v1543 = vpack.c.bf16 %v1506, %v1506
    %v1544 = vpack.c.bf16 %v1507, %v1507
    %v1545 = vpack.c.bf16 %v1508, %v1508
    %v1546 = vpack.c.bf16 %v1509, %v1509
    %v1547 = vpack.c.bf16 %v1510, %v1510
    %v1548 = vld [vmem:[#allocation2 + $0x8] sm:$0xc]
    %v1549 = vld [vmem:[#allocation2 + $0x94] sm:$0xf]
    %v1550 = vld [vmem:[#allocation2 + $0x98] sm:$0xf]
    %v1551 = vld [vmem:[#allocation2 + $0x9c] sm:$0x3]
    %v1552 = vunpack.c.l.bf16 %v1548
    %v1553 = vunpack.c.l.bf16 %v1549
    %v1554 = vunpack.c.l.bf16 %v1550
    %v1555 = vunpack.c.l.bf16 %v1551
    %v1560 = vrot.slane %v1552, 1
    %v1561 = vsel %vm1363, %v1560, %v1369
    %v1562 = vrot.slane %v1553, 1
    %v1563 = vsel %vm1363, %v1435, %v1562
    %v1564 = vrot.slane %v1554, 1
    %v1565 = vsel %vm1363, %v1562, %v1564
    %v1566 = vrot.slane %v1555, 1
    %v1567 = vsel %vm1363, %v1564, %v1566
    %v1573 = vmax.f32 %v1552, %v1561
    %v1574 = vmax.f32 %v1325, %v1563
    %v1575 = vmax.f32 %v1553, %v1565
    %v1576 = vmax.f32 %v1554, %v1567
    %v1577 = vmax.f32 %v1555, %v1566
    %v1578 = vpack.c.bf16 %v1573, %v1573
    %v1579 = vpack.c.bf16 %v1574, %v1574
    %v1580 = vpack.c.bf16 %v1575, %v1575
    %v1581 = vpack.c.bf16 %v1576, %v1576
    %v1582 = vpack.c.bf16 %v1577, %v1577
    %v1583 = vunpack.c.l.bf16 %v1511
    %v1584 = vunpack.c.l.bf16 %v1512
    %v1585 = vunpack.c.l.bf16 %v1513
    %v1586 = vunpack.c.l.bf16 %v1514
    %v1587 = vunpack.c.l.bf16 %v1515
    %v1588 = vunpack.c.l.bf16 %v1516
    %v1589 = vunpack.c.l.bf16 %v1517
    %v1590 = vunpack.c.l.bf16 %v1518
    %v1591 = vunpack.c.l.bf16 %v1519
    %v1592 = vunpack.c.l.bf16 %v1520
    %v1593 = vunpack.c.l.bf16 %v1521
    %v1594 = vunpack.c.l.bf16 %v1522
    %v1595 = vunpack.c.l.bf16 %v1523
    %v1596 = vunpack.c.l.bf16 %v1524
    %v1597 = vunpack.c.l.bf16 %v1525
    %v1598 = vunpack.c.l.bf16 %v1526
    %v1599 = vunpack.c.l.bf16 %v1527
    %v1600 = vunpack.c.l.bf16 %v1528
    %v1601 = vunpack.c.l.bf16 %v1529
    %v1602 = vunpack.c.l.bf16 %v1530
    %v1603 = vunpack.c.l.bf16 %v1531
    %v1604 = vunpack.c.l.bf16 %v1532
    %v1605 = vunpack.c.l.bf16 %v1533
    %v1606 = vunpack.c.l.bf16 %v1534
    %v1607 = vunpack.c.l.bf16 %v1535
    %v1608 = vunpack.c.l.bf16 %v1536
    %v1609 = vunpack.c.l.bf16 %v1537
    %v1610 = vunpack.c.l.bf16 %v1538
    %v1611 = vunpack.c.l.bf16 %v1539
    %v1612 = vunpack.c.l.bf16 %v1540
    %v1613 = vunpack.c.l.bf16 %v1541
    %v1614 = vunpack.c.l.bf16 %v1542
    %v1615 = vunpack.c.l.bf16 %v1543
    %v1616 = vunpack.c.l.bf16 %v1544
    %v1617 = vunpack.c.l.bf16 %v1545
    %v1618 = vunpack.c.l.bf16 %v1546
    %v1619 = vunpack.c.l.bf16 %v1547
    %v1620 = vunpack.c.l.bf16 %v1578
    %v1621 = vunpack.c.l.bf16 %v1579
    %v1622 = vunpack.c.l.bf16 %v1580
    %v1623 = vunpack.c.l.bf16 %v1581
    %v1624 = vunpack.c.l.bf16 %v1582
    %vm1663 = vcmask 1043456
    %v1664 = vrot.slane %v1620, 4
    %v1665 = vrot.slane %v1586, 4
    %v1666 = vsel %vm1663, %v1664, %v1665
    %v1667 = vrot.slane %v1587, 4
    %v1668 = vsel %vm1663, %v1665, %v1667
    %v1669 = vrot.slane %v1588, 4
    %v1670 = vsel %vm1663, %v1667, %v1669
    %v1671 = vrot.slane %v1589, 4
    %v1672 = vsel %vm1663, %v1669, %v1671
    %v1673 = vrot.slane %v1590, 4
    %v1674 = vsel %vm1663, %v1671, %v1673
    %v1675 = vrot.slane %v1591, 4
    %v1676 = vsel %vm1663, %v1673, %v1675
    %v1677 = vrot.slane %v1592, 4
    %v1678 = vsel %vm1663, %v1675, %v1677
    %v1679 = vrot.slane %v1593, 4
    %v1680 = vsel %vm1663, %v1677, %v1679
    %v1681 = vrot.slane %v1594, 4
    %v1682 = vsel %vm1663, %v1679, %v1681
    %v1683 = vrot.slane %v1595, 4
    %v1684 = vsel %vm1663, %v1681, %v1683
    %v1685 = vrot.slane %v1596, 4
    %v1686 = vsel %vm1663, %v1683, %v1685
    %v1687 = vrot.slane %v1597, 4
    %v1688 = vsel %vm1663, %v1685, %v1687
    %v1689 = vrot.slane %v1598, 4
    %v1690 = vsel %vm1663, %v1687, %v1689
    %v1691 = vrot.slane %v1599, 4
    %v1692 = vsel %vm1663, %v1689, %v1691
    %v1693 = vrot.slane %v1600, 4
    %v1694 = vsel %vm1663, %v1691, %v1693
    %v1695 = vrot.slane %v1601, 4
    %v1696 = vsel %vm1663, %v1693, %v1695
    %v1697 = vrot.slane %v1602, 4
    %v1698 = vsel %vm1663, %v1695, %v1697
    %v1699 = vrot.slane %v1603, 4
    %v1700 = vsel %vm1663, %v1697, %v1699
    %v1701 = vrot.slane %v1604, 4
    %v1702 = vsel %vm1663, %v1699, %v1701
    %v1703 = vrot.slane %v1605, 4
    %v1704 = vsel %vm1663, %v1701, %v1703
    %v1705 = vrot.slane %v1606, 4
    %v1706 = vsel %vm1663, %v1703, %v1705
    %v1707 = vrot.slane %v1607, 4
    %v1708 = vsel %vm1663, %v1705, %v1707
    %v1709 = vrot.slane %v1608, 4
    %v1710 = vsel %vm1663, %v1707, %v1709
    %v1711 = vrot.slane %v1609, 4
    %v1712 = vsel %vm1663, %v1709, %v1711
    %v1713 = vrot.slane %v1610, 4
    %v1714 = vsel %vm1663, %v1711, %v1713
    %v1715 = vrot.slane %v1611, 4
    %v1716 = vsel %vm1663, %v1713, %v1715
    %v1717 = vrot.slane %v1612, 4
    %v1718 = vsel %vm1663, %v1715, %v1717
    %v1719 = vrot.slane %v1613, 4
    %v1720 = vsel %vm1663, %v1717, %v1719
    %v1721 = vrot.slane %v1614, 4
    %v1722 = vsel %vm1663, %v1719, %v1721
    %v1723 = vrot.slane %v1615, 4
    %v1724 = vsel %vm1663, %v1721, %v1723
    %v1725 = vrot.slane %v1616, 4
    %v1726 = vsel %vm1663, %v1723, %v1725
    %v1727 = vrot.slane %v1617, 4
    %v1728 = vsel %vm1663, %v1725, %v1727
    %v1729 = vrot.slane %v1618, 4
    %v1730 = vsel %vm1663, %v1727, %v1729
    %v1731 = vrot.slane %v1621, 4
    %v1732 = vsel %vm1663, %v1729, %v1731
    %v1733 = vrot.slane %v1622, 4
    %v1734 = vsel %vm1663, %v1731, %v1733
    %v1735 = vrot.slane %v1623, 4
    %v1736 = vsel %vm1663, %v1733, %v1735
    %v1737 = vrot.slane %v1624, 4
    %v1738 = vsel %vm1663, %v1735, %v1737
    %v1776 = vmax.f32 %v1583, %v1666
    %v1777 = vmax.f32 %v1584, %v1668
    %v1778 = vmax.f32 %v1585, %v1670
    %v1779 = vmax.f32 %v1586, %v1672
    %v1780 = vmax.f32 %v1587, %v1674
    %v1781 = vmax.f32 %v1588, %v1676
    %v1782 = vmax.f32 %v1589, %v1678
    %v1783 = vmax.f32 %v1590, %v1680
    %v1784 = vmax.f32 %v1591, %v1682
    %v1785 = vmax.f32 %v1592, %v1684
    %v1786 = vmax.f32 %v1593, %v1686
    %v1787 = vmax.f32 %v1594, %v1688
    %v1788 = vmax.f32 %v1595, %v1690
    %v1789 = vmax.f32 %v1596, %v1692
    %v1790 = vmax.f32 %v1597, %v1694
    %v1791 = vmax.f32 %v1598, %v1696
    %v1792 = vmax.f32 %v1599, %v1698
    %v1793 = vmax.f32 %v1600, %v1700
    %v1794 = vmax.f32 %v1601, %v1702
    %v1795 = vmax.f32 %v1602, %v1704
    %v1796 = vmax.f32 %v1603, %v1706
    %v1797 = vmax.f32 %v1604, %v1708
    %v1798 = vmax.f32 %v1605, %v1710
    %v1799 = vmax.f32 %v1606, %v1712
    %v1800 = vmax.f32 %v1607, %v1714
    %v1801 = vmax.f32 %v1608, %v1716
    %v1802 = vmax.f32 %v1609, %v1718
    %v1803 = vmax.f32 %v1610, %v1720
    %v1804 = vmax.f32 %v1611, %v1722
    %v1805 = vmax.f32 %v1612, %v1724
    %v1806 = vmax.f32 %v1613, %v1726
    %v1807 = vmax.f32 %v1614, %v1728
    %v1808 = vmax.f32 %v1615, %v1730
    %v1809 = vmax.f32 %v1616, %v1732
    %v1810 = vmax.f32 %v1617, %v1734
    %v1811 = vmax.f32 %v1618, %v1736
    %v1812 = vmax.f32 %v1619, %v1738
    %v1813 = vpack.c.bf16 %v1777, %v1776
    %v1814 = vpack.c.bf16 %v1779, %v1778
    %v1815 = vpack.c.bf16 %v1781, %v1780
    %v1816 = vpack.c.bf16 %v1783, %v1782
    %v1817 = vpack.c.bf16 %v1785, %v1784
    %v1818 = vpack.c.bf16 %v1787, %v1786
    %v1819 = vpack.c.bf16 %v1789, %v1788
    %v1820 = vpack.c.bf16 %v1791, %v1790
    %v1821 = vpack.c.bf16 %v1793, %v1792
    %v1822 = vpack.c.bf16 %v1795, %v1794
    %v1823 = vpack.c.bf16 %v1797, %v1796
    %v1824 = vpack.c.bf16 %v1799, %v1798
    %v1825 = vpack.c.bf16 %v1801, %v1800
    %v1826 = vpack.c.bf16 %v1803, %v1802
    %v1827 = vpack.c.bf16 %v1805, %v1804
    %v1828 = vpack.c.bf16 %v1807, %v1806
    %v1829 = vpack.c.bf16 %v1809, %v1808
    %v1830 = vpack.c.bf16 %v1811, %v1810
    %v1831 = vpack.c.bf16 %v1812, %v1812
    %v1832 = vld [vmem:[%s13] sm:$0xff]
    %v1833 = vld [vmem:[%s13 + $0x8] sm:$0xf]
    %v1834 = vld [vmem:[%s13 + $0xc] sm:$0xff]
    %v1835 = vld [vmem:[%s13 + $0x14] sm:$0xf]
    %v1836 = vld [vmem:[%s13 + $0x18] sm:$0xff]
    %v1837 = vld [vmem:[%s13 + $0x20] sm:$0xf]
    %v1838 = vld [vmem:[%s13 + $0x24] sm:$0xff]
    %v1839 = vld [vmem:[%s13 + $0x2c] sm:$0xf]
    %v1840 = vld [vmem:[%s13 + $0x30] sm:$0xff]
    %v1841 = vld [vmem:[%s13 + $0x38] sm:$0xf]
    %v1842 = vld [vmem:[%s13 + $0x3c] sm:$0xff]
    %v1843 = vld [vmem:[%s13 + $0x44] sm:$0xf]
    %v1844 = vld [vmem:[%s13 + $0x48] sm:$0xff]
    %v1845 = vld [vmem:[%s13 + $0x50] sm:$0xf]
    %v1846 = vld [vmem:[%s13 + $0x54] sm:$0xff]
    %v1847 = vld [vmem:[%s13 + $0x5c] sm:$0xf]
    %v1848 = vld [vmem:[%s13 + $0x60] sm:$0xff]
    %v1849 = vld [vmem:[%s13 + $0x68] sm:$0xf]
    %v1850 = vld [vmem:[%s13 + $0x6c] sm:$0xff]
    %v1851 = vld [vmem:[%s13 + $0x74] sm:$0xf]
    %v1852 = vld [vmem:[%s13 + $0x78] sm:$0xff]
    %v1853 = vld [vmem:[%s13 + $0x80] sm:$0xf]
    %v1854 = vld [vmem:[%s13 + $0x84] sm:$0xff]
    %v1855 = vld [vmem:[%s13 + $0x8c] sm:$0xf]
    %v1856 = vld [vmem:[%s13 + $0x90] sm:$0x33]
    %v1857 = vld [vmem:[%s13 + $0x98] sm:$0x3]
    %v1884 = vunpack.c.l.b16 %v1832
    %v1885 = vunpack.c.h.b16 %v1832
    %v1886 = vunpack.c.l.b16 %v1833
    %v1887 = vunpack.c.l.b16 %v1834
    %v1888 = vunpack.c.h.b16 %v1834
    %v1889 = vunpack.c.l.b16 %v1835
    %v1890 = vunpack.c.l.b16 %v1836
    %v1891 = vunpack.c.h.b16 %v1836
    %v1892 = vunpack.c.l.b16 %v1837
    %v1893 = vunpack.c.l.b16 %v1838
    %v1894 = vunpack.c.h.b16 %v1838
    %v1895 = vunpack.c.l.b16 %v1839
    %v1896 = vunpack.c.l.b16 %v1840
    %v1897 = vunpack.c.h.b16 %v1840
    %v1898 = vunpack.c.l.b16 %v1841
    %v1899 = vunpack.c.l.b16 %v1842
    %v1900 = vunpack.c.h.b16 %v1842
    %v1901 = vunpack.c.l.b16 %v1843
    %v1902 = vunpack.c.l.b16 %v1844
    %v1903 = vunpack.c.h.b16 %v1844
    %v1904 = vunpack.c.l.b16 %v1845
    %v1905 = vunpack.c.l.b16 %v1846
    %v1906 = vunpack.c.h.b16 %v1846
    %v1907 = vunpack.c.l.b16 %v1847
    %v1908 = vunpack.c.l.b16 %v1848
    %v1909 = vunpack.c.h.b16 %v1848
    %v1910 = vunpack.c.l.b16 %v1849
    %v1911 = vunpack.c.l.b16 %v1850
    %v1912 = vunpack.c.h.b16 %v1850
    %v1913 = vunpack.c.l.b16 %v1851
    %v1914 = vunpack.c.l.b16 %v1852
    %v1915 = vunpack.c.h.b16 %v1852
    %v1916 = vunpack.c.l.b16 %v1853
    %v1917 = vunpack.c.l.b16 %v1854
    %v1918 = vunpack.c.h.b16 %v1854
    %v1919 = vunpack.c.l.b16 %v1855
    %v1920 = vunpack.c.l.b16 %v1856
    %v1921 = vunpack.c.h.b16 %v1856
    %v1922 = vunpack.c.l.b16 %v1857
    %v1923 = vpack.c.b16 %v1887, %v1884
    %v1924 = vpack.c.b16 %v1888, %v1885
    %v1925 = vpack.c.b16 %v1889, %v1886
    %v1926 = vpack.c.b16 %v1893, %v1890
    %v1927 = vpack.c.b16 %v1894, %v1891
    %v1928 = vpack.c.b16 %v1895, %v1892
    %v1929 = vpack.c.b16 %v1899, %v1896
    %v1930 = vpack.c.b16 %v1900, %v1897
    %v1931 = vpack.c.b16 %v1901, %v1898
    %v1932 = vpack.c.b16 %v1905, %v1902
    %v1933 = vpack.c.b16 %v1906, %v1903
    %v1934 = vpack.c.b16 %v1907, %v1904
    %v1935 = vpack.c.b16 %v1911, %v1908
    %v1936 = vpack.c.b16 %v1912, %v1909
    %v1937 = vpack.c.b16 %v1913, %v1910
    %v1938 = vpack.c.b16 %v1917, %v1914
    %v1939 = vpack.c.b16 %v1918, %v1915
    %v1940 = vpack.c.b16 %v1919, %v1916
    %v1941 = vpack.c.b16 %v1920, %v1920
    %v1942 = vpack.c.b16 %v1921, %v1921
    %v1943 = vpack.c.b16 %v1922, %v1922
    %vm1958 = vcmask 318464
    %v1960 = vsel %vm1958, %v1925, 0
    %v1963 = vsel %vm1958, %v1928, 0
    %v1966 = vsel %vm1958, %v1931, 0
    %v1969 = vsel %vm1958, %v1934, 0
    %v1972 = vsel %vm1958, %v1937, 0
    %v1975 = vsel %vm1958, %v1940, 0
    %v1978 = vsel %vm1958, %v1943, 0
    %vm1980 = vcmask 1042432
    %v1981 = vsel %vm1980, 4294967295, 65535
    %v1982 = vsel %vm1663, %v1981, 0
    %v1984 = vand.u32 %v1831, %v1982
    %1986 = vmatpush.bf16.msra.mxu0 %v1820
    %1987 = vmatpush.bf16.msra.mxu0 %v1819
    %1988 = vmatpush.bf16.msra.mxu0 %v1818
    %1989 = vmatpush.bf16.msra.mxu0 %v1817
    %1990 = vmatpush.bf16.msra.mxu0 %v1816
    %1991 = vmatpush.bf16.msra.mxu0 %v1815
    %1992 = vmatpush.bf16.msra.mxu0 %v1814
    %1993 = vmatpush.bf16.msra.mxu0 %v1813
    %1994 = vmatmul.bf16.gmra.mxu0 %v1923
    %v1995 = vpop.f32.mrf.mxu0
    %v1996 = vadd.f32 0.0, %v1995
    %v1997 = vpop.f32.mrf.mxu0
    %v1998 = vadd.f32 0.0, %v1997
    %1999 = vmatmul.bf16.gmra.mxu0 %v1926
    %v2000 = vpop.f32.mrf.mxu0
    %v2001 = vadd.f32 0.0, %v2000
    %v2002 = vpop.f32.mrf.mxu0
    %v2003 = vadd.f32 0.0, %v2002
    %2004 = vmatmul.bf16.gmra.mxu0 %v1929
    %v2005 = vpop.f32.mrf.mxu0
    %v2006 = vadd.f32 0.0, %v2005
    %v2007 = vpop.f32.mrf.mxu0
    %v2008 = vadd.f32 0.0, %v2007
    %2009 = vmatmul.bf16.gmra.mxu0 %v1932
    %v2010 = vpop.f32.mrf.mxu0
    %v2011 = vadd.f32 0.0, %v2010
    %v2012 = vpop.f32.mrf.mxu0
    %v2013 = vadd.f32 0.0, %v2012
    %2014 = vmatmul.bf16.gmra.mxu0 %v1935
    %v2015 = vpop.f32.mrf.mxu0
    %v2016 = vadd.f32 0.0, %v2015
    %v2017 = vpop.f32.mrf.mxu0
    %v2018 = vadd.f32 0.0, %v2017
    %2019 = vmatmul.bf16.gmra.mxu0 %v1938
    %v2020 = vpop.f32.mrf.mxu0
    %v2021 = vadd.f32 0.0, %v2020
    %v2022 = vpop.f32.mrf.mxu0
    %v2023 = vadd.f32 0.0, %v2022
    %2024 = vmatmul.bf16.gmra.mxu0 %v1941
    %v2025 = vpop.f32.mrf.mxu0
    %v2026 = vadd.f32 0.0, %v2025
    %v2027 = vpop.f32.mrf.mxu0
    %2028 = vdwg.mxu0
    %2029 = vmatpush.bf16.msra.mxu0 %v1828
    %2030 = vmatpush.bf16.msra.mxu0 %v1827
    %2031 = vmatpush.bf16.msra.mxu0 %v1826
    %2032 = vmatpush.bf16.msra.mxu0 %v1825
    %2033 = vmatpush.bf16.msra.mxu0 %v1824
    %2034 = vmatpush.bf16.msra.mxu0 %v1823
    %2035 = vmatpush.bf16.msra.mxu0 %v1822
    %2036 = vmatpush.bf16.msra.mxu0 %v1821
    %2037 = vmatmul.bf16.gmra.mxu0 %v1924
    %v2038 = vpop.f32.mrf.mxu0
    %v2039 = vadd.f32 %v1996, %v2038
    %v2040 = vpop.f32.mrf.mxu0
    %v2041 = vadd.f32 %v1998, %v2040
    %2042 = vmatmul.bf16.gmra.mxu0 %v1927
    %v2043 = vpop.f32.mrf.mxu0
    %v2044 = vadd.f32 %v2001, %v2043
    %v2045 = vpop.f32.mrf.mxu0
    %v2046 = vadd.f32 %v2003, %v2045
    %2047 = vmatmul.bf16.gmra.mxu0 %v1930
    %v2048 = vpop.f32.mrf.mxu0
    %v2049 = vadd.f32 %v2006, %v2048
    %v2050 = vpop.f32.mrf.mxu0
    %v2051 = vadd.f32 %v2008, %v2050
    %2052 = vmatmul.bf16.gmra.mxu0 %v1933
    %v2053 = vpop.f32.mrf.mxu0
    %v2054 = vadd.f32 %v2011, %v2053
    %v2055 = vpop.f32.mrf.mxu0
    %v2056 = vadd.f32 %v2013, %v2055
    %2057 = vmatmul.bf16.gmra.mxu0 %v1936
    %v2058 = vpop.f32.mrf.mxu0
    %v2059 = vadd.f32 %v2016, %v2058
    %v2060 = vpop.f32.mrf.mxu0
    %v2061 = vadd.f32 %v2018, %v2060
    %2062 = vmatmul.bf16.gmra.mxu0 %v1939
    %v2063 = vpop.f32.mrf.mxu0
    %v2064 = vadd.f32 %v2021, %v2063
    %v2065 = vpop.f32.mrf.mxu0
    %v2066 = vadd.f32 %v2023, %v2065
    %2067 = vmatmul.bf16.gmra.mxu0 %v1942
    %v2068 = vpop.f32.mrf.mxu0
    %v2069 = vadd.f32 %v2026, %v2068
    %v2070 = vpop.f32.mrf.mxu0
    %2071 = vdwg.mxu0
    %2072 = vmatpush.bf16.msra.mxu0 0
    %2073 = vmatpush.bf16.msra.mxu0 0
    %2074 = vmatpush.bf16.msra.mxu0 0
    %2075 = vmatpush.bf16.msra.mxu0 0
    %2076 = vmatpush.bf16.msra.mxu0 0
    %2077 = vmatpush.bf16.msra.mxu0 %v1984
    %2078 = vmatpush.bf16.msra.mxu0 %v1830
    %2079 = vmatpush.bf16.msra.mxu0 %v1829
    %2080 = vmatmul.bf16.gmra.mxu0 %v1960
    %v2081 = vpop.f32.mrf.mxu0
    %v2082 = vadd.f32 %v2039, %v2081
    %v2083 = vpop.f32.mrf.mxu0
    %v2084 = vadd.f32 %v2041, %v2083
    %2085 = vmatmul.bf16.gmra.mxu0 %v1963
    %v2086 = vpop.f32.mrf.mxu0
    %v2087 = vadd.f32 %v2044, %v2086
    %v2088 = vpop.f32.mrf.mxu0
    %v2089 = vadd.f32 %v2046, %v2088
    %2090 = vmatmul.bf16.gmra.mxu0 %v1966
    %v2091 = vpop.f32.mrf.mxu0
    %v2092 = vadd.f32 %v2049, %v2091
    %v2093 = vpop.f32.mrf.mxu0
    %v2094 = vadd.f32 %v2051, %v2093
    %2095 = vmatmul.bf16.gmra.mxu0 %v1969
    %v2096 = vpop.f32.mrf.mxu0
    %v2097 = vadd.f32 %v2054, %v2096
    %v2098 = vpop.f32.mrf.mxu0
    %v2099 = vadd.f32 %v2056, %v2098
    %2100 = vmatmul.bf16.gmra.mxu0 %v1972
    %v2101 = vpop.f32.mrf.mxu0
    %v2102 = vadd.f32 %v2059, %v2101
    %v2103 = vpop.f32.mrf.mxu0
    %v2104 = vadd.f32 %v2061, %v2103
    %2105 = vmatmul.bf16.gmra.mxu0 %v1975
    %v2106 = vpop.f32.mrf.mxu0
    %v2107 = vadd.f32 %v2064, %v2106
    %v2108 = vpop.f32.mrf.mxu0
    %v2109 = vadd.f32 %v2066, %v2108
    %2110 = vmatmul.bf16.gmra.mxu0 %v1978
    %v2111 = vpop.f32.mrf.mxu0
    %v2112 = vadd.f32 %v2069, %v2111
    %v2113 = vpop.f32.mrf.mxu0
    %2114 = vdwg.mxu0
    %v2115 = vpack.c.bf16 %v2082, %v2082
    %v2116 = vpack.c.bf16 %v2084, %v2084
    %v2117 = vpack.c.bf16 %v2087, %v2087
    %v2118 = vpack.c.bf16 %v2089, %v2089
    %v2119 = vpack.c.bf16 %v2092, %v2092
    %v2120 = vpack.c.bf16 %v2094, %v2094
    %v2121 = vpack.c.bf16 %v2097, %v2097
    %v2122 = vpack.c.bf16 %v2099, %v2099
    %v2123 = vpack.c.bf16 %v2102, %v2102
    %v2124 = vpack.c.bf16 %v2104, %v2104
    %v2125 = vpack.c.bf16 %v2107, %v2107
    %v2126 = vpack.c.bf16 %v2109, %v2109
    %v2127 = vpack.c.bf16 %v2112, %v2112
    %2128 = vst.msk [vmem:[#allocation3] sm:$0xf] %vm1160, %v2115
    %2129 = vst.msk [vmem:[#allocation3 + $0x4] sm:$0xf] %vm1160, %v2116
    %2130 = vst.msk [vmem:[#allocation3 + $0x8] sm:$0xf] %vm1160, %v2117
    %2131 = vst.msk [vmem:[#allocation3 + $0xc] sm:$0xf] %vm1160, %v2118
    %2132 = vst.msk [vmem:[#allocation3 + $0x10] sm:$0xf] %vm1160, %v2119
    %2133 = vst.msk [vmem:[#allocation3 + $0x14] sm:$0xf] %vm1160, %v2120
    %2134 = vst.msk [vmem:[#allocation3 + $0x18] sm:$0xf] %vm1160, %v2121
    %2135 = vst.msk [vmem:[#allocation3 + $0x1c] sm:$0xf] %vm1160, %v2122
    %2136 = vst.msk [vmem:[#allocation3 + $0x20] sm:$0xf] %vm1160, %v2123
    %2137 = vst.msk [vmem:[#allocation3 + $0x24] sm:$0xf] %vm1160, %v2124
    %2138 = vst.msk [vmem:[#allocation3 + $0x28] sm:$0xf] %vm1160, %v2125
    %2139 = vst.msk [vmem:[#allocation3 + $0x2c] sm:$0xf] %vm1160, %v2126
    %2140 = vst.msk [vmem:[#allocation3 + $0x30] sm:$0x3] %vm1250, %v2127
    %v2141 = vld [vmem:[#allocation2 + $0xc8] sm:$0xf]
    %v2142 = vld [vmem:[#allocation2 + $0xcc] sm:$0xf]
    %v2143 = vld [vmem:[#allocation2 + $0xd0] sm:$0xf]
    %v2144 = vld [vmem:[#allocation2 + $0xd4] sm:$0xf]
    %v2145 = vld [vmem:[#allocation2 + $0xd8] sm:$0xf]
    %v2146 = vld [vmem:[#allocation2 + $0xdc] sm:$0xf]
    %v2147 = vld [vmem:[#allocation2 + $0xe0] sm:$0xf]
    %v2148 = vld [vmem:[#allocation2 + $0xe4] sm:$0xf]
    %v2149 = vld [vmem:[#allocation2 + $0xe8] sm:$0xf]
    %v2150 = vld [vmem:[#allocation2 + $0xec] sm:$0xf]
    %v2151 = vld [vmem:[#allocation2 + $0xf0] sm:$0xf]
    %v2152 = vld [vmem:[#allocation2 + $0xf4] sm:$0xf]
    %v2153 = vld [vmem:[#allocation2 + $0xf8] sm:$0xf]
    %v2154 = vld [vmem:[#allocation2 + $0xfc] sm:$0xf]
    %v2155 = vld [vmem:[#allocation2 + $0x100] sm:$0xf]
    %v2156 = vld [vmem:[#allocation2 + $0x104] sm:$0xf]
    %v2157 = vld [vmem:[#allocation2 + $0x108] sm:$0xf]
    %v2158 = vld [vmem:[#allocation2 + $0x10c] sm:$0xf]
    %v2159 = vld [vmem:[#allocation2 + $0x110] sm:$0xf]
    %v2160 = vld [vmem:[#allocation2 + $0x114] sm:$0xf]
    %v2161 = vld [vmem:[#allocation2 + $0x118] sm:$0xf]
    %v2162 = vld [vmem:[#allocation2 + $0x11c] sm:$0xf]
    %v2163 = vld [vmem:[#allocation2 + $0x120] sm:$0xf]
    %v2164 = vld [vmem:[#allocation2 + $0x124] sm:$0xf]
    %v2165 = vld [vmem:[#allocation2 + $0x128] sm:$0xf]
    %v2166 = vld [vmem:[#allocation2 + $0x12c] sm:$0xf]
    %v2167 = vld [vmem:[#allocation2 + $0x130] sm:$0xf]
    %v2168 = vld [vmem:[#allocation2 + $0x134] sm:$0xf]
    %v2169 = vld [vmem:[#allocation2 + $0x138] sm:$0xf]
    %v2170 = vld [vmem:[#allocation2 + $0x13c] sm:$0xf]
    %v2171 = vld [vmem:[#allocation2 + $0x140] sm:$0xf]
    %v2172 = vld [vmem:[#allocation2 + $0x144] sm:$0xf]
    %v2173 = vld [vmem:[#allocation2 + $0x148] sm:$0xf]
    %v2174 = vld [vmem:[#allocation2 + $0x14c] sm:$0xf]
    %v2175 = vld [vmem:[#allocation2 + $0x150] sm:$0xf]
    %v2176 = vld [vmem:[#allocation2 + $0x154] sm:$0xf]
    %v2177 = vld [vmem:[#allocation2 + $0x158] sm:$0xf]
    %v2178 = vunpack.c.l.bf16 %v2141
    %v2179 = vunpack.c.l.bf16 %v2142
    %v2180 = vunpack.c.l.bf16 %v2143
    %v2181 = vunpack.c.l.bf16 %v2144
    %v2182 = vunpack.c.l.bf16 %v2145
    %v2183 = vunpack.c.l.bf16 %v2146
    %v2184 = vunpack.c.l.bf16 %v2147
    %v2185 = vunpack.c.l.bf16 %v2148
    %v2186 = vunpack.c.l.bf16 %v2149
    %v2187 = vunpack.c.l.bf16 %v2150
    %v2188 = vunpack.c.l.bf16 %v2151
    %v2189 = vunpack.c.l.bf16 %v2152
    %v2190 = vunpack.c.l.bf16 %v2153
    %v2191 = vunpack.c.l.bf16 %v2154
    %v2192 = vunpack.c.l.bf16 %v2155
    %v2193 = vunpack.c.l.bf16 %v2156
    %v2194 = vunpack.c.l.bf16 %v2157
    %v2195 = vunpack.c.l.bf16 %v2158
    %v2196 = vunpack.c.l.bf16 %v2159
    %v2197 = vunpack.c.l.bf16 %v2160
    %v2198 = vunpack.c.l.bf16 %v2161
    %v2199 = vunpack.c.l.bf16 %v2162
    %v2200 = vunpack.c.l.bf16 %v2163
    %v2201 = vunpack.c.l.bf16 %v2164
    %v2202 = vunpack.c.l.bf16 %v2165
    %v2203 = vunpack.c.l.bf16 %v2166
    %v2204 = vunpack.c.l.bf16 %v2167
    %v2205 = vunpack.c.l.bf16 %v2168
    %v2206 = vunpack.c.l.bf16 %v2169
    %v2207 = vunpack.c.l.bf16 %v2170
    %v2208 = vunpack.c.l.bf16 %v2171
    %v2209 = vunpack.c.l.bf16 %v2172
    %v2210 = vunpack.c.l.bf16 %v2173
    %v2211 = vunpack.c.l.bf16 %v2174
    %v2212 = vunpack.c.l.bf16 %v2175
    %v2213 = vunpack.c.l.bf16 %v2176
    %v2214 = vunpack.c.l.bf16 %v2177
    %v2252 = vrot.slane %v2178, 1
    %v2253 = vrot.slane %v2179, 1
    %v2254 = vsel %vm1363, %v2252, %v2253
    %v2255 = vrot.slane %v2180, 1
    %v2256 = vsel %vm1363, %v2253, %v2255
    %v2257 = vrot.slane %v2181, 1
    %v2258 = vsel %vm1363, %v2255, %v2257
    %v2259 = vrot.slane %v2182, 1
    %v2260 = vsel %vm1363, %v2257, %v2259
    %v2261 = vrot.slane %v2183, 1
    %v2262 = vsel %vm1363, %v2259, %v2261
    %v2263 = vrot.slane %v2184, 1
    %v2264 = vsel %vm1363, %v2261, %v2263
    %v2265 = vrot.slane %v2185, 1
    %v2266 = vsel %vm1363, %v2263, %v2265
    %v2267 = vrot.slane %v2186, 1
    %v2268 = vsel %vm1363, %v2265, %v2267
    %v2269 = vrot.slane %v2187, 1
    %v2270 = vsel %vm1363, %v2267, %v2269
    %v2271 = vrot.slane %v2188, 1
    %v2272 = vsel %vm1363, %v2269, %v2271
    %v2273 = vrot.slane %v2189, 1
    %v2274 = vsel %vm1363, %v2271, %v2273
    %v2275 = vrot.slane %v2190, 1
    %v2276 = vsel %vm1363, %v2273, %v2275
    %v2277 = vrot.slane %v2191, 1
    %v2278 = vsel %vm1363, %v2275, %v2277
    %v2279 = vrot.slane %v2192, 1
    %v2280 = vsel %vm1363, %v2277, %v2279
    %v2281 = vrot.slane %v2193, 1
    %v2282 = vsel %vm1363, %v2279, %v2281
    %v2283 = vrot.slane %v2194, 1
    %v2284 = vsel %vm1363, %v2281, %v2283
    %v2285 = vrot.slane %v2195, 1
    %v2286 = vsel %vm1363, %v2283, %v2285
    %v2287 = vrot.slane %v2196, 1
    %v2288 = vsel %vm1363, %v2285, %v2287
    %v2289 = vrot.slane %v2197, 1
    %v2290 = vsel %vm1363, %v2287, %v2289
    %v2291 = vrot.slane %v2198, 1
    %v2292 = vsel %vm1363, %v2289, %v2291
    %v2293 = vrot.slane %v2199, 1
    %v2294 = vsel %vm1363, %v2291, %v2293
    %v2295 = vrot.slane %v2200, 1
    %v2296 = vsel %vm1363, %v2293, %v2295
    %v2297 = vrot.slane %v2201, 1
    %v2298 = vsel %vm1363, %v2295, %v2297
    %v2299 = vrot.slane %v2202, 1
    %v2300 = vsel %vm1363, %v2297, %v2299
    %v2301 = vrot.slane %v2203, 1
    %v2302 = vsel %vm1363, %v2299, %v2301
    %v2303 = vrot.slane %v2204, 1
    %v2304 = vsel %vm1363, %v2301, %v2303
    %v2305 = vrot.slane %v2205, 1
    %v2306 = vsel %vm1363, %v2303, %v2305
    %v2307 = vrot.slane %v2206, 1
    %v2308 = vsel %vm1363, %v2305, %v2307
    %v2309 = vrot.slane %v2207, 1
    %v2310 = vsel %vm1363, %v2307, %v2309
    %v2311 = vrot.slane %v2208, 1
    %v2312 = vsel %vm1363, %v2309, %v2311
    %v2313 = vrot.slane %v2209, 1
    %v2314 = vsel %vm1363, %v2311, %v2313
    %v2315 = vrot.slane %v2210, 1
    %v2316 = vsel %vm1363, %v2313, %v2315
    %v2317 = vrot.slane %v2211, 1
    %v2318 = vsel %vm1363, %v2315, %v2317
    %v2319 = vrot.slane %v2212, 1
    %v2320 = vsel %vm1363, %v2317, %v2319
    %v2321 = vrot.slane %v2213, 1
    %v2322 = vsel %vm1363, %v2319, %v2321
    %v2323 = vrot.slane %v2214, 1
    %v2324 = vsel %vm1363, %v2321, %v2323
    %v2362 = vmax.f32 %v2178, %v2254
    %v2363 = vmax.f32 %v2179, %v2256
    %v2364 = vmax.f32 %v2180, %v2258
    %v2365 = vmax.f32 %v2181, %v2260
    %v2366 = vmax.f32 %v2182, %v2262
    %v2367 = vmax.f32 %v2183, %v2264
    %v2368 = vmax.f32 %v2184, %v2266
    %v2369 = vmax.f32 %v2185, %v2268
    %v2370 = vmax.f32 %v2186, %v2270
    %v2371 = vmax.f32 %v2187, %v2272
    %v2372 = vmax.f32 %v2188, %v2274
    %v2373 = vmax.f32 %v2189, %v2276
    %v2374 = vmax.f32 %v2190, %v2278
    %v2375 = vmax.f32 %v2191, %v2280
    %v2376 = vmax.f32 %v2192, %v2282
    %v2377 = vmax.f32 %v2193, %v2284
    %v2378 = vmax.f32 %v2194, %v2286
    %v2379 = vmax.f32 %v2195, %v2288
    %v2380 = vmax.f32 %v2196, %v2290
    %v2381 = vmax.f32 %v2197, %v2292
    %v2382 = vmax.f32 %v2198, %v2294
    %v2383 = vmax.f32 %v2199, %v2296
    %v2384 = vmax.f32 %v2200, %v2298
    %v2385 = vmax.f32 %v2201, %v2300
    %v2386 = vmax.f32 %v2202, %v2302
    %v2387 = vmax.f32 %v2203, %v2304
    %v2388 = vmax.f32 %v2204, %v2306
    %v2389 = vmax.f32 %v2205, %v2308
    %v2390 = vmax.f32 %v2206, %v2310
    %v2391 = vmax.f32 %v2207, %v2312
    %v2392 = vmax.f32 %v2208, %v2314
    %v2393 = vmax.f32 %v2209, %v2316
    %v2394 = vmax.f32 %v2210, %v2318
    %v2395 = vmax.f32 %v2211, %v2320
    %v2396 = vmax.f32 %v2212, %v2322
    %v2397 = vmax.f32 %v2213, %v2324
    %v2398 = vmax.f32 %v2214, %v2323
    %v2399 = vpack.c.bf16 %v2362, %v2362
    %v2400 = vpack.c.bf16 %v2363, %v2363
    %v2401 = vpack.c.bf16 %v2364, %v2364
    %v2402 = vpack.c.bf16 %v2365, %v2365
    %v2403 = vpack.c.bf16 %v2366, %v2366
    %v2404 = vpack.c.bf16 %v2367, %v2367
    %v2405 = vpack.c.bf16 %v2368, %v2368
    %v2406 = vpack.c.bf16 %v2369, %v2369
    %v2407 = vpack.c.bf16 %v2370, %v2370
    %v2408 = vpack.c.bf16 %v2371, %v2371
    %v2409 = vpack.c.bf16 %v2372, %v2372
    %v2410 = vpack.c.bf16 %v2373, %v2373
    %v2411 = vpack.c.bf16 %v2374, %v2374
    %v2412 = vpack.c.bf16 %v2375, %v2375
    %v2413 = vpack.c.bf16 %v2376, %v2376
    %v2414 = vpack.c.bf16 %v2377, %v2377
    %v2415 = vpack.c.bf16 %v2378, %v2378
    %v2416 = vpack.c.bf16 %v2379, %v2379
    %v2417 = vpack.c.bf16 %v2380, %v2380
    %v2418 = vpack.c.bf16 %v2381, %v2381
    %v2419 = vpack.c.bf16 %v2382, %v2382
    %v2420 = vpack.c.bf16 %v2383, %v2383
    %v2421 = vpack.c.bf16 %v2384, %v2384
    %v2422 = vpack.c.bf16 %v2385, %v2385
    %v2423 = vpack.c.bf16 %v2386, %v2386
    %v2424 = vpack.c.bf16 %v2387, %v2387
    %v2425 = vpack.c.bf16 %v2388, %v2388
    %v2426 = vpack.c.bf16 %v2389, %v2389
    %v2427 = vpack.c.bf16 %v2390, %v2390
    %v2428 = vpack.c.bf16 %v2391, %v2391
    %v2429 = vpack.c.bf16 %v2392, %v2392
    %v2430 = vpack.c.bf16 %v2393, %v2393
    %v2431 = vpack.c.bf16 %v2394, %v2394
    %v2432 = vpack.c.bf16 %v2395, %v2395
    %v2433 = vpack.c.bf16 %v2396, %v2396
    %v2434 = vpack.c.bf16 %v2397, %v2397
    %v2435 = vpack.c.bf16 %v2398, %v2398
    %v2436 = vld [vmem:[#allocation2 + $0xd0] sm:$0xc]
    %v2437 = vld [vmem:[#allocation2 + $0x15c] sm:$0xf]
    %v2438 = vld [vmem:[#allocation2 + $0x160] sm:$0xf]
    %v2439 = vld [vmem:[#allocation2 + $0x164] sm:$0x3]
    %v2440 = vunpack.c.l.bf16 %v2436
    %v2441 = vunpack.c.l.bf16 %v2437
    %v2442 = vunpack.c.l.bf16 %v2438
    %v2443 = vunpack.c.l.bf16 %v2439
    %v2448 = vrot.slane %v2440, 1
    %v2449 = vsel %vm1363, %v2448, %v2257
    %v2450 = vrot.slane %v2441, 1
    %v2451 = vsel %vm1363, %v2323, %v2450
    %v2452 = vrot.slane %v2442, 1
    %v2453 = vsel %vm1363, %v2450, %v2452
    %v2454 = vrot.slane %v2443, 1
    %v2455 = vsel %vm1363, %v2452, %v2454
    %v2461 = vmax.f32 %v2440, %v2449
    %v2462 = vmax.f32 %v2214, %v2451
    %v2463 = vmax.f32 %v2441, %v2453
    %v2464 = vmax.f32 %v2442, %v2455
    %v2465 = vmax.f32 %v2443, %v2454
    %v2466 = vpack.c.bf16 %v2461, %v2461
    %v2467 = vpack.c.bf16 %v2462, %v2462
    %v2468 = vpack.c.bf16 %v2463, %v2463
    %v2469 = vpack.c.bf16 %v2464, %v2464
    %v2470 = vpack.c.bf16 %v2465, %v2465
    %v2471 = vunpack.c.l.bf16 %v2399
    %v2472 = vunpack.c.l.bf16 %v2400
    %v2473 = vunpack.c.l.bf16 %v2401
    %v2474 = vunpack.c.l.bf16 %v2402
    %v2475 = vunpack.c.l.bf16 %v2403
    %v2476 = vunpack.c.l.bf16 %v2404
    %v2477 = vunpack.c.l.bf16 %v2405
    %v2478 = vunpack.c.l.bf16 %v2406
    %v2479 = vunpack.c.l.bf16 %v2407
    %v2480 = vunpack.c.l.bf16 %v2408
    %v2481 = vunpack.c.l.bf16 %v2409
    %v2482 = vunpack.c.l.bf16 %v2410
    %v2483 = vunpack.c.l.bf16 %v2411
    %v2484 = vunpack.c.l.bf16 %v2412
    %v2485 = vunpack.c.l.bf16 %v2413
    %v2486 = vunpack.c.l.bf16 %v2414
    %v2487 = vunpack.c.l.bf16 %v2415
    %v2488 = vunpack.c.l.bf16 %v2416
    %v2489 = vunpack.c.l.bf16 %v2417
    %v2490 = vunpack.c.l.bf16 %v2418
    %v2491 = vunpack.c.l.bf16 %v2419
    %v2492 = vunpack.c.l.bf16 %v2420
    %v2493 = vunpack.c.l.bf16 %v2421
    %v2494 = vunpack.c.l.bf16 %v2422
    %v2495 = vunpack.c.l.bf16 %v2423
    %v2496 = vunpack.c.l.bf16 %v2424
    %v2497 = vunpack.c.l.bf16 %v2425
    %v2498 = vunpack.c.l.bf16 %v2426
    %v2499 = vunpack.c.l.bf16 %v2427
    %v2500 = vunpack.c.l.bf16 %v2428
    %v2501 = vunpack.c.l.bf16 %v2429
    %v2502 = vunpack.c.l.bf16 %v2430
    %v2503 = vunpack.c.l.bf16 %v2431
    %v2504 = vunpack.c.l.bf16 %v2432
    %v2505 = vunpack.c.l.bf16 %v2433
    %v2506 = vunpack.c.l.bf16 %v2434
    %v2507 = vunpack.c.l.bf16 %v2435
    %v2508 = vunpack.c.l.bf16 %v2466
    %v2509 = vunpack.c.l.bf16 %v2467
    %v2510 = vunpack.c.l.bf16 %v2468
    %v2511 = vunpack.c.l.bf16 %v2469
    %v2512 = vunpack.c.l.bf16 %v2470
    %v2551 = vrot.slane %v2508, 4
    %v2552 = vrot.slane %v2474, 4
    %v2553 = vsel %vm1663, %v2551, %v2552
    %v2554 = vrot.slane %v2475, 4
    %v2555 = vsel %vm1663, %v2552, %v2554
    %v2556 = vrot.slane %v2476, 4
    %v2557 = vsel %vm1663, %v2554, %v2556
    %v2558 = vrot.slane %v2477, 4
    %v2559 = vsel %vm1663, %v2556, %v2558
    %v2560 = vrot.slane %v2478, 4
    %v2561 = vsel %vm1663, %v2558, %v2560
    %v2562 = vrot.slane %v2479, 4
    %v2563 = vsel %vm1663, %v2560, %v2562
    %v2564 = vrot.slane %v2480, 4
    %v2565 = vsel %vm1663, %v2562, %v2564
    %v2566 = vrot.slane %v2481, 4
    %v2567 = vsel %vm1663, %v2564, %v2566
    %v2568 = vrot.slane %v2482, 4
    %v2569 = vsel %vm1663, %v2566, %v2568
    %v2570 = vrot.slane %v2483, 4
    %v2571 = vsel %vm1663, %v2568, %v2570
    %v2572 = vrot.slane %v2484, 4
    %v2573 = vsel %vm1663, %v2570, %v2572
    %v2574 = vrot.slane %v2485, 4
    %v2575 = vsel %vm1663, %v2572, %v2574
    %v2576 = vrot.slane %v2486, 4
    %v2577 = vsel %vm1663, %v2574, %v2576
    %v2578 = vrot.slane %v2487, 4
    %v2579 = vsel %vm1663, %v2576, %v2578
    %v2580 = vrot.slane %v2488, 4
    %v2581 = vsel %vm1663, %v2578, %v2580
    %v2582 = vrot.slane %v2489, 4
    %v2583 = vsel %vm1663, %v2580, %v2582
    %v2584 = vrot.slane %v2490, 4
    %v2585 = vsel %vm1663, %v2582, %v2584
    %v2586 = vrot.slane %v2491, 4
    %v2587 = vsel %vm1663, %v2584, %v2586
    %v2588 = vrot.slane %v2492, 4
    %v2589 = vsel %vm1663, %v2586, %v2588
    %v2590 = vrot.slane %v2493, 4
    %v2591 = vsel %vm1663, %v2588, %v2590
    %v2592 = vrot.slane %v2494, 4
    %v2593 = vsel %vm1663, %v2590, %v2592
    %v2594 = vrot.slane %v2495, 4
    %v2595 = vsel %vm1663, %v2592, %v2594
    %v2596 = vrot.slane %v2496, 4
    %v2597 = vsel %vm1663, %v2594, %v2596
    %v2598 = vrot.slane %v2497, 4
    %v2599 = vsel %vm1663, %v2596, %v2598
    %v2600 = vrot.slane %v2498, 4
    %v2601 = vsel %vm1663, %v2598, %v2600
    %v2602 = vrot.slane %v2499, 4
    %v2603 = vsel %vm1663, %v2600, %v2602
    %v2604 = vrot.slane %v2500, 4
    %v2605 = vsel %vm1663, %v2602, %v2604
    %v2606 = vrot.slane %v2501, 4
    %v2607 = vsel %vm1663, %v2604, %v2606
    %v2608 = vrot.slane %v2502, 4
    %v2609 = vsel %vm1663, %v2606, %v2608
    %v2610 = vrot.slane %v2503, 4
    %v2611 = vsel %vm1663, %v2608, %v2610
    %v2612 = vrot.slane %v2504, 4
    %v2613 = vsel %vm1663, %v2610, %v2612
    %v2614 = vrot.slane %v2505, 4
    %v2615 = vsel %vm1663, %v2612, %v2614
    %v2616 = vrot.slane %v2506, 4
    %v2617 = vsel %vm1663, %v2614, %v2616
    %v2618 = vrot.slane %v2509, 4
    %v2619 = vsel %vm1663, %v2616, %v2618
    %v2620 = vrot.slane %v2510, 4
    %v2621 = vsel %vm1663, %v2618, %v2620
    %v2622 = vrot.slane %v2511, 4
    %v2623 = vsel %vm1663, %v2620, %v2622
    %v2624 = vrot.slane %v2512, 4
    %v2625 = vsel %vm1663, %v2622, %v2624
    %v2663 = vmax.f32 %v2471, %v2553
    %v2664 = vmax.f32 %v2472, %v2555
    %v2665 = vmax.f32 %v2473, %v2557
    %v2666 = vmax.f32 %v2474, %v2559
    %v2667 = vmax.f32 %v2475, %v2561
    %v2668 = vmax.f32 %v2476, %v2563
    %v2669 = vmax.f32 %v2477, %v2565
    %v2670 = vmax.f32 %v2478, %v2567
    %v2671 = vmax.f32 %v2479, %v2569
    %v2672 = vmax.f32 %v2480, %v2571
    %v2673 = vmax.f32 %v2481, %v2573
    %v2674 = vmax.f32 %v2482, %v2575
    %v2675 = vmax.f32 %v2483, %v2577
    %v2676 = vmax.f32 %v2484, %v2579
    %v2677 = vmax.f32 %v2485, %v2581
    %v2678 = vmax.f32 %v2486, %v2583
    %v2679 = vmax.f32 %v2487, %v2585
    %v2680 = vmax.f32 %v2488, %v2587
    %v2681 = vmax.f32 %v2489, %v2589
    %v2682 = vmax.f32 %v2490, %v2591
    %v2683 = vmax.f32 %v2491, %v2593
    %v2684 = vmax.f32 %v2492, %v2595
    %v2685 = vmax.f32 %v2493, %v2597
    %v2686 = vmax.f32 %v2494, %v2599
    %v2687 = vmax.f32 %v2495, %v2601
    %v2688 = vmax.f32 %v2496, %v2603
    %v2689 = vmax.f32 %v2497, %v2605
    %v2690 = vmax.f32 %v2498, %v2607
    %v2691 = vmax.f32 %v2499, %v2609
    %v2692 = vmax.f32 %v2500, %v2611
    %v2693 = vmax.f32 %v2501, %v2613
    %v2694 = vmax.f32 %v2502, %v2615
    %v2695 = vmax.f32 %v2503, %v2617
    %v2696 = vmax.f32 %v2504, %v2619
    %v2697 = vmax.f32 %v2505, %v2621
    %v2698 = vmax.f32 %v2506, %v2623
    %v2699 = vmax.f32 %v2507, %v2625
    %v2700 = vpack.c.bf16 %v2664, %v2663
    %v2701 = vpack.c.bf16 %v2666, %v2665
    %v2702 = vpack.c.bf16 %v2668, %v2667
    %v2703 = vpack.c.bf16 %v2670, %v2669
    %v2704 = vpack.c.bf16 %v2672, %v2671
    %v2705 = vpack.c.bf16 %v2674, %v2673
    %v2706 = vpack.c.bf16 %v2676, %v2675
    %v2707 = vpack.c.bf16 %v2678, %v2677
    %v2708 = vpack.c.bf16 %v2680, %v2679
    %v2709 = vpack.c.bf16 %v2682, %v2681
    %v2710 = vpack.c.bf16 %v2684, %v2683
    %v2711 = vpack.c.bf16 %v2686, %v2685
    %v2712 = vpack.c.bf16 %v2688, %v2687
    %v2713 = vpack.c.bf16 %v2690, %v2689
    %v2714 = vpack.c.bf16 %v2692, %v2691
    %v2715 = vpack.c.bf16 %v2694, %v2693
    %v2716 = vpack.c.bf16 %v2696, %v2695
    %v2717 = vpack.c.bf16 %v2698, %v2697
    %v2718 = vpack.c.bf16 %v2699, %v2699
    %v2719 = vld [vmem:[%s13] sm:$0xff]
    %v2720 = vld [vmem:[%s13 + $0x8] sm:$0xf]
    %v2721 = vld [vmem:[%s13 + $0xc] sm:$0xff]
    %v2722 = vld [vmem:[%s13 + $0x14] sm:$0xf]
    %v2723 = vld [vmem:[%s13 + $0x18] sm:$0xff]
    %v2724 = vld [vmem:[%s13 + $0x20] sm:$0xf]
    %v2725 = vld [vmem:[%s13 + $0x24] sm:$0xff]
    %v2726 = vld [vmem:[%s13 + $0x2c] sm:$0xf]
    %v2727 = vld [vmem:[%s13 + $0x30] sm:$0xff]
    %v2728 = vld [vmem:[%s13 + $0x38] sm:$0xf]
    %v2729 = vld [vmem:[%s13 + $0x3c] sm:$0xff]
    %v2730 = vld [vmem:[%s13 + $0x44] sm:$0xf]
    %v2731 = vld [vmem:[%s13 + $0x48] sm:$0xff]
    %v2732 = vld [vmem:[%s13 + $0x50] sm:$0xf]
    %v2733 = vld [vmem:[%s13 + $0x54] sm:$0xff]
    %v2734 = vld [vmem:[%s13 + $0x5c] sm:$0xf]
    %v2735 = vld [vmem:[%s13 + $0x60] sm:$0xff]
    %v2736 = vld [vmem:[%s13 + $0x68] sm:$0xf]
    %v2737 = vld [vmem:[%s13 + $0x6c] sm:$0xff]
    %v2738 = vld [vmem:[%s13 + $0x74] sm:$0xf]
    %v2739 = vld [vmem:[%s13 + $0x78] sm:$0xff]
    %v2740 = vld [vmem:[%s13 + $0x80] sm:$0xf]
    %v2741 = vld [vmem:[%s13 + $0x84] sm:$0xff]
    %v2742 = vld [vmem:[%s13 + $0x8c] sm:$0xf]
    %v2743 = vld [vmem:[%s13 + $0x90] sm:$0x33]
    %v2744 = vld [vmem:[%s13 + $0x98] sm:$0x3]
    %v2771 = vunpack.c.l.b16 %v2719
    %v2772 = vunpack.c.h.b16 %v2719
    %v2773 = vunpack.c.l.b16 %v2720
    %v2774 = vunpack.c.l.b16 %v2721
    %v2775 = vunpack.c.h.b16 %v2721
    %v2776 = vunpack.c.l.b16 %v2722
    %v2777 = vunpack.c.l.b16 %v2723
    %v2778 = vunpack.c.h.b16 %v2723
    %v2779 = vunpack.c.l.b16 %v2724
    %v2780 = vunpack.c.l.b16 %v2725
    %v2781 = vunpack.c.h.b16 %v2725
    %v2782 = vunpack.c.l.b16 %v2726
    %v2783 = vunpack.c.l.b16 %v2727
    %v2784 = vunpack.c.h.b16 %v2727
    %v2785 = vunpack.c.l.b16 %v2728
    %v2786 = vunpack.c.l.b16 %v2729
    %v2787 = vunpack.c.h.b16 %v2729
    %v2788 = vunpack.c.l.b16 %v2730
    %v2789 = vunpack.c.l.b16 %v2731
    %v2790 = vunpack.c.h.b16 %v2731
    %v2791 = vunpack.c.l.b16 %v2732
    %v2792 = vunpack.c.l.b16 %v2733
    %v2793 = vunpack.c.h.b16 %v2733
    %v2794 = vunpack.c.l.b16 %v2734
    %v2795 = vunpack.c.l.b16 %v2735
    %v2796 = vunpack.c.h.b16 %v2735
    %v2797 = vunpack.c.l.b16 %v2736
    %v2798 = vunpack.c.l.b16 %v2737
    %v2799 = vunpack.c.h.b16 %v2737
    %v2800 = vunpack.c.l.b16 %v2738
    %v2801 = vunpack.c.l.b16 %v2739
    %v2802 = vunpack.c.h.b16 %v2739
    %v2803 = vunpack.c.l.b16 %v2740
    %v2804 = vunpack.c.l.b16 %v2741
    %v2805 = vunpack.c.h.b16 %v2741
    %v2806 = vunpack.c.l.b16 %v2742
    %v2807 = vunpack.c.l.b16 %v2743
    %v2808 = vunpack.c.h.b16 %v2743
    %v2809 = vunpack.c.l.b16 %v2744
    %v2810 = vpack.c.b16 %v2774, %v2771
    %v2811 = vpack.c.b16 %v2775, %v2772
    %v2812 = vpack.c.b16 %v2776, %v2773
    %v2813 = vpack.c.b16 %v2780, %v2777
    %v2814 = vpack.c.b16 %v2781, %v2778
    %v2815 = vpack.c.b16 %v2782, %v2779
    %v2816 = vpack.c.b16 %v2786, %v2783
    %v2817 = vpack.c.b16 %v2787, %v2784
    %v2818 = vpack.c.b16 %v2788, %v2785
    %v2819 = vpack.c.b16 %v2792, %v2789
    %v2820 = vpack.c.b16 %v2793, %v2790
    %v2821 = vpack.c.b16 %v2794, %v2791
    %v2822 = vpack.c.b16 %v2798, %v2795
    %v2823 = vpack.c.b16 %v2799, %v2796
    %v2824 = vpack.c.b16 %v2800, %v2797
    %v2825 = vpack.c.b16 %v2804, %v2801
    %v2826 = vpack.c.b16 %v2805, %v2802
    %v2827 = vpack.c.b16 %v2806, %v2803
    %v2828 = vpack.c.b16 %v2807, %v2807
    %v2829 = vpack.c.b16 %v2808, %v2808
    %v2830 = vpack.c.b16 %v2809, %v2809
    %v2846 = vsel %vm1958, %v2812, 0
    %v2849 = vsel %vm1958, %v2815, 0
    %v2852 = vsel %vm1958, %v2818, 0
    %v2855 = vsel %vm1958, %v2821, 0
    %v2858 = vsel %vm1958, %v2824, 0
    %v2861 = vsel %vm1958, %v2827, 0
    %v2864 = vsel %vm1958, %v2830, 0
    %v2867 = vand.u32 %v2718, %v1982
    %2869 = vmatpush.bf16.msra.mxu0 %v2707
    %2870 = vmatpush.bf16.msra.mxu0 %v2706
    %2871 = vmatpush.bf16.msra.mxu0 %v2705
    %2872 = vmatpush.bf16.msra.mxu0 %v2704
    %2873 = vmatpush.bf16.msra.mxu0 %v2703
    %2874 = vmatpush.bf16.msra.mxu0 %v2702
    %2875 = vmatpush.bf16.msra.mxu0 %v2701
    %2876 = vmatpush.bf16.msra.mxu0 %v2700
    %2877 = vmatmul.bf16.gmra.mxu0 %v2810
    %v2878 = vpop.f32.mrf.mxu0
    %v2879 = vadd.f32 0.0, %v2878
    %v2880 = vpop.f32.mrf.mxu0
    %v2881 = vadd.f32 0.0, %v2880
    %2882 = vmatmul.bf16.gmra.mxu0 %v2813
    %v2883 = vpop.f32.mrf.mxu0
    %v2884 = vadd.f32 0.0, %v2883
    %v2885 = vpop.f32.mrf.mxu0
    %v2886 = vadd.f32 0.0, %v2885
    %2887 = vmatmul.bf16.gmra.mxu0 %v2816
    %v2888 = vpop.f32.mrf.mxu0
    %v2889 = vadd.f32 0.0, %v2888
    %v2890 = vpop.f32.mrf.mxu0
    %v2891 = vadd.f32 0.0, %v2890
    %2892 = vmatmul.bf16.gmra.mxu0 %v2819
    %v2893 = vpop.f32.mrf.mxu0
    %v2894 = vadd.f32 0.0, %v2893
    %v2895 = vpop.f32.mrf.mxu0
    %v2896 = vadd.f32 0.0, %v2895
    %2897 = vmatmul.bf16.gmra.mxu0 %v2822
    %v2898 = vpop.f32.mrf.mxu0
    %v2899 = vadd.f32 0.0, %v2898
    %v2900 = vpop.f32.mrf.mxu0
    %v2901 = vadd.f32 0.0, %v2900
    %2902 = vmatmul.bf16.gmra.mxu0 %v2825
    %v2903 = vpop.f32.mrf.mxu0
    %v2904 = vadd.f32 0.0, %v2903
    %v2905 = vpop.f32.mrf.mxu0
    %v2906 = vadd.f32 0.0, %v2905
    %2907 = vmatmul.bf16.gmra.mxu0 %v2828
    %v2908 = vpop.f32.mrf.mxu0
    %v2909 = vadd.f32 0.0, %v2908
    %v2910 = vpop.f32.mrf.mxu0
    %2911 = vdwg.mxu0
    %2912 = vmatpush.bf16.msra.mxu0 %v2715
    %2913 = vmatpush.bf16.msra.mxu0 %v2714
    %2914 = vmatpush.bf16.msra.mxu0 %v2713
    %2915 = vmatpush.bf16.msra.mxu0 %v2712
    %2916 = vmatpush.bf16.msra.mxu0 %v2711
    %2917 = vmatpush.bf16.msra.mxu0 %v2710
    %2918 = vmatpush.bf16.msra.mxu0 %v2709
    %2919 = vmatpush.bf16.msra.mxu0 %v2708
    %2920 = vmatmul.bf16.gmra.mxu0 %v2811
    %v2921 = vpop.f32.mrf.mxu0
    %v2922 = vadd.f32 %v2879, %v2921
    %v2923 = vpop.f32.mrf.mxu0
    %v2924 = vadd.f32 %v2881, %v2923
    %2925 = vmatmul.bf16.gmra.mxu0 %v2814
    %v2926 = vpop.f32.mrf.mxu0
    %v2927 = vadd.f32 %v2884, %v2926
    %v2928 = vpop.f32.mrf.mxu0
    %v2929 = vadd.f32 %v2886, %v2928
    %2930 = vmatmul.bf16.gmra.mxu0 %v2817
    %v2931 = vpop.f32.mrf.mxu0
    %v2932 = vadd.f32 %v2889, %v2931
    %v2933 = vpop.f32.mrf.mxu0
    %v2934 = vadd.f32 %v2891, %v2933
    %2935 = vmatmul.bf16.gmra.mxu0 %v2820
    %v2936 = vpop.f32.mrf.mxu0
    %v2937 = vadd.f32 %v2894, %v2936
    %v2938 = vpop.f32.mrf.mxu0
    %v2939 = vadd.f32 %v2896, %v2938
    %2940 = vmatmul.bf16.gmra.mxu0 %v2823
    %v2941 = vpop.f32.mrf.mxu0
    %v2942 = vadd.f32 %v2899, %v2941
    %v2943 = vpop.f32.mrf.mxu0
    %v2944 = vadd.f32 %v2901, %v2943
    %2945 = vmatmul.bf16.gmra.mxu0 %v2826
    %v2946 = vpop.f32.mrf.mxu0
    %v2947 = vadd.f32 %v2904, %v2946
    %v2948 = vpop.f32.mrf.mxu0
    %v2949 = vadd.f32 %v2906, %v2948
    %2950 = vmatmul.bf16.gmra.mxu0 %v2829
    %v2951 = vpop.f32.mrf.mxu0
    %v2952 = vadd.f32 %v2909, %v2951
    %v2953 = vpop.f32.mrf.mxu0
    %2954 = vdwg.mxu0
    %2955 = vmatpush.bf16.msra.mxu0 0
    %2956 = vmatpush.bf16.msra.mxu0 0
    %2957 = vmatpush.bf16.msra.mxu0 0
    %2958 = vmatpush.bf16.msra.mxu0 0
    %2959 = vmatpush.bf16.msra.mxu0 0
    %2960 = vmatpush.bf16.msra.mxu0 %v2867
    %2961 = vmatpush.bf16.msra.mxu0 %v2717
    %2962 = vmatpush.bf16.msra.mxu0 %v2716
    %2963 = vmatmul.bf16.gmra.mxu0 %v2846
    %v2964 = vpop.f32.mrf.mxu0
    %v2965 = vadd.f32 %v2922, %v2964
    %v2966 = vpop.f32.mrf.mxu0
    %v2967 = vadd.f32 %v2924, %v2966
    %2968 = vmatmul.bf16.gmra.mxu0 %v2849
    %v2969 = vpop.f32.mrf.mxu0
    %v2970 = vadd.f32 %v2927, %v2969
    %v2971 = vpop.f32.mrf.mxu0
    %v2972 = vadd.f32 %v2929, %v2971
    %2973 = vmatmul.bf16.gmra.mxu0 %v2852
    %v2974 = vpop.f32.mrf.mxu0
    %v2975 = vadd.f32 %v2932, %v2974
    %v2976 = vpop.f32.mrf.mxu0
    %v2977 = vadd.f32 %v2934, %v2976
    %2978 = vmatmul.bf16.gmra.mxu0 %v2855
    %v2979 = vpop.f32.mrf.mxu0
    %v2980 = vadd.f32 %v2937, %v2979
    %v2981 = vpop.f32.mrf.mxu0
    %v2982 = vadd.f32 %v2939, %v2981
    %2983 = vmatmul.bf16.gmra.mxu0 %v2858
    %v2984 = vpop.f32.mrf.mxu0
    %v2985 = vadd.f32 %v2942, %v2984
    %v2986 = vpop.f32.mrf.mxu0
    %v2987 = vadd.f32 %v2944, %v2986
    %2988 = vmatmul.bf16.gmra.mxu0 %v2861
    %v2989 = vpop.f32.mrf.mxu0
    %v2990 = vadd.f32 %v2947, %v2989
    %v2991 = vpop.f32.mrf.mxu0
    %v2992 = vadd.f32 %v2949, %v2991
    %2993 = vmatmul.bf16.gmra.mxu0 %v2864
    %v2994 = vpop.f32.mrf.mxu0
    %v2995 = vadd.f32 %v2952, %v2994
    %v2996 = vpop.f32.mrf.mxu0
    %2997 = vdwg.mxu0
    %v2998 = vpack.c.bf16 %v2965, %v2965
    %v2999 = vpack.c.bf16 %v2967, %v2967
    %v3000 = vpack.c.bf16 %v2970, %v2970
    %v3001 = vpack.c.bf16 %v2972, %v2972
    %v3002 = vpack.c.bf16 %v2975, %v2975
    %v3003 = vpack.c.bf16 %v2977, %v2977
    %v3004 = vpack.c.bf16 %v2980, %v2980
    %v3005 = vpack.c.bf16 %v2982, %v2982
    %v3006 = vpack.c.bf16 %v2985, %v2985
    %v3007 = vpack.c.bf16 %v2987, %v2987
    %v3008 = vpack.c.bf16 %v2990, %v2990
    %v3009 = vpack.c.bf16 %v2992, %v2992
    %v3010 = vpack.c.bf16 %v2995, %v2995
    %vm3024 = vcmask 1041408
    %vm3025 = vcmask 1045508
    %vm3026 = vmor %vm3024, %vm3025
    %v3027 = vrot.slane %v2998, 6
    %v3028 = vrot.slane %v3027, 4
    %v3029 = vrot.slane %v2999, 6
    %v3030 = vsel %vm3026, %v3028, %v3029
    %v3031 = vrot.slane %v3029, 4
    %v3032 = vrot.slane %v3000, 6
    %v3033 = vsel %vm3026, %v3031, %v3032
    %v3034 = vrot.slane %v3032, 4
    %v3035 = vrot.slane %v3001, 6
    %v3036 = vsel %vm3026, %v3034, %v3035
    %v3037 = vrot.slane %v3035, 4
    %v3038 = vrot.slane %v3002, 6
    %v3039 = vsel %vm3026, %v3037, %v3038
    %v3040 = vrot.slane %v3038, 4
    %v3041 = vrot.slane %v3003, 6
    %v3042 = vsel %vm3026, %v3040, %v3041
    %v3043 = vrot.slane %v3041, 4
    %v3044 = vrot.slane %v3004, 6
    %v3045 = vsel %vm3026, %v3043, %v3044
    %v3046 = vrot.slane %v3044, 4
    %v3047 = vrot.slane %v3005, 6
    %v3048 = vsel %vm3026, %v3046, %v3047
    %v3049 = vrot.slane %v3047, 4
    %v3050 = vrot.slane %v3006, 6
    %v3051 = vsel %vm3026, %v3049, %v3050
    %v3052 = vrot.slane %v3050, 4
    %v3053 = vrot.slane %v3007, 6
    %v3054 = vsel %vm3026, %v3052, %v3053
    %v3055 = vrot.slane %v3053, 4
    %v3056 = vrot.slane %v3008, 6
    %v3057 = vsel %vm3026, %v3055, %v3056
    %v3058 = vrot.slane %v3056, 4
    %v3059 = vrot.slane %v3009, 6
    %v3060 = vsel %vm3026, %v3058, %v3059
    %v3061 = vrot.slane %v3059, 4
    %v3062 = vrot.slane %v3010, 6
    %v3063 = vsel %vm3026, %v3061, %v3062
    %vm3077 = vcmask 257026
    %3078 = vst.msk [vmem:[#allocation3 + $0x30] sm:$0xc] %vm3077, %v3027
    %3079 = vst.msk [vmem:[#allocation3 + $0x34] sm:$0xf] %vm1160, %v3030
    %3080 = vst.msk [vmem:[#allocation3 + $0x38] sm:$0xf] %vm1160, %v3033
    %3081 = vst.msk [vmem:[#allocation3 + $0x3c] sm:$0xf] %vm1160, %v3036
    %3082 = vst.msk [vmem:[#allocation3 + $0x40] sm:$0xf] %vm1160, %v3039
    %3083 = vst.msk [vmem:[#allocation3 + $0x44] sm:$0xf] %vm1160, %v3042
    %3084 = vst.msk [vmem:[#allocation3 + $0x48] sm:$0xf] %vm1160, %v3045
    %3085 = vst.msk [vmem:[#allocation3 + $0x4c] sm:$0xf] %vm1160, %v3048
    %3086 = vst.msk [vmem:[#allocation3 + $0x50] sm:$0xf] %vm1160, %v3051
    %3087 = vst.msk [vmem:[#allocation3 + $0x54] sm:$0xf] %vm1160, %v3054
    %3088 = vst.msk [vmem:[#allocation3 + $0x58] sm:$0xf] %vm1160, %v3057
    %3089 = vst.msk [vmem:[#allocation3 + $0x5c] sm:$0xf] %vm1160, %v3060
    %3090 = vst.msk [vmem:[#allocation3 + $0x60] sm:$0xf] %vm1160, %v3063
    %v3091 = vld [vmem:[#allocation3] sm:$0xf]
    %v3092 = vld [vmem:[#allocation3 + $0x4] sm:$0xf]
    %v3093 = vld [vmem:[#allocation3 + $0x8] sm:$0xf]
    %v3094 = vld [vmem:[#allocation3 + $0xc] sm:$0xf]
    %v3095 = vld [vmem:[#allocation3 + $0x10] sm:$0xf]
    %v3096 = vld [vmem:[#allocation3 + $0x14] sm:$0xf]
    %v3097 = vld [vmem:[#allocation3 + $0x18] sm:$0xf]
    %v3098 = vld [vmem:[#allocation3 + $0x1c] sm:$0xf]
    %v3099 = vld [vmem:[#allocation3 + $0x20] sm:$0xf]
    %v3100 = vld [vmem:[#allocation3 + $0x24] sm:$0xf]
    %v3101 = vld [vmem:[#allocation3 + $0x28] sm:$0xf]
    %v3102 = vld [vmem:[#allocation3 + $0x2c] sm:$0xf]
    %v3103 = vld [vmem:[#allocation3 + $0x30] sm:$0xf]
    %v3104 = vld [vmem:[#allocation3 + $0x34] sm:$0xf]
    %v3105 = vld [vmem:[#allocation3 + $0x38] sm:$0xf]
    %v3106 = vld [vmem:[#allocation3 + $0x3c] sm:$0xf]
    %v3107 = vld [vmem:[#allocation3 + $0x40] sm:$0xf]
    %v3108 = vld [vmem:[#allocation3 + $0x44] sm:$0xf]
    %v3109 = vld [vmem:[#allocation3 + $0x48] sm:$0xf]
    %v3110 = vld [vmem:[#allocation3 + $0x4c] sm:$0xf]
    %v3111 = vld [vmem:[#allocation3 + $0x50] sm:$0xf]
    %v3112 = vld [vmem:[#allocation3 + $0x54] sm:$0xf]
    %v3113 = vld [vmem:[#allocation3 + $0x58] sm:$0x1]
    %v3114 = vld [vmem:[#allocation3 + $0x58] sm:$0x3]
    %v3115 = vld [vmem:[#allocation3] sm:$0xe]
    %v3116 = vld [vmem:[#allocation3 + $0x4] sm:$0xe]
    %v3117 = vld [vmem:[#allocation3 + $0x58] sm:$0xf]
    %v3118 = vld [vmem:[#allocation3 + $0x5c] sm:$0x3]
    %v3119 = vld [vmem:[#allocation3 + $0x5c] sm:$0x7]
    %v3120 = vld [vmem:[#allocation3 + $0x4] sm:$0xc]
    %v3121 = vld [vmem:[#allocation3 + $0x8] sm:$0xc]
    %v3122 = vld [vmem:[#allocation3 + $0x5c] sm:$0xf]
    %v3123 = vld [vmem:[#allocation3 + $0x60] sm:$0x7]
    %v3124 = vld [vmem:[#allocation3 + $0x60] sm:$0xf]
    %v3125 = vld [vmem:[#allocation3 + $0x8] sm:$0x8]
    %v3149 = vunpack.c.l.b16 %v3091
    %v3150 = vunpack.c.l.b16 %v3092
    %v3151 = vunpack.c.l.b16 %v3093
    %v3152 = vunpack.c.l.b16 %v3094
    %v3153 = vunpack.c.l.b16 %v3095
    %v3154 = vunpack.c.l.b16 %v3096
    %v3155 = vunpack.c.l.b16 %v3097
    %v3156 = vunpack.c.l.b16 %v3098
    %v3157 = vunpack.c.l.b16 %v3099
    %v3158 = vunpack.c.l.b16 %v3100
    %v3159 = vunpack.c.l.b16 %v3101
    %v3160 = vunpack.c.l.b16 %v3102
    %v3161 = vunpack.c.l.b16 %v3103
    %v3162 = vunpack.c.l.b16 %v3104
    %v3163 = vunpack.c.l.b16 %v3105
    %v3164 = vunpack.c.l.b16 %v3106
    %v3165 = vunpack.c.l.b16 %v3107
    %v3166 = vunpack.c.l.b16 %v3108
    %v3167 = vunpack.c.l.b16 %v3109
    %v3168 = vunpack.c.l.b16 %v3110
    %v3169 = vunpack.c.l.b16 %v3111
    %v3170 = vunpack.c.l.b16 %v3112
    %v3171 = vunpack.c.l.b16 %v3113
    %v3172 = vpack.c.b16 %v3150, %v3149
    %v3173 = vpack.c.b16 %v3152, %v3151
    %v3174 = vpack.c.b16 %v3154, %v3153
    %v3175 = vpack.c.b16 %v3156, %v3155
    %v3176 = vpack.c.b16 %v3158, %v3157
    %v3177 = vpack.c.b16 %v3160, %v3159
    %v3178 = vpack.c.b16 %v3162, %v3161
    %v3179 = vpack.c.b16 %v3164, %v3163
    %v3180 = vpack.c.b16 %v3166, %v3165
    %v3181 = vpack.c.b16 %v3168, %v3167
    %v3182 = vpack.c.b16 %v3170, %v3169
    %v3183 = vpack.c.b16 %v3171, %v3171
    %v3185 = vunpack.c.l.b16 %v3114
    %v3186 = vpack.c.b16 %v3185, %v3185
    %vm3187 = vsmask.f32 7424
    %v3189 = vshrl.u32 %v3172, 16
    %v3191 = vshll.u32 %v3172, 16
    %v3193 = vrot.slane %v3191, 1
    %v3194 = vor.u32 %v3189, %v3193
    %v3196 = vshll.u32 %v3173, 16
    %v3198 = vrot.slane %v3196, 1
    %v3199 = vsel %vm3187, %v3194, %v3198
    %v3200 = vshrl.u32 %v3173, 16
    %v3202 = vor.u32 %v3200, %v3198
    %v3204 = vshll.u32 %v3174, 16
    %v3206 = vrot.slane %v3204, 1
    %v3207 = vsel %vm3187, %v3202, %v3206
    %v3208 = vshrl.u32 %v3174, 16
    %v3210 = vor.u32 %v3208, %v3206
    %v3212 = vshll.u32 %v3175, 16
    %v3214 = vrot.slane %v3212, 1
    %v3215 = vsel %vm3187, %v3210, %v3214
    %v3216 = vshrl.u32 %v3175, 16
    %v3218 = vor.u32 %v3216, %v3214
    %v3220 = vshll.u32 %v3176, 16
    %v3222 = vrot.slane %v3220, 1
    %v3223 = vsel %vm3187, %v3218, %v3222
    %v3224 = vshrl.u32 %v3176, 16
    %v3226 = vor.u32 %v3224, %v3222
    %v3228 = vshll.u32 %v3177, 16
    %v3230 = vrot.slane %v3228, 1
    %v3231 = vsel %vm3187, %v3226, %v3230
    %v3232 = vshrl.u32 %v3177, 16
    %v3234 = vor.u32 %v3232, %v3230
    %v3236 = vshll.u32 %v3178, 16
    %v3238 = vrot.slane %v3236, 1
    %v3239 = vsel %vm3187, %v3234, %v3238
    %v3240 = vshrl.u32 %v3178, 16
    %v3242 = vor.u32 %v3240, %v3238
    %v3244 = vshll.u32 %v3179, 16
    %v3246 = vrot.slane %v3244, 1
    %v3247 = vsel %vm3187, %v3242, %v3246
    %v3248 = vshrl.u32 %v3179, 16
    %v3250 = vor.u32 %v3248, %v3246
    %v3252 = vshll.u32 %v3180, 16
    %v3254 = vrot.slane %v3252, 1
    %v3255 = vsel %vm3187, %v3250, %v3254
    %v3256 = vshrl.u32 %v3180, 16
    %v3258 = vor.u32 %v3256, %v3254
    %v3260 = vshll.u32 %v3181, 16
    %v3262 = vrot.slane %v3260, 1
    %v3263 = vsel %vm3187, %v3258, %v3262
    %v3264 = vshrl.u32 %v3181, 16
    %v3266 = vor.u32 %v3264, %v3262
    %v3268 = vshll.u32 %v3182, 16
    %v3270 = vrot.slane %v3268, 1
    %v3271 = vsel %vm3187, %v3266, %v3270
    %v3272 = vshrl.u32 %v3182, 16
    %v3274 = vor.u32 %v3272, %v3270
    %v3276 = vshll.u32 %v3186, 16
    %v3278 = vrot.slane %v3276, 1
    %v3279 = vsel %vm3187, %v3274, %v3278
    %v3280 = vshrl.u32 %v3186, 16
    %v3282 = vor.u32 %v3280, %v3278
    %3283 = vrot.lane.b32.xlu0 %v3199, 32
    %v3284 = vpop.permute.xlu0 %3283
    %3285 = vrot.lane.b32.xlu0 %v3207, 32
    %v3286 = vpop.permute.xlu0 %3285
    %3287 = vrot.lane.b32.xlu0 %v3215, 32
    %v3288 = vpop.permute.xlu0 %3287
    %3289 = vrot.lane.b32.xlu0 %v3223, 32
    %v3290 = vpop.permute.xlu0 %3289
    %3291 = vrot.lane.b32.xlu0 %v3231, 32
    %v3292 = vpop.permute.xlu0 %3291
    %3293 = vrot.lane.b32.xlu0 %v3239, 32
    %v3294 = vpop.permute.xlu0 %3293
    %3295 = vrot.lane.b32.xlu0 %v3247, 32
    %v3296 = vpop.permute.xlu0 %3295
    %3297 = vrot.lane.b32.xlu0 %v3255, 32
    %v3298 = vpop.permute.xlu0 %3297
    %3299 = vrot.lane.b32.xlu0 %v3263, 32
    %v3300 = vpop.permute.xlu0 %3299
    %3301 = vrot.lane.b32.xlu0 %v3271, 32
    %v3302 = vpop.permute.xlu0 %3301
    %3303 = vrot.lane.b32.xlu0 %v3279, 32
    %v3304 = vpop.permute.xlu0 %3303
    %3305 = vrot.lane.b32.xlu0 %v3282, 32
    %v3306 = vpop.permute.xlu0 %3305
    %v3308 = vunpack.c.l.b16 %v3115
    %v3309 = vpack.c.b16 %v3150, %v3308
    %vm3310 = vcmask 1046528
    %v3311 = vrot.slane %v3309, 1
    %v3312 = vrot.slane %v3173, 1
    %v3313 = vsel %vm3310, %v3311, %v3312
    %v3314 = vrot.slane %v3174, 1
    %v3315 = vsel %vm3310, %v3312, %v3314
    %v3316 = vrot.slane %v3175, 1
    %v3317 = vsel %vm3310, %v3314, %v3316
    %v3318 = vrot.slane %v3176, 1
    %v3319 = vsel %vm3310, %v3316, %v3318
    %v3320 = vrot.slane %v3177, 1
    %v3321 = vsel %vm3310, %v3318, %v3320
    %v3322 = vrot.slane %v3178, 1
    %v3323 = vsel %vm3310, %v3320, %v3322
    %v3324 = vrot.slane %v3179, 1
    %v3325 = vsel %vm3310, %v3322, %v3324
    %v3326 = vrot.slane %v3180, 1
    %v3327 = vsel %vm3310, %v3324, %v3326
    %v3328 = vrot.slane %v3181, 1
    %v3329 = vsel %vm3310, %v3326, %v3328
    %v3330 = vrot.slane %v3182, 1
    %v3331 = vsel %vm3310, %v3328, %v3330
    %v3332 = vrot.slane %v3186, 1
    %v3333 = vsel %vm3310, %v3330, %v3332
    %3334 = vrot.lane.b32.xlu0 %v3313, 64
    %v3335 = vpop.permute.xlu0 %3334
    %3336 = vrot.lane.b32.xlu0 %v3315, 64
    %v3337 = vpop.permute.xlu0 %3336
    %3338 = vrot.lane.b32.xlu0 %v3317, 64
    %v3339 = vpop.permute.xlu0 %3338
    %3340 = vrot.lane.b32.xlu0 %v3319, 64
    %v3341 = vpop.permute.xlu0 %3340
    %3342 = vrot.lane.b32.xlu0 %v3321, 64
    %v3343 = vpop.permute.xlu0 %3342
    %3344 = vrot.lane.b32.xlu0 %v3323, 64
    %v3345 = vpop.permute.xlu0 %3344
    %3346 = vrot.lane.b32.xlu0 %v3325, 64
    %v3347 = vpop.permute.xlu0 %3346
    %3348 = vrot.lane.b32.xlu0 %v3327, 64
    %v3349 = vpop.permute.xlu0 %3348
    %3350 = vrot.lane.b32.xlu0 %v3329, 64
    %v3351 = vpop.permute.xlu0 %3350
    %3352 = vrot.lane.b32.xlu0 %v3331, 64
    %v3353 = vpop.permute.xlu0 %3352
    %3354 = vrot.lane.b32.xlu0 %v3333, 64
    %v3355 = vpop.permute.xlu0 %3354
    %3356 = vrot.lane.b32.xlu0 %v3332, 64
    %v3357 = vpop.permute.xlu0 %3356
    %v3361 = vunpack.c.l.b16 %v3116
    %v3362 = vunpack.c.l.b16 %v3117
    %v3363 = vunpack.c.l.b16 %v3118
    %v3364 = vpack.c.b16 %v3151, %v3361
    %v3365 = vpack.c.b16 %v3153, %v3152
    %v3366 = vpack.c.b16 %v3155, %v3154
    %v3367 = vpack.c.b16 %v3157, %v3156
    %v3368 = vpack.c.b16 %v3159, %v3158
    %v3369 = vpack.c.b16 %v3161, %v3160
    %v3370 = vpack.c.b16 %v3163, %v3162
    %v3371 = vpack.c.b16 %v3165, %v3164
    %v3372 = vpack.c.b16 %v3167, %v3166
    %v3373 = vpack.c.b16 %v3169, %v3168
    %v3374 = vpack.c.b16 %v3362, %v3170
    %v3375 = vpack.c.b16 %v3363, %v3363
    %v3376 = vrot.slane %v3364, 1
    %v3377 = vrot.slane %v3365, 1
    %v3378 = vsel %vm3310, %v3376, %v3377
    %v3379 = vrot.slane %v3366, 1
    %v3380 = vsel %vm3310, %v3377, %v3379
    %v3381 = vrot.slane %v3367, 1
    %v3382 = vsel %vm3310, %v3379, %v3381
    %v3383 = vrot.slane %v3368, 1
    %v3384 = vsel %vm3310, %v3381, %v3383
    %v3385 = vrot.slane %v3369, 1
    %v3386 = vsel %vm3310, %v3383, %v3385
    %v3387 = vrot.slane %v3370, 1
    %v3388 = vsel %vm3310, %v3385, %v3387
    %v3389 = vrot.slane %v3371, 1
    %v3390 = vsel %vm3310, %v3387, %v3389
    %v3391 = vrot.slane %v3372, 1
    %v3392 = vsel %vm3310, %v3389, %v3391
    %v3393 = vrot.slane %v3373, 1
    %v3394 = vsel %vm3310, %v3391, %v3393
    %v3395 = vrot.slane %v3374, 1
    %v3396 = vsel %vm3310, %v3393, %v3395
    %v3397 = vrot.slane %v3375, 1
    %v3398 = vsel %vm3310, %v3395, %v3397
    %3399 = vrot.lane.b32.xlu0 %v3378, 96
    %v3400 = vpop.permute.xlu0 %3399
    %3401 = vrot.lane.b32.xlu0 %v3380, 96
    %v3402 = vpop.permute.xlu0 %3401
    %3403 = vrot.lane.b32.xlu0 %v3382, 96
    %v3404 = vpop.permute.xlu0 %3403
    %3405 = vrot.lane.b32.xlu0 %v3384, 96
    %v3406 = vpop.permute.xlu0 %3405
    %3407 = vrot.lane.b32.xlu0 %v3386, 96
    %v3408 = vpop.permute.xlu0 %3407
    %3409 = vrot.lane.b32.xlu0 %v3388, 96
    %v3410 = vpop.permute.xlu0 %3409
    %3411 = vrot.lane.b32.xlu0 %v3390, 96
    %v3412 = vpop.permute.xlu0 %3411
    %3413 = vrot.lane.b32.xlu0 %v3392, 96
    %v3414 = vpop.permute.xlu0 %3413
    %3415 = vrot.lane.b32.xlu0 %v3394, 96
    %v3416 = vpop.permute.xlu0 %3415
    %3417 = vrot.lane.b32.xlu0 %v3396, 96
    %v3418 = vpop.permute.xlu0 %3417
    %3419 = vrot.lane.b32.xlu0 %v3398, 96
    %v3420 = vpop.permute.xlu0 %3419
    %3421 = vrot.lane.b32.xlu0 %v3397, 96
    %v3422 = vpop.permute.xlu0 %3421
    %v3424 = vunpack.c.l.b16 %v3119
    %v3425 = vpack.c.b16 %v3424, %v3424
    %vm3426 = vsmask.f32 6400
    %v3428 = vshrl.u32 %v3364, 16
    %v3430 = vrot.slane %v3428, 1
    %v3431 = vshll.u32 %v3364, 16
    %v3433 = vrot.slane %v3431, 2
    %v3434 = vor.u32 %v3430, %v3433
    %v3436 = vshrl.u32 %v3365, 16
    %v3438 = vrot.slane %v3436, 1
    %v3439 = vshll.u32 %v3365, 16
    %v3441 = vrot.slane %v3439, 2
    %v3442 = vor.u32 %v3438, %v3441
    %v3443 = vsel %vm3426, %v3434, %v3442
    %v3445 = vshrl.u32 %v3366, 16
    %v3447 = vrot.slane %v3445, 1
    %v3448 = vshll.u32 %v3366, 16
    %v3450 = vrot.slane %v3448, 2
    %v3451 = vor.u32 %v3447, %v3450
    %v3452 = vsel %vm3426, %v3442, %v3451
    %v3454 = vshrl.u32 %v3367, 16
    %v3456 = vrot.slane %v3454, 1
    %v3457 = vshll.u32 %v3367, 16
    %v3459 = vrot.slane %v3457, 2
    %v3460 = vor.u32 %v3456, %v3459
    %v3461 = vsel %vm3426, %v3451, %v3460
    %v3463 = vshrl.u32 %v3368, 16
    %v3465 = vrot.slane %v3463, 1
    %v3466 = vshll.u32 %v3368, 16
    %v3468 = vrot.slane %v3466, 2
    %v3469 = vor.u32 %v3465, %v3468
    %v3470 = vsel %vm3426, %v3460, %v3469
    %v3472 = vshrl.u32 %v3369, 16
    %v3474 = vrot.slane %v3472, 1
    %v3475 = vshll.u32 %v3369, 16
    %v3477 = vrot.slane %v3475, 2
    %v3478 = vor.u32 %v3474, %v3477
    %v3479 = vsel %vm3426, %v3469, %v3478
    %v3481 = vshrl.u32 %v3370, 16
    %v3483 = vrot.slane %v3481, 1
    %v3484 = vshll.u32 %v3370, 16
    %v3486 = vrot.slane %v3484, 2
    %v3487 = vor.u32 %v3483, %v3486
    %v3488 = vsel %vm3426, %v3478, %v3487
    %v3490 = vshrl.u32 %v3371, 16
    %v3492 = vrot.slane %v3490, 1
    %v3493 = vshll.u32 %v3371, 16
    %v3495 = vrot.slane %v3493, 2
    %v3496 = vor.u32 %v3492, %v3495
    %v3497 = vsel %vm3426, %v3487, %v3496
    %v3499 = vshrl.u32 %v3372, 16
    %v3501 = vrot.slane %v3499, 1
    %v3502 = vshll.u32 %v3372, 16
    %v3504 = vrot.slane %v3502, 2
    %v3505 = vor.u32 %v3501, %v3504
    %v3506 = vsel %vm3426, %v3496, %v3505
    %v3508 = vshrl.u32 %v3373, 16
    %v3510 = vrot.slane %v3508, 1
    %v3511 = vshll.u32 %v3373, 16
    %v3513 = vrot.slane %v3511, 2
    %v3514 = vor.u32 %v3510, %v3513
    %v3515 = vsel %vm3426, %v3505, %v3514
    %v3517 = vshrl.u32 %v3374, 16
    %v3519 = vrot.slane %v3517, 1
    %v3520 = vshll.u32 %v3374, 16
    %v3522 = vrot.slane %v3520, 2
    %v3523 = vor.u32 %v3519, %v3522
    %v3524 = vsel %vm3426, %v3514, %v3523
    %v3526 = vshrl.u32 %v3425, 16
    %v3528 = vrot.slane %v3526, 1
    %v3529 = vshll.u32 %v3425, 16
    %v3531 = vrot.slane %v3529, 2
    %v3532 = vor.u32 %v3528, %v3531
    %v3533 = vsel %vm3426, %v3523, %v3532
    %v3535 = vunpack.c.l.b16 %v3120
    %v3536 = vpack.c.b16 %v3151, %v3535
    %vm3537 = vcmask 1045504
    %v3538 = vrot.slane %v3536, 2
    %v3539 = vrot.slane %v3365, 2
    %v3540 = vsel %vm3537, %v3538, %v3539
    %v3541 = vrot.slane %v3366, 2
    %v3542 = vsel %vm3537, %v3539, %v3541
    %v3543 = vrot.slane %v3367, 2
    %v3544 = vsel %vm3537, %v3541, %v3543
    %v3545 = vrot.slane %v3368, 2
    %v3546 = vsel %vm3537, %v3543, %v3545
    %v3547 = vrot.slane %v3369, 2
    %v3548 = vsel %vm3537, %v3545, %v3547
    %v3549 = vrot.slane %v3370, 2
    %v3550 = vsel %vm3537, %v3547, %v3549
    %v3551 = vrot.slane %v3371, 2
    %v3552 = vsel %vm3537, %v3549, %v3551
    %v3553 = vrot.slane %v3372, 2
    %v3554 = vsel %vm3537, %v3551, %v3553
    %v3555 = vrot.slane %v3373, 2
    %v3556 = vsel %vm3537, %v3553, %v3555
    %v3557 = vrot.slane %v3374, 2
    %v3558 = vsel %vm3537, %v3555, %v3557
    %v3559 = vrot.slane %v3425, 2
    %v3560 = vsel %vm3537, %v3557, %v3559
    %3561 = vrot.lane.b32.xlu0 %v3540, 32
    %v3562 = vpop.permute.xlu0 %3561
    %3563 = vrot.lane.b32.xlu0 %v3542, 32
    %v3564 = vpop.permute.xlu0 %3563
    %3565 = vrot.lane.b32.xlu0 %v3544, 32
    %v3566 = vpop.permute.xlu0 %3565
    %3567 = vrot.lane.b32.xlu0 %v3546, 32
    %v3568 = vpop.permute.xlu0 %3567
    %3569 = vrot.lane.b32.xlu0 %v3548, 32
    %v3570 = vpop.permute.xlu0 %3569
    %3571 = vrot.lane.b32.xlu0 %v3550, 32
    %v3572 = vpop.permute.xlu0 %3571
    %3573 = vrot.lane.b32.xlu0 %v3552, 32
    %v3574 = vpop.permute.xlu0 %3573
    %3575 = vrot.lane.b32.xlu0 %v3554, 32
    %v3576 = vpop.permute.xlu0 %3575
    %3577 = vrot.lane.b32.xlu0 %v3556, 32
    %v3578 = vpop.permute.xlu0 %3577
    %3579 = vrot.lane.b32.xlu0 %v3558, 32
    %v3580 = vpop.permute.xlu0 %3579
    %3581 = vrot.lane.b32.xlu0 %v3560, 32
    %v3582 = vpop.permute.xlu0 %3581
    %3583 = vrot.lane.b32.xlu0 %v3559, 32
    %v3584 = vpop.permute.xlu0 %3583
    %v3588 = vunpack.c.l.b16 %v3121
    %v3589 = vunpack.c.l.b16 %v3122
    %v3590 = vunpack.c.l.b16 %v3123
    %v3591 = vpack.c.b16 %v3152, %v3588
    %v3592 = vpack.c.b16 %v3589, %v3362
    %v3593 = vpack.c.b16 %v3590, %v3590
    %v3594 = vrot.slane %v3591, 2
    %v3595 = vrot.slane %v3174, 2
    %v3596 = vsel %vm3537, %v3594, %v3595
    %v3597 = vrot.slane %v3175, 2
    %v3598 = vsel %vm3537, %v3595, %v3597
    %v3599 = vrot.slane %v3176, 2
    %v3600 = vsel %vm3537, %v3597, %v3599
    %v3601 = vrot.slane %v3177, 2
    %v3602 = vsel %vm3537, %v3599, %v3601
    %v3603 = vrot.slane %v3178, 2
    %v3604 = vsel %vm3537, %v3601, %v3603
    %v3605 = vrot.slane %v3179, 2
    %v3606 = vsel %vm3537, %v3603, %v3605
    %v3607 = vrot.slane %v3180, 2
    %v3608 = vsel %vm3537, %v3605, %v3607
    %v3609 = vrot.slane %v3181, 2
    %v3610 = vsel %vm3537, %v3607, %v3609
    %v3611 = vrot.slane %v3182, 2
    %v3612 = vsel %vm3537, %v3609, %v3611
    %v3613 = vrot.slane %v3592, 2
    %v3614 = vsel %vm3537, %v3611, %v3613
    %v3615 = vrot.slane %v3593, 2
    %v3616 = vsel %vm3537, %v3613, %v3615
    %3617 = vrot.lane.b32.xlu0 %v3596, 64
    %v3618 = vpop.permute.xlu0 %3617
    %3619 = vrot.lane.b32.xlu0 %v3598, 64
    %v3620 = vpop.permute.xlu0 %3619
    %3621 = vrot.lane.b32.xlu0 %v3600, 64
    %v3622 = vpop.permute.xlu0 %3621
    %3623 = vrot.lane.b32.xlu0 %v3602, 64
    %v3624 = vpop.permute.xlu0 %3623
    %3625 = vrot.lane.b32.xlu0 %v3604, 64
    %v3626 = vpop.permute.xlu0 %3625
    %3627 = vrot.lane.b32.xlu0 %v3606, 64
    %v3628 = vpop.permute.xlu0 %3627
    %3629 = vrot.lane.b32.xlu0 %v3608, 64
    %v3630 = vpop.permute.xlu0 %3629
    %3631 = vrot.lane.b32.xlu0 %v3610, 64
    %v3632 = vpop.permute.xlu0 %3631
    %3633 = vrot.lane.b32.xlu0 %v3612, 64
    %v3634 = vpop.permute.xlu0 %3633
    %3635 = vrot.lane.b32.xlu0 %v3614, 64
    %v3636 = vpop.permute.xlu0 %3635
    %3637 = vrot.lane.b32.xlu0 %v3616, 64
    %v3638 = vpop.permute.xlu0 %3637
    %3639 = vrot.lane.b32.xlu0 %v3615, 64
    %v3640 = vpop.permute.xlu0 %3639
    %v3642 = vunpack.c.l.b16 %v3124
    %v3643 = vpack.c.b16 %v3642, %v3642
    %vm3644 = vsmask.f32 5376
    %v3646 = vshrl.u32 %v3591, 16
    %v3648 = vrot.slane %v3646, 2
    %v3649 = vshll.u32 %v3591, 16
    %v3651 = vrot.slane %v3649, 3
    %v3652 = vor.u32 %v3648, %v3651
    %v3653 = vrot.slane %v3208, 2
    %v3654 = vrot.slane %v3204, 3
    %v3655 = vor.u32 %v3653, %v3654
    %v3656 = vsel %vm3644, %v3652, %v3655
    %v3657 = vrot.slane %v3216, 2
    %v3658 = vrot.slane %v3212, 3
    %v3659 = vor.u32 %v3657, %v3658
    %v3660 = vsel %vm3644, %v3655, %v3659
    %v3661 = vrot.slane %v3224, 2
    %v3662 = vrot.slane %v3220, 3
    %v3663 = vor.u32 %v3661, %v3662
    %v3664 = vsel %vm3644, %v3659, %v3663
    %v3665 = vrot.slane %v3232, 2
    %v3666 = vrot.slane %v3228, 3
    %v3667 = vor.u32 %v3665, %v3666
    %v3668 = vsel %vm3644, %v3663, %v3667
    %v3669 = vrot.slane %v3240, 2
    %v3670 = vrot.slane %v3236, 3
    %v3671 = vor.u32 %v3669, %v3670
    %v3672 = vsel %vm3644, %v3667, %v3671
    %v3673 = vrot.slane %v3248, 2
    %v3674 = vrot.slane %v3244, 3
    %v3675 = vor.u32 %v3673, %v3674
    %v3676 = vsel %vm3644, %v3671, %v3675
    %v3677 = vrot.slane %v3256, 2
    %v3678 = vrot.slane %v3252, 3
    %v3679 = vor.u32 %v3677, %v3678
    %v3680 = vsel %vm3644, %v3675, %v3679
    %v3681 = vrot.slane %v3264, 2
    %v3682 = vrot.slane %v3260, 3
    %v3683 = vor.u32 %v3681, %v3682
    %v3684 = vsel %vm3644, %v3679, %v3683
    %v3685 = vrot.slane %v3272, 2
    %v3686 = vrot.slane %v3268, 3
    %v3687 = vor.u32 %v3685, %v3686
    %v3688 = vsel %vm3644, %v3683, %v3687
    %v3690 = vshrl.u32 %v3592, 16
    %v3692 = vrot.slane %v3690, 2
    %v3693 = vshll.u32 %v3592, 16
    %v3695 = vrot.slane %v3693, 3
    %v3696 = vor.u32 %v3692, %v3695
    %v3697 = vsel %vm3644, %v3687, %v3696
    %v3699 = vshrl.u32 %v3643, 16
    %v3701 = vrot.slane %v3699, 2
    %v3702 = vshll.u32 %v3643, 16
    %v3704 = vrot.slane %v3702, 3
    %v3705 = vor.u32 %v3701, %v3704
    %v3706 = vsel %vm3644, %v3696, %v3705
    %3707 = vrot.lane.b32.xlu0 %v3656, 96
    %v3708 = vpop.permute.xlu0 %3707
    %3709 = vrot.lane.b32.xlu0 %v3660, 96
    %v3710 = vpop.permute.xlu0 %3709
    %3711 = vrot.lane.b32.xlu0 %v3664, 96
    %v3712 = vpop.permute.xlu0 %3711
    %3713 = vrot.lane.b32.xlu0 %v3668, 96
    %v3714 = vpop.permute.xlu0 %3713
    %3715 = vrot.lane.b32.xlu0 %v3672, 96
    %v3716 = vpop.permute.xlu0 %3715
    %3717 = vrot.lane.b32.xlu0 %v3676, 96
    %v3718 = vpop.permute.xlu0 %3717
    %3719 = vrot.lane.b32.xlu0 %v3680, 96
    %v3720 = vpop.permute.xlu0 %3719
    %3721 = vrot.lane.b32.xlu0 %v3684, 96
    %v3722 = vpop.permute.xlu0 %3721
    %3723 = vrot.lane.b32.xlu0 %v3688, 96
    %v3724 = vpop.permute.xlu0 %3723
    %3725 = vrot.lane.b32.xlu0 %v3697, 96
    %v3726 = vpop.permute.xlu0 %3725
    %3727 = vrot.lane.b32.xlu0 %v3706, 96
    %v3728 = vpop.permute.xlu0 %3727
    %3729 = vrot.lane.b32.xlu0 %v3705, 96
    %v3730 = vpop.permute.xlu0 %3729
    %v3732 = vunpack.c.l.b16 %v3125
    %v3733 = vpack.c.b16 %v3152, %v3732
    %vm3734 = vcmask 1044480
    %v3735 = vrot.slane %v3733, 3
    %v3736 = vrot.slane %v3174, 3
    %v3737 = vsel %vm3734, %v3735, %v3736
    %v3738 = vrot.slane %v3175, 3
    %v3739 = vsel %vm3734, %v3736, %v3738
    %v3740 = vrot.slane %v3176, 3
    %v3741 = vsel %vm3734, %v3738, %v3740
    %v3742 = vrot.slane %v3177, 3
    %v3743 = vsel %vm3734, %v3740, %v3742
    %v3744 = vrot.slane %v3178, 3
    %v3745 = vsel %vm3734, %v3742, %v3744
    %v3746 = vrot.slane %v3179, 3
    %v3747 = vsel %vm3734, %v3744, %v3746
    %v3748 = vrot.slane %v3180, 3
    %v3749 = vsel %vm3734, %v3746, %v3748
    %v3750 = vrot.slane %v3181, 3
    %v3751 = vsel %vm3734, %v3748, %v3750
    %v3752 = vrot.slane %v3182, 3
    %v3753 = vsel %vm3734, %v3750, %v3752
    %v3754 = vrot.slane %v3592, 3
    %v3755 = vsel %vm3734, %v3752, %v3754
    %v3756 = vrot.slane %v3643, 3
    %v3757 = vsel %vm3734, %v3754, %v3756
    %vm3758 = vcmask 261120
    %v3760 = vsel %vm3758, %v3172, %v3284
    %v3762 = vsel %vm3758, %v3173, %v3286
    %v3764 = vsel %vm3758, %v3174, %v3288
    %v3766 = vsel %vm3758, %v3175, %v3290
    %v3768 = vsel %vm3758, %v3176, %v3292
    %v3770 = vsel %vm3758, %v3177, %v3294
    %v3772 = vsel %vm3758, %v3178, %v3296
    %v3774 = vsel %vm3758, %v3179, %v3298
    %v3776 = vsel %vm3758, %v3180, %v3300
    %v3778 = vsel %vm3758, %v3181, %v3302
    %v3780 = vsel %vm3758, %v3182, %v3304
    %v3783 = vsel %vm3758, %v3183, %v3306
    %vm3784 = vcmask 523264
    %v3786 = vsel %vm3784, %v3760, %v3335
    %v3788 = vsel %vm3784, %v3762, %v3337
    %v3790 = vsel %vm3784, %v3764, %v3339
    %v3792 = vsel %vm3784, %v3766, %v3341
    %v3794 = vsel %vm3784, %v3768, %v3343
    %v3796 = vsel %vm3784, %v3770, %v3345
    %v3798 = vsel %vm3784, %v3772, %v3347
    %v3800 = vsel %vm3784, %v3774, %v3349
    %v3802 = vsel %vm3784, %v3776, %v3351
    %v3804 = vsel %vm3784, %v3778, %v3353
    %v3806 = vsel %vm3784, %v3780, %v3355
    %v3808 = vsel %vm3784, %v3783, %v3357
    %vm3809 = vcmask 785408
    %v3811 = vsel %vm3809, %v3786, %v3400
    %v3814 = vsel %vm3809, %v3788, %v3402
    %v3817 = vsel %vm3809, %v3790, %v3404
    %v3820 = vsel %vm3809, %v3792, %v3406
    %v3823 = vsel %vm3809, %v3794, %v3408
    %v3826 = vsel %vm3809, %v3796, %v3410
    %v3829 = vsel %vm3809, %v3798, %v3412
    %v3832 = vsel %vm3809, %v3800, %v3414
    %v3835 = vsel %vm3809, %v3802, %v3416
    %v3838 = vsel %vm3809, %v3804, %v3418
    %v3841 = vsel %vm3809, %v3806, %v3420
    %v3844 = vsel %vm3809, %v3808, %v3422
    %v3848 = vsel %vm3758, %v3443, %v3562
    %v3851 = vsel %vm3758, %v3452, %v3564
    %v3854 = vsel %vm3758, %v3461, %v3566
    %v3857 = vsel %vm3758, %v3470, %v3568
    %v3860 = vsel %vm3758, %v3479, %v3570
    %v3863 = vsel %vm3758, %v3488, %v3572
    %v3866 = vsel %vm3758, %v3497, %v3574
    %v3869 = vsel %vm3758, %v3506, %v3576
    %v3872 = vsel %vm3758, %v3515, %v3578
    %v3875 = vsel %vm3758, %v3524, %v3580
    %v3878 = vsel %vm3758, %v3533, %v3582
    %v3881 = vsel %vm3758, %v3532, %v3584
    %v3883 = vsel %vm3784, %v3848, %v3618
    %v3885 = vsel %vm3784, %v3851, %v3620
    %v3887 = vsel %vm3784, %v3854, %v3622
    %v3889 = vsel %vm3784, %v3857, %v3624
    %v3891 = vsel %vm3784, %v3860, %v3626
    %v3893 = vsel %vm3784, %v3863, %v3628
    %v3895 = vsel %vm3784, %v3866, %v3630
    %v3897 = vsel %vm3784, %v3869, %v3632
    %v3899 = vsel %vm3784, %v3872, %v3634
    %v3901 = vsel %vm3784, %v3875, %v3636
    %v3903 = vsel %vm3784, %v3878, %v3638
    %v3905 = vsel %vm3784, %v3881, %v3640
    %v3907 = vsel %vm3809, %v3883, %v3708
    %v3910 = vsel %vm3809, %v3885, %v3710
    %v3913 = vsel %vm3809, %v3887, %v3712
    %v3916 = vsel %vm3809, %v3889, %v3714
    %v3919 = vsel %vm3809, %v3891, %v3716
    %v3922 = vsel %vm3809, %v3893, %v3718
    %v3925 = vsel %vm3809, %v3895, %v3720
    %v3928 = vsel %vm3809, %v3897, %v3722
    %v3931 = vsel %vm3809, %v3899, %v3724
    %v3934 = vsel %vm3809, %v3901, %v3726
    %v3937 = vsel %vm3809, %v3903, %v3728
    %v3940 = vsel %vm3809, %v3905, %v3730
    %v3942 = vld [vmem:[%s4] sm:$0xf]
    %v3943 = vld [vmem:[%s4 + $0x4] sm:$0xf]
    %v3944 = vld [vmem:[%s4 + $0x8] sm:$0xf]
    %v3945 = vld [vmem:[%s4 + $0xc] sm:$0xf]
    %v3946 = vld [vmem:[%s4 + $0x10] sm:$0xf]
    %v3947 = vld [vmem:[%s4 + $0x14] sm:$0xf]
    %v3948 = vld [vmem:[%s4 + $0x18] sm:$0xf]
    %v3949 = vld [vmem:[%s4 + $0x1c] sm:$0xf]
    %v3950 = vld [vmem:[%s4 + $0x20] sm:$0xf]
    %v3951 = vld [vmem:[%s4 + $0x24] sm:$0xf]
    %v3952 = vld [vmem:[%s4 + $0x28] sm:$0xf]
    %v3953 = vld [vmem:[%s4 + $0x2c] sm:$0xf]
    %v3954 = vld [vmem:[%s4 + $0x30] sm:$0xf]
    %v3955 = vld [vmem:[%s4 + $0x34] sm:$0xf]
    %v3956 = vld [vmem:[%s4 + $0x38] sm:$0xf]
    %v3957 = vld [vmem:[%s4 + $0x3c] sm:$0xf]
    %v3958 = vld [vmem:[%s4 + $0x40] sm:$0xf]
    %v3959 = vld [vmem:[%s4 + $0x44] sm:$0xf]
    %v3960 = vld [vmem:[%s4 + $0x48] sm:$0xf]
    %v3961 = vld [vmem:[%s4 + $0x4c] sm:$0xf]
    %v3962 = vld [vmem:[%s4 + $0x50] sm:$0xf]
    %v3963 = vld [vmem:[%s4 + $0x54] sm:$0xf]
    %v3964 = vld [vmem:[%s4 + $0x58] sm:$0xf]
    %v3965 = vld [vmem:[%s4 + $0x5c] sm:$0xf]
    %v3966 = vld [vmem:[%s4 + $0x60] sm:$0xf]
    %v3967 = vld [vmem:[%s4 + $0x64] sm:$0xf]
    %v3968 = vld [vmem:[%s4 + $0x68] sm:$0xf]
    %v3969 = vld [vmem:[%s4 + $0x6c] sm:$0xf]
    %v3970 = vld [vmem:[%s4 + $0x70] sm:$0xf]
    %v3971 = vld [vmem:[%s4 + $0x74] sm:$0xf]
    %v3972 = vld [vmem:[%s4 + $0x78] sm:$0xf]
    %v3973 = vld [vmem:[%s4 + $0x7c] sm:$0xf]
    %v3974 = vld [vmem:[%s4 + $0x80] sm:$0xf]
    %v3975 = vld [vmem:[%s4 + $0x84] sm:$0xf]
    %v3976 = vld [vmem:[%s4 + $0x88] sm:$0xf]
    %v3977 = vld [vmem:[%s4 + $0x8c] sm:$0xf]
    %v4014 = vunpack.c.l.b16 %v3942
    %v4015 = vunpack.c.l.b16 %v3943
    %v4016 = vunpack.c.l.b16 %v3944
    %v4017 = vunpack.c.l.b16 %v3945
    %v4018 = vunpack.c.l.b16 %v3946
    %v4019 = vunpack.c.l.b16 %v3947
    %v4020 = vunpack.c.l.b16 %v3948
    %v4021 = vunpack.c.l.b16 %v3949
    %v4022 = vunpack.c.l.b16 %v3950
    %v4023 = vunpack.c.l.b16 %v3951
    %v4024 = vunpack.c.l.b16 %v3952
    %v4025 = vunpack.c.l.b16 %v3953
    %v4026 = vunpack.c.l.b16 %v3954
    %v4027 = vunpack.c.l.b16 %v3955
    %v4028 = vunpack.c.l.b16 %v3956
    %v4029 = vunpack.c.l.b16 %v3957
    %v4030 = vunpack.c.l.b16 %v3958
    %v4031 = vunpack.c.l.b16 %v3959
    %v4032 = vunpack.c.l.b16 %v3960
    %v4033 = vunpack.c.l.b16 %v3961
    %v4034 = vunpack.c.l.b16 %v3962
    %v4035 = vunpack.c.l.b16 %v3963
    %v4036 = vunpack.c.l.b16 %v3964
    %v4037 = vunpack.c.l.b16 %v3965
    %v4038 = vunpack.c.l.b16 %v3966
    %v4039 = vunpack.c.l.b16 %v3967
    %v4040 = vunpack.c.l.b16 %v3968
    %v4041 = vunpack.c.l.b16 %v3969
    %v4042 = vunpack.c.l.b16 %v3970
    %v4043 = vunpack.c.l.b16 %v3971
    %v4044 = vunpack.c.l.b16 %v3972
    %v4045 = vunpack.c.l.b16 %v3973
    %v4046 = vunpack.c.l.b16 %v3974
    %v4047 = vunpack.c.l.b16 %v3975
    %v4048 = vunpack.c.l.b16 %v3976
    %v4049 = vunpack.c.l.b16 %v3977
    %v4050 = vpack.c.b16 %v4015, %v4014
    %v4051 = vpack.c.b16 %v4017, %v4016
    %v4052 = vpack.c.b16 %v4019, %v4018
    %v4053 = vpack.c.b16 %v4021, %v4020
    %v4054 = vpack.c.b16 %v4023, %v4022
    %v4055 = vpack.c.b16 %v4025, %v4024
    %v4056 = vpack.c.b16 %v4027, %v4026
    %v4057 = vpack.c.b16 %v4029, %v4028
    %v4058 = vpack.c.b16 %v4031, %v4030
    %v4059 = vpack.c.b16 %v4033, %v4032
    %v4060 = vpack.c.b16 %v4035, %v4034
    %v4061 = vpack.c.b16 %v4037, %v4036
    %v4062 = vpack.c.b16 %v4039, %v4038
    %v4063 = vpack.c.b16 %v4041, %v4040
    %v4064 = vpack.c.b16 %v4043, %v4042
    %v4065 = vpack.c.b16 %v4045, %v4044
    %v4066 = vpack.c.b16 %v4047, %v4046
    %v4067 = vpack.c.b16 %v4049, %v4048
    %v4087 = vsel %vm3758, %v3737, 0
    %v4090 = vsel %vm3758, %v3739, 0
    %v4093 = vsel %vm3758, %v3741, 0
    %v4096 = vsel %vm3758, %v3743, 0
    %v4099 = vsel %vm3758, %v3745, 0
    %v4102 = vsel %vm3758, %v3747, 0
    %v4105 = vsel %vm3758, %v3749, 0
    %v4108 = vsel %vm3758, %v3751, 0
    %v4111 = vsel %vm3758, %v3753, 0
    %v4114 = vsel %vm3758, %v3755, 0
    %v4117 = vsel %vm3758, %v3757, 0
    %v4120 = vsel %vm3758, %v3756, 0
    %4122 = vmatpush.bf16.msra.mxu0 %v4057
    %4123 = vmatpush.bf16.msra.mxu0 %v4056
    %4124 = vmatpush.bf16.msra.mxu0 %v4055
    %4125 = vmatpush.bf16.msra.mxu0 %v4054
    %4126 = vmatpush.bf16.msra.mxu0 %v4053
    %4127 = vmatpush.bf16.msra.mxu0 %v4052
    %4128 = vmatpush.bf16.msra.mxu0 %v4051
    %4129 = vmatpush.bf16.msra.mxu0 %v4050
    %4130 = vmatmul.bf16.gmra.mxu0 %v3811
    %v4131 = vpop.f32.mrf.mxu0
    %v4132 = vadd.f32 0.0, %v4131
    %v4133 = vpop.f32.mrf.mxu0
    %v4134 = vadd.f32 0.0, %v4133
    %4135 = vmatmul.bf16.gmra.mxu0 %v3814
    %v4136 = vpop.f32.mrf.mxu0
    %v4137 = vadd.f32 0.0, %v4136
    %v4138 = vpop.f32.mrf.mxu0
    %v4139 = vadd.f32 0.0, %v4138
    %4140 = vmatmul.bf16.gmra.mxu0 %v3817
    %v4141 = vpop.f32.mrf.mxu0
    %v4142 = vadd.f32 0.0, %v4141
    %v4143 = vpop.f32.mrf.mxu0
    %v4144 = vadd.f32 0.0, %v4143
    %4145 = vmatmul.bf16.gmra.mxu0 %v3820
    %v4146 = vpop.f32.mrf.mxu0
    %v4147 = vadd.f32 0.0, %v4146
    %v4148 = vpop.f32.mrf.mxu0
    %v4149 = vadd.f32 0.0, %v4148
    %4150 = vmatmul.bf16.gmra.mxu0 %v3823
    %v4151 = vpop.f32.mrf.mxu0
    %v4152 = vadd.f32 0.0, %v4151
    %v4153 = vpop.f32.mrf.mxu0
    %v4154 = vadd.f32 0.0, %v4153
    %4155 = vmatmul.bf16.gmra.mxu0 %v3826
    %v4156 = vpop.f32.mrf.mxu0
    %v4157 = vadd.f32 0.0, %v4156
    %v4158 = vpop.f32.mrf.mxu0
    %v4159 = vadd.f32 0.0, %v4158
    %4160 = vmatmul.bf16.gmra.mxu0 %v3829
    %v4161 = vpop.f32.mrf.mxu0
    %v4162 = vadd.f32 0.0, %v4161
    %v4163 = vpop.f32.mrf.mxu0
    %v4164 = vadd.f32 0.0, %v4163
    %4165 = vmatmul.bf16.gmra.mxu0 %v3832
    %v4166 = vpop.f32.mrf.mxu0
    %v4167 = vadd.f32 0.0, %v4166
    %v4168 = vpop.f32.mrf.mxu0
    %v4169 = vadd.f32 0.0, %v4168
    %4170 = vmatmul.bf16.gmra.mxu0 %v3835
    %v4171 = vpop.f32.mrf.mxu0
    %v4172 = vadd.f32 0.0, %v4171
    %v4173 = vpop.f32.mrf.mxu0
    %v4174 = vadd.f32 0.0, %v4173
    %4175 = vmatmul.bf16.gmra.mxu0 %v3838
    %v4176 = vpop.f32.mrf.mxu0
    %v4177 = vadd.f32 0.0, %v4176
    %v4178 = vpop.f32.mrf.mxu0
    %v4179 = vadd.f32 0.0, %v4178
    %4180 = vmatmul.bf16.gmra.mxu0 %v3841
    %v4181 = vpop.f32.mrf.mxu0
    %v4182 = vadd.f32 0.0, %v4181
    %v4183 = vpop.f32.mrf.mxu0
    %v4184 = vadd.f32 0.0, %v4183
    %4185 = vmatmul.bf16.gmra.mxu0 %v3844
    %v4186 = vpop.f32.mrf.mxu0
    %v4187 = vadd.f32 0.0, %v4186
    %v4188 = vpop.f32.mrf.mxu0
    %4189 = vdwg.mxu0
    %4190 = vmatpush.bf16.msra.mxu0 %v4065
    %4191 = vmatpush.bf16.msra.mxu0 %v4064
    %4192 = vmatpush.bf16.msra.mxu0 %v4063
    %4193 = vmatpush.bf16.msra.mxu0 %v4062
    %4194 = vmatpush.bf16.msra.mxu0 %v4061
    %4195 = vmatpush.bf16.msra.mxu0 %v4060
    %4196 = vmatpush.bf16.msra.mxu0 %v4059
    %4197 = vmatpush.bf16.msra.mxu0 %v4058
    %4198 = vmatmul.bf16.gmra.mxu0 %v3907
    %v4199 = vpop.f32.mrf.mxu0
    %v4200 = vadd.f32 %v4132, %v4199
    %v4201 = vpop.f32.mrf.mxu0
    %v4202 = vadd.f32 %v4134, %v4201
    %4203 = vmatmul.bf16.gmra.mxu0 %v3910
    %v4204 = vpop.f32.mrf.mxu0
    %v4205 = vadd.f32 %v4137, %v4204
    %v4206 = vpop.f32.mrf.mxu0
    %v4207 = vadd.f32 %v4139, %v4206
    %4208 = vmatmul.bf16.gmra.mxu0 %v3913
    %v4209 = vpop.f32.mrf.mxu0
    %v4210 = vadd.f32 %v4142, %v4209
    %v4211 = vpop.f32.mrf.mxu0
    %v4212 = vadd.f32 %v4144, %v4211
    %4213 = vmatmul.bf16.gmra.mxu0 %v3916
    %v4214 = vpop.f32.mrf.mxu0
    %v4215 = vadd.f32 %v4147, %v4214
    %v4216 = vpop.f32.mrf.mxu0
    %v4217 = vadd.f32 %v4149, %v4216
    %4218 = vmatmul.bf16.gmra.mxu0 %v3919
    %v4219 = vpop.f32.mrf.mxu0
    %v4220 = vadd.f32 %v4152, %v4219
    %v4221 = vpop.f32.mrf.mxu0
    %v4222 = vadd.f32 %v4154, %v4221
    %4223 = vmatmul.bf16.gmra.mxu0 %v3922
    %v4224 = vpop.f32.mrf.mxu0
    %v4225 = vadd.f32 %v4157, %v4224
    %v4226 = vpop.f32.mrf.mxu0
    %v4227 = vadd.f32 %v4159, %v4226
    %4228 = vmatmul.bf16.gmra.mxu0 %v3925
    %v4229 = vpop.f32.mrf.mxu0
    %v4230 = vadd.f32 %v4162, %v4229
    %v4231 = vpop.f32.mrf.mxu0
    %v4232 = vadd.f32 %v4164, %v4231
    %4233 = vmatmul.bf16.gmra.mxu0 %v3928
    %v4234 = vpop.f32.mrf.mxu0
    %v4235 = vadd.f32 %v4167, %v4234
    %v4236 = vpop.f32.mrf.mxu0
    %v4237 = vadd.f32 %v4169, %v4236
    %4238 = vmatmul.bf16.gmra.mxu0 %v3931
    %v4239 = vpop.f32.mrf.mxu0
    %v4240 = vadd.f32 %v4172, %v4239
    %v4241 = vpop.f32.mrf.mxu0
    %v4242 = vadd.f32 %v4174, %v4241
    %4243 = vmatmul.bf16.gmra.mxu0 %v3934
    %v4244 = vpop.f32.mrf.mxu0
    %v4245 = vadd.f32 %v4177, %v4244
    %v4246 = vpop.f32.mrf.mxu0
    %v4247 = vadd.f32 %v4179, %v4246
    %4248 = vmatmul.bf16.gmra.mxu0 %v3937
    %v4249 = vpop.f32.mrf.mxu0
    %v4250 = vadd.f32 %v4182, %v4249
    %v4251 = vpop.f32.mrf.mxu0
    %v4252 = vadd.f32 %v4184, %v4251
    %4253 = vmatmul.bf16.gmra.mxu0 %v3940
    %v4254 = vpop.f32.mrf.mxu0
    %v4255 = vadd.f32 %v4187, %v4254
    %v4256 = vpop.f32.mrf.mxu0
    %4257 = vdwg.mxu0
    %4258 = vmatpush.bf16.msra.mxu0 0
    %4259 = vmatpush.bf16.msra.mxu0 0
    %4260 = vmatpush.bf16.msra.mxu0 0
    %4261 = vmatpush.bf16.msra.mxu0 0
    %4262 = vmatpush.bf16.msra.mxu0 0
    %4263 = vmatpush.bf16.msra.mxu0 0
    %4264 = vmatpush.bf16.msra.mxu0 %v4067
    %4265 = vmatpush.bf16.msra.mxu0 %v4066
    %4266 = vmatmul.bf16.gmra.mxu0 %v4087
    %v4267 = vpop.f32.mrf.mxu0
    %v4268 = vadd.f32 %v4200, %v4267
    %v4269 = vpop.f32.mrf.mxu0
    %v4270 = vadd.f32 %v4202, %v4269
    %4271 = vmatmul.bf16.gmra.mxu0 %v4090
    %v4272 = vpop.f32.mrf.mxu0
    %v4273 = vadd.f32 %v4205, %v4272
    %v4274 = vpop.f32.mrf.mxu0
    %v4275 = vadd.f32 %v4207, %v4274
    %4276 = vmatmul.bf16.gmra.mxu0 %v4093
    %v4277 = vpop.f32.mrf.mxu0
    %v4278 = vadd.f32 %v4210, %v4277
    %v4279 = vpop.f32.mrf.mxu0
    %v4280 = vadd.f32 %v4212, %v4279
    %4281 = vmatmul.bf16.gmra.mxu0 %v4096
    %v4282 = vpop.f32.mrf.mxu0
    %v4283 = vadd.f32 %v4215, %v4282
    %v4284 = vpop.f32.mrf.mxu0
    %v4285 = vadd.f32 %v4217, %v4284
    %4286 = vmatmul.bf16.gmra.mxu0 %v4099
    %v4287 = vpop.f32.mrf.mxu0
    %v4288 = vadd.f32 %v4220, %v4287
    %v4289 = vpop.f32.mrf.mxu0
    %v4290 = vadd.f32 %v4222, %v4289
    %4291 = vmatmul.bf16.gmra.mxu0 %v4102
    %v4292 = vpop.f32.mrf.mxu0
    %v4293 = vadd.f32 %v4225, %v4292
    %v4294 = vpop.f32.mrf.mxu0
    %v4295 = vadd.f32 %v4227, %v4294
    %4296 = vmatmul.bf16.gmra.mxu0 %v4105
    %v4297 = vpop.f32.mrf.mxu0
    %v4298 = vadd.f32 %v4230, %v4297
    %v4299 = vpop.f32.mrf.mxu0
    %v4300 = vadd.f32 %v4232, %v4299
    %4301 = vmatmul.bf16.gmra.mxu0 %v4108
    %v4302 = vpop.f32.mrf.mxu0
    %v4303 = vadd.f32 %v4235, %v4302
    %v4304 = vpop.f32.mrf.mxu0
    %v4305 = vadd.f32 %v4237, %v4304
    %4306 = vmatmul.bf16.gmra.mxu0 %v4111
    %v4307 = vpop.f32.mrf.mxu0
    %v4308 = vadd.f32 %v4240, %v4307
    %v4309 = vpop.f32.mrf.mxu0
    %v4310 = vadd.f32 %v4242, %v4309
    %4311 = vmatmul.bf16.gmra.mxu0 %v4114
    %v4312 = vpop.f32.mrf.mxu0
    %v4313 = vadd.f32 %v4245, %v4312
    %v4314 = vpop.f32.mrf.mxu0
    %v4315 = vadd.f32 %v4247, %v4314
    %4316 = vmatmul.bf16.gmra.mxu0 %v4117
    %v4317 = vpop.f32.mrf.mxu0
    %v4318 = vadd.f32 %v4250, %v4317
    %v4319 = vpop.f32.mrf.mxu0
    %v4320 = vadd.f32 %v4252, %v4319
    %4321 = vmatmul.bf16.gmra.mxu0 %v4120
    %v4322 = vpop.f32.mrf.mxu0
    %v4323 = vadd.f32 %v4255, %v4322
    %v4324 = vpop.f32.mrf.mxu0
    %4325 = vdwg.mxu0
    %v4326 = vld [vmem:[%s5] sm:$0x1]
    %v4328 = vperm.slane %v4326, 0
    %v4330 = vmul.f32 %v4268, %v4328
    %v4331 = vmul.f32 %v4270, %v4328
    %v4332 = vmul.f32 %v4273, %v4328
    %v4333 = vmul.f32 %v4275, %v4328
    %v4334 = vmul.f32 %v4278, %v4328
    %v4335 = vmul.f32 %v4280, %v4328
    %v4336 = vmul.f32 %v4283, %v4328
    %v4337 = vmul.f32 %v4285, %v4328
    %v4338 = vmul.f32 %v4288, %v4328
    %v4339 = vmul.f32 %v4290, %v4328
    %v4340 = vmul.f32 %v4293, %v4328
    %v4341 = vmul.f32 %v4295, %v4328
    %v4342 = vmul.f32 %v4298, %v4328
    %v4343 = vmul.f32 %v4300, %v4328
    %v4344 = vmul.f32 %v4303, %v4328
    %v4345 = vmul.f32 %v4305, %v4328
    %v4346 = vmul.f32 %v4308, %v4328
    %v4347 = vmul.f32 %v4310, %v4328
    %v4348 = vmul.f32 %v4313, %v4328
    %v4349 = vmul.f32 %v4315, %v4328
    %v4350 = vmul.f32 %v4318, %v4328
    %v4351 = vmul.f32 %v4320, %v4328
    %v4352 = vmul.f32 %v4323, %v4328
    %v4353 = vld [vmem:[%s6] sm:$0x1]
    %v4355 = vperm.slane %v4353, 0
    %v4357 = vadd.f32 %v4330, %v4355
    %v4358 = vadd.f32 %v4331, %v4355
    %v4359 = vadd.f32 %v4332, %v4355
    %v4360 = vadd.f32 %v4333, %v4355
    %v4361 = vadd.f32 %v4334, %v4355
    %v4362 = vadd.f32 %v4335, %v4355
    %v4363 = vadd.f32 %v4336, %v4355
    %v4364 = vadd.f32 %v4337, %v4355
    %v4365 = vadd.f32 %v4338, %v4355
    %v4366 = vadd.f32 %v4339, %v4355
    %v4367 = vadd.f32 %v4340, %v4355
    %v4368 = vadd.f32 %v4341, %v4355
    %v4369 = vadd.f32 %v4342, %v4355
    %v4370 = vadd.f32 %v4343, %v4355
    %v4371 = vadd.f32 %v4344, %v4355
    %v4372 = vadd.f32 %v4345, %v4355
    %v4373 = vadd.f32 %v4346, %v4355
    %v4374 = vadd.f32 %v4347, %v4355
    %v4375 = vadd.f32 %v4348, %v4355
    %v4376 = vadd.f32 %v4349, %v4355
    %v4377 = vadd.f32 %v4350, %v4355
    %v4378 = vadd.f32 %v4351, %v4355
    %v4379 = vadd.f32 %v4352, %v4355
    %v4380 = vmax.f32 %v4357, 0.0
    %v4381 = vmax.f32 %v4358, 0.0
    %v4382 = vmax.f32 %v4359, 0.0
    %v4383 = vmax.f32 %v4360, 0.0
    %v4384 = vmax.f32 %v4361, 0.0
    %v4385 = vmax.f32 %v4362, 0.0
    %v4386 = vmax.f32 %v4363, 0.0
    %v4387 = vmax.f32 %v4364, 0.0
    %v4388 = vmax.f32 %v4365, 0.0
    %v4389 = vmax.f32 %v4366, 0.0
    %v4390 = vmax.f32 %v4367, 0.0
    %v4391 = vmax.f32 %v4368, 0.0
    %v4392 = vmax.f32 %v4369, 0.0
    %v4393 = vmax.f32 %v4370, 0.0
    %v4394 = vmax.f32 %v4371, 0.0
    %v4395 = vmax.f32 %v4372, 0.0
    %v4396 = vmax.f32 %v4373, 0.0
    %v4397 = vmax.f32 %v4374, 0.0
    %v4398 = vmax.f32 %v4375, 0.0
    %v4399 = vmax.f32 %v4376, 0.0
    %v4400 = vmax.f32 %v4377, 0.0
    %v4401 = vmax.f32 %v4378, 0.0
    %v4402 = vmax.f32 %v4379, 0.0
    %v4403 = vpack.c.bf16 %v4380, %v4380
    %v4404 = vpack.c.bf16 %v4381, %v4381
    %v4405 = vpack.c.bf16 %v4382, %v4382
    %v4406 = vpack.c.bf16 %v4383, %v4383
    %v4407 = vpack.c.bf16 %v4384, %v4384
    %v4408 = vpack.c.bf16 %v4385, %v4385
    %v4409 = vpack.c.bf16 %v4386, %v4386
    %v4410 = vpack.c.bf16 %v4387, %v4387
    %v4411 = vpack.c.bf16 %v4388, %v4388
    %v4412 = vpack.c.bf16 %v4389, %v4389
    %v4413 = vpack.c.bf16 %v4390, %v4390
    %v4414 = vpack.c.bf16 %v4391, %v4391
    %v4415 = vpack.c.bf16 %v4392, %v4392
    %v4416 = vpack.c.bf16 %v4393, %v4393
    %v4417 = vpack.c.bf16 %v4394, %v4394
    %v4418 = vpack.c.bf16 %v4395, %v4395
    %v4419 = vpack.c.bf16 %v4396, %v4396
    %v4420 = vpack.c.bf16 %v4397, %v4397
    %v4421 = vpack.c.bf16 %v4398, %v4398
    %v4422 = vpack.c.bf16 %v4399, %v4399
    %v4423 = vpack.c.bf16 %v4400, %v4400
    %v4424 = vpack.c.bf16 %v4401, %v4401
    %v4425 = vpack.c.bf16 %v4402, %v4402
    %vm4426 = vcmask 519168
    %4427 = vst.msk [vmem:[#allocation4] sm:$0xf] %vm4426, %v4403
    %4428 = vst.msk [vmem:[#allocation4 + $0x4] sm:$0xf] %vm4426, %v4404
    %4429 = vst.msk [vmem:[#allocation4 + $0x8] sm:$0xf] %vm4426, %v4405
    %4430 = vst.msk [vmem:[#allocation4 + $0xc] sm:$0xf] %vm4426, %v4406
    %4431 = vst.msk [vmem:[#allocation4 + $0x10] sm:$0xf] %vm4426, %v4407
    %4432 = vst.msk [vmem:[#allocation4 + $0x14] sm:$0xf] %vm4426, %v4408
    %4433 = vst.msk [vmem:[#allocation4 + $0x18] sm:$0xf] %vm4426, %v4409
    %4434 = vst.msk [vmem:[#allocation4 + $0x1c] sm:$0xf] %vm4426, %v4410
    %4435 = vst.msk [vmem:[#allocation4 + $0x20] sm:$0xf] %vm4426, %v4411
    %4436 = vst.msk [vmem:[#allocation4 + $0x24] sm:$0xf] %vm4426, %v4412
    %4437 = vst.msk [vmem:[#allocation4 + $0x28] sm:$0xf] %vm4426, %v4413
    %4438 = vst.msk [vmem:[#allocation4 + $0x2c] sm:$0xf] %vm4426, %v4414
    %4439 = vst.msk [vmem:[#allocation4 + $0x30] sm:$0xf] %vm4426, %v4415
    %4440 = vst.msk [vmem:[#allocation4 + $0x34] sm:$0xf] %vm4426, %v4416
    %4441 = vst.msk [vmem:[#allocation4 + $0x38] sm:$0xf] %vm4426, %v4417
    %4442 = vst.msk [vmem:[#allocation4 + $0x3c] sm:$0xf] %vm4426, %v4418
    %4443 = vst.msk [vmem:[#allocation4 + $0x40] sm:$0xf] %vm4426, %v4419
    %4444 = vst.msk [vmem:[#allocation4 + $0x44] sm:$0xf] %vm4426, %v4420
    %4445 = vst.msk [vmem:[#allocation4 + $0x48] sm:$0xf] %vm4426, %v4421
    %4446 = vst.msk [vmem:[#allocation4 + $0x4c] sm:$0xf] %vm4426, %v4422
    %4447 = vst.msk [vmem:[#allocation4 + $0x50] sm:$0xf] %vm4426, %v4423
    %4448 = vst.msk [vmem:[#allocation4 + $0x54] sm:$0xf] %vm4426, %v4424
    %vm4449 = vcmask 516096
    %4450 = vst.msk [vmem:[#allocation4 + $0x58] sm:$0x1] %vm4449, %v4425
    %v4451 = vld [vmem:[#allocation4] sm:$0xf]
    %v4452 = vld [vmem:[#allocation4 + $0x4] sm:$0xf]
    %v4453 = vld [vmem:[#allocation4 + $0x8] sm:$0xf]
    %v4454 = vld [vmem:[#allocation4 + $0xc] sm:$0xf]
    %v4455 = vld [vmem:[#allocation4 + $0x10] sm:$0xf]
    %v4456 = vld [vmem:[#allocation4 + $0x14] sm:$0xf]
    %v4457 = vld [vmem:[#allocation4 + $0x18] sm:$0xf]
    %v4458 = vld [vmem:[#allocation4 + $0x1c] sm:$0xf]
    %v4459 = vld [vmem:[#allocation4 + $0x20] sm:$0x3]
    %v4460 = vunpack.c.l.bf16 %v4451
    %v4461 = vunpack.c.l.bf16 %v4452
    %v4462 = vunpack.c.l.bf16 %v4453
    %v4463 = vunpack.c.l.bf16 %v4454
    %v4464 = vunpack.c.l.bf16 %v4455
    %v4465 = vunpack.c.l.bf16 %v4456
    %v4466 = vunpack.c.l.bf16 %v4457
    %v4467 = vunpack.c.l.bf16 %v4458
    %v4468 = vunpack.c.l.bf16 %v4459
    %v4478 = vrot.slane %v4460, 1
    %v4479 = vrot.slane %v4461, 1
    %v4480 = vsel %vm1363, %v4478, %v4479
    %v4481 = vrot.slane %v4462, 1
    %v4482 = vsel %vm1363, %v4479, %v4481
    %v4483 = vrot.slane %v4463, 1
    %v4484 = vsel %vm1363, %v4481, %v4483
    %v4485 = vrot.slane %v4464, 1
    %v4486 = vsel %vm1363, %v4483, %v4485
    %v4487 = vrot.slane %v4465, 1
    %v4488 = vsel %vm1363, %v4485, %v4487
    %v4489 = vrot.slane %v4466, 1
    %v4490 = vsel %vm1363, %v4487, %v4489
    %v4491 = vrot.slane %v4467, 1
    %v4492 = vsel %vm1363, %v4489, %v4491
    %v4493 = vrot.slane %v4468, 1
    %v4494 = vsel %vm1363, %v4491, %v4493
    %v4504 = vmax.f32 %v4460, %v4480
    %v4505 = vmax.f32 %v4461, %v4482
    %v4506 = vmax.f32 %v4462, %v4484
    %v4507 = vmax.f32 %v4463, %v4486
    %v4508 = vmax.f32 %v4464, %v4488
    %v4509 = vmax.f32 %v4465, %v4490
    %v4510 = vmax.f32 %v4466, %v4492
    %v4511 = vmax.f32 %v4467, %v4494
    %v4512 = vmax.f32 %v4468, %v4493
    %v4513 = vpack.c.bf16 %v4504, %v4504
    %v4514 = vpack.c.bf16 %v4505, %v4505
    %v4515 = vpack.c.bf16 %v4506, %v4506
    %v4516 = vpack.c.bf16 %v4507, %v4507
    %v4517 = vpack.c.bf16 %v4508, %v4508
    %v4518 = vpack.c.bf16 %v4509, %v4509
    %v4519 = vpack.c.bf16 %v4510, %v4510
    %v4520 = vpack.c.bf16 %v4511, %v4511
    %v4521 = vpack.c.bf16 %v4512, %v4512
    %v4522 = vld [vmem:[#allocation4 + $0x4] sm:$0xe]
    %v4523 = vld [vmem:[#allocation4 + $0x20] sm:$0xf]
    %v4524 = vld [vmem:[#allocation4 + $0x24] sm:$0x7]
    %v4525 = vunpack.c.l.bf16 %v4522
    %v4526 = vunpack.c.l.bf16 %v4523
    %v4527 = vunpack.c.l.bf16 %v4524
    %v4531 = vrot.slane %v4525, 1
    %v4532 = vsel %vm1363, %v4531, %v4481
    %v4533 = vrot.slane %v4526, 1
    %v4534 = vsel %vm1363, %v4491, %v4533
    %v4535 = vrot.slane %v4527, 1
    %v4536 = vsel %vm1363, %v4533, %v4535
    %v4541 = vmax.f32 %v4525, %v4532
    %v4542 = vmax.f32 %v4467, %v4534
    %v4543 = vmax.f32 %v4526, %v4536
    %v4544 = vmax.f32 %v4527, %v4535
    %v4545 = vpack.c.bf16 %v4541, %v4541
    %v4546 = vpack.c.bf16 %v4542, %v4542
    %v4547 = vpack.c.bf16 %v4543, %v4543
    %v4548 = vpack.c.bf16 %v4544, %v4544
    %v4549 = vunpack.c.l.bf16 %v4513
    %v4550 = vunpack.c.l.bf16 %v4514
    %v4551 = vunpack.c.l.bf16 %v4515
    %v4552 = vunpack.c.l.bf16 %v4516
    %v4553 = vunpack.c.l.bf16 %v4517
    %v4554 = vunpack.c.l.bf16 %v4518
    %v4555 = vunpack.c.l.bf16 %v4519
    %v4556 = vunpack.c.l.bf16 %v4520
    %v4557 = vunpack.c.l.bf16 %v4521
    %v4558 = vunpack.c.l.bf16 %v4545
    %v4559 = vunpack.c.l.bf16 %v4546
    %v4560 = vunpack.c.l.bf16 %v4547
    %v4561 = vunpack.c.l.bf16 %v4548
    %v4571 = vrot.slane %v4558, 2
    %v4572 = vrot.slane %v4551, 2
    %v4573 = vsel %vm552, %v4571, %v4572
    %v4574 = vrot.slane %v4552, 2
    %v4575 = vsel %vm552, %v4572, %v4574
    %v4576 = vrot.slane %v4553, 2
    %v4577 = vsel %vm552, %v4574, %v4576
    %v4578 = vrot.slane %v4554, 2
    %v4579 = vsel %vm552, %v4576, %v4578
    %v4580 = vrot.slane %v4555, 2
    %v4581 = vsel %vm552, %v4578, %v4580
    %v4582 = vrot.slane %v4559, 2
    %v4583 = vsel %vm552, %v4580, %v4582
    %v4584 = vrot.slane %v4560, 2
    %v4585 = vsel %vm552, %v4582, %v4584
    %v4586 = vrot.slane %v4561, 2
    %v4587 = vsel %vm552, %v4584, %v4586
    %v4597 = vmax.f32 %v4549, %v4573
    %v4598 = vmax.f32 %v4550, %v4575
    %v4599 = vmax.f32 %v4551, %v4577
    %v4600 = vmax.f32 %v4552, %v4579
    %v4601 = vmax.f32 %v4553, %v4581
    %v4602 = vmax.f32 %v4554, %v4583
    %v4603 = vmax.f32 %v4555, %v4585
    %v4604 = vmax.f32 %v4556, %v4587
    %v4605 = vmax.f32 %v4557, %v4586
    %v4606 = vpack.c.bf16 %v4598, %v4597
    %v4607 = vpack.c.bf16 %v4600, %v4599
    %v4608 = vpack.c.bf16 %v4602, %v4601
    %v4609 = vpack.c.bf16 %v4604, %v4603
    %v4610 = vpack.c.bf16 %v4605, %v4605
    %v4611 = vld [vmem:[%s14] sm:$0xf]
    %v4612 = vld [vmem:[%s14 + $0x4] sm:$0xf]
    %v4613 = vld [vmem:[%s14 + $0x8] sm:$0xf]
    %v4614 = vld [vmem:[%s14 + $0xc] sm:$0xf]
    %v4615 = vld [vmem:[%s14 + $0x10] sm:$0x3]
    %v4621 = vunpack.c.l.b16 %v4611
    %v4622 = vunpack.c.l.b16 %v4612
    %v4623 = vunpack.c.l.b16 %v4613
    %v4624 = vunpack.c.l.b16 %v4614
    %v4625 = vunpack.c.l.b16 %v4615
    %v4626 = vpack.c.b16 %v4622, %v4621
    %v4627 = vpack.c.b16 %v4624, %v4623
    %v4628 = vpack.c.b16 %v4625, %v4625
    %vm4629 = vcmask 547840
    %v4631 = vsel %vm4629, %v4626, 0
    %v4634 = vsel %vm4629, %v4627, 0
    %v4637 = vsel %vm4629, %v4628, 0
    %vm4639 = vcmask 1040384
    %vm4640 = vcmask 1041408
    %v4641 = vsel %vm4639, 4294967295, 65535
    %v4642 = vsel %vm4640, %v4641, 0
    %v4644 = vand.u32 %v4610, %v4642
    %4646 = vmatpush.bf16.msra.mxu0 0
    %4647 = vmatpush.bf16.msra.mxu0 0
    %4648 = vmatpush.bf16.msra.mxu0 0
    %4649 = vmatpush.bf16.msra.mxu0 %v4644
    %4650 = vmatpush.bf16.msra.mxu0 %v4609
    %4651 = vmatpush.bf16.msra.mxu0 %v4608
    %4652 = vmatpush.bf16.msra.mxu0 %v4607
    %4653 = vmatpush.bf16.msra.mxu0 %v4606
    %4654 = vmatmul.bf16.gmra.mxu0 %v4631
    %v4655 = vpop.f32.mrf.mxu0
    %v4656 = vadd.f32 0.0, %v4655
    %v4657 = vpop.f32.mrf.mxu0
    %v4658 = vadd.f32 0.0, %v4657
    %4659 = vmatmul.bf16.gmra.mxu0 %v4634
    %v4660 = vpop.f32.mrf.mxu0
    %v4661 = vadd.f32 0.0, %v4660
    %v4662 = vpop.f32.mrf.mxu0
    %v4663 = vadd.f32 0.0, %v4662
    %4664 = vmatmul.bf16.gmra.mxu0 %v4637
    %v4665 = vpop.f32.mrf.mxu0
    %v4666 = vadd.f32 0.0, %v4665
    %v4667 = vpop.f32.mrf.mxu0
    %4668 = vdwg.mxu0
    %v4669 = vpack.c.bf16 %v4656, %v4656
    %v4670 = vpack.c.bf16 %v4658, %v4658
    %v4671 = vpack.c.bf16 %v4661, %v4661
    %v4672 = vpack.c.bf16 %v4663, %v4663
    %v4673 = vpack.c.bf16 %v4666, %v4666
    %4674 = vst.msk [vmem:[#allocation5] sm:$0xf] %vm4426, %v4669
    %4675 = vst.msk [vmem:[#allocation5 + $0x4] sm:$0xf] %vm4426, %v4670
    %4676 = vst.msk [vmem:[#allocation5 + $0x8] sm:$0xf] %vm4426, %v4671
    %4677 = vst.msk [vmem:[#allocation5 + $0xc] sm:$0xf] %vm4426, %v4672
    %vm4678 = vcmask 517120
    %4679 = vst.msk [vmem:[#allocation5 + $0x10] sm:$0x3] %vm4678, %v4673
    %v4680 = vld [vmem:[#allocation4 + $0x30] sm:$0xc]
    %v4681 = vld [vmem:[#allocation4 + $0x34] sm:$0xf]
    %v4682 = vld [vmem:[#allocation4 + $0x38] sm:$0xf]
    %v4683 = vld [vmem:[#allocation4 + $0x3c] sm:$0xf]
    %v4684 = vld [vmem:[#allocation4 + $0x40] sm:$0xf]
    %v4685 = vld [vmem:[#allocation4 + $0x44] sm:$0xf]
    %v4686 = vld [vmem:[#allocation4 + $0x48] sm:$0xf]
    %v4687 = vld [vmem:[#allocation4 + $0x4c] sm:$0xf]
    %v4688 = vld [vmem:[#allocation4 + $0x50] sm:$0xf]
    %v4689 = vunpack.c.l.bf16 %v4680
    %v4690 = vunpack.c.l.bf16 %v4681
    %v4691 = vunpack.c.l.bf16 %v4682
    %v4692 = vunpack.c.l.bf16 %v4683
    %v4693 = vunpack.c.l.bf16 %v4684
    %v4694 = vunpack.c.l.bf16 %v4685
    %v4695 = vunpack.c.l.bf16 %v4686
    %v4696 = vunpack.c.l.bf16 %v4687
    %v4697 = vunpack.c.l.bf16 %v4688
    %v4707 = vrot.slane %v4689, 1
    %v4708 = vrot.slane %v4690, 1
    %v4709 = vsel %vm1363, %v4707, %v4708
    %v4710 = vrot.slane %v4691, 1
    %v4711 = vsel %vm1363, %v4708, %v4710
    %v4712 = vrot.slane %v4692, 1
    %v4713 = vsel %vm1363, %v4710, %v4712
    %v4714 = vrot.slane %v4693, 1
    %v4715 = vsel %vm1363, %v4712, %v4714
    %v4716 = vrot.slane %v4694, 1
    %v4717 = vsel %vm1363, %v4714, %v4716
    %v4718 = vrot.slane %v4695, 1
    %v4719 = vsel %vm1363, %v4716, %v4718
    %v4720 = vrot.slane %v4696, 1
    %v4721 = vsel %vm1363, %v4718, %v4720
    %v4722 = vrot.slane %v4697, 1
    %v4723 = vsel %vm1363, %v4720, %v4722
    %v4733 = vmax.f32 %v4689, %v4709
    %v4734 = vmax.f32 %v4690, %v4711
    %v4735 = vmax.f32 %v4691, %v4713
    %v4736 = vmax.f32 %v4692, %v4715
    %v4737 = vmax.f32 %v4693, %v4717
    %v4738 = vmax.f32 %v4694, %v4719
    %v4739 = vmax.f32 %v4695, %v4721
    %v4740 = vmax.f32 %v4696, %v4723
    %v4741 = vmax.f32 %v4697, %v4722
    %v4742 = vpack.c.bf16 %v4733, %v4733
    %v4743 = vpack.c.bf16 %v4734, %v4734
    %v4744 = vpack.c.bf16 %v4735, %v4735
    %v4745 = vpack.c.bf16 %v4736, %v4736
    %v4746 = vpack.c.bf16 %v4737, %v4737
    %v4747 = vpack.c.bf16 %v4738, %v4738
    %v4748 = vpack.c.bf16 %v4739, %v4739
    %v4749 = vpack.c.bf16 %v4740, %v4740
    %v4750 = vpack.c.bf16 %v4741, %v4741
    %v4751 = vld [vmem:[#allocation4 + $0x34] sm:$0x8]
    %v4752 = vld [vmem:[#allocation4 + $0x54] sm:$0xf]
    %v4753 = vld [vmem:[#allocation4 + $0x58] sm:$0x1]
    %v4754 = vunpack.c.l.bf16 %v4751
    %v4755 = vunpack.c.l.bf16 %v4752
    %v4756 = vunpack.c.l.bf16 %v4753
    %v4760 = vrot.slane %v4754, 1
    %v4761 = vsel %vm1363, %v4760, %v4710
    %v4762 = vrot.slane %v4755, 1
    %v4763 = vsel %vm1363, %v4722, %v4762
    %v4764 = vrot.slane %v4756, 1
    %v4765 = vsel %vm1363, %v4762, %v4764
    %v4770 = vmax.f32 %v4754, %v4761
    %v4771 = vmax.f32 %v4697, %v4763
    %v4772 = vmax.f32 %v4755, %v4765
    %v4773 = vmax.f32 %v4756, %v4764
    %v4774 = vpack.c.bf16 %v4770, %v4770
    %v4775 = vpack.c.bf16 %v4771, %v4771
    %v4776 = vpack.c.bf16 %v4772, %v4772
    %v4777 = vpack.c.bf16 %v4773, %v4773
    %v4778 = vunpack.c.l.bf16 %v4742
    %v4779 = vunpack.c.l.bf16 %v4743
    %v4780 = vunpack.c.l.bf16 %v4744
    %v4781 = vunpack.c.l.bf16 %v4745
    %v4782 = vunpack.c.l.bf16 %v4746
    %v4783 = vunpack.c.l.bf16 %v4747
    %v4784 = vunpack.c.l.bf16 %v4748
    %v4785 = vunpack.c.l.bf16 %v4749
    %v4786 = vunpack.c.l.bf16 %v4750
    %v4787 = vunpack.c.l.bf16 %v4774
    %v4788 = vunpack.c.l.bf16 %v4775
    %v4789 = vunpack.c.l.bf16 %v4776
    %v4790 = vunpack.c.l.bf16 %v4777
    %v4801 = vrot.slane %v4787, 2
    %v4802 = vrot.slane %v4780, 2
    %v4803 = vsel %vm552, %v4801, %v4802
    %v4804 = vrot.slane %v4781, 2
    %v4805 = vsel %vm552, %v4802, %v4804
    %v4806 = vrot.slane %v4782, 2
    %v4807 = vsel %vm552, %v4804, %v4806
    %v4808 = vrot.slane %v4783, 2
    %v4809 = vsel %vm552, %v4806, %v4808
    %v4810 = vrot.slane %v4784, 2
    %v4811 = vsel %vm552, %v4808, %v4810
    %v4812 = vrot.slane %v4785, 2
    %v4813 = vsel %vm552, %v4810, %v4812
    %v4814 = vrot.slane %v4788, 2
    %v4815 = vsel %vm552, %v4812, %v4814
    %v4816 = vrot.slane %v4789, 2
    %v4817 = vsel %vm552, %v4814, %v4816
    %v4818 = vrot.slane %v4790, 2
    %v4819 = vsel %vm552, %v4816, %v4818
    %v4829 = vmax.f32 %v4778, %v4803
    %v4830 = vmax.f32 %v4779, %v4805
    %v4831 = vmax.f32 %v4780, %v4807
    %v4832 = vmax.f32 %v4781, %v4809
    %v4833 = vmax.f32 %v4782, %v4811
    %v4834 = vmax.f32 %v4783, %v4813
    %v4835 = vmax.f32 %v4784, %v4815
    %v4836 = vmax.f32 %v4785, %v4817
    %v4837 = vmax.f32 %v4786, %v4819
    %v4838 = vpack.c.bf16 %v4830, %v4829
    %v4839 = vpack.c.bf16 %v4832, %v4831
    %v4840 = vpack.c.bf16 %v4834, %v4833
    %v4841 = vpack.c.bf16 %v4836, %v4835
    %v4842 = vpack.c.bf16 %v4837, %v4837
    %v4843 = vld [vmem:[%s14] sm:$0xf]
    %v4844 = vld [vmem:[%s14 + $0x4] sm:$0xf]
    %v4845 = vld [vmem:[%s14 + $0x8] sm:$0xf]
    %v4846 = vld [vmem:[%s14 + $0xc] sm:$0xf]
    %v4847 = vld [vmem:[%s14 + $0x10] sm:$0x3]
    %v4853 = vunpack.c.l.b16 %v4843
    %v4854 = vunpack.c.l.b16 %v4844
    %v4855 = vunpack.c.l.b16 %v4845
    %v4856 = vunpack.c.l.b16 %v4846
    %v4857 = vunpack.c.l.b16 %v4847
    %v4858 = vpack.c.b16 %v4854, %v4853
    %v4859 = vpack.c.b16 %v4856, %v4855
    %v4860 = vpack.c.b16 %v4857, %v4857
    %v4866 = vrot.slane %v4838, 2
    %v4867 = vrot.slane %v4839, 2
    %v4868 = vsel %vm3537, %v4866, %v4867
    %v4869 = vrot.slane %v4840, 2
    %v4870 = vsel %vm3537, %v4867, %v4869
    %v4871 = vrot.slane %v4841, 2
    %v4872 = vsel %vm3537, %v4869, %v4871
    %v4873 = vrot.slane %v4842, 2
    %v4874 = vsel %vm3537, %v4871, %v4873
    %v4880 = vsel %vm4629, %v4858, 0
    %v4883 = vsel %vm4629, %v4859, 0
    %v4886 = vsel %vm4629, %v4860, 0
    %v4889 = vand.u32 %v4873, %v4642
    %4891 = vmatpush.bf16.msra.mxu0 0
    %4892 = vmatpush.bf16.msra.mxu0 0
    %4893 = vmatpush.bf16.msra.mxu0 0
    %4894 = vmatpush.bf16.msra.mxu0 %v4889
    %4895 = vmatpush.bf16.msra.mxu0 %v4874
    %4896 = vmatpush.bf16.msra.mxu0 %v4872
    %4897 = vmatpush.bf16.msra.mxu0 %v4870
    %4898 = vmatpush.bf16.msra.mxu0 %v4868
    %4899 = vmatmul.bf16.gmra.mxu0 %v4880
    %v4900 = vpop.f32.mrf.mxu0
    %v4901 = vadd.f32 0.0, %v4900
    %v4902 = vpop.f32.mrf.mxu0
    %v4903 = vadd.f32 0.0, %v4902
    %4904 = vmatmul.bf16.gmra.mxu0 %v4883
    %v4905 = vpop.f32.mrf.mxu0
    %v4906 = vadd.f32 0.0, %v4905
    %v4907 = vpop.f32.mrf.mxu0
    %v4908 = vadd.f32 0.0, %v4907
    %4909 = vmatmul.bf16.gmra.mxu0 %v4886
    %v4910 = vpop.f32.mrf.mxu0
    %v4911 = vadd.f32 0.0, %v4910
    %v4912 = vpop.f32.mrf.mxu0
    %4913 = vdwg.mxu0
    %v4914 = vpack.c.bf16 %v4901, %v4901
    %v4915 = vpack.c.bf16 %v4903, %v4903
    %v4916 = vpack.c.bf16 %v4906, %v4906
    %v4917 = vpack.c.bf16 %v4908, %v4908
    %v4918 = vpack.c.bf16 %v4911, %v4911
    %v4924 = vrot.slane %v4914, 6
    %v4925 = vrot.slane %v4924, 4
    %v4926 = vrot.slane %v4915, 6
    %v4927 = vsel %vm3026, %v4925, %v4926
    %v4928 = vrot.slane %v4926, 4
    %v4929 = vrot.slane %v4916, 6
    %v4930 = vsel %vm3026, %v4928, %v4929
    %v4931 = vrot.slane %v4929, 4
    %v4932 = vrot.slane %v4917, 6
    %v4933 = vsel %vm3026, %v4931, %v4932
    %v4934 = vrot.slane %v4932, 4
    %v4935 = vrot.slane %v4918, 6
    %v4936 = vsel %vm3026, %v4934, %v4935
    %vm4942 = vcmask 519170
    %4943 = vst.msk [vmem:[#allocation5 + $0x10] sm:$0xc] %vm4942, %v4924
    %4944 = vst.msk [vmem:[#allocation5 + $0x14] sm:$0xf] %vm4426, %v4927
    %4945 = vst.msk [vmem:[#allocation5 + $0x18] sm:$0xf] %vm4426, %v4930
    %4946 = vst.msk [vmem:[#allocation5 + $0x1c] sm:$0xf] %vm4426, %v4933
    %4947 = vst.msk [vmem:[#allocation5 + $0x20] sm:$0xf] %vm4426, %v4936
    %v4948 = vld [vmem:[#allocation5] sm:$0xf]
    %v4949 = vld [vmem:[#allocation5 + $0x4] sm:$0xf]
    %v4950 = vld [vmem:[#allocation5 + $0x8] sm:$0xf]
    %v4951 = vld [vmem:[#allocation5 + $0xc] sm:$0xf]
    %v4952 = vld [vmem:[#allocation5 + $0x10] sm:$0xf]
    %v4953 = vld [vmem:[#allocation5 + $0x14] sm:$0xf]
    %v4954 = vld [vmem:[#allocation5 + $0x18] sm:$0xf]
    %v4955 = vld [vmem:[#allocation5 + $0x1c] sm:$0x1]
    %v4956 = vld [vmem:[#allocation5 + $0x1c] sm:$0x3]
    %v4957 = vld [vmem:[#allocation5] sm:$0xe]
    %v4958 = vld [vmem:[#allocation5] sm:$0x8]
    %v4959 = vld [vmem:[#allocation5 + $0x1c] sm:$0xf]
    %v4960 = vld [vmem:[#allocation5 + $0x20] sm:$0x1]
    %v4961 = vld [vmem:[#allocation5 + $0x4] sm:$0xc]
    %v4962 = vld [vmem:[#allocation5 + $0x20] sm:$0x7]
    %v4963 = vld [vmem:[#allocation5 + $0x20] sm:$0xf]
    %v4964 = vld [vmem:[#allocation5 + $0x4] sm:$0x8]
    %v4973 = vunpack.c.l.b16 %v4948
    %v4974 = vunpack.c.l.b16 %v4949
    %v4975 = vunpack.c.l.b16 %v4950
    %v4976 = vunpack.c.l.b16 %v4951
    %v4977 = vunpack.c.l.b16 %v4952
    %v4978 = vunpack.c.l.b16 %v4953
    %v4979 = vunpack.c.l.b16 %v4954
    %v4980 = vunpack.c.l.b16 %v4955
    %v4981 = vpack.c.b16 %v4974, %v4973
    %v4982 = vpack.c.b16 %v4976, %v4975
    %v4983 = vpack.c.b16 %v4978, %v4977
    %v4984 = vpack.c.b16 %v4980, %v4979
    %v4986 = vunpack.c.l.b16 %v4956
    %v4987 = vpack.c.b16 %v4986, %v4979
    %v4989 = vshrl.u32 %v4981, 16
    %v4991 = vshll.u32 %v4981, 16
    %v4993 = vrot.slane %v4991, 1
    %v4994 = vor.u32 %v4989, %v4993
    %v4996 = vshll.u32 %v4982, 16
    %v4998 = vrot.slane %v4996, 1
    %v4999 = vsel %vm3187, %v4994, %v4998
    %v5000 = vshrl.u32 %v4982, 16
    %v5002 = vor.u32 %v5000, %v4998
    %v5004 = vshll.u32 %v4983, 16
    %v5006 = vrot.slane %v5004, 1
    %v5007 = vsel %vm3187, %v5002, %v5006
    %v5008 = vshrl.u32 %v4983, 16
    %v5010 = vor.u32 %v5008, %v5006
    %v5012 = vshll.u32 %v4987, 16
    %v5014 = vrot.slane %v5012, 1
    %v5015 = vsel %vm3187, %v5010, %v5014
    %v5016 = vshrl.u32 %v4987, 16
    %v5018 = vor.u32 %v5016, %v5014
    %5019 = vrot.lane.b32.xlu0 %v4999, 64
    %v5020 = vpop.permute.xlu0 %5019
    %5021 = vrot.lane.b32.xlu0 %v5007, 64
    %v5022 = vpop.permute.xlu0 %5021
    %5023 = vrot.lane.b32.xlu0 %v5015, 64
    %v5024 = vpop.permute.xlu0 %5023
    %5025 = vrot.lane.b32.xlu0 %v5018, 64
    %v5026 = vpop.permute.xlu0 %5025
    %v5028 = vunpack.c.l.b16 %v4957
    %v5029 = vpack.c.b16 %v4974, %v5028
    %v5030 = vrot.slane %v5029, 1
    %v5031 = vrot.slane %v4982, 1
    %v5032 = vsel %vm3310, %v5030, %v5031
    %v5033 = vrot.slane %v4983, 1
    %v5034 = vsel %vm3310, %v5031, %v5033
    %v5035 = vrot.slane %v4987, 1
    %v5036 = vsel %vm3310, %v5033, %v5035
    %v5039 = vunpack.c.l.b16 %v4958
    %v5040 = vunpack.c.l.b16 %v4959
    %v5041 = vpack.c.b16 %v4974, %v5039
    %v5042 = vpack.c.b16 %v5040, %v4979
    %v5043 = vrot.slane %v5041, 3
    %v5044 = vrot.slane %v4982, 3
    %v5045 = vsel %vm3734, %v5043, %v5044
    %v5046 = vrot.slane %v4983, 3
    %v5047 = vsel %vm3734, %v5044, %v5046
    %v5048 = vrot.slane %v5042, 3
    %v5049 = vsel %vm3734, %v5046, %v5048
    %5050 = vrot.lane.b32.xlu0 %v5045, 64
    %v5051 = vpop.permute.xlu0 %5050
    %5052 = vrot.lane.b32.xlu0 %v5047, 64
    %v5053 = vpop.permute.xlu0 %5052
    %5054 = vrot.lane.b32.xlu0 %v5049, 64
    %v5055 = vpop.permute.xlu0 %5054
    %5056 = vrot.lane.b32.xlu0 %v5048, 64
    %v5057 = vpop.permute.xlu0 %5056
    %v5059 = vunpack.c.l.b16 %v4960
    %v5060 = vpack.c.b16 %v5059, %v5059
    %vm5061 = vsmask.f32 4352
    %v5063 = vshrl.u32 %v5041, 16
    %v5065 = vrot.slane %v5063, 3
    %v5066 = vshll.u32 %v5041, 16
    %v5068 = vrot.slane %v5066, 4
    %v5069 = vor.u32 %v5065, %v5068
    %v5070 = vrot.slane %v5000, 3
    %v5071 = vrot.slane %v4996, 4
    %v5072 = vor.u32 %v5070, %v5071
    %v5073 = vsel %vm5061, %v5069, %v5072
    %v5074 = vrot.slane %v5008, 3
    %v5075 = vrot.slane %v5004, 4
    %v5076 = vor.u32 %v5074, %v5075
    %v5077 = vsel %vm5061, %v5072, %v5076
    %v5079 = vshrl.u32 %v5042, 16
    %v5081 = vrot.slane %v5079, 3
    %v5082 = vshll.u32 %v5042, 16
    %v5084 = vrot.slane %v5082, 4
    %v5085 = vor.u32 %v5081, %v5084
    %v5086 = vsel %vm5061, %v5076, %v5085
    %v5088 = vshll.u32 %v5060, 16
    %v5090 = vrot.slane %v5088, 4
    %v5091 = vsel %vm5061, %v5085, %v5090
    %v5092 = vpack.c.b16 %v4975, %v4974
    %v5093 = vpack.c.b16 %v4977, %v4976
    %v5094 = vpack.c.b16 %v4979, %v4978
    %v5095 = vpack.c.b16 %v5059, %v5040
    %5096 = vrot.lane.b32.xlu0 %v5092, 64
    %v5097 = vpop.permute.xlu0 %5096
    %5098 = vrot.lane.b32.xlu0 %v5093, 64
    %v5099 = vpop.permute.xlu0 %5098
    %5100 = vrot.lane.b32.xlu0 %v5094, 64
    %v5101 = vpop.permute.xlu0 %5100
    %5102 = vrot.lane.b32.xlu0 %v5095, 64
    %v5103 = vpop.permute.xlu0 %5102
    %v5106 = vunpack.c.l.b16 %v4961
    %v5107 = vunpack.c.l.b16 %v4962
    %v5108 = vpack.c.b16 %v4975, %v5106
    %v5109 = vpack.c.b16 %v5107, %v5040
    %v5110 = vrot.slane %v5108, 2
    %v5111 = vrot.slane %v5093, 2
    %v5112 = vsel %vm3537, %v5110, %v5111
    %v5113 = vrot.slane %v5094, 2
    %v5114 = vsel %vm3537, %v5111, %v5113
    %v5115 = vrot.slane %v5109, 2
    %v5116 = vsel %vm3537, %v5113, %v5115
    %v5118 = vunpack.c.l.b16 %v4963
    %v5119 = vpack.c.b16 %v5118, %v5040
    %v5121 = vshrl.u32 %v5108, 16
    %v5123 = vrot.slane %v5121, 2
    %v5124 = vshll.u32 %v5108, 16
    %v5126 = vrot.slane %v5124, 3
    %v5127 = vor.u32 %v5123, %v5126
    %v5129 = vshrl.u32 %v5093, 16
    %v5131 = vrot.slane %v5129, 2
    %v5132 = vshll.u32 %v5093, 16
    %v5134 = vrot.slane %v5132, 3
    %v5135 = vor.u32 %v5131, %v5134
    %v5136 = vsel %vm3644, %v5127, %v5135
    %v5138 = vshrl.u32 %v5094, 16
    %v5140 = vrot.slane %v5138, 2
    %v5141 = vshll.u32 %v5094, 16
    %v5143 = vrot.slane %v5141, 3
    %v5144 = vor.u32 %v5140, %v5143
    %v5145 = vsel %vm3644, %v5135, %v5144
    %v5147 = vshrl.u32 %v5119, 16
    %v5149 = vrot.slane %v5147, 2
    %v5150 = vshll.u32 %v5119, 16
    %v5152 = vrot.slane %v5150, 3
    %v5153 = vor.u32 %v5149, %v5152
    %v5154 = vsel %vm3644, %v5144, %v5153
    %5155 = vrot.lane.b32.xlu0 %v5136, 64
    %v5156 = vpop.permute.xlu0 %5155
    %5157 = vrot.lane.b32.xlu0 %v5145, 64
    %v5158 = vpop.permute.xlu0 %5157
    %5159 = vrot.lane.b32.xlu0 %v5154, 64
    %v5160 = vpop.permute.xlu0 %5159
    %5161 = vrot.lane.b32.xlu0 %v5153, 64
    %v5162 = vpop.permute.xlu0 %5161
    %v5164 = vunpack.c.l.b16 %v4964
    %v5165 = vpack.c.b16 %v4975, %v5164
    %v5166 = vrot.slane %v5165, 3
    %v5167 = vrot.slane %v5093, 3
    %v5168 = vsel %vm3734, %v5166, %v5167
    %v5169 = vrot.slane %v5094, 3
    %v5170 = vsel %vm3734, %v5167, %v5169
    %v5171 = vrot.slane %v5119, 3
    %v5172 = vsel %vm3734, %v5169, %v5171
    %v5174 = vsel %vm3784, %v4981, %v5020
    %v5177 = vsel %vm3784, %v4982, %v5022
    %v5180 = vsel %vm3784, %v4983, %v5024
    %v5184 = vsel %vm3784, %v4984, %v5026
    %v5188 = vsel %vm3784, %v5032, %v5051
    %v5192 = vsel %vm3784, %v5034, %v5053
    %v5196 = vsel %vm3784, %v5036, %v5055
    %v5200 = vsel %vm3784, %v5035, %v5057
    %v5204 = vsel %vm3784, %v5073, %v5097
    %v5208 = vsel %vm3784, %v5077, %v5099
    %v5212 = vsel %vm3784, %v5086, %v5101
    %v5216 = vsel %vm3784, %v5091, %v5103
    %v5220 = vsel %vm3784, %v5112, %v5156
    %v5224 = vsel %vm3784, %v5114, %v5158
    %v5228 = vsel %vm3784, %v5116, %v5160
    %v5232 = vsel %vm3784, %v5115, %v5162
    %v5234 = vld [vmem:[%s7] sm:$0xf]
    %v5235 = vld [vmem:[%s7 + $0x4] sm:$0xf]
    %v5236 = vld [vmem:[%s7 + $0x8] sm:$0xf]
    %v5237 = vld [vmem:[%s7 + $0xc] sm:$0xf]
    %v5238 = vld [vmem:[%s7 + $0x10] sm:$0xf]
    %v5239 = vld [vmem:[%s7 + $0x14] sm:$0xf]
    %v5240 = vld [vmem:[%s7 + $0x18] sm:$0xf]
    %v5241 = vld [vmem:[%s7 + $0x1c] sm:$0xf]
    %v5242 = vld [vmem:[%s7 + $0x20] sm:$0xf]
    %v5243 = vld [vmem:[%s7 + $0x24] sm:$0xf]
    %v5244 = vld [vmem:[%s7 + $0x28] sm:$0xf]
    %v5245 = vld [vmem:[%s7 + $0x2c] sm:$0xf]
    %v5246 = vld [vmem:[%s7 + $0x30] sm:$0xf]
    %v5247 = vld [vmem:[%s7 + $0x34] sm:$0xf]
    %v5248 = vld [vmem:[%s7 + $0x38] sm:$0xf]
    %v5249 = vld [vmem:[%s7 + $0x3c] sm:$0xf]
    %v5250 = vld [vmem:[%s7 + $0x40] sm:$0xf]
    %v5251 = vld [vmem:[%s7 + $0x44] sm:$0xf]
    %v5252 = vld [vmem:[%s7 + $0x48] sm:$0xf]
    %v5253 = vld [vmem:[%s7 + $0x4c] sm:$0xf]
    %v5254 = vld [vmem:[%s7 + $0x50] sm:$0xf]
    %v5255 = vld [vmem:[%s7 + $0x54] sm:$0xf]
    %v5256 = vld [vmem:[%s7 + $0x58] sm:$0xf]
    %v5257 = vld [vmem:[%s7 + $0x5c] sm:$0xf]
    %v5258 = vld [vmem:[%s7 + $0x60] sm:$0xf]
    %v5259 = vld [vmem:[%s7 + $0x64] sm:$0xf]
    %v5260 = vld [vmem:[%s7 + $0x68] sm:$0xf]
    %v5261 = vld [vmem:[%s7 + $0x6c] sm:$0xf]
    %v5262 = vld [vmem:[%s7 + $0x70] sm:$0xf]
    %v5263 = vld [vmem:[%s7 + $0x74] sm:$0xf]
    %v5264 = vld [vmem:[%s7 + $0x78] sm:$0xf]
    %v5265 = vld [vmem:[%s7 + $0x7c] sm:$0xf]
    %v5266 = vld [vmem:[%s7 + $0x80] sm:$0xf]
    %v5267 = vld [vmem:[%s7 + $0x84] sm:$0xf]
    %v5268 = vld [vmem:[%s7 + $0x88] sm:$0xf]
    %v5269 = vld [vmem:[%s7 + $0x8c] sm:$0xf]
    %v5270 = vld [vmem:[%s7 + $0x90] sm:$0xf]
    %v5271 = vld [vmem:[%s7 + $0x94] sm:$0xf]
    %v5272 = vld [vmem:[%s7 + $0x98] sm:$0xf]
    %v5273 = vld [vmem:[%s7 + $0x9c] sm:$0xf]
    %v5274 = vld [vmem:[%s7 + $0xa0] sm:$0xf]
    %v5275 = vld [vmem:[%s7 + $0xa4] sm:$0xf]
    %v5276 = vld [vmem:[%s7 + $0xa8] sm:$0xf]
    %v5277 = vld [vmem:[%s7 + $0xac] sm:$0xf]
    %v5278 = vld [vmem:[%s7 + $0xb0] sm:$0xf]
    %v5279 = vld [vmem:[%s7 + $0xb4] sm:$0xf]
    %v5280 = vld [vmem:[%s7 + $0xb8] sm:$0xf]
    %v5281 = vld [vmem:[%s7 + $0xbc] sm:$0xf]
    %v5282 = vld [vmem:[%s7 + $0xc0] sm:$0xf]
    %v5283 = vld [vmem:[%s7 + $0xc4] sm:$0xf]
    %v5284 = vld [vmem:[%s7 + $0xc8] sm:$0xf]
    %v5285 = vld [vmem:[%s7 + $0xcc] sm:$0xf]
    %v5286 = vld [vmem:[%s7 + $0xd0] sm:$0xf]
    %v5287 = vld [vmem:[%s7 + $0xd4] sm:$0xf]
    %v5288 = vld [vmem:[%s7 + $0xd8] sm:$0xf]
    %v5289 = vld [vmem:[%s7 + $0xdc] sm:$0xf]
    %v5290 = vld [vmem:[%s7 + $0xe0] sm:$0xf]
    %v5291 = vld [vmem:[%s7 + $0xe4] sm:$0xf]
    %v5292 = vld [vmem:[%s7 + $0xe8] sm:$0xf]
    %v5293 = vld [vmem:[%s7 + $0xec] sm:$0xf]
    %v5294 = vld [vmem:[%s7 + $0xf0] sm:$0xf]
    %v5295 = vld [vmem:[%s7 + $0xf4] sm:$0xf]
    %v5296 = vld [vmem:[%s7 + $0xf8] sm:$0xf]
    %v5297 = vld [vmem:[%s7 + $0xfc] sm:$0xf]
    %v5298 = vld [vmem:[%s7 + $0x100] sm:$0xf]
    %v5299 = vld [vmem:[%s7 + $0x104] sm:$0xf]
    %v5300 = vld [vmem:[%s7 + $0x108] sm:$0xf]
    %v5301 = vld [vmem:[%s7 + $0x10c] sm:$0xf]
    %v5302 = vld [vmem:[%s7 + $0x110] sm:$0xf]
    %v5303 = vld [vmem:[%s7 + $0x114] sm:$0xf]
    %v5304 = vld [vmem:[%s7 + $0x118] sm:$0xf]
    %v5305 = vld [vmem:[%s7 + $0x11c] sm:$0xf]
    %v5378 = vunpack.c.l.b16 %v5234
    %v5379 = vunpack.c.l.b16 %v5235
    %v5380 = vunpack.c.l.b16 %v5236
    %v5381 = vunpack.c.l.b16 %v5237
    %v5382 = vunpack.c.l.b16 %v5238
    %v5383 = vunpack.c.l.b16 %v5239
    %v5384 = vunpack.c.l.b16 %v5240
    %v5385 = vunpack.c.l.b16 %v5241
    %v5386 = vunpack.c.l.b16 %v5242
    %v5387 = vunpack.c.l.b16 %v5243
    %v5388 = vunpack.c.l.b16 %v5244
    %v5389 = vunpack.c.l.b16 %v5245
    %v5390 = vunpack.c.l.b16 %v5246
    %v5391 = vunpack.c.l.b16 %v5247
    %v5392 = vunpack.c.l.b16 %v5248
    %v5393 = vunpack.c.l.b16 %v5249
    %v5394 = vunpack.c.l.b16 %v5250
    %v5395 = vunpack.c.l.b16 %v5251
    %v5396 = vunpack.c.l.b16 %v5252
    %v5397 = vunpack.c.l.b16 %v5253
    %v5398 = vunpack.c.l.b16 %v5254
    %v5399 = vunpack.c.l.b16 %v5255
    %v5400 = vunpack.c.l.b16 %v5256
    %v5401 = vunpack.c.l.b16 %v5257
    %v5402 = vunpack.c.l.b16 %v5258
    %v5403 = vunpack.c.l.b16 %v5259
    %v5404 = vunpack.c.l.b16 %v5260
    %v5405 = vunpack.c.l.b16 %v5261
    %v5406 = vunpack.c.l.b16 %v5262
    %v5407 = vunpack.c.l.b16 %v5263
    %v5408 = vunpack.c.l.b16 %v5264
    %v5409 = vunpack.c.l.b16 %v5265
    %v5410 = vunpack.c.l.b16 %v5266
    %v5411 = vunpack.c.l.b16 %v5267
    %v5412 = vunpack.c.l.b16 %v5268
    %v5413 = vunpack.c.l.b16 %v5269
    %v5414 = vunpack.c.l.b16 %v5270
    %v5415 = vunpack.c.l.b16 %v5271
    %v5416 = vunpack.c.l.b16 %v5272
    %v5417 = vunpack.c.l.b16 %v5273
    %v5418 = vunpack.c.l.b16 %v5274
    %v5419 = vunpack.c.l.b16 %v5275
    %v5420 = vunpack.c.l.b16 %v5276
    %v5421 = vunpack.c.l.b16 %v5277
    %v5422 = vunpack.c.l.b16 %v5278
    %v5423 = vunpack.c.l.b16 %v5279
    %v5424 = vunpack.c.l.b16 %v5280
    %v5425 = vunpack.c.l.b16 %v5281
    %v5426 = vunpack.c.l.b16 %v5282
    %v5427 = vunpack.c.l.b16 %v5283
    %v5428 = vunpack.c.l.b16 %v5284
    %v5429 = vunpack.c.l.b16 %v5285
    %v5430 = vunpack.c.l.b16 %v5286
    %v5431 = vunpack.c.l.b16 %v5287
    %v5432 = vunpack.c.l.b16 %v5288
    %v5433 = vunpack.c.l.b16 %v5289
    %v5434 = vunpack.c.l.b16 %v5290
    %v5435 = vunpack.c.l.b16 %v5291
    %v5436 = vunpack.c.l.b16 %v5292
    %v5437 = vunpack.c.l.b16 %v5293
    %v5438 = vunpack.c.l.b16 %v5294
    %v5439 = vunpack.c.l.b16 %v5295
    %v5440 = vunpack.c.l.b16 %v5296
    %v5441 = vunpack.c.l.b16 %v5297
    %v5442 = vunpack.c.l.b16 %v5298
    %v5443 = vunpack.c.l.b16 %v5299
    %v5444 = vunpack.c.l.b16 %v5300
    %v5445 = vunpack.c.l.b16 %v5301
    %v5446 = vunpack.c.l.b16 %v5302
    %v5447 = vunpack.c.l.b16 %v5303
    %v5448 = vunpack.c.l.b16 %v5304
    %v5449 = vunpack.c.l.b16 %v5305
    %v5450 = vpack.c.b16 %v5379, %v5378
    %v5451 = vpack.c.b16 %v5381, %v5380
    %v5452 = vpack.c.b16 %v5383, %v5382
    %v5453 = vpack.c.b16 %v5385, %v5384
    %v5454 = vpack.c.b16 %v5387, %v5386
    %v5455 = vpack.c.b16 %v5389, %v5388
    %v5456 = vpack.c.b16 %v5391, %v5390
    %v5457 = vpack.c.b16 %v5393, %v5392
    %v5458 = vpack.c.b16 %v5395, %v5394
    %v5459 = vpack.c.b16 %v5397, %v5396
    %v5460 = vpack.c.b16 %v5399, %v5398
    %v5461 = vpack.c.b16 %v5401, %v5400
    %v5462 = vpack.c.b16 %v5403, %v5402
    %v5463 = vpack.c.b16 %v5405, %v5404
    %v5464 = vpack.c.b16 %v5407, %v5406
    %v5465 = vpack.c.b16 %v5409, %v5408
    %v5466 = vpack.c.b16 %v5411, %v5410
    %v5467 = vpack.c.b16 %v5413, %v5412
    %v5468 = vpack.c.b16 %v5415, %v5414
    %v5469 = vpack.c.b16 %v5417, %v5416
    %v5470 = vpack.c.b16 %v5419, %v5418
    %v5471 = vpack.c.b16 %v5421, %v5420
    %v5472 = vpack.c.b16 %v5423, %v5422
    %v5473 = vpack.c.b16 %v5425, %v5424
    %v5474 = vpack.c.b16 %v5427, %v5426
    %v5475 = vpack.c.b16 %v5429, %v5428
    %v5476 = vpack.c.b16 %v5431, %v5430
    %v5477 = vpack.c.b16 %v5433, %v5432
    %v5478 = vpack.c.b16 %v5435, %v5434
    %v5479 = vpack.c.b16 %v5437, %v5436
    %v5480 = vpack.c.b16 %v5439, %v5438
    %v5481 = vpack.c.b16 %v5441, %v5440
    %v5482 = vpack.c.b16 %v5443, %v5442
    %v5483 = vpack.c.b16 %v5445, %v5444
    %v5484 = vpack.c.b16 %v5447, %v5446
    %v5485 = vpack.c.b16 %v5449, %v5448
    %v5523 = vsel %vm3784, %v5168, 0
    %v5526 = vsel %vm3784, %v5170, 0
    %v5529 = vsel %vm3784, %v5172, 0
    %v5532 = vsel %vm3784, %v5171, 0
    %5534 = vmatpush.bf16.msra.mxu0 %v5457
    %5535 = vmatpush.bf16.msra.mxu0 %v5456
    %5536 = vmatpush.bf16.msra.mxu0 %v5455
    %5537 = vmatpush.bf16.msra.mxu0 %v5454
    %5538 = vmatpush.bf16.msra.mxu0 %v5453
    %5539 = vmatpush.bf16.msra.mxu0 %v5452
    %5540 = vmatpush.bf16.msra.mxu0 %v5451
    %5541 = vmatpush.bf16.msra.mxu0 %v5450
    %5542 = vmatmul.bf16.gmra.mxu0 %v5174
    %v5543 = vpop.f32.mrf.mxu0
    %v5544 = vadd.f32 0.0, %v5543
    %v5545 = vpop.f32.mrf.mxu0
    %v5546 = vadd.f32 0.0, %v5545
    %5547 = vmatmul.bf16.gmra.mxu0 %v5177
    %v5548 = vpop.f32.mrf.mxu0
    %v5549 = vadd.f32 0.0, %v5548
    %v5550 = vpop.f32.mrf.mxu0
    %v5551 = vadd.f32 0.0, %v5550
    %5552 = vmatmul.bf16.gmra.mxu0 %v5180
    %v5553 = vpop.f32.mrf.mxu0
    %v5554 = vadd.f32 0.0, %v5553
    %v5555 = vpop.f32.mrf.mxu0
    %v5556 = vadd.f32 0.0, %v5555
    %5557 = vmatmul.bf16.gmra.mxu0 %v5184
    %v5558 = vpop.f32.mrf.mxu0
    %v5559 = vadd.f32 0.0, %v5558
    %v5560 = vpop.f32.mrf.mxu0
    %v5561 = vadd.f32 0.0, %v5560
    %5562 = vdwg.mxu0
    %5563 = vmatpush.bf16.msra.mxu0 %v5465
    %5564 = vmatpush.bf16.msra.mxu0 %v5464
    %5565 = vmatpush.bf16.msra.mxu0 %v5463
    %5566 = vmatpush.bf16.msra.mxu0 %v5462
    %5567 = vmatpush.bf16.msra.mxu0 %v5461
    %5568 = vmatpush.bf16.msra.mxu0 %v5460
    %5569 = vmatpush.bf16.msra.mxu0 %v5459
    %5570 = vmatpush.bf16.msra.mxu0 %v5458
    %5571 = vmatmul.bf16.gmra.mxu0 %v5188
    %v5572 = vpop.f32.mrf.mxu0
    %v5573 = vadd.f32 %v5544, %v5572
    %v5574 = vpop.f32.mrf.mxu0
    %v5575 = vadd.f32 %v5546, %v5574
    %5576 = vmatmul.bf16.gmra.mxu0 %v5192
    %v5577 = vpop.f32.mrf.mxu0
    %v5578 = vadd.f32 %v5549, %v5577
    %v5579 = vpop.f32.mrf.mxu0
    %v5580 = vadd.f32 %v5551, %v5579
    %5581 = vmatmul.bf16.gmra.mxu0 %v5196
    %v5582 = vpop.f32.mrf.mxu0
    %v5583 = vadd.f32 %v5554, %v5582
    %v5584 = vpop.f32.mrf.mxu0
    %v5585 = vadd.f32 %v5556, %v5584
    %5586 = vmatmul.bf16.gmra.mxu0 %v5200
    %v5587 = vpop.f32.mrf.mxu0
    %v5588 = vadd.f32 %v5559, %v5587
    %v5589 = vpop.f32.mrf.mxu0
    %v5590 = vadd.f32 %v5561, %v5589
    %5591 = vdwg.mxu0
    %5592 = vmatpush.bf16.msra.mxu0 %v5473
    %5593 = vmatpush.bf16.msra.mxu0 %v5472
    %5594 = vmatpush.bf16.msra.mxu0 %v5471
    %5595 = vmatpush.bf16.msra.mxu0 %v5470
    %5596 = vmatpush.bf16.msra.mxu0 %v5469
    %5597 = vmatpush.bf16.msra.mxu0 %v5468
    %5598 = vmatpush.bf16.msra.mxu0 %v5467
    %5599 = vmatpush.bf16.msra.mxu0 %v5466
    %5600 = vmatmul.bf16.gmra.mxu0 %v5204
    %v5601 = vpop.f32.mrf.mxu0
    %v5602 = vadd.f32 %v5573, %v5601
    %v5603 = vpop.f32.mrf.mxu0
    %v5604 = vadd.f32 %v5575, %v5603
    %5605 = vmatmul.bf16.gmra.mxu0 %v5208
    %v5606 = vpop.f32.mrf.mxu0
    %v5607 = vadd.f32 %v5578, %v5606
    %v5608 = vpop.f32.mrf.mxu0
    %v5609 = vadd.f32 %v5580, %v5608
    %5610 = vmatmul.bf16.gmra.mxu0 %v5212
    %v5611 = vpop.f32.mrf.mxu0
    %v5612 = vadd.f32 %v5583, %v5611
    %v5613 = vpop.f32.mrf.mxu0
    %v5614 = vadd.f32 %v5585, %v5613
    %5615 = vmatmul.bf16.gmra.mxu0 %v5216
    %v5616 = vpop.f32.mrf.mxu0
    %v5617 = vadd.f32 %v5588, %v5616
    %v5618 = vpop.f32.mrf.mxu0
    %v5619 = vadd.f32 %v5590, %v5618
    %5620 = vdwg.mxu0
    %5621 = vmatpush.bf16.msra.mxu0 %v5481
    %5622 = vmatpush.bf16.msra.mxu0 %v5480
    %5623 = vmatpush.bf16.msra.mxu0 %v5479
    %5624 = vmatpush.bf16.msra.mxu0 %v5478
    %5625 = vmatpush.bf16.msra.mxu0 %v5477
    %5626 = vmatpush.bf16.msra.mxu0 %v5476
    %5627 = vmatpush.bf16.msra.mxu0 %v5475
    %5628 = vmatpush.bf16.msra.mxu0 %v5474
    %5629 = vmatmul.bf16.gmra.mxu0 %v5220
    %v5630 = vpop.f32.mrf.mxu0
    %v5631 = vadd.f32 %v5602, %v5630
    %v5632 = vpop.f32.mrf.mxu0
    %v5633 = vadd.f32 %v5604, %v5632
    %5634 = vmatmul.bf16.gmra.mxu0 %v5224
    %v5635 = vpop.f32.mrf.mxu0
    %v5636 = vadd.f32 %v5607, %v5635
    %v5637 = vpop.f32.mrf.mxu0
    %v5638 = vadd.f32 %v5609, %v5637
    %5639 = vmatmul.bf16.gmra.mxu0 %v5228
    %v5640 = vpop.f32.mrf.mxu0
    %v5641 = vadd.f32 %v5612, %v5640
    %v5642 = vpop.f32.mrf.mxu0
    %v5643 = vadd.f32 %v5614, %v5642
    %5644 = vmatmul.bf16.gmra.mxu0 %v5232
    %v5645 = vpop.f32.mrf.mxu0
    %v5646 = vadd.f32 %v5617, %v5645
    %v5647 = vpop.f32.mrf.mxu0
    %v5648 = vadd.f32 %v5619, %v5647
    %5649 = vdwg.mxu0
    %5650 = vmatpush.bf16.msra.mxu0 0
    %5651 = vmatpush.bf16.msra.mxu0 0
    %5652 = vmatpush.bf16.msra.mxu0 0
    %5653 = vmatpush.bf16.msra.mxu0 0
    %5654 = vmatpush.bf16.msra.mxu0 %v5485
    %5655 = vmatpush.bf16.msra.mxu0 %v5484
    %5656 = vmatpush.bf16.msra.mxu0 %v5483
    %5657 = vmatpush.bf16.msra.mxu0 %v5482
    %5658 = vmatmul.bf16.gmra.mxu0 %v5523
    %v5659 = vpop.f32.mrf.mxu0
    %v5660 = vadd.f32 %v5631, %v5659
    %v5661 = vpop.f32.mrf.mxu0
    %v5662 = vadd.f32 %v5633, %v5661
    %5663 = vmatmul.bf16.gmra.mxu0 %v5526
    %v5664 = vpop.f32.mrf.mxu0
    %v5665 = vadd.f32 %v5636, %v5664
    %v5666 = vpop.f32.mrf.mxu0
    %v5667 = vadd.f32 %v5638, %v5666
    %5668 = vmatmul.bf16.gmra.mxu0 %v5529
    %v5669 = vpop.f32.mrf.mxu0
    %v5670 = vadd.f32 %v5641, %v5669
    %v5671 = vpop.f32.mrf.mxu0
    %v5672 = vadd.f32 %v5643, %v5671
    %5673 = vmatmul.bf16.gmra.mxu0 %v5532
    %v5674 = vpop.f32.mrf.mxu0
    %v5675 = vadd.f32 %v5646, %v5674
    %v5676 = vpop.f32.mrf.mxu0
    %v5677 = vadd.f32 %v5648, %v5676
    %5678 = vdwg.mxu0
    %v5679 = vld [vmem:[%s8] sm:$0x1]
    %v5681 = vperm.slane %v5679, 0
    %v5683 = vmul.f32 %v5660, %v5681
    %v5684 = vmul.f32 %v5662, %v5681
    %v5685 = vmul.f32 %v5665, %v5681
    %v5686 = vmul.f32 %v5667, %v5681
    %v5687 = vmul.f32 %v5670, %v5681
    %v5688 = vmul.f32 %v5672, %v5681
    %v5689 = vmul.f32 %v5675, %v5681
    %v5690 = vmul.f32 %v5677, %v5681
    %v5691 = vld [vmem:[%s9] sm:$0x1]
    %v5693 = vperm.slane %v5691, 0
    %v5695 = vadd.f32 %v5683, %v5693
    %v5696 = vadd.f32 %v5684, %v5693
    %v5697 = vadd.f32 %v5685, %v5693
    %v5698 = vadd.f32 %v5686, %v5693
    %v5699 = vadd.f32 %v5687, %v5693
    %v5700 = vadd.f32 %v5688, %v5693
    %v5701 = vadd.f32 %v5689, %v5693
    %v5702 = vadd.f32 %v5690, %v5693
    %v5703 = vmax.f32 %v5695, 0.0
    %v5704 = vmax.f32 %v5696, 0.0
    %v5705 = vmax.f32 %v5697, 0.0
    %v5706 = vmax.f32 %v5698, 0.0
    %v5707 = vmax.f32 %v5699, 0.0
    %v5708 = vmax.f32 %v5700, 0.0
    %v5709 = vmax.f32 %v5701, 0.0
    %v5710 = vmax.f32 %v5702, 0.0
    %v5711 = vpack.c.bf16 %v5703, %v5703
    %v5712 = vpack.c.bf16 %v5704, %v5704
    %v5713 = vpack.c.bf16 %v5705, %v5705
    %v5714 = vpack.c.bf16 %v5706, %v5706
    %v5715 = vpack.c.bf16 %v5707, %v5707
    %v5716 = vpack.c.bf16 %v5708, %v5708
    %v5717 = vpack.c.bf16 %v5709, %v5709
    %v5718 = vpack.c.bf16 %v5710, %v5710
    %5719 = vst [vmem:[#allocation6] sm:$0xf] %v5711
    %5720 = vst [vmem:[#allocation6 + $0x4] sm:$0xf] %v5712
    %5721 = vst [vmem:[#allocation6 + $0x8] sm:$0xf] %v5713
    %5722 = vst [vmem:[#allocation6 + $0xc] sm:$0xf] %v5714
    %5723 = vst [vmem:[#allocation6 + $0x10] sm:$0xf] %v5715
    %5724 = vst [vmem:[#allocation6 + $0x14] sm:$0xf] %v5716
    %5725 = vst [vmem:[#allocation6 + $0x18] sm:$0xf] %v5717
    %5726 = vst [vmem:[#allocation6 + $0x1c] sm:$0x1] %v5718
    %v5727 = vld [vmem:[#allocation6] sm:$0xf]
    %v5728 = vld [vmem:[#allocation6 + $0x4] sm:$0xf]
    %v5729 = vunpack.c.l.bf16 %v5727
    %v5730 = vunpack.c.l.bf16 %v5728
    %v5733 = vrot.slane %v5729, 1
    %v5734 = vrot.slane %v5730, 1
    %v5735 = vsel %vm1363, %v5733, %v5734
    %v5738 = vmax.f32 %v5729, %v5735
    %v5739 = vmax.f32 %v5730, %v5734
    %v5740 = vpack.c.bf16 %v5738, %v5738
    %v5741 = vpack.c.bf16 %v5739, %v5739
    %v5742 = vld [vmem:[#allocation6] sm:$0x8]
    %v5743 = vld [vmem:[#allocation6 + $0x8] sm:$0x7]
    %v5744 = vunpack.c.l.bf16 %v5742
    %v5745 = vunpack.c.l.bf16 %v5743
    %v5748 = vrot.slane %v5744, 1
    %v5749 = vsel %vm1363, %v5748, %v5734
    %v5750 = vrot.slane %v5745, 1
    %v5751 = vsel %vm1363, %v5734, %v5750
    %v5755 = vmax.f32 %v5744, %v5749
    %v5756 = vmax.f32 %v5730, %v5751
    %v5757 = vmax.f32 %v5745, %v5750
    %v5758 = vpack.c.bf16 %v5755, %v5755
    %v5759 = vpack.c.bf16 %v5756, %v5756
    %v5760 = vpack.c.bf16 %v5757, %v5757
    %v5761 = vunpack.c.l.bf16 %v5740
    %v5762 = vunpack.c.l.bf16 %v5741
    %v5763 = vunpack.c.l.bf16 %v5758
    %v5764 = vunpack.c.l.bf16 %v5759
    %v5765 = vunpack.c.l.bf16 %v5760
    %v5769 = vrot.slane %v5763, 6
    %v5770 = vrot.slane %v5764, 6
    %v5771 = vsel %vm4640, %v5769, %v5770
    %v5772 = vrot.slane %v5765, 6
    %v5773 = vsel %vm4640, %v5770, %v5772
    %v5776 = vmax.f32 %v5761, %v5771
    %v5777 = vmax.f32 %v5762, %v5773
    %v5778 = vpack.c.bf16 %v5777, %v5776
    %v5779 = vld [vmem:[%s15] sm:$0xf]
    %v5780 = vld [vmem:[%s15 + $0x4] sm:$0xf]
    %v5783 = vunpack.c.l.b16 %v5779
    %v5784 = vunpack.c.l.b16 %v5780
    %v5785 = vpack.c.b16 %v5784, %v5783
    %vm5786 = vcmask 121856
    %v5788 = vsel %vm5786, %v5785, 0
    %vm5790 = vcmask 1047552
    %v5791 = vsel %vm1363, 4294967295, 65535
    %v5792 = vsel %vm5790, %v5791, 0
    %v5794 = vand.u32 %v5778, %v5792
    %5796 = vmatpush.bf16.msra.mxu0 0
    %5797 = vmatpush.bf16.msra.mxu0 0
    %5798 = vmatpush.bf16.msra.mxu0 0
    %5799 = vmatpush.bf16.msra.mxu0 0
    %5800 = vmatpush.bf16.msra.mxu0 0
    %5801 = vmatpush.bf16.msra.mxu0 0
    %5802 = vmatpush.bf16.msra.mxu0 0
    %5803 = vmatpush.bf16.msra.mxu0 %v5794
    %5804 = vmatmul.bf16.gmra.mxu0 %v5788
    %v5805 = vpop.f32.mrf.mxu0
    %v5806 = vadd.f32 0.0, %v5805
    %v5807 = vpop.f32.mrf.mxu0
    %v5808 = vadd.f32 0.0, %v5807
    %5809 = vdwg.mxu0
    %v5810 = vpack.c.bf16 %v5806, %v5806
    %v5811 = vpack.c.bf16 %v5808, %v5808
    %5812 = vst [vmem:[#allocation7] sm:$0xf] %v5810
    %5813 = vst [vmem:[#allocation7 + $0x4] sm:$0xf] %v5811
    %v5814 = vld [vmem:[#allocation6 + $0x10] sm:$0xc]
    %v5815 = vld [vmem:[#allocation6 + $0x14] sm:$0xf]
    %v5816 = vld [vmem:[#allocation6 + $0x18] sm:$0x3]
    %v5817 = vunpack.c.l.bf16 %v5814
    %v5818 = vunpack.c.l.bf16 %v5815
    %v5819 = vunpack.c.l.bf16 %v5816
    %v5823 = vrot.slane %v5817, 1
    %v5824 = vrot.slane %v5818, 1
    %v5825 = vsel %vm1363, %v5823, %v5824
    %v5826 = vrot.slane %v5819, 1
    %v5827 = vsel %vm1363, %v5824, %v5826
    %v5831 = vmax.f32 %v5817, %v5825
    %v5832 = vmax.f32 %v5818, %v5827
    %v5833 = vmax.f32 %v5819, %v5826
    %v5834 = vpack.c.bf16 %v5831, %v5831
    %v5835 = vpack.c.bf16 %v5832, %v5832
    %v5836 = vpack.c.bf16 %v5833, %v5833
    %v5837 = vld [vmem:[#allocation6 + $0x14] sm:$0xe]
    %v5838 = vld [vmem:[#allocation6 + $0x18] sm:$0xf]
    %v5839 = vld [vmem:[#allocation6 + $0x1c] sm:$0x1]
    %v5840 = vunpack.c.l.bf16 %v5837
    %v5841 = vunpack.c.l.bf16 %v5838
    %v5842 = vunpack.c.l.bf16 %v5839
    %v5846 = vrot.slane %v5840, 1
    %v5847 = vrot.slane %v5841, 1
    %v5848 = vsel %vm1363, %v5846, %v5847
    %v5849 = vrot.slane %v5842, 1
    %v5850 = vsel %vm1363, %v5847, %v5849
    %v5854 = vmax.f32 %v5840, %v5848
    %v5855 = vmax.f32 %v5841, %v5850
    %v5856 = vmax.f32 %v5842, %v5849
    %v5857 = vpack.c.bf16 %v5854, %v5854
    %v5858 = vpack.c.bf16 %v5855, %v5855
    %v5859 = vpack.c.bf16 %v5856, %v5856
    %v5860 = vunpack.c.l.bf16 %v5834
    %v5861 = vunpack.c.l.bf16 %v5835
    %v5862 = vunpack.c.l.bf16 %v5836
    %v5863 = vunpack.c.l.bf16 %v5857
    %v5864 = vunpack.c.l.bf16 %v5858
    %v5865 = vunpack.c.l.bf16 %v5859
    %v5869 = vrot.slane %v5863, 6
    %v5870 = vrot.slane %v5864, 6
    %v5871 = vsel %vm4640, %v5869, %v5870
    %v5872 = vrot.slane %v5865, 6
    %v5873 = vsel %vm4640, %v5870, %v5872
    %v5877 = vmax.f32 %v5860, %v5869
    %v5878 = vmax.f32 %v5861, %v5871
    %v5879 = vmax.f32 %v5862, %v5873
    %v5880 = vpack.c.bf16 %v5878, %v5877
    %v5881 = vpack.c.bf16 %v5879, %v5879
    %v5882 = vld [vmem:[%s15] sm:$0xf]
    %v5883 = vld [vmem:[%s15 + $0x4] sm:$0xf]
    %v5886 = vunpack.c.l.b16 %v5882
    %v5887 = vunpack.c.l.b16 %v5883
    %v5888 = vpack.c.b16 %v5887, %v5886
    %v5891 = vrot.slane %v5880, 2
    %v5892 = vrot.slane %v5881, 2
    %v5893 = vsel %vm3537, %v5891, %v5892
    %v5895 = vsel %vm5786, %v5888, 0
    %v5898 = vand.u32 %v5893, %v5792
    %5900 = vmatpush.bf16.msra.mxu0 0
    %5901 = vmatpush.bf16.msra.mxu0 0
    %5902 = vmatpush.bf16.msra.mxu0 0
    %5903 = vmatpush.bf16.msra.mxu0 0
    %5904 = vmatpush.bf16.msra.mxu0 0
    %5905 = vmatpush.bf16.msra.mxu0 0
    %5906 = vmatpush.bf16.msra.mxu0 0
    %5907 = vmatpush.bf16.msra.mxu0 %v5898
    %5908 = vmatmul.bf16.gmra.mxu0 %v5895
    %v5909 = vpop.f32.mrf.mxu0
    %v5910 = vadd.f32 0.0, %v5909
    %v5911 = vpop.f32.mrf.mxu0
    %v5912 = vadd.f32 0.0, %v5911
    %5913 = vdwg.mxu0
    %v5914 = vpack.c.bf16 %v5910, %v5910
    %v5915 = vpack.c.bf16 %v5912, %v5912
    %5916 = vst [vmem:[#allocation7 + $0x8] sm:$0xf] %v5914
    %5917 = vst [vmem:[#allocation7 + $0xc] sm:$0xf] %v5915
    %v5918 = vld [vmem:[#allocation7] sm:$0xf]
    %v5919 = vld [vmem:[#allocation7 + $0x4] sm:$0xf]
    %v5920 = vld [vmem:[#allocation7 + $0x8] sm:$0x7]
    %v5921 = vld [vmem:[#allocation7 + $0x8] sm:$0xf]
    %v5922 = vld [vmem:[#allocation7] sm:$0xe]
    %v5923 = vld [vmem:[#allocation7] sm:$0xc]
    %v5924 = vld [vmem:[#allocation7 + $0x4] sm:$0xf]
    %v5925 = vld [vmem:[#allocation7 + $0x8] sm:$0xf]
    %v5926 = vld [vmem:[#allocation7 + $0xc] sm:$0x1]
    %v5927 = vld [vmem:[#allocation7 + $0xc] sm:$0x3]
    %v5928 = vld [vmem:[#allocation7] sm:$0x8]
    %v5929 = vld [vmem:[#allocation7 + $0xc] sm:$0x7]
    %v5930 = vld [vmem:[#allocation7 + $0xc] sm:$0xf]
    %v5931 = vld [vmem:[#allocation7 + $0x4] sm:$0xe]
    %v5935 = vunpack.c.l.b16 %v5918
    %v5936 = vunpack.c.l.b16 %v5919
    %v5937 = vunpack.c.l.b16 %v5920
    %v5938 = vpack.c.b16 %v5936, %v5935
    %v5939 = vpack.c.b16 %v5937, %v5937
    %v5943 = vunpack.c.l.b16 %v5921
    %v5944 = vpack.c.b16 %v5943, %v5943
    %v5946 = vshrl.u32 %v5938, 16
    %v5948 = vshll.u32 %v5938, 16
    %v5950 = vrot.slane %v5948, 1
    %v5951 = vor.u32 %v5946, %v5950
    %v5953 = vshll.u32 %v5944, 16
    %v5955 = vrot.slane %v5953, 1
    %v5956 = vsel %vm3187, %v5951, %v5955
    %v5957 = vshrl.u32 %v5944, 16
    %v5959 = vor.u32 %v5957, %v5955
    %v5963 = vunpack.c.l.b16 %v5922
    %v5964 = vpack.c.b16 %v5936, %v5963
    %v5965 = vrot.slane %v5964, 1
    %v5966 = vrot.slane %v5944, 1
    %v5967 = vsel %vm3310, %v5965, %v5966
    %v5974 = vunpack.c.l.b16 %v5923
    %v5975 = vunpack.c.l.b16 %v5924
    %v5976 = vunpack.c.l.b16 %v5925
    %v5977 = vunpack.c.l.b16 %v5926
    %v5978 = vpack.c.b16 %v5975, %v5974
    %v5979 = vpack.c.b16 %v5977, %v5976
    %v5980 = vrot.slane %v5978, 2
    %v5981 = vrot.slane %v5979, 2
    %v5982 = vsel %vm3537, %v5980, %v5981
    %v5986 = vunpack.c.l.b16 %v5927
    %v5987 = vpack.c.b16 %v5986, %v5976
    %v5989 = vshrl.u32 %v5978, 16
    %v5991 = vrot.slane %v5989, 2
    %v5992 = vshll.u32 %v5978, 16
    %v5994 = vrot.slane %v5992, 3
    %v5995 = vor.u32 %v5991, %v5994
    %v5997 = vshrl.u32 %v5987, 16
    %v5999 = vrot.slane %v5997, 2
    %v6000 = vshll.u32 %v5987, 16
    %v6002 = vrot.slane %v6000, 3
    %v6003 = vor.u32 %v5999, %v6002
    %v6004 = vsel %vm3644, %v5995, %v6003
    %v6008 = vunpack.c.l.b16 %v5928
    %v6009 = vpack.c.b16 %v5975, %v6008
    %v6010 = vrot.slane %v6009, 3
    %v6011 = vrot.slane %v5987, 3
    %v6012 = vsel %vm3734, %v6010, %v6011
    %v6016 = vunpack.c.l.b16 %v5929
    %v6017 = vpack.c.b16 %v5976, %v5975
    %v6018 = vpack.c.b16 %v6016, %v6016
    %v6022 = vunpack.c.l.b16 %v5930
    %v6023 = vpack.c.b16 %v6022, %v6022
    %v6025 = vshrl.u32 %v6017, 16
    %v6027 = vshll.u32 %v6017, 16
    %v6029 = vrot.slane %v6027, 1
    %v6030 = vor.u32 %v6025, %v6029
    %v6032 = vshll.u32 %v6023, 16
    %v6034 = vrot.slane %v6032, 1
    %v6035 = vsel %vm3187, %v6030, %v6034
    %v6036 = vshrl.u32 %v6023, 16
    %v6038 = vor.u32 %v6036, %v6034
    %v6042 = vunpack.c.l.b16 %v5931
    %v6043 = vpack.c.b16 %v5976, %v6042
    %v6044 = vrot.slane %v6043, 1
    %v6045 = vrot.slane %v6023, 1
    %v6046 = vsel %vm3310, %v6044, %v6045
    %v6049 = vld [vmem:[%s10] sm:$0xff]
    %v6050 = vld [vmem:[%s10 + $0x8] sm:$0xff]
    %v6051 = vld [vmem:[%s10 + $0x10] sm:$0xff]
    %v6052 = vld [vmem:[%s10 + $0x18] sm:$0xff]
    %v6053 = vld [vmem:[%s10 + $0x20] sm:$0xff]
    %v6054 = vld [vmem:[%s10 + $0x28] sm:$0xff]
    %v6055 = vld [vmem:[%s10 + $0x30] sm:$0xff]
    %v6056 = vld [vmem:[%s10 + $0x38] sm:$0xff]
    %v6057 = vld [vmem:[%s10 + $0x40] sm:$0xff]
    %v6058 = vld [vmem:[%s10 + $0x48] sm:$0xff]
    %v6059 = vld [vmem:[%s10 + $0x50] sm:$0xff]
    %v6060 = vld [vmem:[%s10 + $0x58] sm:$0xff]
    %v6061 = vld [vmem:[%s10 + $0x60] sm:$0xff]
    %v6062 = vld [vmem:[%s10 + $0x68] sm:$0xff]
    %v6063 = vld [vmem:[%s10 + $0x70] sm:$0xff]
    %v6064 = vld [vmem:[%s10 + $0x78] sm:$0xff]
    %v6065 = vld [vmem:[%s10 + $0x80] sm:$0xff]
    %v6066 = vld [vmem:[%s10 + $0x88] sm:$0xff]
    %v6067 = vld [vmem:[%s10 + $0x90] sm:$0xff]
    %v6068 = vld [vmem:[%s10 + $0x98] sm:$0xff]
    %v6069 = vld [vmem:[%s10 + $0xa0] sm:$0xff]
    %v6070 = vld [vmem:[%s10 + $0xa8] sm:$0xff]
    %v6071 = vld [vmem:[%s10 + $0xb0] sm:$0xff]
    %v6072 = vld [vmem:[%s10 + $0xb8] sm:$0xff]
    %v6073 = vld [vmem:[%s10 + $0xc0] sm:$0xff]
    %v6074 = vld [vmem:[%s10 + $0xc8] sm:$0xff]
    %v6075 = vld [vmem:[%s10 + $0xd0] sm:$0xff]
    %v6076 = vld [vmem:[%s10 + $0xd8] sm:$0xff]
    %v6077 = vld [vmem:[%s10 + $0xe0] sm:$0xff]
    %v6078 = vld [vmem:[%s10 + $0xe8] sm:$0xff]
    %v6079 = vld [vmem:[%s10 + $0xf0] sm:$0xff]
    %v6080 = vld [vmem:[%s10 + $0xf8] sm:$0xff]
    %v6081 = vld [vmem:[%s10 + $0x100] sm:$0xff]
    %v6082 = vld [vmem:[%s10 + $0x108] sm:$0xff]
    %v6083 = vld [vmem:[%s10 + $0x110] sm:$0xff]
    %v6084 = vld [vmem:[%s10 + $0x118] sm:$0xff]
    %v6085 = vld [vmem:[%s10 + $0x120] sm:$0xff]
    %v6086 = vld [vmem:[%s10 + $0x128] sm:$0xff]
    %v6087 = vld [vmem:[%s10 + $0x130] sm:$0xff]
    %v6088 = vld [vmem:[%s10 + $0x138] sm:$0xff]
    %v6089 = vld [vmem:[%s10 + $0x140] sm:$0xff]
    %v6090 = vld [vmem:[%s10 + $0x148] sm:$0xff]
    %v6091 = vld [vmem:[%s10 + $0x150] sm:$0xff]
    %v6092 = vld [vmem:[%s10 + $0x158] sm:$0xff]
    %v6093 = vld [vmem:[%s10 + $0x160] sm:$0xff]
    %v6094 = vld [vmem:[%s10 + $0x168] sm:$0xff]
    %v6095 = vld [vmem:[%s10 + $0x170] sm:$0xff]
    %v6096 = vld [vmem:[%s10 + $0x178] sm:$0xff]
    %v6097 = vld [vmem:[%s10 + $0x180] sm:$0xff]
    %v6098 = vld [vmem:[%s10 + $0x188] sm:$0xff]
    %v6099 = vld [vmem:[%s10 + $0x190] sm:$0xff]
    %v6100 = vld [vmem:[%s10 + $0x198] sm:$0xff]
    %v6101 = vld [vmem:[%s10 + $0x1a0] sm:$0xff]
    %v6102 = vld [vmem:[%s10 + $0x1a8] sm:$0xff]
    %v6103 = vld [vmem:[%s10 + $0x1b0] sm:$0xff]
    %v6104 = vld [vmem:[%s10 + $0x1b8] sm:$0xff]
    %v6105 = vld [vmem:[%s10 + $0x1c0] sm:$0xff]
    %v6106 = vld [vmem:[%s10 + $0x1c8] sm:$0xff]
    %v6107 = vld [vmem:[%s10 + $0x1d0] sm:$0xff]
    %v6108 = vld [vmem:[%s10 + $0x1d8] sm:$0xff]
    %v6109 = vld [vmem:[%s10 + $0x1e0] sm:$0xff]
    %v6110 = vld [vmem:[%s10 + $0x1e8] sm:$0xff]
    %v6111 = vld [vmem:[%s10 + $0x1f0] sm:$0xff]
    %v6112 = vld [vmem:[%s10 + $0x1f8] sm:$0xff]
    %v6113 = vld [vmem:[%s10 + $0x200] sm:$0xff]
    %v6114 = vld [vmem:[%s10 + $0x208] sm:$0xff]
    %v6115 = vld [vmem:[%s10 + $0x210] sm:$0xff]
    %v6116 = vld [vmem:[%s10 + $0x218] sm:$0xff]
    %v6117 = vld [vmem:[%s10 + $0x220] sm:$0xff]
    %v6118 = vld [vmem:[%s10 + $0x228] sm:$0xff]
    %v6119 = vld [vmem:[%s10 + $0x230] sm:$0xff]
    %v6120 = vld [vmem:[%s10 + $0x238] sm:$0xff]
    %v6121 = vld [vmem:[%s10 + $0x240] sm:$0xff]
    %v6122 = vld [vmem:[%s10 + $0x248] sm:$0xff]
    %v6123 = vld [vmem:[%s10 + $0x250] sm:$0xff]
    %v6124 = vld [vmem:[%s10 + $0x258] sm:$0xff]
    %v6125 = vld [vmem:[%s10 + $0x260] sm:$0xff]
    %v6126 = vld [vmem:[%s10 + $0x268] sm:$0xff]
    %v6127 = vld [vmem:[%s10 + $0x270] sm:$0xff]
    %v6128 = vld [vmem:[%s10 + $0x278] sm:$0xff]
    %v6129 = vld [vmem:[%s10 + $0x280] sm:$0xff]
    %v6130 = vld [vmem:[%s10 + $0x288] sm:$0xff]
    %v6131 = vld [vmem:[%s10 + $0x290] sm:$0xff]
    %v6132 = vld [vmem:[%s10 + $0x298] sm:$0xff]
    %v6133 = vld [vmem:[%s10 + $0x2a0] sm:$0xff]
    %v6134 = vld [vmem:[%s10 + $0x2a8] sm:$0xff]
    %v6135 = vld [vmem:[%s10 + $0x2b0] sm:$0xff]
    %v6136 = vld [vmem:[%s10 + $0x2b8] sm:$0xff]
    %v6137 = vld [vmem:[%s10 + $0x2c0] sm:$0xff]
    %v6138 = vld [vmem:[%s10 + $0x2c8] sm:$0xff]
    %v6139 = vld [vmem:[%s10 + $0x2d0] sm:$0xff]
    %v6140 = vld [vmem:[%s10 + $0x2d8] sm:$0xff]
    %v6141 = vld [vmem:[%s10 + $0x2e0] sm:$0xff]
    %v6142 = vld [vmem:[%s10 + $0x2e8] sm:$0xff]
    %v6143 = vld [vmem:[%s10 + $0x2f0] sm:$0xff]
    %v6144 = vld [vmem:[%s10 + $0x2f8] sm:$0xff]
    %v6145 = vld [vmem:[%s10 + $0x300] sm:$0xff]
    %v6146 = vld [vmem:[%s10 + $0x308] sm:$0xff]
    %v6147 = vld [vmem:[%s10 + $0x310] sm:$0xff]
    %v6148 = vld [vmem:[%s10 + $0x318] sm:$0xff]
    %v6149 = vld [vmem:[%s10 + $0x320] sm:$0xff]
    %v6150 = vld [vmem:[%s10 + $0x328] sm:$0xff]
    %v6151 = vld [vmem:[%s10 + $0x330] sm:$0xff]
    %v6152 = vld [vmem:[%s10 + $0x338] sm:$0xff]
    %v6153 = vld [vmem:[%s10 + $0x340] sm:$0xff]
    %v6154 = vld [vmem:[%s10 + $0x348] sm:$0xff]
    %v6155 = vld [vmem:[%s10 + $0x350] sm:$0xff]
    %v6156 = vld [vmem:[%s10 + $0x358] sm:$0xff]
    %v6157 = vld [vmem:[%s10 + $0x360] sm:$0xff]
    %v6158 = vld [vmem:[%s10 + $0x368] sm:$0xff]
    %v6159 = vld [vmem:[%s10 + $0x370] sm:$0xff]
    %v6160 = vld [vmem:[%s10 + $0x378] sm:$0xff]
    %v6161 = vld [vmem:[%s10 + $0x380] sm:$0xff]
    %v6162 = vld [vmem:[%s10 + $0x388] sm:$0xff]
    %v6163 = vld [vmem:[%s10 + $0x390] sm:$0xff]
    %v6164 = vld [vmem:[%s10 + $0x398] sm:$0xff]
    %v6165 = vld [vmem:[%s10 + $0x3a0] sm:$0xff]
    %v6166 = vld [vmem:[%s10 + $0x3a8] sm:$0xff]
    %v6167 = vld [vmem:[%s10 + $0x3b0] sm:$0xff]
    %v6168 = vld [vmem:[%s10 + $0x3b8] sm:$0xff]
    %v6169 = vld [vmem:[%s10 + $0x3c0] sm:$0xff]
    %v6170 = vld [vmem:[%s10 + $0x3c8] sm:$0xff]
    %v6171 = vld [vmem:[%s10 + $0x3d0] sm:$0xff]
    %v6172 = vld [vmem:[%s10 + $0x3d8] sm:$0xff]
    %v6173 = vld [vmem:[%s10 + $0x3e0] sm:$0xff]
    %v6174 = vld [vmem:[%s10 + $0x3e8] sm:$0xff]
    %v6175 = vld [vmem:[%s10 + $0x3f0] sm:$0xff]
    %v6176 = vld [vmem:[%s10 + $0x3f8] sm:$0xff]
    %v6177 = vld [vmem:[%s10 + $0x400] sm:$0xff]
    %v6178 = vld [vmem:[%s10 + $0x408] sm:$0xff]
    %v6179 = vld [vmem:[%s10 + $0x410] sm:$0xff]
    %v6180 = vld [vmem:[%s10 + $0x418] sm:$0xff]
    %v6181 = vld [vmem:[%s10 + $0x420] sm:$0xff]
    %v6182 = vld [vmem:[%s10 + $0x428] sm:$0xff]
    %v6183 = vld [vmem:[%s10 + $0x430] sm:$0xff]
    %v6184 = vld [vmem:[%s10 + $0x438] sm:$0xff]
    %v6185 = vld [vmem:[%s10 + $0x440] sm:$0xff]
    %v6186 = vld [vmem:[%s10 + $0x448] sm:$0xff]
    %v6187 = vld [vmem:[%s10 + $0x450] sm:$0xff]
    %v6188 = vld [vmem:[%s10 + $0x458] sm:$0xff]
    %v6189 = vld [vmem:[%s10 + $0x460] sm:$0xff]
    %v6190 = vld [vmem:[%s10 + $0x468] sm:$0xff]
    %v6191 = vld [vmem:[%s10 + $0x470] sm:$0xff]
    %v6192 = vld [vmem:[%s10 + $0x478] sm:$0xff]
    %v6337 = vunpack.c.l.b16 %v6049
    %v6338 = vunpack.c.h.b16 %v6049
    %v6339 = vunpack.c.l.b16 %v6050
    %v6340 = vunpack.c.h.b16 %v6050
    %v6341 = vunpack.c.l.b16 %v6051
    %v6342 = vunpack.c.h.b16 %v6051
    %v6343 = vunpack.c.l.b16 %v6052
    %v6344 = vunpack.c.h.b16 %v6052
    %v6345 = vunpack.c.l.b16 %v6053
    %v6346 = vunpack.c.h.b16 %v6053
    %v6347 = vunpack.c.l.b16 %v6054
    %v6348 = vunpack.c.h.b16 %v6054
    %v6349 = vunpack.c.l.b16 %v6055
    %v6350 = vunpack.c.h.b16 %v6055
    %v6351 = vunpack.c.l.b16 %v6056
    %v6352 = vunpack.c.h.b16 %v6056
    %v6353 = vunpack.c.l.b16 %v6057
    %v6354 = vunpack.c.h.b16 %v6057
    %v6355 = vunpack.c.l.b16 %v6058
    %v6356 = vunpack.c.h.b16 %v6058
    %v6357 = vunpack.c.l.b16 %v6059
    %v6358 = vunpack.c.h.b16 %v6059
    %v6359 = vunpack.c.l.b16 %v6060
    %v6360 = vunpack.c.h.b16 %v6060
    %v6361 = vunpack.c.l.b16 %v6061
    %v6362 = vunpack.c.h.b16 %v6061
    %v6363 = vunpack.c.l.b16 %v6062
    %v6364 = vunpack.c.h.b16 %v6062
    %v6365 = vunpack.c.l.b16 %v6063
    %v6366 = vunpack.c.h.b16 %v6063
    %v6367 = vunpack.c.l.b16 %v6064
    %v6368 = vunpack.c.h.b16 %v6064
    %v6369 = vunpack.c.l.b16 %v6065
    %v6370 = vunpack.c.h.b16 %v6065
    %v6371 = vunpack.c.l.b16 %v6066
    %v6372 = vunpack.c.h.b16 %v6066
    %v6373 = vunpack.c.l.b16 %v6067
    %v6374 = vunpack.c.h.b16 %v6067
    %v6375 = vunpack.c.l.b16 %v6068
    %v6376 = vunpack.c.h.b16 %v6068
    %v6377 = vunpack.c.l.b16 %v6069
    %v6378 = vunpack.c.h.b16 %v6069
    %v6379 = vunpack.c.l.b16 %v6070
    %v6380 = vunpack.c.h.b16 %v6070
    %v6381 = vunpack.c.l.b16 %v6071
    %v6382 = vunpack.c.h.b16 %v6071
    %v6383 = vunpack.c.l.b16 %v6072
    %v6384 = vunpack.c.h.b16 %v6072
    %v6385 = vunpack.c.l.b16 %v6073
    %v6386 = vunpack.c.h.b16 %v6073
    %v6387 = vunpack.c.l.b16 %v6074
    %v6388 = vunpack.c.h.b16 %v6074
    %v6389 = vunpack.c.l.b16 %v6075
    %v6390 = vunpack.c.h.b16 %v6075
    %v6391 = vunpack.c.l.b16 %v6076
    %v6392 = vunpack.c.h.b16 %v6076
    %v6393 = vunpack.c.l.b16 %v6077
    %v6394 = vunpack.c.h.b16 %v6077
    %v6395 = vunpack.c.l.b16 %v6078
    %v6396 = vunpack.c.h.b16 %v6078
    %v6397 = vunpack.c.l.b16 %v6079
    %v6398 = vunpack.c.h.b16 %v6079
    %v6399 = vunpack.c.l.b16 %v6080
    %v6400 = vunpack.c.h.b16 %v6080
    %v6401 = vunpack.c.l.b16 %v6081
    %v6402 = vunpack.c.h.b16 %v6081
    %v6403 = vunpack.c.l.b16 %v6082
    %v6404 = vunpack.c.h.b16 %v6082
    %v6405 = vunpack.c.l.b16 %v6083
    %v6406 = vunpack.c.h.b16 %v6083
    %v6407 = vunpack.c.l.b16 %v6084
    %v6408 = vunpack.c.h.b16 %v6084
    %v6409 = vunpack.c.l.b16 %v6085
    %v6410 = vunpack.c.h.b16 %v6085
    %v6411 = vunpack.c.l.b16 %v6086
    %v6412 = vunpack.c.h.b16 %v6086
    %v6413 = vunpack.c.l.b16 %v6087
    %v6414 = vunpack.c.h.b16 %v6087
    %v6415 = vunpack.c.l.b16 %v6088
    %v6416 = vunpack.c.h.b16 %v6088
    %v6417 = vunpack.c.l.b16 %v6089
    %v6418 = vunpack.c.h.b16 %v6089
    %v6419 = vunpack.c.l.b16 %v6090
    %v6420 = vunpack.c.h.b16 %v6090
    %v6421 = vunpack.c.l.b16 %v6091
    %v6422 = vunpack.c.h.b16 %v6091
    %v6423 = vunpack.c.l.b16 %v6092
    %v6424 = vunpack.c.h.b16 %v6092
    %v6425 = vunpack.c.l.b16 %v6093
    %v6426 = vunpack.c.h.b16 %v6093
    %v6427 = vunpack.c.l.b16 %v6094
    %v6428 = vunpack.c.h.b16 %v6094
    %v6429 = vunpack.c.l.b16 %v6095
    %v6430 = vunpack.c.h.b16 %v6095
    %v6431 = vunpack.c.l.b16 %v6096
    %v6432 = vunpack.c.h.b16 %v6096
    %v6433 = vunpack.c.l.b16 %v6097
    %v6434 = vunpack.c.h.b16 %v6097
    %v6435 = vunpack.c.l.b16 %v6098
    %v6436 = vunpack.c.h.b16 %v6098
    %v6437 = vunpack.c.l.b16 %v6099
    %v6438 = vunpack.c.h.b16 %v6099
    %v6439 = vunpack.c.l.b16 %v6100
    %v6440 = vunpack.c.h.b16 %v6100
    %v6441 = vunpack.c.l.b16 %v6101
    %v6442 = vunpack.c.h.b16 %v6101
    %v6443 = vunpack.c.l.b16 %v6102
    %v6444 = vunpack.c.h.b16 %v6102
    %v6445 = vunpack.c.l.b16 %v6103
    %v6446 = vunpack.c.h.b16 %v6103
    %v6447 = vunpack.c.l.b16 %v6104
    %v6448 = vunpack.c.h.b16 %v6104
    %v6449 = vunpack.c.l.b16 %v6105
    %v6450 = vunpack.c.h.b16 %v6105
    %v6451 = vunpack.c.l.b16 %v6106
    %v6452 = vunpack.c.h.b16 %v6106
    %v6453 = vunpack.c.l.b16 %v6107
    %v6454 = vunpack.c.h.b16 %v6107
    %v6455 = vunpack.c.l.b16 %v6108
    %v6456 = vunpack.c.h.b16 %v6108
    %v6457 = vunpack.c.l.b16 %v6109
    %v6458 = vunpack.c.h.b16 %v6109
    %v6459 = vunpack.c.l.b16 %v6110
    %v6460 = vunpack.c.h.b16 %v6110
    %v6461 = vunpack.c.l.b16 %v6111
    %v6462 = vunpack.c.h.b16 %v6111
    %v6463 = vunpack.c.l.b16 %v6112
    %v6464 = vunpack.c.h.b16 %v6112
    %v6465 = vunpack.c.l.b16 %v6113
    %v6466 = vunpack.c.h.b16 %v6113
    %v6467 = vunpack.c.l.b16 %v6114
    %v6468 = vunpack.c.h.b16 %v6114
    %v6469 = vunpack.c.l.b16 %v6115
    %v6470 = vunpack.c.h.b16 %v6115
    %v6471 = vunpack.c.l.b16 %v6116
    %v6472 = vunpack.c.h.b16 %v6116
    %v6473 = vunpack.c.l.b16 %v6117
    %v6474 = vunpack.c.h.b16 %v6117
    %v6475 = vunpack.c.l.b16 %v6118
    %v6476 = vunpack.c.h.b16 %v6118
    %v6477 = vunpack.c.l.b16 %v6119
    %v6478 = vunpack.c.h.b16 %v6119
    %v6479 = vunpack.c.l.b16 %v6120
    %v6480 = vunpack.c.h.b16 %v6120
    %v6481 = vunpack.c.l.b16 %v6121
    %v6482 = vunpack.c.h.b16 %v6121
    %v6483 = vunpack.c.l.b16 %v6122
    %v6484 = vunpack.c.h.b16 %v6122
    %v6485 = vunpack.c.l.b16 %v6123
    %v6486 = vunpack.c.h.b16 %v6123
    %v6487 = vunpack.c.l.b16 %v6124
    %v6488 = vunpack.c.h.b16 %v6124
    %v6489 = vunpack.c.l.b16 %v6125
    %v6490 = vunpack.c.h.b16 %v6125
    %v6491 = vunpack.c.l.b16 %v6126
    %v6492 = vunpack.c.h.b16 %v6126
    %v6493 = vunpack.c.l.b16 %v6127
    %v6494 = vunpack.c.h.b16 %v6127
    %v6495 = vunpack.c.l.b16 %v6128
    %v6496 = vunpack.c.h.b16 %v6128
    %v6497 = vunpack.c.l.b16 %v6129
    %v6498 = vunpack.c.h.b16 %v6129
    %v6499 = vunpack.c.l.b16 %v6130
    %v6500 = vunpack.c.h.b16 %v6130
    %v6501 = vunpack.c.l.b16 %v6131
    %v6502 = vunpack.c.h.b16 %v6131
    %v6503 = vunpack.c.l.b16 %v6132
    %v6504 = vunpack.c.h.b16 %v6132
    %v6505 = vunpack.c.l.b16 %v6133
    %v6506 = vunpack.c.h.b16 %v6133
    %v6507 = vunpack.c.l.b16 %v6134
    %v6508 = vunpack.c.h.b16 %v6134
    %v6509 = vunpack.c.l.b16 %v6135
    %v6510 = vunpack.c.h.b16 %v6135
    %v6511 = vunpack.c.l.b16 %v6136
    %v6512 = vunpack.c.h.b16 %v6136
    %v6513 = vunpack.c.l.b16 %v6137
    %v6514 = vunpack.c.h.b16 %v6137
    %v6515 = vunpack.c.l.b16 %v6138
    %v6516 = vunpack.c.h.b16 %v6138
    %v6517 = vunpack.c.l.b16 %v6139
    %v6518 = vunpack.c.h.b16 %v6139
    %v6519 = vunpack.c.l.b16 %v6140
    %v6520 = vunpack.c.h.b16 %v6140
    %v6521 = vunpack.c.l.b16 %v6141
    %v6522 = vunpack.c.h.b16 %v6141
    %v6523 = vunpack.c.l.b16 %v6142
    %v6524 = vunpack.c.h.b16 %v6142
    %v6525 = vunpack.c.l.b16 %v6143
    %v6526 = vunpack.c.h.b16 %v6143
    %v6527 = vunpack.c.l.b16 %v6144
    %v6528 = vunpack.c.h.b16 %v6144
    %v6529 = vunpack.c.l.b16 %v6145
    %v6530 = vunpack.c.h.b16 %v6145
    %v6531 = vunpack.c.l.b16 %v6146
    %v6532 = vunpack.c.h.b16 %v6146
    %v6533 = vunpack.c.l.b16 %v6147
    %v6534 = vunpack.c.h.b16 %v6147
    %v6535 = vunpack.c.l.b16 %v6148
    %v6536 = vunpack.c.h.b16 %v6148
    %v6537 = vunpack.c.l.b16 %v6149
    %v6538 = vunpack.c.h.b16 %v6149
    %v6539 = vunpack.c.l.b16 %v6150
    %v6540 = vunpack.c.h.b16 %v6150
    %v6541 = vunpack.c.l.b16 %v6151
    %v6542 = vunpack.c.h.b16 %v6151
    %v6543 = vunpack.c.l.b16 %v6152
    %v6544 = vunpack.c.h.b16 %v6152
    %v6545 = vunpack.c.l.b16 %v6153
    %v6546 = vunpack.c.h.b16 %v6153
    %v6547 = vunpack.c.l.b16 %v6154
    %v6548 = vunpack.c.h.b16 %v6154
    %v6549 = vunpack.c.l.b16 %v6155
    %v6550 = vunpack.c.h.b16 %v6155
    %v6551 = vunpack.c.l.b16 %v6156
    %v6552 = vunpack.c.h.b16 %v6156
    %v6553 = vunpack.c.l.b16 %v6157
    %v6554 = vunpack.c.h.b16 %v6157
    %v6555 = vunpack.c.l.b16 %v6158
    %v6556 = vunpack.c.h.b16 %v6158
    %v6557 = vunpack.c.l.b16 %v6159
    %v6558 = vunpack.c.h.b16 %v6159
    %v6559 = vunpack.c.l.b16 %v6160
    %v6560 = vunpack.c.h.b16 %v6160
    %v6561 = vunpack.c.l.b16 %v6161
    %v6562 = vunpack.c.h.b16 %v6161
    %v6563 = vunpack.c.l.b16 %v6162
    %v6564 = vunpack.c.h.b16 %v6162
    %v6565 = vunpack.c.l.b16 %v6163
    %v6566 = vunpack.c.h.b16 %v6163
    %v6567 = vunpack.c.l.b16 %v6164
    %v6568 = vunpack.c.h.b16 %v6164
    %v6569 = vunpack.c.l.b16 %v6165
    %v6570 = vunpack.c.h.b16 %v6165
    %v6571 = vunpack.c.l.b16 %v6166
    %v6572 = vunpack.c.h.b16 %v6166
    %v6573 = vunpack.c.l.b16 %v6167
    %v6574 = vunpack.c.h.b16 %v6167
    %v6575 = vunpack.c.l.b16 %v6168
    %v6576 = vunpack.c.h.b16 %v6168
    %v6577 = vunpack.c.l.b16 %v6169
    %v6578 = vunpack.c.h.b16 %v6169
    %v6579 = vunpack.c.l.b16 %v6170
    %v6580 = vunpack.c.h.b16 %v6170
    %v6581 = vunpack.c.l.b16 %v6171
    %v6582 = vunpack.c.h.b16 %v6171
    %v6583 = vunpack.c.l.b16 %v6172
    %v6584 = vunpack.c.h.b16 %v6172
    %v6585 = vunpack.c.l.b16 %v6173
    %v6586 = vunpack.c.h.b16 %v6173
    %v6587 = vunpack.c.l.b16 %v6174
    %v6588 = vunpack.c.h.b16 %v6174
    %v6589 = vunpack.c.l.b16 %v6175
    %v6590 = vunpack.c.h.b16 %v6175
    %v6591 = vunpack.c.l.b16 %v6176
    %v6592 = vunpack.c.h.b16 %v6176
    %v6593 = vunpack.c.l.b16 %v6177
    %v6594 = vunpack.c.h.b16 %v6177
    %v6595 = vunpack.c.l.b16 %v6178
    %v6596 = vunpack.c.h.b16 %v6178
    %v6597 = vunpack.c.l.b16 %v6179
    %v6598 = vunpack.c.h.b16 %v6179
    %v6599 = vunpack.c.l.b16 %v6180
    %v6600 = vunpack.c.h.b16 %v6180
    %v6601 = vunpack.c.l.b16 %v6181
    %v6602 = vunpack.c.h.b16 %v6181
    %v6603 = vunpack.c.l.b16 %v6182
    %v6604 = vunpack.c.h.b16 %v6182
    %v6605 = vunpack.c.l.b16 %v6183
    %v6606 = vunpack.c.h.b16 %v6183
    %v6607 = vunpack.c.l.b16 %v6184
    %v6608 = vunpack.c.h.b16 %v6184
    %v6609 = vunpack.c.l.b16 %v6185
    %v6610 = vunpack.c.h.b16 %v6185
    %v6611 = vunpack.c.l.b16 %v6186
    %v6612 = vunpack.c.h.b16 %v6186
    %v6613 = vunpack.c.l.b16 %v6187
    %v6614 = vunpack.c.h.b16 %v6187
    %v6615 = vunpack.c.l.b16 %v6188
    %v6616 = vunpack.c.h.b16 %v6188
    %v6617 = vunpack.c.l.b16 %v6189
    %v6618 = vunpack.c.h.b16 %v6189
    %v6619 = vunpack.c.l.b16 %v6190
    %v6620 = vunpack.c.h.b16 %v6190
    %v6621 = vunpack.c.l.b16 %v6191
    %v6622 = vunpack.c.h.b16 %v6191
    %v6623 = vunpack.c.l.b16 %v6192
    %v6624 = vunpack.c.h.b16 %v6192
    %v6625 = vpack.c.b16 %v6339, %v6337
    %v6626 = vpack.c.b16 %v6340, %v6338
    %v6627 = vpack.c.b16 %v6343, %v6341
    %v6628 = vpack.c.b16 %v6344, %v6342
    %v6629 = vpack.c.b16 %v6347, %v6345
    %v6630 = vpack.c.b16 %v6348, %v6346
    %v6631 = vpack.c.b16 %v6351, %v6349
    %v6632 = vpack.c.b16 %v6352, %v6350
    %v6633 = vpack.c.b16 %v6355, %v6353
    %v6634 = vpack.c.b16 %v6356, %v6354
    %v6635 = vpack.c.b16 %v6359, %v6357
    %v6636 = vpack.c.b16 %v6360, %v6358
    %v6637 = vpack.c.b16 %v6363, %v6361
    %v6638 = vpack.c.b16 %v6364, %v6362
    %v6639 = vpack.c.b16 %v6367, %v6365
    %v6640 = vpack.c.b16 %v6368, %v6366
    %v6641 = vpack.c.b16 %v6371, %v6369
    %v6642 = vpack.c.b16 %v6372, %v6370
    %v6643 = vpack.c.b16 %v6375, %v6373
    %v6644 = vpack.c.b16 %v6376, %v6374
    %v6645 = vpack.c.b16 %v6379, %v6377
    %v6646 = vpack.c.b16 %v6380, %v6378
    %v6647 = vpack.c.b16 %v6383, %v6381
    %v6648 = vpack.c.b16 %v6384, %v6382
    %v6649 = vpack.c.b16 %v6387, %v6385
    %v6650 = vpack.c.b16 %v6388, %v6386
    %v6651 = vpack.c.b16 %v6391, %v6389
    %v6652 = vpack.c.b16 %v6392, %v6390
    %v6653 = vpack.c.b16 %v6395, %v6393
    %v6654 = vpack.c.b16 %v6396, %v6394
    %v6655 = vpack.c.b16 %v6399, %v6397
    %v6656 = vpack.c.b16 %v6400, %v6398
    %v6657 = vpack.c.b16 %v6403, %v6401
    %v6658 = vpack.c.b16 %v6404, %v6402
    %v6659 = vpack.c.b16 %v6407, %v6405
    %v6660 = vpack.c.b16 %v6408, %v6406
    %v6661 = vpack.c.b16 %v6411, %v6409
    %v6662 = vpack.c.b16 %v6412, %v6410
    %v6663 = vpack.c.b16 %v6415, %v6413
    %v6664 = vpack.c.b16 %v6416, %v6414
    %v6665 = vpack.c.b16 %v6419, %v6417
    %v6666 = vpack.c.b16 %v6420, %v6418
    %v6667 = vpack.c.b16 %v6423, %v6421
    %v6668 = vpack.c.b16 %v6424, %v6422
    %v6669 = vpack.c.b16 %v6427, %v6425
    %v6670 = vpack.c.b16 %v6428, %v6426
    %v6671 = vpack.c.b16 %v6431, %v6429
    %v6672 = vpack.c.b16 %v6432, %v6430
    %v6673 = vpack.c.b16 %v6435, %v6433
    %v6674 = vpack.c.b16 %v6436, %v6434
    %v6675 = vpack.c.b16 %v6439, %v6437
    %v6676 = vpack.c.b16 %v6440, %v6438
    %v6677 = vpack.c.b16 %v6443, %v6441
    %v6678 = vpack.c.b16 %v6444, %v6442
    %v6679 = vpack.c.b16 %v6447, %v6445
    %v6680 = vpack.c.b16 %v6448, %v6446
    %v6681 = vpack.c.b16 %v6451, %v6449
    %v6682 = vpack.c.b16 %v6452, %v6450
    %v6683 = vpack.c.b16 %v6455, %v6453
    %v6684 = vpack.c.b16 %v6456, %v6454
    %v6685 = vpack.c.b16 %v6459, %v6457
    %v6686 = vpack.c.b16 %v6460, %v6458
    %v6687 = vpack.c.b16 %v6463, %v6461
    %v6688 = vpack.c.b16 %v6464, %v6462
    %v6689 = vpack.c.b16 %v6467, %v6465
    %v6690 = vpack.c.b16 %v6468, %v6466
    %v6691 = vpack.c.b16 %v6471, %v6469
    %v6692 = vpack.c.b16 %v6472, %v6470
    %v6693 = vpack.c.b16 %v6475, %v6473
    %v6694 = vpack.c.b16 %v6476, %v6474
    %v6695 = vpack.c.b16 %v6479, %v6477
    %v6696 = vpack.c.b16 %v6480, %v6478
    %v6697 = vpack.c.b16 %v6483, %v6481
    %v6698 = vpack.c.b16 %v6484, %v6482
    %v6699 = vpack.c.b16 %v6487, %v6485
    %v6700 = vpack.c.b16 %v6488, %v6486
    %v6701 = vpack.c.b16 %v6491, %v6489
    %v6702 = vpack.c.b16 %v6492, %v6490
    %v6703 = vpack.c.b16 %v6495, %v6493
    %v6704 = vpack.c.b16 %v6496, %v6494
    %v6705 = vpack.c.b16 %v6499, %v6497
    %v6706 = vpack.c.b16 %v6500, %v6498
    %v6707 = vpack.c.b16 %v6503, %v6501
    %v6708 = vpack.c.b16 %v6504, %v6502
    %v6709 = vpack.c.b16 %v6507, %v6505
    %v6710 = vpack.c.b16 %v6508, %v6506
    %v6711 = vpack.c.b16 %v6511, %v6509
    %v6712 = vpack.c.b16 %v6512, %v6510
    %v6713 = vpack.c.b16 %v6515, %v6513
    %v6714 = vpack.c.b16 %v6516, %v6514
    %v6715 = vpack.c.b16 %v6519, %v6517
    %v6716 = vpack.c.b16 %v6520, %v6518
    %v6717 = vpack.c.b16 %v6523, %v6521
    %v6718 = vpack.c.b16 %v6524, %v6522
    %v6719 = vpack.c.b16 %v6527, %v6525
    %v6720 = vpack.c.b16 %v6528, %v6526
    %v6721 = vpack.c.b16 %v6531, %v6529
    %v6722 = vpack.c.b16 %v6532, %v6530
    %v6723 = vpack.c.b16 %v6535, %v6533
    %v6724 = vpack.c.b16 %v6536, %v6534
    %v6725 = vpack.c.b16 %v6539, %v6537
    %v6726 = vpack.c.b16 %v6540, %v6538
    %v6727 = vpack.c.b16 %v6543, %v6541
    %v6728 = vpack.c.b16 %v6544, %v6542
    %v6729 = vpack.c.b16 %v6547, %v6545
    %v6730 = vpack.c.b16 %v6548, %v6546
    %v6731 = vpack.c.b16 %v6551, %v6549
    %v6732 = vpack.c.b16 %v6552, %v6550
    %v6733 = vpack.c.b16 %v6555, %v6553
    %v6734 = vpack.c.b16 %v6556, %v6554
    %v6735 = vpack.c.b16 %v6559, %v6557
    %v6736 = vpack.c.b16 %v6560, %v6558
    %v6737 = vpack.c.b16 %v6563, %v6561
    %v6738 = vpack.c.b16 %v6564, %v6562
    %v6739 = vpack.c.b16 %v6567, %v6565
    %v6740 = vpack.c.b16 %v6568, %v6566
    %v6741 = vpack.c.b16 %v6571, %v6569
    %v6742 = vpack.c.b16 %v6572, %v6570
    %v6743 = vpack.c.b16 %v6575, %v6573
    %v6744 = vpack.c.b16 %v6576, %v6574
    %v6745 = vpack.c.b16 %v6579, %v6577
    %v6746 = vpack.c.b16 %v6580, %v6578
    %v6747 = vpack.c.b16 %v6583, %v6581
    %v6748 = vpack.c.b16 %v6584, %v6582
    %v6749 = vpack.c.b16 %v6587, %v6585
    %v6750 = vpack.c.b16 %v6588, %v6586
    %v6751 = vpack.c.b16 %v6591, %v6589
    %v6752 = vpack.c.b16 %v6592, %v6590
    %v6753 = vpack.c.b16 %v6595, %v6593
    %v6754 = vpack.c.b16 %v6596, %v6594
    %v6755 = vpack.c.b16 %v6599, %v6597
    %v6756 = vpack.c.b16 %v6600, %v6598
    %v6757 = vpack.c.b16 %v6603, %v6601
    %v6758 = vpack.c.b16 %v6604, %v6602
    %v6759 = vpack.c.b16 %v6607, %v6605
    %v6760 = vpack.c.b16 %v6608, %v6606
    %v6761 = vpack.c.b16 %v6611, %v6609
    %v6762 = vpack.c.b16 %v6612, %v6610
    %v6763 = vpack.c.b16 %v6615, %v6613
    %v6764 = vpack.c.b16 %v6616, %v6614
    %v6765 = vpack.c.b16 %v6619, %v6617
    %v6766 = vpack.c.b16 %v6620, %v6618
    %v6767 = vpack.c.b16 %v6623, %v6621
    %v6768 = vpack.c.b16 %v6624, %v6622
    %6913 = vmatpush.bf16.msra.mxu0 %v6639
    %6914 = vmatpush.bf16.msra.mxu0 %v6637
    %6915 = vmatpush.bf16.msra.mxu0 %v6635
    %6916 = vmatpush.bf16.msra.mxu0 %v6633
    %6917 = vmatpush.bf16.msra.mxu0 %v6631
    %6918 = vmatpush.bf16.msra.mxu0 %v6629
    %6919 = vmatpush.bf16.msra.mxu0 %v6627
    %6920 = vmatpush.bf16.msra.mxu0 %v6625
    %6921 = vmatmul.bf16.gmra.mxu0 %v5938
    %v6922 = vpop.f32.mrf.mxu0
    %v6923 = vadd.f32 0.0, %v6922
    %v6924 = vpop.f32.mrf.mxu0
    %v6925 = vadd.f32 0.0, %v6924
    %6926 = vmatmul.bf16.gmra.mxu0 %v5939
    %v6927 = vpop.f32.mrf.mxu0
    %v6928 = vadd.f32 0.0, %v6927
    %v6929 = vpop.f32.mrf.mxu0
    %6930 = vdwg.mxu0
    %6931 = vmatpush.bf16.msra.mxu0 %v6655
    %6932 = vmatpush.bf16.msra.mxu0 %v6653
    %6933 = vmatpush.bf16.msra.mxu0 %v6651
    %6934 = vmatpush.bf16.msra.mxu0 %v6649
    %6935 = vmatpush.bf16.msra.mxu0 %v6647
    %6936 = vmatpush.bf16.msra.mxu0 %v6645
    %6937 = vmatpush.bf16.msra.mxu0 %v6643
    %6938 = vmatpush.bf16.msra.mxu0 %v6641
    %6939 = vmatmul.bf16.gmra.mxu0 %v5956
    %v6940 = vpop.f32.mrf.mxu0
    %v6941 = vadd.f32 %v6923, %v6940
    %v6942 = vpop.f32.mrf.mxu0
    %v6943 = vadd.f32 %v6925, %v6942
    %6944 = vmatmul.bf16.gmra.mxu0 %v5959
    %v6945 = vpop.f32.mrf.mxu0
    %v6946 = vadd.f32 %v6928, %v6945
    %v6947 = vpop.f32.mrf.mxu0
    %6948 = vdwg.mxu0
    %6949 = vmatpush.bf16.msra.mxu0 %v6671
    %6950 = vmatpush.bf16.msra.mxu0 %v6669
    %6951 = vmatpush.bf16.msra.mxu0 %v6667
    %6952 = vmatpush.bf16.msra.mxu0 %v6665
    %6953 = vmatpush.bf16.msra.mxu0 %v6663
    %6954 = vmatpush.bf16.msra.mxu0 %v6661
    %6955 = vmatpush.bf16.msra.mxu0 %v6659
    %6956 = vmatpush.bf16.msra.mxu0 %v6657
    %6957 = vmatmul.bf16.gmra.mxu0 %v5967
    %v6958 = vpop.f32.mrf.mxu0
    %v6959 = vadd.f32 %v6941, %v6958
    %v6960 = vpop.f32.mrf.mxu0
    %v6961 = vadd.f32 %v6943, %v6960
    %6962 = vmatmul.bf16.gmra.mxu0 %v5966
    %v6963 = vpop.f32.mrf.mxu0
    %v6964 = vadd.f32 %v6946, %v6963
    %v6965 = vpop.f32.mrf.mxu0
    %6966 = vdwg.mxu0
    %6967 = vmatpush.bf16.msra.mxu0 %v6687
    %6968 = vmatpush.bf16.msra.mxu0 %v6685
    %6969 = vmatpush.bf16.msra.mxu0 %v6683
    %6970 = vmatpush.bf16.msra.mxu0 %v6681
    %6971 = vmatpush.bf16.msra.mxu0 %v6679
    %6972 = vmatpush.bf16.msra.mxu0 %v6677
    %6973 = vmatpush.bf16.msra.mxu0 %v6675
    %6974 = vmatpush.bf16.msra.mxu0 %v6673
    %6975 = vmatmul.bf16.gmra.mxu0 %v5982
    %v6976 = vpop.f32.mrf.mxu0
    %v6977 = vadd.f32 %v6959, %v6976
    %v6978 = vpop.f32.mrf.mxu0
    %v6979 = vadd.f32 %v6961, %v6978
    %6980 = vmatmul.bf16.gmra.mxu0 %v5981
    %v6981 = vpop.f32.mrf.mxu0
    %v6982 = vadd.f32 %v6964, %v6981
    %v6983 = vpop.f32.mrf.mxu0
    %6984 = vdwg.mxu0
    %6985 = vmatpush.bf16.msra.mxu0 %v6703
    %6986 = vmatpush.bf16.msra.mxu0 %v6701
    %6987 = vmatpush.bf16.msra.mxu0 %v6699
    %6988 = vmatpush.bf16.msra.mxu0 %v6697
    %6989 = vmatpush.bf16.msra.mxu0 %v6695
    %6990 = vmatpush.bf16.msra.mxu0 %v6693
    %6991 = vmatpush.bf16.msra.mxu0 %v6691
    %6992 = vmatpush.bf16.msra.mxu0 %v6689
    %6993 = vmatmul.bf16.gmra.mxu0 %v6004
    %v6994 = vpop.f32.mrf.mxu0
    %v6995 = vadd.f32 %v6977, %v6994
    %v6996 = vpop.f32.mrf.mxu0
    %v6997 = vadd.f32 %v6979, %v6996
    %6998 = vmatmul.bf16.gmra.mxu0 %v6003
    %v6999 = vpop.f32.mrf.mxu0
    %v7000 = vadd.f32 %v6982, %v6999
    %v7001 = vpop.f32.mrf.mxu0
    %7002 = vdwg.mxu0
    %7003 = vmatpush.bf16.msra.mxu0 %v6719
    %7004 = vmatpush.bf16.msra.mxu0 %v6717
    %7005 = vmatpush.bf16.msra.mxu0 %v6715
    %7006 = vmatpush.bf16.msra.mxu0 %v6713
    %7007 = vmatpush.bf16.msra.mxu0 %v6711
    %7008 = vmatpush.bf16.msra.mxu0 %v6709
    %7009 = vmatpush.bf16.msra.mxu0 %v6707
    %7010 = vmatpush.bf16.msra.mxu0 %v6705
    %7011 = vmatmul.bf16.gmra.mxu0 %v6012
    %v7012 = vpop.f32.mrf.mxu0
    %v7013 = vadd.f32 %v6995, %v7012
    %v7014 = vpop.f32.mrf.mxu0
    %v7015 = vadd.f32 %v6997, %v7014
    %7016 = vmatmul.bf16.gmra.mxu0 %v6011
    %v7017 = vpop.f32.mrf.mxu0
    %v7018 = vadd.f32 %v7000, %v7017
    %v7019 = vpop.f32.mrf.mxu0
    %7020 = vdwg.mxu0
    %7021 = vmatpush.bf16.msra.mxu0 %v6735
    %7022 = vmatpush.bf16.msra.mxu0 %v6733
    %7023 = vmatpush.bf16.msra.mxu0 %v6731
    %7024 = vmatpush.bf16.msra.mxu0 %v6729
    %7025 = vmatpush.bf16.msra.mxu0 %v6727
    %7026 = vmatpush.bf16.msra.mxu0 %v6725
    %7027 = vmatpush.bf16.msra.mxu0 %v6723
    %7028 = vmatpush.bf16.msra.mxu0 %v6721
    %7029 = vmatmul.bf16.gmra.mxu0 %v6017
    %v7030 = vpop.f32.mrf.mxu0
    %v7031 = vadd.f32 %v7013, %v7030
    %v7032 = vpop.f32.mrf.mxu0
    %v7033 = vadd.f32 %v7015, %v7032
    %7034 = vmatmul.bf16.gmra.mxu0 %v6018
    %v7035 = vpop.f32.mrf.mxu0
    %v7036 = vadd.f32 %v7018, %v7035
    %v7037 = vpop.f32.mrf.mxu0
    %7038 = vdwg.mxu0
    %7039 = vmatpush.bf16.msra.mxu0 %v6751
    %7040 = vmatpush.bf16.msra.mxu0 %v6749
    %7041 = vmatpush.bf16.msra.mxu0 %v6747
    %7042 = vmatpush.bf16.msra.mxu0 %v6745
    %7043 = vmatpush.bf16.msra.mxu0 %v6743
    %7044 = vmatpush.bf16.msra.mxu0 %v6741
    %7045 = vmatpush.bf16.msra.mxu0 %v6739
    %7046 = vmatpush.bf16.msra.mxu0 %v6737
    %7047 = vmatmul.bf16.gmra.mxu0 %v6035
    %v7048 = vpop.f32.mrf.mxu0
    %v7049 = vadd.f32 %v7031, %v7048
    %v7050 = vpop.f32.mrf.mxu0
    %v7051 = vadd.f32 %v7033, %v7050
    %7052 = vmatmul.bf16.gmra.mxu0 %v6038
    %v7053 = vpop.f32.mrf.mxu0
    %v7054 = vadd.f32 %v7036, %v7053
    %v7055 = vpop.f32.mrf.mxu0
    %7056 = vdwg.mxu0
    %7057 = vmatpush.bf16.msra.mxu0 %v6767
    %7058 = vmatpush.bf16.msra.mxu0 %v6765
    %7059 = vmatpush.bf16.msra.mxu0 %v6763
    %7060 = vmatpush.bf16.msra.mxu0 %v6761
    %7061 = vmatpush.bf16.msra.mxu0 %v6759
    %7062 = vmatpush.bf16.msra.mxu0 %v6757
    %7063 = vmatpush.bf16.msra.mxu0 %v6755
    %7064 = vmatpush.bf16.msra.mxu0 %v6753
    %7065 = vmatmul.bf16.gmra.mxu0 %v6046
    %v7066 = vpop.f32.mrf.mxu0
    %v7067 = vadd.f32 %v7049, %v7066
    %v7068 = vpop.f32.mrf.mxu0
    %v7069 = vadd.f32 %v7051, %v7068
    %7070 = vmatmul.bf16.gmra.mxu0 %v6045
    %v7071 = vpop.f32.mrf.mxu0
    %v7072 = vadd.f32 %v7054, %v7071
    %v7073 = vpop.f32.mrf.mxu0
    %7074 = vdwg.mxu0
    %7075 = vmatpush.bf16.msra.mxu0 %v6640
    %7076 = vmatpush.bf16.msra.mxu0 %v6638
    %7077 = vmatpush.bf16.msra.mxu0 %v6636
    %7078 = vmatpush.bf16.msra.mxu0 %v6634
    %7079 = vmatpush.bf16.msra.mxu0 %v6632
    %7080 = vmatpush.bf16.msra.mxu0 %v6630
    %7081 = vmatpush.bf16.msra.mxu0 %v6628
    %7082 = vmatpush.bf16.msra.mxu0 %v6626
    %7083 = vmatmul.bf16.gmra.mxu0 %v5938
    %v7084 = vpop.f32.mrf.mxu0
    %v7085 = vadd.f32 0.0, %v7084
    %v7086 = vpop.f32.mrf.mxu0
    %v7087 = vadd.f32 0.0, %v7086
    %7088 = vmatmul.bf16.gmra.mxu0 %v5939
    %v7089 = vpop.f32.mrf.mxu0
    %v7090 = vadd.f32 0.0, %v7089
    %v7091 = vpop.f32.mrf.mxu0
    %7092 = vdwg.mxu0
    %7093 = vmatpush.bf16.msra.mxu0 %v6656
    %7094 = vmatpush.bf16.msra.mxu0 %v6654
    %7095 = vmatpush.bf16.msra.mxu0 %v6652
    %7096 = vmatpush.bf16.msra.mxu0 %v6650
    %7097 = vmatpush.bf16.msra.mxu0 %v6648
    %7098 = vmatpush.bf16.msra.mxu0 %v6646
    %7099 = vmatpush.bf16.msra.mxu0 %v6644
    %7100 = vmatpush.bf16.msra.mxu0 %v6642
    %7101 = vmatmul.bf16.gmra.mxu0 %v5956
    %v7102 = vpop.f32.mrf.mxu0
    %v7103 = vadd.f32 %v7085, %v7102
    %v7104 = vpop.f32.mrf.mxu0
    %v7105 = vadd.f32 %v7087, %v7104
    %7106 = vmatmul.bf16.gmra.mxu0 %v5959
    %v7107 = vpop.f32.mrf.mxu0
    %v7108 = vadd.f32 %v7090, %v7107
    %v7109 = vpop.f32.mrf.mxu0
    %7110 = vdwg.mxu0
    %7111 = vmatpush.bf16.msra.mxu0 %v6672
    %7112 = vmatpush.bf16.msra.mxu0 %v6670
    %7113 = vmatpush.bf16.msra.mxu0 %v6668
    %7114 = vmatpush.bf16.msra.mxu0 %v6666
    %7115 = vmatpush.bf16.msra.mxu0 %v6664
    %7116 = vmatpush.bf16.msra.mxu0 %v6662
    %7117 = vmatpush.bf16.msra.mxu0 %v6660
    %7118 = vmatpush.bf16.msra.mxu0 %v6658
    %7119 = vmatmul.bf16.gmra.mxu0 %v5967
    %v7120 = vpop.f32.mrf.mxu0
    %v7121 = vadd.f32 %v7103, %v7120
    %v7122 = vpop.f32.mrf.mxu0
    %v7123 = vadd.f32 %v7105, %v7122
    %7124 = vmatmul.bf16.gmra.mxu0 %v5966
    %v7125 = vpop.f32.mrf.mxu0
    %v7126 = vadd.f32 %v7108, %v7125
    %v7127 = vpop.f32.mrf.mxu0
    %7128 = vdwg.mxu0
    %7129 = vmatpush.bf16.msra.mxu0 %v6688
    %7130 = vmatpush.bf16.msra.mxu0 %v6686
    %7131 = vmatpush.bf16.msra.mxu0 %v6684
    %7132 = vmatpush.bf16.msra.mxu0 %v6682
    %7133 = vmatpush.bf16.msra.mxu0 %v6680
    %7134 = vmatpush.bf16.msra.mxu0 %v6678
    %7135 = vmatpush.bf16.msra.mxu0 %v6676
    %7136 = vmatpush.bf16.msra.mxu0 %v6674
    %7137 = vmatmul.bf16.gmra.mxu0 %v5982
    %v7138 = vpop.f32.mrf.mxu0
    %v7139 = vadd.f32 %v7121, %v7138
    %v7140 = vpop.f32.mrf.mxu0
    %v7141 = vadd.f32 %v7123, %v7140
    %7142 = vmatmul.bf16.gmra.mxu0 %v5981
    %v7143 = vpop.f32.mrf.mxu0
    %v7144 = vadd.f32 %v7126, %v7143
    %v7145 = vpop.f32.mrf.mxu0
    %7146 = vdwg.mxu0
    %7147 = vmatpush.bf16.msra.mxu0 %v6704
    %7148 = vmatpush.bf16.msra.mxu0 %v6702
    %7149 = vmatpush.bf16.msra.mxu0 %v6700
    %7150 = vmatpush.bf16.msra.mxu0 %v6698
    %7151 = vmatpush.bf16.msra.mxu0 %v6696
    %7152 = vmatpush.bf16.msra.mxu0 %v6694
    %7153 = vmatpush.bf16.msra.mxu0 %v6692
    %7154 = vmatpush.bf16.msra.mxu0 %v6690
    %7155 = vmatmul.bf16.gmra.mxu0 %v6004
    %v7156 = vpop.f32.mrf.mxu0
    %v7157 = vadd.f32 %v7139, %v7156
    %v7158 = vpop.f32.mrf.mxu0
    %v7159 = vadd.f32 %v7141, %v7158
    %7160 = vmatmul.bf16.gmra.mxu0 %v6003
    %v7161 = vpop.f32.mrf.mxu0
    %v7162 = vadd.f32 %v7144, %v7161
    %v7163 = vpop.f32.mrf.mxu0
    %7164 = vdwg.mxu0
    %7165 = vmatpush.bf16.msra.mxu0 %v6720
    %7166 = vmatpush.bf16.msra.mxu0 %v6718
    %7167 = vmatpush.bf16.msra.mxu0 %v6716
    %7168 = vmatpush.bf16.msra.mxu0 %v6714
    %7169 = vmatpush.bf16.msra.mxu0 %v6712
    %7170 = vmatpush.bf16.msra.mxu0 %v6710
    %7171 = vmatpush.bf16.msra.mxu0 %v6708
    %7172 = vmatpush.bf16.msra.mxu0 %v6706
    %7173 = vmatmul.bf16.gmra.mxu0 %v6012
    %v7174 = vpop.f32.mrf.mxu0
    %v7175 = vadd.f32 %v7157, %v7174
    %v7176 = vpop.f32.mrf.mxu0
    %v7177 = vadd.f32 %v7159, %v7176
    %7178 = vmatmul.bf16.gmra.mxu0 %v6011
    %v7179 = vpop.f32.mrf.mxu0
    %v7180 = vadd.f32 %v7162, %v7179
    %v7181 = vpop.f32.mrf.mxu0
    %7182 = vdwg.mxu0
    %7183 = vmatpush.bf16.msra.mxu0 %v6736
    %7184 = vmatpush.bf16.msra.mxu0 %v6734
    %7185 = vmatpush.bf16.msra.mxu0 %v6732
    %7186 = vmatpush.bf16.msra.mxu0 %v6730
    %7187 = vmatpush.bf16.msra.mxu0 %v6728
    %7188 = vmatpush.bf16.msra.mxu0 %v6726
    %7189 = vmatpush.bf16.msra.mxu0 %v6724
    %7190 = vmatpush.bf16.msra.mxu0 %v6722
    %7191 = vmatmul.bf16.gmra.mxu0 %v6017
    %v7192 = vpop.f32.mrf.mxu0
    %v7193 = vadd.f32 %v7175, %v7192
    %v7194 = vpop.f32.mrf.mxu0
    %v7195 = vadd.f32 %v7177, %v7194
    %7196 = vmatmul.bf16.gmra.mxu0 %v6018
    %v7197 = vpop.f32.mrf.mxu0
    %v7198 = vadd.f32 %v7180, %v7197
    %v7199 = vpop.f32.mrf.mxu0
    %7200 = vdwg.mxu0
    %7201 = vmatpush.bf16.msra.mxu0 %v6752
    %7202 = vmatpush.bf16.msra.mxu0 %v6750
    %7203 = vmatpush.bf16.msra.mxu0 %v6748
    %7204 = vmatpush.bf16.msra.mxu0 %v6746
    %7205 = vmatpush.bf16.msra.mxu0 %v6744
    %7206 = vmatpush.bf16.msra.mxu0 %v6742
    %7207 = vmatpush.bf16.msra.mxu0 %v6740
    %7208 = vmatpush.bf16.msra.mxu0 %v6738
    %7209 = vmatmul.bf16.gmra.mxu0 %v6035
    %v7210 = vpop.f32.mrf.mxu0
    %v7211 = vadd.f32 %v7193, %v7210
    %v7212 = vpop.f32.mrf.mxu0
    %v7213 = vadd.f32 %v7195, %v7212
    %7214 = vmatmul.bf16.gmra.mxu0 %v6038
    %v7215 = vpop.f32.mrf.mxu0
    %v7216 = vadd.f32 %v7198, %v7215
    %v7217 = vpop.f32.mrf.mxu0
    %7218 = vdwg.mxu0
    %7219 = vmatpush.bf16.msra.mxu0 %v6768
    %7220 = vmatpush.bf16.msra.mxu0 %v6766
    %7221 = vmatpush.bf16.msra.mxu0 %v6764
    %7222 = vmatpush.bf16.msra.mxu0 %v6762
    %7223 = vmatpush.bf16.msra.mxu0 %v6760
    %7224 = vmatpush.bf16.msra.mxu0 %v6758
    %7225 = vmatpush.bf16.msra.mxu0 %v6756
    %7226 = vmatpush.bf16.msra.mxu0 %v6754
    %7227 = vmatmul.bf16.gmra.mxu0 %v6046
    %v7228 = vpop.f32.mrf.mxu0
    %v7229 = vadd.f32 %v7211, %v7228
    %v7230 = vpop.f32.mrf.mxu0
    %v7231 = vadd.f32 %v7213, %v7230
    %7232 = vmatmul.bf16.gmra.mxu0 %v6045
    %v7233 = vpop.f32.mrf.mxu0
    %v7234 = vadd.f32 %v7216, %v7233
    %v7235 = vpop.f32.mrf.mxu0
    %7236 = vdwg.mxu0
    %v7237 = vld [vmem:[%s11] sm:$0x3]
    %v7239 = vperm.slane %v7237, 0
    %v7240 = vperm.slane %v7237, 1
    %v7243 = vmul.f32 %v7067, %v7239
    %v7244 = vmul.f32 %v7229, %v7240
    %v7245 = vmul.f32 %v7069, %v7239
    %v7246 = vmul.f32 %v7231, %v7240
    %v7247 = vmul.f32 %v7072, %v7239
    %v7248 = vmul.f32 %v7234, %v7240
    %v7249 = vld [vmem:[%s12] sm:$0x3]
    %v7251 = vperm.slane %v7249, 0
    %v7252 = vperm.slane %v7249, 1
    %v7255 = vadd.f32 %v7243, %v7251
    %v7256 = vadd.f32 %v7244, %v7252
    %v7257 = vadd.f32 %v7245, %v7251
    %v7258 = vadd.f32 %v7246, %v7252
    %v7259 = vadd.f32 %v7247, %v7251
    %v7260 = vadd.f32 %v7248, %v7252
    %v7261 = vmax.f32 %v7255, 0.0
    %v7262 = vmax.f32 %v7256, 0.0
    %v7263 = vmax.f32 %v7257, 0.0
    %v7264 = vmax.f32 %v7258, 0.0
    %v7265 = vmax.f32 %v7259, 0.0
    %v7266 = vmax.f32 %v7260, 0.0
    %v7267 = vpack.c.bf16 %v7262, %v7261
    %v7268 = vpack.c.bf16 %v7264, %v7263
    %v7269 = vpack.c.bf16 %v7266, %v7265
    %7270 = vst [vmem:[#allocation8] sm:$0xff] %v7267
    %7271 = vst [vmem:[#allocation8 + $0x8] sm:$0xff] %v7268
    %7272 = vst [vmem:[#allocation8 + $0x10] sm:$0x77] %v7269
    %v7273 = vlaneseq
    %v7274 = vshrl.u32 %v7273, 7
    %vm7275 = vcmp.lt.s32.totalorder %v7274, 0
    %v7276 = vsub.s32 0, %v7274
    %v7277 = vsel %vm7275, %v7276, %v7274
    %v7278 = vshrl.u32 %v7277, 2
    %v7279 = vand.u32 %v7277, 3
    %v7280 = vsub.s32 0, %v7279
    %v7281 = vsel %vm7275, %v7280, %v7279
    %vm7282 = vcmp.ne.s32.totalorder %v7281, 0
    %vm7283 = vcmp.lt.s32.totalorder %v7281, 0
    %vm7284 = vmand %vm7283, %vm7282
    %v7285 = vadd.s32 %v7281, 4
    %v7286 = vsel %vm7284, %v7285, %v7281
    %vm7287 = vcmp.lt.s32.totalorder %v7286, 2
    %v7288 = vld [vmem:[#allocation8] sm:$0x77]
    %v7289 = vsel %vm7287, 1, 0
    %vm7290 = vcmp.eq.s32.totalorder %v7289, 1
    %vm7291 = vmpackc.low %vm7290, %vm7290
    %v7292 = vsel %vm7291, %v7288, 0
    %v7293 = vunpack.c.l.bf16 %v7292
    %v7294 = vunpack.c.h.bf16 %v7292
    %v7295 = vsel %vm552, %v7293, -inf
    %v7296 = vrot.slane %v7295, 4
    %v7297 = vmax.f32 %v7295, %v7296
    %v7298 = vrot.slane %v7297, 2
    %v7299 = vmax.f32 %v7297, %v7298
    %v7300 = vrot.slane %v7299, 1
    %v7301 = vmax.f32 %v7299, %v7300
    %v7302 = vsel %vm552, %v7294, -inf
    %v7303 = vrot.slane %v7302, 4
    %v7304 = vmax.f32 %v7302, %v7303
    %v7305 = vrot.slane %v7304, 2
    %v7306 = vmax.f32 %v7304, %v7305
    %v7307 = vrot.slane %v7306, 1
    %v7308 = vmax.f32 %v7306, %v7307
    %v7309 = vpack.c.bf16 %v7308, %v7301
    %v7310 = vunpack.c.l.bf16 %v7309
    %v7311 = vunpack.c.h.bf16 %v7309
    %v7314 = vrot.slane %v7311, 7
    %v7315 = vsel %vm4639, %v7310, %v7314
    %v7317 = vlaneseq
    %vm7318 = vcmp.ge.s32.totalorder %v7317, 0
    %vm7319 = vcmp.lt.s32.totalorder %v7317, 256
    %vm7320 = vmand %vm7318, %vm7319
    %7321 = vst.msk [vmem:[#allocation9] ss:$2 sm:$0x3] %vm7320, %v7315
    %v7322 = vld [vmem:[#allocation8 + $0x10] sm:$0x77]
    %v7323 = vsel %vm7291, %v7322, 0
    %v7324 = vunpack.c.l.bf16 %v7323
    %v7325 = vunpack.c.h.bf16 %v7323
    %v7326 = vsel %vm552, %v7324, -inf
    %v7327 = vrot.slane %v7326, 4
    %v7328 = vmax.f32 %v7326, %v7327
    %v7329 = vrot.slane %v7328, 2
    %v7330 = vmax.f32 %v7328, %v7329
    %v7331 = vrot.slane %v7330, 1
    %v7332 = vmax.f32 %v7330, %v7331
    %v7333 = vsel %vm552, %v7325, -inf
    %v7334 = vrot.slane %v7333, 4
    %v7335 = vmax.f32 %v7333, %v7334
    %v7336 = vrot.slane %v7335, 2
    %v7337 = vmax.f32 %v7335, %v7336
    %v7338 = vrot.slane %v7337, 1
    %v7339 = vmax.f32 %v7337, %v7338
    %v7340 = vpack.c.bf16 %v7339, %v7332
    %v7341 = vunpack.c.l.bf16 %v7340
    %v7342 = vunpack.c.h.bf16 %v7340
    %v7345 = vrot.slane %v7342, 7
    %v7346 = vsel %vm4639, %v7341, %v7345
    %s7348 = scalar_lea.vmem [#allocation9], 1
    %7349 = vst.msk [vmem:[%s7348] ss:$2 sm:$0x3] %vm7320, %v7346
    %v7350 = vld [vmem:[#allocation9] sm:$0xf]
    %7352 = vst [vmem:[#allocation1] ss:$4 sm:$0xff] %v7350
    %v7353 = vld.sshfl [vmem:[#allocation1] sm:$0xff pattern:$0x73625140]
    %v7354 = vld.sshfl [vmem:[#allocation1 + $0x8] sm:$0xff pattern:$0x73625140]
    %v7357 = vpack.c.bf16 %v7353, %v7353
    %v7358 = vpack.c.bf16 %v7354, %v7354
    %v7359 = vld [vmem:[%s16] sm:$0xf]
    %v7360 = vld [vmem:[%s16 + $0x4] sm:$0xf]
    %v7361 = vld [vmem:[%s16 + $0x8] sm:$0xf]
    %v7362 = vld [vmem:[%s16 + $0xc] sm:$0xf]
    %v7363 = vld [vmem:[%s16 + $0x10] sm:$0xf]
    %v7364 = vld [vmem:[%s16 + $0x14] sm:$0xf]
    %v7365 = vld [vmem:[%s16 + $0x18] sm:$0xf]
    %v7366 = vld [vmem:[%s16 + $0x1c] sm:$0xf]
    %v7367 = vld [vmem:[%s16 + $0x20] sm:$0xf]
    %v7368 = vld [vmem:[%s16 + $0x24] sm:$0xf]
    %v7369 = vld [vmem:[%s16 + $0x28] sm:$0xf]
    %v7370 = vld [vmem:[%s16 + $0x2c] sm:$0xf]
    %v7371 = vld [vmem:[%s16 + $0x30] sm:$0xf]
    %v7372 = vld [vmem:[%s16 + $0x34] sm:$0xf]
    %v7373 = vld [vmem:[%s16 + $0x38] sm:$0xf]
    %v7374 = vld [vmem:[%s16 + $0x3c] sm:$0xf]
    %v7375 = vld [vmem:[%s16 + $0x40] sm:$0xf]
    %v7376 = vld [vmem:[%s16 + $0x44] sm:$0xf]
    %v7377 = vld [vmem:[%s16 + $0x48] sm:$0xf]
    %v7378 = vld [vmem:[%s16 + $0x4c] sm:$0xf]
    %v7379 = vld [vmem:[%s16 + $0x50] sm:$0xf]
    %v7380 = vld [vmem:[%s16 + $0x54] sm:$0xf]
    %v7381 = vld [vmem:[%s16 + $0x58] sm:$0xf]
    %v7382 = vld [vmem:[%s16 + $0x5c] sm:$0xf]
    %v7383 = vld [vmem:[%s16 + $0x60] sm:$0xf]
    %v7384 = vld [vmem:[%s16 + $0x64] sm:$0xf]
    %v7385 = vld [vmem:[%s16 + $0x68] sm:$0xf]
    %v7386 = vld [vmem:[%s16 + $0x6c] sm:$0xf]
    %v7387 = vld [vmem:[%s16 + $0x70] sm:$0xf]
    %v7388 = vld [vmem:[%s16 + $0x74] sm:$0xf]
    %v7389 = vld [vmem:[%s16 + $0x78] sm:$0xf]
    %v7390 = vld [vmem:[%s16 + $0x7c] sm:$0xf]
    %v7391 = vld [vmem:[%s17] sm:$0x1]
    %v7393 = vperm.slane %v7391, 0
    %v7427 = vunpack.c.l.b16 %v7359
    %v7428 = vunpack.c.l.b16 %v7360
    %v7429 = vunpack.c.l.b16 %v7361
    %v7430 = vunpack.c.l.b16 %v7362
    %v7431 = vunpack.c.l.b16 %v7363
    %v7432 = vunpack.c.l.b16 %v7364
    %v7433 = vunpack.c.l.b16 %v7365
    %v7434 = vunpack.c.l.b16 %v7366
    %v7435 = vunpack.c.l.b16 %v7367
    %v7436 = vunpack.c.l.b16 %v7368
    %v7437 = vunpack.c.l.b16 %v7369
    %v7438 = vunpack.c.l.b16 %v7370
    %v7439 = vunpack.c.l.b16 %v7371
    %v7440 = vunpack.c.l.b16 %v7372
    %v7441 = vunpack.c.l.b16 %v7373
    %v7442 = vunpack.c.l.b16 %v7374
    %v7443 = vunpack.c.l.b16 %v7375
    %v7444 = vunpack.c.l.b16 %v7376
    %v7445 = vunpack.c.l.b16 %v7377
    %v7446 = vunpack.c.l.b16 %v7378
    %v7447 = vunpack.c.l.b16 %v7379
    %v7448 = vunpack.c.l.b16 %v7380
    %v7449 = vunpack.c.l.b16 %v7381
    %v7450 = vunpack.c.l.b16 %v7382
    %v7451 = vunpack.c.l.b16 %v7383
    %v7452 = vunpack.c.l.b16 %v7384
    %v7453 = vunpack.c.l.b16 %v7385
    %v7454 = vunpack.c.l.b16 %v7386
    %v7455 = vunpack.c.l.b16 %v7387
    %v7456 = vunpack.c.l.b16 %v7388
    %v7457 = vunpack.c.l.b16 %v7389
    %v7458 = vunpack.c.l.b16 %v7390
    %v7459 = vpack.c.b16 %v7428, %v7427
    %v7460 = vpack.c.b16 %v7430, %v7429
    %v7461 = vpack.c.b16 %v7432, %v7431
    %v7462 = vpack.c.b16 %v7434, %v7433
    %v7463 = vpack.c.b16 %v7436, %v7435
    %v7464 = vpack.c.b16 %v7438, %v7437
    %v7465 = vpack.c.b16 %v7440, %v7439
    %v7466 = vpack.c.b16 %v7442, %v7441
    %v7467 = vpack.c.b16 %v7444, %v7443
    %v7468 = vpack.c.b16 %v7446, %v7445
    %v7469 = vpack.c.b16 %v7448, %v7447
    %v7470 = vpack.c.b16 %v7450, %v7449
    %v7471 = vpack.c.b16 %v7452, %v7451
    %v7472 = vpack.c.b16 %v7454, %v7453
    %v7473 = vpack.c.b16 %v7456, %v7455
    %v7474 = vpack.c.b16 %v7458, %v7457
    %7491 = vmatpush.bf16.msra.mxu0 %v7466
    %7492 = vmatpush.bf16.msra.mxu0 %v7465
    %7493 = vmatpush.bf16.msra.mxu0 %v7464
    %7494 = vmatpush.bf16.msra.mxu0 %v7463
    %7495 = vmatpush.bf16.msra.mxu0 %v7462
    %7496 = vmatpush.bf16.msra.mxu0 %v7461
    %7497 = vmatpush.bf16.msra.mxu0 %v7460
    %7498 = vmatpush.bf16.msra.mxu0 %v7459
    %7499 = vmatmul.bf16.gmra.mxu0 %v7357
    %v7500 = vpop.f32.mrf.mxu0
    %v7501 = vadd.f32 %v7393, %v7500
    %v7502 = vpop.f32.mrf.mxu0
    %7503 = vdwg.mxu0
    %7504 = vmatpush.bf16.msra.mxu0 %v7474
    %7505 = vmatpush.bf16.msra.mxu0 %v7473
    %7506 = vmatpush.bf16.msra.mxu0 %v7472
    %7507 = vmatpush.bf16.msra.mxu0 %v7471
    %7508 = vmatpush.bf16.msra.mxu0 %v7470
    %7509 = vmatpush.bf16.msra.mxu0 %v7469
    %7510 = vmatpush.bf16.msra.mxu0 %v7468
    %7511 = vmatpush.bf16.msra.mxu0 %v7467
    %7512 = vmatmul.bf16.gmra.mxu0 %v7358
    %v7513 = vpop.f32.mrf.mxu0
    %v7514 = vadd.f32 %v7501, %v7513
    %v7515 = vpop.f32.mrf.mxu0
    %7516 = vdwg.mxu0
    %7517 = vst [vmem:[#allocation10] sm:$0x3] %v7514
    // Predicated region
    $region74: #{classifier_forward.1} parent=1 // pred_check
      _
    $region75: #{classifier_forward.1} parent=1 // pred_check_branch
      %7519 = sbr.rel (0) target = $region77
    $region76: #{classifier_forward.1} parent=1 // pred_region
      %7521 = vsyncadd [#allocation11], 0
      %s7523 = sshll.u32 [#allocation10], 4
      %s7524 = int_to_ptr.vmem [resolvable:$true] %s7523
      %s7525 = sshll.u32 %s18, 4
      %s7526 = int_to_ptr.hbm [resolvable:$true] %s7525
      %7528 = dma.vmem_to_hbm [thread:$0]  %s7524, 32, %s7526, [#allocation11]
    $region77: #{classifier_forward.1} parent=1 // pred_fallthru
      _
    // Predicated region
    $region78: #{classifier_forward.1} parent=1 // pred_check
      _
    $region79: #{classifier_forward.1} parent=1 // pred_check_branch
      %7530 = sbr.rel (0) target = $region81
    $region80: #{classifier_forward.1} parent=1 // pred_region
      %7532 = dma.done [#allocation11], 32
    $region81: #{classifier_forward.1} parent=1 // pred_fallthru
      _
    %7533 = vsyncpa [#allocation11], 1

</llo_original>
